<compile_context>
chip_gen: v7x
topology: tpu7x:2x2x1
jax: 0.10.0
libtpu: 0.0.40
codegen_flags: <defaults>
</compile_context>

<pallas_src>
import numpy as np
import jax
import jax.numpy as jnp
from jax import lax
from jax.experimental import pallas as pl
from jax.experimental.pallas import tpu as pltpu

# ---------------- static problem sizes ----------------
H, W = 12, 20            # input spatial dims (gives 96 flattened features)
C1, C2 = 16, 16          # conv1 / conv2 output channels
KH = KW = 3
# MaxPool2d(kernel_size=3, padding=1) -> stride=3, floor mode
H1 = (H + 2 - 3) // 3 + 1    # 4
W1 = (W + 2 - 3) // 3 + 1    # 7
H2 = (H1 + 2 - 3) // 3 + 1   # 2
W2 = (W1 + 2 - 3) // 3 + 1   # 3
FEAT = C2 * H2 * W2          # 96
OUT = 50


def _pool_windows(n_in, n_out):
    """Valid input indices of each MaxPool2d(k=3, s=3, pad=1, floor) window."""
    return [[w for w in range(3 * i - 1, 3 * i + 2) if 0 <= w < n_in]
            for i in range(n_out)]


_POOL1_ROWS = _pool_windows(H, H1)    # 4 windows over 12 rows
_POOL1_COLS = _pool_windows(W, W1)    # 7 windows over 20 cols
_POOL2_ROWS = _pool_windows(H1, H2)   # 2 windows over 4 rows
_POOL2_COLS = _pool_windows(W1, W2)   # 3 windows over 7 cols
assert all(len(w) > 0 for w in _POOL1_ROWS + _POOL1_COLS + _POOL2_ROWS + _POOL2_COLS)


def _vmax(vals):
    out = vals[0]
    for v in vals[1:]:
        out = jnp.maximum(out, v)
    return out


def _cnn_pair_kernel(x_ref, w1_ref, b1_ref, w2_ref, b2_ref, wf_ref, bf_ref,
                     out_ref):
    """One tile: NB = 2*TB images in the lanes, ordered [x1 block | x2 block]."""
    f32 = jnp.float32
    bf16 = jnp.bfloat16
    NB = x_ref.shape[-1]
    TB = NB // 2

    # ---- conv1 (1 -> 16, 3x3, pad 1) + ReLU; activations live as (H, W, C, img) ----
    x1s = x_ref[0]                                           # (H+2, W+2, 1, NB)
    xb = jnp.broadcast_to(x1s, (H + 2, W + 2, C1, NB))       # replicate over channel sublanes
    w1 = w1_ref[...]                                         # (9, C1, 1)
    acc = None
    for t in range(KH * KW):
        dy, dx = divmod(t, KW)
        w1t = jnp.broadcast_to(w1[t], (C1, NB))              # per-tap channel weights, lane-splat
        term = xb[dy:dy + H, dx:dx + W] * w1t[None, None]
        acc = term if acc is None else acc + term
    b1t = jnp.broadcast_to(b1_ref[...], (C1, NB))
    h1 = jnp.maximum(acc + b1t[None, None], 0.0)             # (H, W, C1, NB) f32

    # ---- pool1: exact MaxPool2d(k=3, s=3, pad=1) via valid-window elementwise max ----
    rmax = [_vmax([h1[h] for h in rows]) for rows in _POOL1_ROWS]        # 4 x (W, C1, NB)
    p1 = {(i, j): _vmax([rmax[i][w] for w in cols]).astype(bf16)
          for i in range(H1) for j, cols in enumerate(_POOL1_COLS)}      # (C1, NB) bf16 each

    # ---- conv2 (16 -> 16, 3x3, pad 1) + ReLU: one small MXU matmul per output position ----
    w2 = w2_ref[...]                                         # (C2, 144) bf16
    b2 = b2_ref[...]                                         # (C2, 1)   f32
    zero_piece = jnp.zeros((C1, NB), bf16)
    h2 = {}
    for i in range(H1):
        for j in range(W1):
            taps = []
            for dy in range(KH):
                for dx in range(KW):
                    r, c = i + dy - 1, j + dx - 1
                    taps.append(p1[(r, c)] if (0 <= r < H1 and 0 <= c < W1)
                                else zero_piece)
            colvec = jnp.concatenate(taps, axis=0)                         # (144, NB) bf16
            out2 = jnp.dot(w2, colvec, preferred_element_type=f32)         # (C2, NB) f32
            h2[(i, j)] = jnp.maximum(out2 + b2, 0.0)

    # ---- pool2 + flatten (pos-major / channel-minor; fc weight pre-permuted to match) ----
    feat_pieces = [_vmax([h2[(i, j)] for i in rows for j in cols]).astype(bf16)
                   for rows in _POOL2_ROWS for cols in _POOL2_COLS]        # 6 x (C2, NB)
    featT = jnp.concatenate(feat_pieces, axis=0)                           # (FEAT, NB) bf16

    # ---- fc1: (50, 96) @ (96, NB) ----
    logits = jnp.dot(wf_ref[...], featT, preferred_element_type=f32) + bf_ref[...]  # (OUT, NB)

    # ---- siamese score + single lane-dense store: rows [logits | score] ----
    f1 = logits[:, :TB]
    f2 = logits[:, TB:]
    d = jnp.sum(jnp.abs(f1 - f2), axis=0, keepdims=True)                   # (1, TB)
    score = jnp.exp(-d)
    score_row = jnp.concatenate([score, score], axis=1)                    # (1, NB)
    out_ref[0] = jnp.concatenate([logits, score_row], axis=0)              # (OUT+1, NB)


def cnn_pallas(x1, x2, params):
    """Pallas implementation of CNN.forward(x1, x2). Returns (score(B,), logits(2B,50))."""
    w1, b1, w2, b2, wf, bf = (params[k] for k in ("w1", "b1", "w2", "b2", "wf", "bf"))
    B = x1.shape[0]

    # Pair-tile policy: images live in lanes (NB = 2*TB per step).
    #   B <= 64 : one step, NB = 2B <= 128 lanes (fewest total vreg ops).
    #   B  > 64 : TB = 64 (full 128 lanes) and >= 2 grid steps, so the "parallel"
    #             axis shards across both v7x TensorCores; batch padded to G*TB.
    TB = 64 if B > 64 else B
    G = -(-B // TB)
    Bp = G * TB
    NB = 2 * TB

    # glue: pair-stack, pad batch, zero-pad spatially, move images into the lane dim
    x = jnp.stack([x1, x2], axis=0).astype(jnp.float32)                    # (2, B, H, W)
    if Bp != B:
        x = jnp.pad(x, ((0, 0), (0, Bp - B), (0, 0), (0, 0)))
    x = jnp.pad(x, ((0, 0), (0, 0), (1, 1), (1, 1)))                       # (2, Bp, H+2, W+2)
    x = x.reshape(2, G, TB, H + 2, W + 2)
    x = jnp.transpose(x, (1, 3, 4, 0, 2)).reshape(G, H + 2, W + 2, 1, NB)

    # glue: parameter layout prep
    w1c = jnp.transpose(w1[:, 0], (1, 2, 0)).reshape(KH * KW, C1)[:, :, None]   # (9, 16, 1)
    b1c = b1.reshape(C1, 1)
    w2m = jnp.transpose(w2, (0, 2, 3, 1)).reshape(C2, KH * KW * C1)             # (16, 144)
    w2m = w2m.astype(jnp.bfloat16)
    b2c = b2.reshape(C2, 1)
    wfp = jnp.transpose(wf.reshape(OUT, C2, H2 * W2), (0, 2, 1)).reshape(OUT, FEAT)
    wfp = wfp.astype(jnp.bfloat16)                                              # (50, 96)
    bfc = bf.reshape(OUT, 1)

    n_img = 2 * Bp
    flops = 2 * n_img * (H * W * KH * KW * C1
                         + H1 * W1 * KH * KW * C1 * C2
                         + FEAT * OUT)
    bytes_accessed = (4 * (x.size + w1c.size + b1c.size + b2c.size + bfc.size
                           + G * (OUT + 1) * NB)
                      + 2 * (w2m.size + wfp.size))

    out = pl.pallas_call(
        _cnn_pair_kernel,
        grid=(G,),
        in_specs=[
            pl.BlockSpec((1, H + 2, W + 2, 1, NB), lambda g: (g, 0, 0, 0, 0)),
            pl.BlockSpec((KH * KW, C1, 1), lambda g: (0, 0, 0)),
            pl.BlockSpec((C1, 1), lambda g: (0, 0)),
            pl.BlockSpec((C2, KH * KW * C1), lambda g: (0, 0)),
            pl.BlockSpec((C2, 1), lambda g: (0, 0)),
            pl.BlockSpec((OUT, FEAT), lambda g: (0, 0)),
            pl.BlockSpec((OUT, 1), lambda g: (0, 0)),
        ],
        out_specs=pl.BlockSpec((1, OUT + 1, NB), lambda g: (g, 0, 0)),
        out_shape=jax.ShapeDtypeStruct((G, OUT + 1, NB), jnp.float32),
        compiler_params=pltpu.CompilerParams(
            dimension_semantics=("parallel",),
            vmem_limit_bytes=32 * 1024 * 1024),
        cost_estimate=pl.CostEstimate(flops=int(flops), transcendentals=int(Bp),
                                      bytes_accessed=int(bytes_accessed)),
    )(x, w1c, b1c, w2m, b2c, wfp, bfc)

    # unpack: lanes [0:TB] carry the x1 logits, [TB:NB] the x2 logits, row OUT the scores
    f1 = jnp.transpose(out[:, :OUT, :TB], (0, 2, 1)).reshape(Bp, OUT)[:B]
    f2 = jnp.transpose(out[:, :OUT, TB:], (0, 2, 1)).reshape(Bp, OUT)[:B]
    score = out[:, OUT, :TB].reshape(Bp)[:B]
    feats = jnp.concatenate([f1, f2], axis=0)                    # (2B, OUT) debug output
    return score, feats


# ---------------- pure-JAX reference (mirrors the PyTorch module) ----------------
def cnn_reference(x1, x2, params):
    w1, b1, w2, b2, wf, bf = (params[k] for k in ("w1", "b1", "w2", "b2", "wf", "bf"))

    def features(x):
        y = x[:, None, :, :]                                        # NCHW, C=1
        y = lax.conv_general_dilated(y, w1, (1, 1), [(1, 1), (1, 1)],
                                     dimension_numbers=("NCHW", "OIHW", "NCHW"),
                                     precision=lax.Precision.HIGHEST)
        y = jnp.maximum(y + b1[None, :, None, None], 0.0)
        y = lax.reduce_window(y, -jnp.inf, lax.max, (1, 1, 3, 3), (1, 1, 3, 3),
                              [(0, 0), (0, 0), (1, 1), (1, 1)])
        y = lax.conv_general_dilated(y, w2, (1, 1), [(1, 1), (1, 1)],
                                     dimension_numbers=("NCHW", "OIHW", "NCHW"),
                                     precision=lax.Precision.HIGHEST)
        y = jnp.maximum(y + b2[None, :, None, None], 0.0)
        y = lax.reduce_window(y, -jnp.inf, lax.max, (1, 1, 3, 3), (1, 1, 3, 3),
                              [(0, 0), (0, 0), (1, 1), (1, 1)])
        y = y.reshape(y.shape[0], -1)                               # torch.flatten(x, 1)
        return jnp.dot(y, wf.T, precision=lax.Precision.HIGHEST) + bf

    f1, f2 = features(x1), features(x2)
    d = jnp.sum(jnp.abs(f1 - f2), axis=1)
    return jnp.exp(-d), jnp.concatenate([f1, f2], axis=0)


def init_params(key):
    ks = jax.random.split(key, 6)

    def u(k, shape, fan_in):
        bound = 1.0 / np.sqrt(fan_in)
        return jax.random.uniform(k, shape, jnp.float32, -bound, bound)

    return dict(
        w1=u(ks[0], (C1, 1, KH, KW), 1 * KH * KW),    # Conv2d(1, 16, 3, padding=1)
        b1=u(ks[1], (C1,), 1 * KH * KW),
        w2=u(ks[2], (C2, C1, KH, KW), C1 * KH * KW),  # Conv2d(16, 16, 3, padding=1)
        b2=u(ks[3], (C2,), C1 * KH * KW),
        wf=u(ks[4], (OUT, FEAT), FEAT),               # Linear(96, 50)
        bf=u(ks[5], (OUT,), FEAT),
    )


if __name__ == "__main__":
    key = jax.random.PRNGKey(0)
    kp, kx1, kx2 = jax.random.split(key, 3)
    params = init_params(kp)

    B = 2
    x1 = jax.random.uniform(kx1, (B, H, W), jnp.float32)
    x2 = jax.random.uniform(kx2, (B, H, W), jnp.float32)

    score, feats = cnn_pallas(x1, x2, params)
    score = jax.block_until_ready(score)
    feats = jax.block_until_ready(feats)

    ref_score, ref_feats = cnn_reference(x1, x2, params)
    if not np.allclose(np.asarray(feats), np.asarray(ref_feats), rtol=1e-2, atol=1e-2):
        raise AssertionError("fc feature mismatch vs reference")
    if not np.allclose(np.asarray(score), np.asarray(ref_score), rtol=1e-2, atol=1e-2):
        raise AssertionError("score mismatch vs reference")

    # TODO(synk): the print(x.shape) calls in the PyTorch forward are debug-only and omitted.
    print("KERNEL_OK")
</pallas_src>

<mosaic_0001>
module attributes {stable_mosaic.version = 11 : i64} {
  func.func @_cnn_pair_kernel(%arg0: i32, %arg1: memref<1x14x22x1x4xf32, #tpu.memory_space<vmem>>, %arg2: memref<9x16x1xf32, #tpu.memory_space<vmem>>, %arg3: memref<16x1xf32, #tpu.memory_space<vmem>>, %arg4: memref<16x144xbf16, #tpu.memory_space<vmem>>, %arg5: memref<16x1xf32, #tpu.memory_space<vmem>>, %arg6: memref<50x96xbf16, #tpu.memory_space<vmem>>, %arg7: memref<50x1xf32, #tpu.memory_space<vmem>>, %arg8: memref<1x51x4xf32, #tpu.memory_space<vmem>>) attributes {dimension_semantics = [#tpu.dimension_semantics<parallel>], iteration_bounds = array<i64: 1>, scalar_prefetch = 0 : i64, scratch_operands = 0 : i64, tpu.core_type = #tpu.core_type<tc>, window_params = [{transform_indices = @transform_0, window_bounds = array<i64: 1, 14, 22, 1, 4>}, {pipeline_mode = #tpu.pipeline_mode<synchronous>, transform_indices = @transform_1, window_bounds = array<i64: 9, 16, 1>}, {pipeline_mode = #tpu.pipeline_mode<synchronous>, transform_indices = @transform_2, window_bounds = array<i64: 16, 1>}, {pipeline_mode = #tpu.pipeline_mode<synchronous>, transform_indices = @transform_3, window_bounds = array<i64: 16, 144>}, {pipeline_mode = #tpu.pipeline_mode<synchronous>, transform_indices = @transform_4, window_bounds = array<i64: 16, 1>}, {pipeline_mode = #tpu.pipeline_mode<synchronous>, transform_indices = @transform_5, window_bounds = array<i64: 50, 96>}, {pipeline_mode = #tpu.pipeline_mode<synchronous>, transform_indices = @transform_6, window_bounds = array<i64: 50, 1>}, {transform_indices = @transform_7, window_bounds = array<i64: 1, 51, 4>}]} {
    %c0 = arith.constant 0 : index
    %c0_0 = arith.constant 0 : index
    %c0_1 = arith.constant 0 : index
    %c0_2 = arith.constant 0 : index
    %c0_3 = arith.constant 0 : index
    %0 = vector.load %arg1[%c0, %c0_0, %c0_1, %c0_2, %c0_3] : memref<1x14x22x1x4xf32, #tpu.memory_space<vmem>>, vector<1x14x22x1x4xf32>
    %1 = vector.shape_cast %0 : vector<1x14x22x1x4xf32> to vector<14x22x1x4xf32>
    %2 = vector.shape_cast %1 : vector<14x22x1x4xf32> to vector<14x22x1x4xf32>
    %3 = vector.broadcast %2 : vector<14x22x1x4xf32> to vector<14x22x16x4xf32>
    %c0_4 = arith.constant 0 : index
    %c0_5 = arith.constant 0 : index
    %c0_6 = arith.constant 0 : index
    %4 = vector.load %arg2[%c0_4, %c0_5, %c0_6] : memref<9x16x1xf32, #tpu.memory_space<vmem>>, vector<9x16x1xf32>
    %5 = vector.extract_strided_slice %4 {offsets = [0, 0, 0], sizes = [1, 16, 1], strides = [1, 1, 1]} : vector<9x16x1xf32> to vector<1x16x1xf32>
    %6 = vector.shape_cast %5 : vector<1x16x1xf32> to vector<16x1xf32>
    %7 = vector.shape_cast %6 : vector<16x1xf32> to vector<16x1xf32>
    %8 = vector.broadcast %7 : vector<16x1xf32> to vector<16x4xf32>
    %9 = vector.extract_strided_slice %3 {offsets = [0, 0, 0, 0], sizes = [12, 20, 16, 4], strides = [1, 1, 1, 1]} : vector<14x22x16x4xf32> to vector<12x20x16x4xf32>
    %10 = vector.shape_cast %8 : vector<16x4xf32> to vector<1x1x16x4xf32>
    %11 = vector.broadcast %10 : vector<1x1x16x4xf32> to vector<12x20x16x4xf32>
    %12 = arith.mulf %9, %11 : vector<12x20x16x4xf32>
    %13 = vector.extract_strided_slice %4 {offsets = [1, 0, 0], sizes = [1, 16, 1], strides = [1, 1, 1]} : vector<9x16x1xf32> to vector<1x16x1xf32>
    %14 = vector.shape_cast %13 : vector<1x16x1xf32> to vector<16x1xf32>
    %15 = vector.shape_cast %14 : vector<16x1xf32> to vector<16x1xf32>
    %16 = vector.broadcast %15 : vector<16x1xf32> to vector<16x4xf32>
    %17 = vector.extract_strided_slice %3 {offsets = [0, 1, 0, 0], sizes = [12, 20, 16, 4], strides = [1, 1, 1, 1]} : vector<14x22x16x4xf32> to vector<12x20x16x4xf32>
    %18 = vector.shape_cast %16 : vector<16x4xf32> to vector<1x1x16x4xf32>
    %19 = vector.broadcast %18 : vector<1x1x16x4xf32> to vector<12x20x16x4xf32>
    %20 = arith.mulf %17, %19 : vector<12x20x16x4xf32>
    %21 = arith.addf %12, %20 : vector<12x20x16x4xf32>
    %22 = vector.extract_strided_slice %4 {offsets = [2, 0, 0], sizes = [1, 16, 1], strides = [1, 1, 1]} : vector<9x16x1xf32> to vector<1x16x1xf32>
    %23 = vector.shape_cast %22 : vector<1x16x1xf32> to vector<16x1xf32>
    %24 = vector.shape_cast %23 : vector<16x1xf32> to vector<16x1xf32>
    %25 = vector.broadcast %24 : vector<16x1xf32> to vector<16x4xf32>
    %26 = vector.extract_strided_slice %3 {offsets = [0, 2, 0, 0], sizes = [12, 20, 16, 4], strides = [1, 1, 1, 1]} : vector<14x22x16x4xf32> to vector<12x20x16x4xf32>
    %27 = vector.shape_cast %25 : vector<16x4xf32> to vector<1x1x16x4xf32>
    %28 = vector.broadcast %27 : vector<1x1x16x4xf32> to vector<12x20x16x4xf32>
    %29 = arith.mulf %26, %28 : vector<12x20x16x4xf32>
    %30 = arith.addf %21, %29 : vector<12x20x16x4xf32>
    %31 = vector.extract_strided_slice %4 {offsets = [3, 0, 0], sizes = [1, 16, 1], strides = [1, 1, 1]} : vector<9x16x1xf32> to vector<1x16x1xf32>
    %32 = vector.shape_cast %31 : vector<1x16x1xf32> to vector<16x1xf32>
    %33 = vector.shape_cast %32 : vector<16x1xf32> to vector<16x1xf32>
    %34 = vector.broadcast %33 : vector<16x1xf32> to vector<16x4xf32>
    %35 = vector.extract_strided_slice %3 {offsets = [1, 0, 0, 0], sizes = [12, 20, 16, 4], strides = [1, 1, 1, 1]} : vector<14x22x16x4xf32> to vector<12x20x16x4xf32>
    %36 = vector.shape_cast %34 : vector<16x4xf32> to vector<1x1x16x4xf32>
    %37 = vector.broadcast %36 : vector<1x1x16x4xf32> to vector<12x20x16x4xf32>
    %38 = arith.mulf %35, %37 : vector<12x20x16x4xf32>
    %39 = arith.addf %30, %38 : vector<12x20x16x4xf32>
    %40 = vector.extract_strided_slice %4 {offsets = [4, 0, 0], sizes = [1, 16, 1], strides = [1, 1, 1]} : vector<9x16x1xf32> to vector<1x16x1xf32>
    %41 = vector.shape_cast %40 : vector<1x16x1xf32> to vector<16x1xf32>
    %42 = vector.shape_cast %41 : vector<16x1xf32> to vector<16x1xf32>
    %43 = vector.broadcast %42 : vector<16x1xf32> to vector<16x4xf32>
    %44 = vector.extract_strided_slice %3 {offsets = [1, 1, 0, 0], sizes = [12, 20, 16, 4], strides = [1, 1, 1, 1]} : vector<14x22x16x4xf32> to vector<12x20x16x4xf32>
    %45 = vector.shape_cast %43 : vector<16x4xf32> to vector<1x1x16x4xf32>
    %46 = vector.broadcast %45 : vector<1x1x16x4xf32> to vector<12x20x16x4xf32>
    %47 = arith.mulf %44, %46 : vector<12x20x16x4xf32>
    %48 = arith.addf %39, %47 : vector<12x20x16x4xf32>
    %49 = vector.extract_strided_slice %4 {offsets = [5, 0, 0], sizes = [1, 16, 1], strides = [1, 1, 1]} : vector<9x16x1xf32> to vector<1x16x1xf32>
    %50 = vector.shape_cast %49 : vector<1x16x1xf32> to vector<16x1xf32>
    %51 = vector.shape_cast %50 : vector<16x1xf32> to vector<16x1xf32>
    %52 = vector.broadcast %51 : vector<16x1xf32> to vector<16x4xf32>
    %53 = vector.extract_strided_slice %3 {offsets = [1, 2, 0, 0], sizes = [12, 20, 16, 4], strides = [1, 1, 1, 1]} : vector<14x22x16x4xf32> to vector<12x20x16x4xf32>
    %54 = vector.shape_cast %52 : vector<16x4xf32> to vector<1x1x16x4xf32>
    %55 = vector.broadcast %54 : vector<1x1x16x4xf32> to vector<12x20x16x4xf32>
    %56 = arith.mulf %53, %55 : vector<12x20x16x4xf32>
    %57 = arith.addf %48, %56 : vector<12x20x16x4xf32>
    %58 = vector.extract_strided_slice %4 {offsets = [6, 0, 0], sizes = [1, 16, 1], strides = [1, 1, 1]} : vector<9x16x1xf32> to vector<1x16x1xf32>
    %59 = vector.shape_cast %58 : vector<1x16x1xf32> to vector<16x1xf32>
    %60 = vector.shape_cast %59 : vector<16x1xf32> to vector<16x1xf32>
    %61 = vector.broadcast %60 : vector<16x1xf32> to vector<16x4xf32>
    %62 = vector.extract_strided_slice %3 {offsets = [2, 0, 0, 0], sizes = [12, 20, 16, 4], strides = [1, 1, 1, 1]} : vector<14x22x16x4xf32> to vector<12x20x16x4xf32>
    %63 = vector.shape_cast %61 : vector<16x4xf32> to vector<1x1x16x4xf32>
    %64 = vector.broadcast %63 : vector<1x1x16x4xf32> to vector<12x20x16x4xf32>
    %65 = arith.mulf %62, %64 : vector<12x20x16x4xf32>
    %66 = arith.addf %57, %65 : vector<12x20x16x4xf32>
    %67 = vector.extract_strided_slice %4 {offsets = [7, 0, 0], sizes = [1, 16, 1], strides = [1, 1, 1]} : vector<9x16x1xf32> to vector<1x16x1xf32>
    %68 = vector.shape_cast %67 : vector<1x16x1xf32> to vector<16x1xf32>
    %69 = vector.shape_cast %68 : vector<16x1xf32> to vector<16x1xf32>
    %70 = vector.broadcast %69 : vector<16x1xf32> to vector<16x4xf32>
    %71 = vector.extract_strided_slice %3 {offsets = [2, 1, 0, 0], sizes = [12, 20, 16, 4], strides = [1, 1, 1, 1]} : vector<14x22x16x4xf32> to vector<12x20x16x4xf32>
    %72 = vector.shape_cast %70 : vector<16x4xf32> to vector<1x1x16x4xf32>
    %73 = vector.broadcast %72 : vector<1x1x16x4xf32> to vector<12x20x16x4xf32>
    %74 = arith.mulf %71, %73 : vector<12x20x16x4xf32>
    %75 = arith.addf %66, %74 : vector<12x20x16x4xf32>
    %76 = vector.extract_strided_slice %4 {offsets = [8, 0, 0], sizes = [1, 16, 1], strides = [1, 1, 1]} : vector<9x16x1xf32> to vector<1x16x1xf32>
    %77 = vector.shape_cast %76 : vector<1x16x1xf32> to vector<16x1xf32>
    %78 = vector.shape_cast %77 : vector<16x1xf32> to vector<16x1xf32>
    %79 = vector.broadcast %78 : vector<16x1xf32> to vector<16x4xf32>
    %80 = vector.extract_strided_slice %3 {offsets = [2, 2, 0, 0], sizes = [12, 20, 16, 4], strides = [1, 1, 1, 1]} : vector<14x22x16x4xf32> to vector<12x20x16x4xf32>
    %81 = vector.shape_cast %79 : vector<16x4xf32> to vector<1x1x16x4xf32>
    %82 = vector.broadcast %81 : vector<1x1x16x4xf32> to vector<12x20x16x4xf32>
    %83 = arith.mulf %80, %82 : vector<12x20x16x4xf32>
    %84 = arith.addf %75, %83 : vector<12x20x16x4xf32>
    %c0_7 = arith.constant 0 : index
    %c0_8 = arith.constant 0 : index
    %85 = vector.load %arg3[%c0_7, %c0_8] : memref<16x1xf32, #tpu.memory_space<vmem>>, vector<16x1xf32>
    %86 = vector.shape_cast %85 : vector<16x1xf32> to vector<16x1xf32>
    %87 = vector.broadcast %86 : vector<16x1xf32> to vector<16x4xf32>
    %88 = vector.shape_cast %87 : vector<16x4xf32> to vector<1x1x16x4xf32>
    %89 = vector.broadcast %88 : vector<1x1x16x4xf32> to vector<12x20x16x4xf32>
    %90 = arith.addf %84, %89 : vector<12x20x16x4xf32>
    %cst = arith.constant 0.000000e+00 : f32
    %91 = vector.broadcast %cst : f32 to vector<12x20x16x4xf32>
    %92 = arith.maximumf %90, %91 : vector<12x20x16x4xf32>
    %93 = vector.extract_strided_slice %92 {offsets = [0, 0, 0, 0], sizes = [1, 20, 16, 4], strides = [1, 1, 1, 1]} : vector<12x20x16x4xf32> to vector<1x20x16x4xf32>
    %94 = vector.shape_cast %93 : vector<1x20x16x4xf32> to vector<20x16x4xf32>
    %95 = vector.extract_strided_slice %92 {offsets = [1, 0, 0, 0], sizes = [1, 20, 16, 4], strides = [1, 1, 1, 1]} : vector<12x20x16x4xf32> to vector<1x20x16x4xf32>
    %96 = vector.shape_cast %95 : vector<1x20x16x4xf32> to vector<20x16x4xf32>
    %97 = arith.maximumf %94, %96 : vector<20x16x4xf32>
    %98 = vector.extract_strided_slice %92 {offsets = [2, 0, 0, 0], sizes = [1, 20, 16, 4], strides = [1, 1, 1, 1]} : vector<12x20x16x4xf32> to vector<1x20x16x4xf32>
    %99 = vector.shape_cast %98 : vector<1x20x16x4xf32> to vector<20x16x4xf32>
    %100 = vector.extract_strided_slice %92 {offsets = [3, 0, 0, 0], sizes = [1, 20, 16, 4], strides = [1, 1, 1, 1]} : vector<12x20x16x4xf32> to vector<1x20x16x4xf32>
    %101 = vector.shape_cast %100 : vector<1x20x16x4xf32> to vector<20x16x4xf32>
    %102 = vector.extract_strided_slice %92 {offsets = [4, 0, 0, 0], sizes = [1, 20, 16, 4], strides = [1, 1, 1, 1]} : vector<12x20x16x4xf32> to vector<1x20x16x4xf32>
    %103 = vector.shape_cast %102 : vector<1x20x16x4xf32> to vector<20x16x4xf32>
    %104 = arith.maximumf %99, %101 : vector<20x16x4xf32>
    %105 = arith.maximumf %104, %103 : vector<20x16x4xf32>
    %106 = vector.extract_strided_slice %92 {offsets = [5, 0, 0, 0], sizes = [1, 20, 16, 4], strides = [1, 1, 1, 1]} : vector<12x20x16x4xf32> to vector<1x20x16x4xf32>
    %107 = vector.shape_cast %106 : vector<1x20x16x4xf32> to vector<20x16x4xf32>
    %108 = vector.extract_strided_slice %92 {offsets = [6, 0, 0, 0], sizes = [1, 20, 16, 4], strides = [1, 1, 1, 1]} : vector<12x20x16x4xf32> to vector<1x20x16x4xf32>
    %109 = vector.shape_cast %108 : vector<1x20x16x4xf32> to vector<20x16x4xf32>
    %110 = vector.extract_strided_slice %92 {offsets = [7, 0, 0, 0], sizes = [1, 20, 16, 4], strides = [1, 1, 1, 1]} : vector<12x20x16x4xf32> to vector<1x20x16x4xf32>
    %111 = vector.shape_cast %110 : vector<1x20x16x4xf32> to vector<20x16x4xf32>
    %112 = arith.maximumf %107, %109 : vector<20x16x4xf32>
    %113 = arith.maximumf %112, %111 : vector<20x16x4xf32>
    %114 = vector.extract_strided_slice %92 {offsets = [8, 0, 0, 0], sizes = [1, 20, 16, 4], strides = [1, 1, 1, 1]} : vector<12x20x16x4xf32> to vector<1x20x16x4xf32>
    %115 = vector.shape_cast %114 : vector<1x20x16x4xf32> to vector<20x16x4xf32>
    %116 = vector.extract_strided_slice %92 {offsets = [9, 0, 0, 0], sizes = [1, 20, 16, 4], strides = [1, 1, 1, 1]} : vector<12x20x16x4xf32> to vector<1x20x16x4xf32>
    %117 = vector.shape_cast %116 : vector<1x20x16x4xf32> to vector<20x16x4xf32>
    %118 = vector.extract_strided_slice %92 {offsets = [10, 0, 0, 0], sizes = [1, 20, 16, 4], strides = [1, 1, 1, 1]} : vector<12x20x16x4xf32> to vector<1x20x16x4xf32>
    %119 = vector.shape_cast %118 : vector<1x20x16x4xf32> to vector<20x16x4xf32>
    %120 = arith.maximumf %115, %117 : vector<20x16x4xf32>
    %121 = arith.maximumf %120, %119 : vector<20x16x4xf32>
    %122 = vector.extract_strided_slice %97 {offsets = [0, 0, 0], sizes = [1, 16, 4], strides = [1, 1, 1]} : vector<20x16x4xf32> to vector<1x16x4xf32>
    %123 = vector.shape_cast %122 : vector<1x16x4xf32> to vector<16x4xf32>
    %124 = vector.extract_strided_slice %97 {offsets = [1, 0, 0], sizes = [1, 16, 4], strides = [1, 1, 1]} : vector<20x16x4xf32> to vector<1x16x4xf32>
    %125 = vector.shape_cast %124 : vector<1x16x4xf32> to vector<16x4xf32>
    %126 = arith.maximumf %123, %125 : vector<16x4xf32>
    %127 = arith.truncf %126 : vector<16x4xf32> to vector<16x4xbf16>
    %128 = vector.extract_strided_slice %97 {offsets = [2, 0, 0], sizes = [1, 16, 4], strides = [1, 1, 1]} : vector<20x16x4xf32> to vector<1x16x4xf32>
    %129 = vector.shape_cast %128 : vector<1x16x4xf32> to vector<16x4xf32>
    %130 = vector.extract_strided_slice %97 {offsets = [3, 0, 0], sizes = [1, 16, 4], strides = [1, 1, 1]} : vector<20x16x4xf32> to vector<1x16x4xf32>
    %131 = vector.shape_cast %130 : vector<1x16x4xf32> to vector<16x4xf32>
    %132 = vector.extract_strided_slice %97 {offsets = [4, 0, 0], sizes = [1, 16, 4], strides = [1, 1, 1]} : vector<20x16x4xf32> to vector<1x16x4xf32>
    %133 = vector.shape_cast %132 : vector<1x16x4xf32> to vector<16x4xf32>
    %134 = arith.maximumf %129, %131 : vector<16x4xf32>
    %135 = arith.maximumf %134, %133 : vector<16x4xf32>
    %136 = arith.truncf %135 : vector<16x4xf32> to vector<16x4xbf16>
    %137 = vector.extract_strided_slice %97 {offsets = [5, 0, 0], sizes = [1, 16, 4], strides = [1, 1, 1]} : vector<20x16x4xf32> to vector<1x16x4xf32>
    %138 = vector.shape_cast %137 : vector<1x16x4xf32> to vector<16x4xf32>
    %139 = vector.extract_strided_slice %97 {offsets = [6, 0, 0], sizes = [1, 16, 4], strides = [1, 1, 1]} : vector<20x16x4xf32> to vector<1x16x4xf32>
    %140 = vector.shape_cast %139 : vector<1x16x4xf32> to vector<16x4xf32>
    %141 = vector.extract_strided_slice %97 {offsets = [7, 0, 0], sizes = [1, 16, 4], strides = [1, 1, 1]} : vector<20x16x4xf32> to vector<1x16x4xf32>
    %142 = vector.shape_cast %141 : vector<1x16x4xf32> to vector<16x4xf32>
    %143 = arith.maximumf %138, %140 : vector<16x4xf32>
    %144 = arith.maximumf %143, %142 : vector<16x4xf32>
    %145 = arith.truncf %144 : vector<16x4xf32> to vector<16x4xbf16>
    %146 = vector.extract_strided_slice %97 {offsets = [8, 0, 0], sizes = [1, 16, 4], strides = [1, 1, 1]} : vector<20x16x4xf32> to vector<1x16x4xf32>
    %147 = vector.shape_cast %146 : vector<1x16x4xf32> to vector<16x4xf32>
    %148 = vector.extract_strided_slice %97 {offsets = [9, 0, 0], sizes = [1, 16, 4], strides = [1, 1, 1]} : vector<20x16x4xf32> to vector<1x16x4xf32>
    %149 = vector.shape_cast %148 : vector<1x16x4xf32> to vector<16x4xf32>
    %150 = vector.extract_strided_slice %97 {offsets = [10, 0, 0], sizes = [1, 16, 4], strides = [1, 1, 1]} : vector<20x16x4xf32> to vector<1x16x4xf32>
    %151 = vector.shape_cast %150 : vector<1x16x4xf32> to vector<16x4xf32>
    %152 = arith.maximumf %147, %149 : vector<16x4xf32>
    %153 = arith.maximumf %152, %151 : vector<16x4xf32>
    %154 = arith.truncf %153 : vector<16x4xf32> to vector<16x4xbf16>
    %155 = vector.extract_strided_slice %97 {offsets = [11, 0, 0], sizes = [1, 16, 4], strides = [1, 1, 1]} : vector<20x16x4xf32> to vector<1x16x4xf32>
    %156 = vector.shape_cast %155 : vector<1x16x4xf32> to vector<16x4xf32>
    %157 = vector.extract_strided_slice %97 {offsets = [12, 0, 0], sizes = [1, 16, 4], strides = [1, 1, 1]} : vector<20x16x4xf32> to vector<1x16x4xf32>
    %158 = vector.shape_cast %157 : vector<1x16x4xf32> to vector<16x4xf32>
    %159 = vector.extract_strided_slice %97 {offsets = [13, 0, 0], sizes = [1, 16, 4], strides = [1, 1, 1]} : vector<20x16x4xf32> to vector<1x16x4xf32>
    %160 = vector.shape_cast %159 : vector<1x16x4xf32> to vector<16x4xf32>
    %161 = arith.maximumf %156, %158 : vector<16x4xf32>
    %162 = arith.maximumf %161, %160 : vector<16x4xf32>
    %163 = arith.truncf %162 : vector<16x4xf32> to vector<16x4xbf16>
    %164 = vector.extract_strided_slice %97 {offsets = [14, 0, 0], sizes = [1, 16, 4], strides = [1, 1, 1]} : vector<20x16x4xf32> to vector<1x16x4xf32>
    %165 = vector.shape_cast %164 : vector<1x16x4xf32> to vector<16x4xf32>
    %166 = vector.extract_strided_slice %97 {offsets = [15, 0, 0], sizes = [1, 16, 4], strides = [1, 1, 1]} : vector<20x16x4xf32> to vector<1x16x4xf32>
    %167 = vector.shape_cast %166 : vector<1x16x4xf32> to vector<16x4xf32>
    %168 = vector.extract_strided_slice %97 {offsets = [16, 0, 0], sizes = [1, 16, 4], strides = [1, 1, 1]} : vector<20x16x4xf32> to vector<1x16x4xf32>
    %169 = vector.shape_cast %168 : vector<1x16x4xf32> to vector<16x4xf32>
    %170 = arith.maximumf %165, %167 : vector<16x4xf32>
    %171 = arith.maximumf %170, %169 : vector<16x4xf32>
    %172 = arith.truncf %171 : vector<16x4xf32> to vector<16x4xbf16>
    %173 = vector.extract_strided_slice %97 {offsets = [17, 0, 0], sizes = [1, 16, 4], strides = [1, 1, 1]} : vector<20x16x4xf32> to vector<1x16x4xf32>
    %174 = vector.shape_cast %173 : vector<1x16x4xf32> to vector<16x4xf32>
    %175 = vector.extract_strided_slice %97 {offsets = [18, 0, 0], sizes = [1, 16, 4], strides = [1, 1, 1]} : vector<20x16x4xf32> to vector<1x16x4xf32>
    %176 = vector.shape_cast %175 : vector<1x16x4xf32> to vector<16x4xf32>
    %177 = vector.extract_strided_slice %97 {offsets = [19, 0, 0], sizes = [1, 16, 4], strides = [1, 1, 1]} : vector<20x16x4xf32> to vector<1x16x4xf32>
    %178 = vector.shape_cast %177 : vector<1x16x4xf32> to vector<16x4xf32>
    %179 = arith.maximumf %174, %176 : vector<16x4xf32>
    %180 = arith.maximumf %179, %178 : vector<16x4xf32>
    %181 = arith.truncf %180 : vector<16x4xf32> to vector<16x4xbf16>
    %182 = vector.extract_strided_slice %105 {offsets = [0, 0, 0], sizes = [1, 16, 4], strides = [1, 1, 1]} : vector<20x16x4xf32> to vector<1x16x4xf32>
    %183 = vector.shape_cast %182 : vector<1x16x4xf32> to vector<16x4xf32>
    %184 = vector.extract_strided_slice %105 {offsets = [1, 0, 0], sizes = [1, 16, 4], strides = [1, 1, 1]} : vector<20x16x4xf32> to vector<1x16x4xf32>
    %185 = vector.shape_cast %184 : vector<1x16x4xf32> to vector<16x4xf32>
    %186 = arith.maximumf %183, %185 : vector<16x4xf32>
    %187 = arith.truncf %186 : vector<16x4xf32> to vector<16x4xbf16>
    %188 = vector.extract_strided_slice %105 {offsets = [2, 0, 0], sizes = [1, 16, 4], strides = [1, 1, 1]} : vector<20x16x4xf32> to vector<1x16x4xf32>
    %189 = vector.shape_cast %188 : vector<1x16x4xf32> to vector<16x4xf32>
    %190 = vector.extract_strided_slice %105 {offsets = [3, 0, 0], sizes = [1, 16, 4], strides = [1, 1, 1]} : vector<20x16x4xf32> to vector<1x16x4xf32>
    %191 = vector.shape_cast %190 : vector<1x16x4xf32> to vector<16x4xf32>
    %192 = vector.extract_strided_slice %105 {offsets = [4, 0, 0], sizes = [1, 16, 4], strides = [1, 1, 1]} : vector<20x16x4xf32> to vector<1x16x4xf32>
    %193 = vector.shape_cast %192 : vector<1x16x4xf32> to vector<16x4xf32>
    %194 = arith.maximumf %189, %191 : vector<16x4xf32>
    %195 = arith.maximumf %194, %193 : vector<16x4xf32>
    %196 = arith.truncf %195 : vector<16x4xf32> to vector<16x4xbf16>
    %197 = vector.extract_strided_slice %105 {offsets = [5, 0, 0], sizes = [1, 16, 4], strides = [1, 1, 1]} : vector<20x16x4xf32> to vector<1x16x4xf32>
    %198 = vector.shape_cast %197 : vector<1x16x4xf32> to vector<16x4xf32>
    %199 = vector.extract_strided_slice %105 {offsets = [6, 0, 0], sizes = [1, 16, 4], strides = [1, 1, 1]} : vector<20x16x4xf32> to vector<1x16x4xf32>
    %200 = vector.shape_cast %199 : vector<1x16x4xf32> to vector<16x4xf32>
    %201 = vector.extract_strided_slice %105 {offsets = [7, 0, 0], sizes = [1, 16, 4], strides = [1, 1, 1]} : vector<20x16x4xf32> to vector<1x16x4xf32>
    %202 = vector.shape_cast %201 : vector<1x16x4xf32> to vector<16x4xf32>
    %203 = arith.maximumf %198, %200 : vector<16x4xf32>
    %204 = arith.maximumf %203, %202 : vector<16x4xf32>
    %205 = arith.truncf %204 : vector<16x4xf32> to vector<16x4xbf16>
    %206 = vector.extract_strided_slice %105 {offsets = [8, 0, 0], sizes = [1, 16, 4], strides = [1, 1, 1]} : vector<20x16x4xf32> to vector<1x16x4xf32>
    %207 = vector.shape_cast %206 : vector<1x16x4xf32> to vector<16x4xf32>
    %208 = vector.extract_strided_slice %105 {offsets = [9, 0, 0], sizes = [1, 16, 4], strides = [1, 1, 1]} : vector<20x16x4xf32> to vector<1x16x4xf32>
    %209 = vector.shape_cast %208 : vector<1x16x4xf32> to vector<16x4xf32>
    %210 = vector.extract_strided_slice %105 {offsets = [10, 0, 0], sizes = [1, 16, 4], strides = [1, 1, 1]} : vector<20x16x4xf32> to vector<1x16x4xf32>
    %211 = vector.shape_cast %210 : vector<1x16x4xf32> to vector<16x4xf32>
    %212 = arith.maximumf %207, %209 : vector<16x4xf32>
    %213 = arith.maximumf %212, %211 : vector<16x4xf32>
    %214 = arith.truncf %213 : vector<16x4xf32> to vector<16x4xbf16>
    %215 = vector.extract_strided_slice %105 {offsets = [11, 0, 0], sizes = [1, 16, 4], strides = [1, 1, 1]} : vector<20x16x4xf32> to vector<1x16x4xf32>
    %216 = vector.shape_cast %215 : vector<1x16x4xf32> to vector<16x4xf32>
    %217 = vector.extract_strided_slice %105 {offsets = [12, 0, 0], sizes = [1, 16, 4], strides = [1, 1, 1]} : vector<20x16x4xf32> to vector<1x16x4xf32>
    %218 = vector.shape_cast %217 : vector<1x16x4xf32> to vector<16x4xf32>
    %219 = vector.extract_strided_slice %105 {offsets = [13, 0, 0], sizes = [1, 16, 4], strides = [1, 1, 1]} : vector<20x16x4xf32> to vector<1x16x4xf32>
    %220 = vector.shape_cast %219 : vector<1x16x4xf32> to vector<16x4xf32>
    %221 = arith.maximumf %216, %218 : vector<16x4xf32>
    %222 = arith.maximumf %221, %220 : vector<16x4xf32>
    %223 = arith.truncf %222 : vector<16x4xf32> to vector<16x4xbf16>
    %224 = vector.extract_strided_slice %105 {offsets = [14, 0, 0], sizes = [1, 16, 4], strides = [1, 1, 1]} : vector<20x16x4xf32> to vector<1x16x4xf32>
    %225 = vector.shape_cast %224 : vector<1x16x4xf32> to vector<16x4xf32>
    %226 = vector.extract_strided_slice %105 {offsets = [15, 0, 0], sizes = [1, 16, 4], strides = [1, 1, 1]} : vector<20x16x4xf32> to vector<1x16x4xf32>
    %227 = vector.shape_cast %226 : vector<1x16x4xf32> to vector<16x4xf32>
    %228 = vector.extract_strided_slice %105 {offsets = [16, 0, 0], sizes = [1, 16, 4], strides = [1, 1, 1]} : vector<20x16x4xf32> to vector<1x16x4xf32>
    %229 = vector.shape_cast %228 : vector<1x16x4xf32> to vector<16x4xf32>
    %230 = arith.maximumf %225, %227 : vector<16x4xf32>
    %231 = arith.maximumf %230, %229 : vector<16x4xf32>
    %232 = arith.truncf %231 : vector<16x4xf32> to vector<16x4xbf16>
    %233 = vector.extract_strided_slice %105 {offsets = [17, 0, 0], sizes = [1, 16, 4], strides = [1, 1, 1]} : vector<20x16x4xf32> to vector<1x16x4xf32>
    %234 = vector.shape_cast %233 : vector<1x16x4xf32> to vector<16x4xf32>
    %235 = vector.extract_strided_slice %105 {offsets = [18, 0, 0], sizes = [1, 16, 4], strides = [1, 1, 1]} : vector<20x16x4xf32> to vector<1x16x4xf32>
    %236 = vector.shape_cast %235 : vector<1x16x4xf32> to vector<16x4xf32>
    %237 = vector.extract_strided_slice %105 {offsets = [19, 0, 0], sizes = [1, 16, 4], strides = [1, 1, 1]} : vector<20x16x4xf32> to vector<1x16x4xf32>
    %238 = vector.shape_cast %237 : vector<1x16x4xf32> to vector<16x4xf32>
    %239 = arith.maximumf %234, %236 : vector<16x4xf32>
    %240 = arith.maximumf %239, %238 : vector<16x4xf32>
    %241 = arith.truncf %240 : vector<16x4xf32> to vector<16x4xbf16>
    %242 = vector.extract_strided_slice %113 {offsets = [0, 0, 0], sizes = [1, 16, 4], strides = [1, 1, 1]} : vector<20x16x4xf32> to vector<1x16x4xf32>
    %243 = vector.shape_cast %242 : vector<1x16x4xf32> to vector<16x4xf32>
    %244 = vector.extract_strided_slice %113 {offsets = [1, 0, 0], sizes = [1, 16, 4], strides = [1, 1, 1]} : vector<20x16x4xf32> to vector<1x16x4xf32>
    %245 = vector.shape_cast %244 : vector<1x16x4xf32> to vector<16x4xf32>
    %246 = arith.maximumf %243, %245 : vector<16x4xf32>
    %247 = arith.truncf %246 : vector<16x4xf32> to vector<16x4xbf16>
    %248 = vector.extract_strided_slice %113 {offsets = [2, 0, 0], sizes = [1, 16, 4], strides = [1, 1, 1]} : vector<20x16x4xf32> to vector<1x16x4xf32>
    %249 = vector.shape_cast %248 : vector<1x16x4xf32> to vector<16x4xf32>
    %250 = vector.extract_strided_slice %113 {offsets = [3, 0, 0], sizes = [1, 16, 4], strides = [1, 1, 1]} : vector<20x16x4xf32> to vector<1x16x4xf32>
    %251 = vector.shape_cast %250 : vector<1x16x4xf32> to vector<16x4xf32>
    %252 = vector.extract_strided_slice %113 {offsets = [4, 0, 0], sizes = [1, 16, 4], strides = [1, 1, 1]} : vector<20x16x4xf32> to vector<1x16x4xf32>
    %253 = vector.shape_cast %252 : vector<1x16x4xf32> to vector<16x4xf32>
    %254 = arith.maximumf %249, %251 : vector<16x4xf32>
    %255 = arith.maximumf %254, %253 : vector<16x4xf32>
    %256 = arith.truncf %255 : vector<16x4xf32> to vector<16x4xbf16>
    %257 = vector.extract_strided_slice %113 {offsets = [5, 0, 0], sizes = [1, 16, 4], strides = [1, 1, 1]} : vector<20x16x4xf32> to vector<1x16x4xf32>
    %258 = vector.shape_cast %257 : vector<1x16x4xf32> to vector<16x4xf32>
    %259 = vector.extract_strided_slice %113 {offsets = [6, 0, 0], sizes = [1, 16, 4], strides = [1, 1, 1]} : vector<20x16x4xf32> to vector<1x16x4xf32>
    %260 = vector.shape_cast %259 : vector<1x16x4xf32> to vector<16x4xf32>
    %261 = vector.extract_strided_slice %113 {offsets = [7, 0, 0], sizes = [1, 16, 4], strides = [1, 1, 1]} : vector<20x16x4xf32> to vector<1x16x4xf32>
    %262 = vector.shape_cast %261 : vector<1x16x4xf32> to vector<16x4xf32>
    %263 = arith.maximumf %258, %260 : vector<16x4xf32>
    %264 = arith.maximumf %263, %262 : vector<16x4xf32>
    %265 = arith.truncf %264 : vector<16x4xf32> to vector<16x4xbf16>
    %266 = vector.extract_strided_slice %113 {offsets = [8, 0, 0], sizes = [1, 16, 4], strides = [1, 1, 1]} : vector<20x16x4xf32> to vector<1x16x4xf32>
    %267 = vector.shape_cast %266 : vector<1x16x4xf32> to vector<16x4xf32>
    %268 = vector.extract_strided_slice %113 {offsets = [9, 0, 0], sizes = [1, 16, 4], strides = [1, 1, 1]} : vector<20x16x4xf32> to vector<1x16x4xf32>
    %269 = vector.shape_cast %268 : vector<1x16x4xf32> to vector<16x4xf32>
    %270 = vector.extract_strided_slice %113 {offsets = [10, 0, 0], sizes = [1, 16, 4], strides = [1, 1, 1]} : vector<20x16x4xf32> to vector<1x16x4xf32>
    %271 = vector.shape_cast %270 : vector<1x16x4xf32> to vector<16x4xf32>
    %272 = arith.maximumf %267, %269 : vector<16x4xf32>
    %273 = arith.maximumf %272, %271 : vector<16x4xf32>
    %274 = arith.truncf %273 : vector<16x4xf32> to vector<16x4xbf16>
    %275 = vector.extract_strided_slice %113 {offsets = [11, 0, 0], sizes = [1, 16, 4], strides = [1, 1, 1]} : vector<20x16x4xf32> to vector<1x16x4xf32>
    %276 = vector.shape_cast %275 : vector<1x16x4xf32> to vector<16x4xf32>
    %277 = vector.extract_strided_slice %113 {offsets = [12, 0, 0], sizes = [1, 16, 4], strides = [1, 1, 1]} : vector<20x16x4xf32> to vector<1x16x4xf32>
    %278 = vector.shape_cast %277 : vector<1x16x4xf32> to vector<16x4xf32>
    %279 = vector.extract_strided_slice %113 {offsets = [13, 0, 0], sizes = [1, 16, 4], strides = [1, 1, 1]} : vector<20x16x4xf32> to vector<1x16x4xf32>
    %280 = vector.shape_cast %279 : vector<1x16x4xf32> to vector<16x4xf32>
    %281 = arith.maximumf %276, %278 : vector<16x4xf32>
    %282 = arith.maximumf %281, %280 : vector<16x4xf32>
    %283 = arith.truncf %282 : vector<16x4xf32> to vector<16x4xbf16>
    %284 = vector.extract_strided_slice %113 {offsets = [14, 0, 0], sizes = [1, 16, 4], strides = [1, 1, 1]} : vector<20x16x4xf32> to vector<1x16x4xf32>
    %285 = vector.shape_cast %284 : vector<1x16x4xf32> to vector<16x4xf32>
    %286 = vector.extract_strided_slice %113 {offsets = [15, 0, 0], sizes = [1, 16, 4], strides = [1, 1, 1]} : vector<20x16x4xf32> to vector<1x16x4xf32>
    %287 = vector.shape_cast %286 : vector<1x16x4xf32> to vector<16x4xf32>
    %288 = vector.extract_strided_slice %113 {offsets = [16, 0, 0], sizes = [1, 16, 4], strides = [1, 1, 1]} : vector<20x16x4xf32> to vector<1x16x4xf32>
    %289 = vector.shape_cast %288 : vector<1x16x4xf32> to vector<16x4xf32>
    %290 = arith.maximumf %285, %287 : vector<16x4xf32>
    %291 = arith.maximumf %290, %289 : vector<16x4xf32>
    %292 = arith.truncf %291 : vector<16x4xf32> to vector<16x4xbf16>
    %293 = vector.extract_strided_slice %113 {offsets = [17, 0, 0], sizes = [1, 16, 4], strides = [1, 1, 1]} : vector<20x16x4xf32> to vector<1x16x4xf32>
    %294 = vector.shape_cast %293 : vector<1x16x4xf32> to vector<16x4xf32>
    %295 = vector.extract_strided_slice %113 {offsets = [18, 0, 0], sizes = [1, 16, 4], strides = [1, 1, 1]} : vector<20x16x4xf32> to vector<1x16x4xf32>
    %296 = vector.shape_cast %295 : vector<1x16x4xf32> to vector<16x4xf32>
    %297 = vector.extract_strided_slice %113 {offsets = [19, 0, 0], sizes = [1, 16, 4], strides = [1, 1, 1]} : vector<20x16x4xf32> to vector<1x16x4xf32>
    %298 = vector.shape_cast %297 : vector<1x16x4xf32> to vector<16x4xf32>
    %299 = arith.maximumf %294, %296 : vector<16x4xf32>
    %300 = arith.maximumf %299, %298 : vector<16x4xf32>
    %301 = arith.truncf %300 : vector<16x4xf32> to vector<16x4xbf16>
    %302 = vector.extract_strided_slice %121 {offsets = [0, 0, 0], sizes = [1, 16, 4], strides = [1, 1, 1]} : vector<20x16x4xf32> to vector<1x16x4xf32>
    %303 = vector.shape_cast %302 : vector<1x16x4xf32> to vector<16x4xf32>
    %304 = vector.extract_strided_slice %121 {offsets = [1, 0, 0], sizes = [1, 16, 4], strides = [1, 1, 1]} : vector<20x16x4xf32> to vector<1x16x4xf32>
    %305 = vector.shape_cast %304 : vector<1x16x4xf32> to vector<16x4xf32>
    %306 = arith.maximumf %303, %305 : vector<16x4xf32>
    %307 = arith.truncf %306 : vector<16x4xf32> to vector<16x4xbf16>
    %308 = vector.extract_strided_slice %121 {offsets = [2, 0, 0], sizes = [1, 16, 4], strides = [1, 1, 1]} : vector<20x16x4xf32> to vector<1x16x4xf32>
    %309 = vector.shape_cast %308 : vector<1x16x4xf32> to vector<16x4xf32>
    %310 = vector.extract_strided_slice %121 {offsets = [3, 0, 0], sizes = [1, 16, 4], strides = [1, 1, 1]} : vector<20x16x4xf32> to vector<1x16x4xf32>
    %311 = vector.shape_cast %310 : vector<1x16x4xf32> to vector<16x4xf32>
    %312 = vector.extract_strided_slice %121 {offsets = [4, 0, 0], sizes = [1, 16, 4], strides = [1, 1, 1]} : vector<20x16x4xf32> to vector<1x16x4xf32>
    %313 = vector.shape_cast %312 : vector<1x16x4xf32> to vector<16x4xf32>
    %314 = arith.maximumf %309, %311 : vector<16x4xf32>
    %315 = arith.maximumf %314, %313 : vector<16x4xf32>
    %316 = arith.truncf %315 : vector<16x4xf32> to vector<16x4xbf16>
    %317 = vector.extract_strided_slice %121 {offsets = [5, 0, 0], sizes = [1, 16, 4], strides = [1, 1, 1]} : vector<20x16x4xf32> to vector<1x16x4xf32>
    %318 = vector.shape_cast %317 : vector<1x16x4xf32> to vector<16x4xf32>
    %319 = vector.extract_strided_slice %121 {offsets = [6, 0, 0], sizes = [1, 16, 4], strides = [1, 1, 1]} : vector<20x16x4xf32> to vector<1x16x4xf32>
    %320 = vector.shape_cast %319 : vector<1x16x4xf32> to vector<16x4xf32>
    %321 = vector.extract_strided_slice %121 {offsets = [7, 0, 0], sizes = [1, 16, 4], strides = [1, 1, 1]} : vector<20x16x4xf32> to vector<1x16x4xf32>
    %322 = vector.shape_cast %321 : vector<1x16x4xf32> to vector<16x4xf32>
    %323 = arith.maximumf %318, %320 : vector<16x4xf32>
    %324 = arith.maximumf %323, %322 : vector<16x4xf32>
    %325 = arith.truncf %324 : vector<16x4xf32> to vector<16x4xbf16>
    %326 = vector.extract_strided_slice %121 {offsets = [8, 0, 0], sizes = [1, 16, 4], strides = [1, 1, 1]} : vector<20x16x4xf32> to vector<1x16x4xf32>
    %327 = vector.shape_cast %326 : vector<1x16x4xf32> to vector<16x4xf32>
    %328 = vector.extract_strided_slice %121 {offsets = [9, 0, 0], sizes = [1, 16, 4], strides = [1, 1, 1]} : vector<20x16x4xf32> to vector<1x16x4xf32>
    %329 = vector.shape_cast %328 : vector<1x16x4xf32> to vector<16x4xf32>
    %330 = vector.extract_strided_slice %121 {offsets = [10, 0, 0], sizes = [1, 16, 4], strides = [1, 1, 1]} : vector<20x16x4xf32> to vector<1x16x4xf32>
    %331 = vector.shape_cast %330 : vector<1x16x4xf32> to vector<16x4xf32>
    %332 = arith.maximumf %327, %329 : vector<16x4xf32>
    %333 = arith.maximumf %332, %331 : vector<16x4xf32>
    %334 = arith.truncf %333 : vector<16x4xf32> to vector<16x4xbf16>
    %335 = vector.extract_strided_slice %121 {offsets = [11, 0, 0], sizes = [1, 16, 4], strides = [1, 1, 1]} : vector<20x16x4xf32> to vector<1x16x4xf32>
    %336 = vector.shape_cast %335 : vector<1x16x4xf32> to vector<16x4xf32>
    %337 = vector.extract_strided_slice %121 {offsets = [12, 0, 0], sizes = [1, 16, 4], strides = [1, 1, 1]} : vector<20x16x4xf32> to vector<1x16x4xf32>
    %338 = vector.shape_cast %337 : vector<1x16x4xf32> to vector<16x4xf32>
    %339 = vector.extract_strided_slice %121 {offsets = [13, 0, 0], sizes = [1, 16, 4], strides = [1, 1, 1]} : vector<20x16x4xf32> to vector<1x16x4xf32>
    %340 = vector.shape_cast %339 : vector<1x16x4xf32> to vector<16x4xf32>
    %341 = arith.maximumf %336, %338 : vector<16x4xf32>
    %342 = arith.maximumf %341, %340 : vector<16x4xf32>
    %343 = arith.truncf %342 : vector<16x4xf32> to vector<16x4xbf16>
    %344 = vector.extract_strided_slice %121 {offsets = [14, 0, 0], sizes = [1, 16, 4], strides = [1, 1, 1]} : vector<20x16x4xf32> to vector<1x16x4xf32>
    %345 = vector.shape_cast %344 : vector<1x16x4xf32> to vector<16x4xf32>
    %346 = vector.extract_strided_slice %121 {offsets = [15, 0, 0], sizes = [1, 16, 4], strides = [1, 1, 1]} : vector<20x16x4xf32> to vector<1x16x4xf32>
    %347 = vector.shape_cast %346 : vector<1x16x4xf32> to vector<16x4xf32>
    %348 = vector.extract_strided_slice %121 {offsets = [16, 0, 0], sizes = [1, 16, 4], strides = [1, 1, 1]} : vector<20x16x4xf32> to vector<1x16x4xf32>
    %349 = vector.shape_cast %348 : vector<1x16x4xf32> to vector<16x4xf32>
    %350 = arith.maximumf %345, %347 : vector<16x4xf32>
    %351 = arith.maximumf %350, %349 : vector<16x4xf32>
    %352 = arith.truncf %351 : vector<16x4xf32> to vector<16x4xbf16>
    %353 = vector.extract_strided_slice %121 {offsets = [17, 0, 0], sizes = [1, 16, 4], strides = [1, 1, 1]} : vector<20x16x4xf32> to vector<1x16x4xf32>
    %354 = vector.shape_cast %353 : vector<1x16x4xf32> to vector<16x4xf32>
    %355 = vector.extract_strided_slice %121 {offsets = [18, 0, 0], sizes = [1, 16, 4], strides = [1, 1, 1]} : vector<20x16x4xf32> to vector<1x16x4xf32>
    %356 = vector.shape_cast %355 : vector<1x16x4xf32> to vector<16x4xf32>
    %357 = vector.extract_strided_slice %121 {offsets = [19, 0, 0], sizes = [1, 16, 4], strides = [1, 1, 1]} : vector<20x16x4xf32> to vector<1x16x4xf32>
    %358 = vector.shape_cast %357 : vector<1x16x4xf32> to vector<16x4xf32>
    %359 = arith.maximumf %354, %356 : vector<16x4xf32>
    %360 = arith.maximumf %359, %358 : vector<16x4xf32>
    %361 = arith.truncf %360 : vector<16x4xf32> to vector<16x4xbf16>
    %c0_9 = arith.constant 0 : index
    %c0_10 = arith.constant 0 : index
    %362 = vector.load %arg4[%c0_9, %c0_10] : memref<16x144xbf16, #tpu.memory_space<vmem>>, vector<16x144xbf16>
    %c0_11 = arith.constant 0 : index
    %c0_12 = arith.constant 0 : index
    %363 = vector.load %arg5[%c0_11, %c0_12] : memref<16x1xf32, #tpu.memory_space<vmem>>, vector<16x1xf32>
    %cst_13 = arith.constant 0.000000e+00 : bf16
    %364 = vector.broadcast %cst_13 : bf16 to vector<16x4xbf16>
    %365 = tpu.concatenate %364, %364, %364, %364, %127, %136, %364, %187, %196 in 0 : vector<16x4xbf16>, vector<16x4xbf16>, vector<16x4xbf16>, vector<16x4xbf16>, vector<16x4xbf16>, vector<16x4xbf16>, vector<16x4xbf16>, vector<16x4xbf16>, vector<16x4xbf16> -> vector<144x4xbf16>
    %cst_14 = arith.constant dense<0.000000e+00> : vector<16x4xf32>
    %366 = tpu.matmul %362, %365, %cst_14 {dimension_numbers = #tpu.dot_dimension_numbers<[1], [0], [0], [1], [0, 0, 1, 1], [], []>} : vector<16x144xbf16>, vector<144x4xbf16>, vector<16x4xf32> -> vector<16x4xf32>
    %367 = vector.broadcast %363 : vector<16x1xf32> to vector<16x4xf32>
    %368 = arith.addf %366, %367 : vector<16x4xf32>
    %cst_15 = arith.constant 0.000000e+00 : f32
    %369 = vector.broadcast %cst_15 : f32 to vector<16x4xf32>
    %370 = arith.maximumf %368, %369 : vector<16x4xf32>
    %371 = tpu.concatenate %364, %364, %364, %127, %136, %145, %187, %196, %205 in 0 : vector<16x4xbf16>, vector<16x4xbf16>, vector<16x4xbf16>, vector<16x4xbf16>, vector<16x4xbf16>, vector<16x4xbf16>, vector<16x4xbf16>, vector<16x4xbf16>, vector<16x4xbf16> -> vector<144x4xbf16>
    %cst_16 = arith.constant dense<0.000000e+00> : vector<16x4xf32>
    %372 = tpu.matmul %362, %371, %cst_16 {dimension_numbers = #tpu.dot_dimension_numbers<[1], [0], [0], [1], [0, 0, 1, 1], [], []>} : vector<16x144xbf16>, vector<144x4xbf16>, vector<16x4xf32> -> vector<16x4xf32>
    %373 = vector.broadcast %363 : vector<16x1xf32> to vector<16x4xf32>
    %374 = arith.addf %372, %373 : vector<16x4xf32>
    %cst_17 = arith.constant 0.000000e+00 : f32
    %375 = vector.broadcast %cst_17 : f32 to vector<16x4xf32>
    %376 = arith.maximumf %374, %375 : vector<16x4xf32>
    %377 = tpu.concatenate %364, %364, %364, %136, %145, %154, %196, %205, %214 in 0 : vector<16x4xbf16>, vector<16x4xbf16>, vector<16x4xbf16>, vector<16x4xbf16>, vector<16x4xbf16>, vector<16x4xbf16>, vector<16x4xbf16>, vector<16x4xbf16>, vector<16x4xbf16> -> vector<144x4xbf16>
    %cst_18 = arith.constant dense<0.000000e+00> : vector<16x4xf32>
    %378 = tpu.matmul %362, %377, %cst_18 {dimension_numbers = #tpu.dot_dimension_numbers<[1], [0], [0], [1], [0, 0, 1, 1], [], []>} : vector<16x144xbf16>, vector<144x4xbf16>, vector<16x4xf32> -> vector<16x4xf32>
    %379 = vector.broadcast %363 : vector<16x1xf32> to vector<16x4xf32>
    %380 = arith.addf %378, %379 : vector<16x4xf32>
    %cst_19 = arith.constant 0.000000e+00 : f32
    %381 = vector.broadcast %cst_19 : f32 to vector<16x4xf32>
    %382 = arith.maximumf %380, %381 : vector<16x4xf32>
    %383 = tpu.concatenate %364, %364, %364, %145, %154, %163, %205, %214, %223 in 0 : vector<16x4xbf16>, vector<16x4xbf16>, vector<16x4xbf16>, vector<16x4xbf16>, vector<16x4xbf16>, vector<16x4xbf16>, vector<16x4xbf16>, vector<16x4xbf16>, vector<16x4xbf16> -> vector<144x4xbf16>
    %cst_20 = arith.constant dense<0.000000e+00> : vector<16x4xf32>
    %384 = tpu.matmul %362, %383, %cst_20 {dimension_numbers = #tpu.dot_dimension_numbers<[1], [0], [0], [1], [0, 0, 1, 1], [], []>} : vector<16x144xbf16>, vector<144x4xbf16>, vector<16x4xf32> -> vector<16x4xf32>
    %385 = vector.broadcast %363 : vector<16x1xf32> to vector<16x4xf32>
    %386 = arith.addf %384, %385 : vector<16x4xf32>
    %cst_21 = arith.constant 0.000000e+00 : f32
    %387 = vector.broadcast %cst_21 : f32 to vector<16x4xf32>
    %388 = arith.maximumf %386, %387 : vector<16x4xf32>
    %389 = tpu.concatenate %364, %364, %364, %154, %163, %172, %214, %223, %232 in 0 : vector<16x4xbf16>, vector<16x4xbf16>, vector<16x4xbf16>, vector<16x4xbf16>, vector<16x4xbf16>, vector<16x4xbf16>, vector<16x4xbf16>, vector<16x4xbf16>, vector<16x4xbf16> -> vector<144x4xbf16>
    %cst_22 = arith.constant dense<0.000000e+00> : vector<16x4xf32>
    %390 = tpu.matmul %362, %389, %cst_22 {dimension_numbers = #tpu.dot_dimension_numbers<[1], [0], [0], [1], [0, 0, 1, 1], [], []>} : vector<16x144xbf16>, vector<144x4xbf16>, vector<16x4xf32> -> vector<16x4xf32>
    %391 = vector.broadcast %363 : vector<16x1xf32> to vector<16x4xf32>
    %392 = arith.addf %390, %391 : vector<16x4xf32>
    %cst_23 = arith.constant 0.000000e+00 : f32
    %393 = vector.broadcast %cst_23 : f32 to vector<16x4xf32>
    %394 = arith.maximumf %392, %393 : vector<16x4xf32>
    %395 = tpu.concatenate %364, %364, %364, %163, %172, %181, %223, %232, %241 in 0 : vector<16x4xbf16>, vector<16x4xbf16>, vector<16x4xbf16>, vector<16x4xbf16>, vector<16x4xbf16>, vector<16x4xbf16>, vector<16x4xbf16>, vector<16x4xbf16>, vector<16x4xbf16> -> vector<144x4xbf16>
    %cst_24 = arith.constant dense<0.000000e+00> : vector<16x4xf32>
    %396 = tpu.matmul %362, %395, %cst_24 {dimension_numbers = #tpu.dot_dimension_numbers<[1], [0], [0], [1], [0, 0, 1, 1], [], []>} : vector<16x144xbf16>, vector<144x4xbf16>, vector<16x4xf32> -> vector<16x4xf32>
    %397 = vector.broadcast %363 : vector<16x1xf32> to vector<16x4xf32>
    %398 = arith.addf %396, %397 : vector<16x4xf32>
    %cst_25 = arith.constant 0.000000e+00 : f32
    %399 = vector.broadcast %cst_25 : f32 to vector<16x4xf32>
    %400 = arith.maximumf %398, %399 : vector<16x4xf32>
    %401 = tpu.concatenate %364, %364, %364, %172, %181, %364, %232, %241, %364 in 0 : vector<16x4xbf16>, vector<16x4xbf16>, vector<16x4xbf16>, vector<16x4xbf16>, vector<16x4xbf16>, vector<16x4xbf16>, vector<16x4xbf16>, vector<16x4xbf16>, vector<16x4xbf16> -> vector<144x4xbf16>
    %cst_26 = arith.constant dense<0.000000e+00> : vector<16x4xf32>
    %402 = tpu.matmul %362, %401, %cst_26 {dimension_numbers = #tpu.dot_dimension_numbers<[1], [0], [0], [1], [0, 0, 1, 1], [], []>} : vector<16x144xbf16>, vector<144x4xbf16>, vector<16x4xf32> -> vector<16x4xf32>
    %403 = vector.broadcast %363 : vector<16x1xf32> to vector<16x4xf32>
    %404 = arith.addf %402, %403 : vector<16x4xf32>
    %cst_27 = arith.constant 0.000000e+00 : f32
    %405 = vector.broadcast %cst_27 : f32 to vector<16x4xf32>
    %406 = arith.maximumf %404, %405 : vector<16x4xf32>
    %407 = tpu.concatenate %364, %127, %136, %364, %187, %196, %364, %247, %256 in 0 : vector<16x4xbf16>, vector<16x4xbf16>, vector<16x4xbf16>, vector<16x4xbf16>, vector<16x4xbf16>, vector<16x4xbf16>, vector<16x4xbf16>, vector<16x4xbf16>, vector<16x4xbf16> -> vector<144x4xbf16>
    %cst_28 = arith.constant dense<0.000000e+00> : vector<16x4xf32>
    %408 = tpu.matmul %362, %407, %cst_28 {dimension_numbers = #tpu.dot_dimension_numbers<[1], [0], [0], [1], [0, 0, 1, 1], [], []>} : vector<16x144xbf16>, vector<144x4xbf16>, vector<16x4xf32> -> vector<16x4xf32>
    %409 = vector.broadcast %363 : vector<16x1xf32> to vector<16x4xf32>
    %410 = arith.addf %408, %409 : vector<16x4xf32>
    %cst_29 = arith.constant 0.000000e+00 : f32
    %411 = vector.broadcast %cst_29 : f32 to vector<16x4xf32>
    %412 = arith.maximumf %410, %411 : vector<16x4xf32>
    %413 = tpu.concatenate %127, %136, %145, %187, %196, %205, %247, %256, %265 in 0 : vector<16x4xbf16>, vector<16x4xbf16>, vector<16x4xbf16>, vector<16x4xbf16>, vector<16x4xbf16>, vector<16x4xbf16>, vector<16x4xbf16>, vector<16x4xbf16>, vector<16x4xbf16> -> vector<144x4xbf16>
    %cst_30 = arith.constant dense<0.000000e+00> : vector<16x4xf32>
    %414 = tpu.matmul %362, %413, %cst_30 {dimension_numbers = #tpu.dot_dimension_numbers<[1], [0], [0], [1], [0, 0, 1, 1], [], []>} : vector<16x144xbf16>, vector<144x4xbf16>, vector<16x4xf32> -> vector<16x4xf32>
    %415 = vector.broadcast %363 : vector<16x1xf32> to vector<16x4xf32>
    %416 = arith.addf %414, %415 : vector<16x4xf32>
    %cst_31 = arith.constant 0.000000e+00 : f32
    %417 = vector.broadcast %cst_31 : f32 to vector<16x4xf32>
    %418 = arith.maximumf %416, %417 : vector<16x4xf32>
    %419 = tpu.concatenate %136, %145, %154, %196, %205, %214, %256, %265, %274 in 0 : vector<16x4xbf16>, vector<16x4xbf16>, vector<16x4xbf16>, vector<16x4xbf16>, vector<16x4xbf16>, vector<16x4xbf16>, vector<16x4xbf16>, vector<16x4xbf16>, vector<16x4xbf16> -> vector<144x4xbf16>
    %cst_32 = arith.constant dense<0.000000e+00> : vector<16x4xf32>
    %420 = tpu.matmul %362, %419, %cst_32 {dimension_numbers = #tpu.dot_dimension_numbers<[1], [0], [0], [1], [0, 0, 1, 1], [], []>} : vector<16x144xbf16>, vector<144x4xbf16>, vector<16x4xf32> -> vector<16x4xf32>
    %421 = vector.broadcast %363 : vector<16x1xf32> to vector<16x4xf32>
    %422 = arith.addf %420, %421 : vector<16x4xf32>
    %cst_33 = arith.constant 0.000000e+00 : f32
    %423 = vector.broadcast %cst_33 : f32 to vector<16x4xf32>
    %424 = arith.maximumf %422, %423 : vector<16x4xf32>
    %425 = tpu.concatenate %145, %154, %163, %205, %214, %223, %265, %274, %283 in 0 : vector<16x4xbf16>, vector<16x4xbf16>, vector<16x4xbf16>, vector<16x4xbf16>, vector<16x4xbf16>, vector<16x4xbf16>, vector<16x4xbf16>, vector<16x4xbf16>, vector<16x4xbf16> -> vector<144x4xbf16>
    %cst_34 = arith.constant dense<0.000000e+00> : vector<16x4xf32>
    %426 = tpu.matmul %362, %425, %cst_34 {dimension_numbers = #tpu.dot_dimension_numbers<[1], [0], [0], [1], [0, 0, 1, 1], [], []>} : vector<16x144xbf16>, vector<144x4xbf16>, vector<16x4xf32> -> vector<16x4xf32>
    %427 = vector.broadcast %363 : vector<16x1xf32> to vector<16x4xf32>
    %428 = arith.addf %426, %427 : vector<16x4xf32>
    %cst_35 = arith.constant 0.000000e+00 : f32
    %429 = vector.broadcast %cst_35 : f32 to vector<16x4xf32>
    %430 = arith.maximumf %428, %429 : vector<16x4xf32>
    %431 = tpu.concatenate %154, %163, %172, %214, %223, %232, %274, %283, %292 in 0 : vector<16x4xbf16>, vector<16x4xbf16>, vector<16x4xbf16>, vector<16x4xbf16>, vector<16x4xbf16>, vector<16x4xbf16>, vector<16x4xbf16>, vector<16x4xbf16>, vector<16x4xbf16> -> vector<144x4xbf16>
    %cst_36 = arith.constant dense<0.000000e+00> : vector<16x4xf32>
    %432 = tpu.matmul %362, %431, %cst_36 {dimension_numbers = #tpu.dot_dimension_numbers<[1], [0], [0], [1], [0, 0, 1, 1], [], []>} : vector<16x144xbf16>, vector<144x4xbf16>, vector<16x4xf32> -> vector<16x4xf32>
    %433 = vector.broadcast %363 : vector<16x1xf32> to vector<16x4xf32>
    %434 = arith.addf %432, %433 : vector<16x4xf32>
    %cst_37 = arith.constant 0.000000e+00 : f32
    %435 = vector.broadcast %cst_37 : f32 to vector<16x4xf32>
    %436 = arith.maximumf %434, %435 : vector<16x4xf32>
    %437 = tpu.concatenate %163, %172, %181, %223, %232, %241, %283, %292, %301 in 0 : vector<16x4xbf16>, vector<16x4xbf16>, vector<16x4xbf16>, vector<16x4xbf16>, vector<16x4xbf16>, vector<16x4xbf16>, vector<16x4xbf16>, vector<16x4xbf16>, vector<16x4xbf16> -> vector<144x4xbf16>
    %cst_38 = arith.constant dense<0.000000e+00> : vector<16x4xf32>
    %438 = tpu.matmul %362, %437, %cst_38 {dimension_numbers = #tpu.dot_dimension_numbers<[1], [0], [0], [1], [0, 0, 1, 1], [], []>} : vector<16x144xbf16>, vector<144x4xbf16>, vector<16x4xf32> -> vector<16x4xf32>
    %439 = vector.broadcast %363 : vector<16x1xf32> to vector<16x4xf32>
    %440 = arith.addf %438, %439 : vector<16x4xf32>
    %cst_39 = arith.constant 0.000000e+00 : f32
    %441 = vector.broadcast %cst_39 : f32 to vector<16x4xf32>
    %442 = arith.maximumf %440, %441 : vector<16x4xf32>
    %443 = tpu.concatenate %172, %181, %364, %232, %241, %364, %292, %301, %364 in 0 : vector<16x4xbf16>, vector<16x4xbf16>, vector<16x4xbf16>, vector<16x4xbf16>, vector<16x4xbf16>, vector<16x4xbf16>, vector<16x4xbf16>, vector<16x4xbf16>, vector<16x4xbf16> -> vector<144x4xbf16>
    %cst_40 = arith.constant dense<0.000000e+00> : vector<16x4xf32>
    %444 = tpu.matmul %362, %443, %cst_40 {dimension_numbers = #tpu.dot_dimension_numbers<[1], [0], [0], [1], [0, 0, 1, 1], [], []>} : vector<16x144xbf16>, vector<144x4xbf16>, vector<16x4xf32> -> vector<16x4xf32>
    %445 = vector.broadcast %363 : vector<16x1xf32> to vector<16x4xf32>
    %446 = arith.addf %444, %445 : vector<16x4xf32>
    %cst_41 = arith.constant 0.000000e+00 : f32
    %447 = vector.broadcast %cst_41 : f32 to vector<16x4xf32>
    %448 = arith.maximumf %446, %447 : vector<16x4xf32>
    %449 = tpu.concatenate %364, %187, %196, %364, %247, %256, %364, %307, %316 in 0 : vector<16x4xbf16>, vector<16x4xbf16>, vector<16x4xbf16>, vector<16x4xbf16>, vector<16x4xbf16>, vector<16x4xbf16>, vector<16x4xbf16>, vector<16x4xbf16>, vector<16x4xbf16> -> vector<144x4xbf16>
    %cst_42 = arith.constant dense<0.000000e+00> : vector<16x4xf32>
    %450 = tpu.matmul %362, %449, %cst_42 {dimension_numbers = #tpu.dot_dimension_numbers<[1], [0], [0], [1], [0, 0, 1, 1], [], []>} : vector<16x144xbf16>, vector<144x4xbf16>, vector<16x4xf32> -> vector<16x4xf32>
    %451 = vector.broadcast %363 : vector<16x1xf32> to vector<16x4xf32>
    %452 = arith.addf %450, %451 : vector<16x4xf32>
    %cst_43 = arith.constant 0.000000e+00 : f32
    %453 = vector.broadcast %cst_43 : f32 to vector<16x4xf32>
    %454 = arith.maximumf %452, %453 : vector<16x4xf32>
    %455 = tpu.concatenate %187, %196, %205, %247, %256, %265, %307, %316, %325 in 0 : vector<16x4xbf16>, vector<16x4xbf16>, vector<16x4xbf16>, vector<16x4xbf16>, vector<16x4xbf16>, vector<16x4xbf16>, vector<16x4xbf16>, vector<16x4xbf16>, vector<16x4xbf16> -> vector<144x4xbf16>
    %cst_44 = arith.constant dense<0.000000e+00> : vector<16x4xf32>
    %456 = tpu.matmul %362, %455, %cst_44 {dimension_numbers = #tpu.dot_dimension_numbers<[1], [0], [0], [1], [0, 0, 1, 1], [], []>} : vector<16x144xbf16>, vector<144x4xbf16>, vector<16x4xf32> -> vector<16x4xf32>
    %457 = vector.broadcast %363 : vector<16x1xf32> to vector<16x4xf32>
    %458 = arith.addf %456, %457 : vector<16x4xf32>
    %cst_45 = arith.constant 0.000000e+00 : f32
    %459 = vector.broadcast %cst_45 : f32 to vector<16x4xf32>
    %460 = arith.maximumf %458, %459 : vector<16x4xf32>
    %461 = tpu.concatenate %196, %205, %214, %256, %265, %274, %316, %325, %334 in 0 : vector<16x4xbf16>, vector<16x4xbf16>, vector<16x4xbf16>, vector<16x4xbf16>, vector<16x4xbf16>, vector<16x4xbf16>, vector<16x4xbf16>, vector<16x4xbf16>, vector<16x4xbf16> -> vector<144x4xbf16>
    %cst_46 = arith.constant dense<0.000000e+00> : vector<16x4xf32>
    %462 = tpu.matmul %362, %461, %cst_46 {dimension_numbers = #tpu.dot_dimension_numbers<[1], [0], [0], [1], [0, 0, 1, 1], [], []>} : vector<16x144xbf16>, vector<144x4xbf16>, vector<16x4xf32> -> vector<16x4xf32>
    %463 = vector.broadcast %363 : vector<16x1xf32> to vector<16x4xf32>
    %464 = arith.addf %462, %463 : vector<16x4xf32>
    %cst_47 = arith.constant 0.000000e+00 : f32
    %465 = vector.broadcast %cst_47 : f32 to vector<16x4xf32>
    %466 = arith.maximumf %464, %465 : vector<16x4xf32>
    %467 = tpu.concatenate %205, %214, %223, %265, %274, %283, %325, %334, %343 in 0 : vector<16x4xbf16>, vector<16x4xbf16>, vector<16x4xbf16>, vector<16x4xbf16>, vector<16x4xbf16>, vector<16x4xbf16>, vector<16x4xbf16>, vector<16x4xbf16>, vector<16x4xbf16> -> vector<144x4xbf16>
    %cst_48 = arith.constant dense<0.000000e+00> : vector<16x4xf32>
    %468 = tpu.matmul %362, %467, %cst_48 {dimension_numbers = #tpu.dot_dimension_numbers<[1], [0], [0], [1], [0, 0, 1, 1], [], []>} : vector<16x144xbf16>, vector<144x4xbf16>, vector<16x4xf32> -> vector<16x4xf32>
    %469 = vector.broadcast %363 : vector<16x1xf32> to vector<16x4xf32>
    %470 = arith.addf %468, %469 : vector<16x4xf32>
    %cst_49 = arith.constant 0.000000e+00 : f32
    %471 = vector.broadcast %cst_49 : f32 to vector<16x4xf32>
    %472 = arith.maximumf %470, %471 : vector<16x4xf32>
    %473 = tpu.concatenate %214, %223, %232, %274, %283, %292, %334, %343, %352 in 0 : vector<16x4xbf16>, vector<16x4xbf16>, vector<16x4xbf16>, vector<16x4xbf16>, vector<16x4xbf16>, vector<16x4xbf16>, vector<16x4xbf16>, vector<16x4xbf16>, vector<16x4xbf16> -> vector<144x4xbf16>
    %cst_50 = arith.constant dense<0.000000e+00> : vector<16x4xf32>
    %474 = tpu.matmul %362, %473, %cst_50 {dimension_numbers = #tpu.dot_dimension_numbers<[1], [0], [0], [1], [0, 0, 1, 1], [], []>} : vector<16x144xbf16>, vector<144x4xbf16>, vector<16x4xf32> -> vector<16x4xf32>
    %475 = vector.broadcast %363 : vector<16x1xf32> to vector<16x4xf32>
    %476 = arith.addf %474, %475 : vector<16x4xf32>
    %cst_51 = arith.constant 0.000000e+00 : f32
    %477 = vector.broadcast %cst_51 : f32 to vector<16x4xf32>
    %478 = arith.maximumf %476, %477 : vector<16x4xf32>
    %479 = tpu.concatenate %223, %232, %241, %283, %292, %301, %343, %352, %361 in 0 : vector<16x4xbf16>, vector<16x4xbf16>, vector<16x4xbf16>, vector<16x4xbf16>, vector<16x4xbf16>, vector<16x4xbf16>, vector<16x4xbf16>, vector<16x4xbf16>, vector<16x4xbf16> -> vector<144x4xbf16>
    %cst_52 = arith.constant dense<0.000000e+00> : vector<16x4xf32>
    %480 = tpu.matmul %362, %479, %cst_52 {dimension_numbers = #tpu.dot_dimension_numbers<[1], [0], [0], [1], [0, 0, 1, 1], [], []>} : vector<16x144xbf16>, vector<144x4xbf16>, vector<16x4xf32> -> vector<16x4xf32>
    %481 = vector.broadcast %363 : vector<16x1xf32> to vector<16x4xf32>
    %482 = arith.addf %480, %481 : vector<16x4xf32>
    %cst_53 = arith.constant 0.000000e+00 : f32
    %483 = vector.broadcast %cst_53 : f32 to vector<16x4xf32>
    %484 = arith.maximumf %482, %483 : vector<16x4xf32>
    %485 = tpu.concatenate %232, %241, %364, %292, %301, %364, %352, %361, %364 in 0 : vector<16x4xbf16>, vector<16x4xbf16>, vector<16x4xbf16>, vector<16x4xbf16>, vector<16x4xbf16>, vector<16x4xbf16>, vector<16x4xbf16>, vector<16x4xbf16>, vector<16x4xbf16> -> vector<144x4xbf16>
    %cst_54 = arith.constant dense<0.000000e+00> : vector<16x4xf32>
    %486 = tpu.matmul %362, %485, %cst_54 {dimension_numbers = #tpu.dot_dimension_numbers<[1], [0], [0], [1], [0, 0, 1, 1], [], []>} : vector<16x144xbf16>, vector<144x4xbf16>, vector<16x4xf32> -> vector<16x4xf32>
    %487 = vector.broadcast %363 : vector<16x1xf32> to vector<16x4xf32>
    %488 = arith.addf %486, %487 : vector<16x4xf32>
    %cst_55 = arith.constant 0.000000e+00 : f32
    %489 = vector.broadcast %cst_55 : f32 to vector<16x4xf32>
    %490 = arith.maximumf %488, %489 : vector<16x4xf32>
    %491 = tpu.concatenate %364, %247, %256, %364, %307, %316, %364, %364, %364 in 0 : vector<16x4xbf16>, vector<16x4xbf16>, vector<16x4xbf16>, vector<16x4xbf16>, vector<16x4xbf16>, vector<16x4xbf16>, vector<16x4xbf16>, vector<16x4xbf16>, vector<16x4xbf16> -> vector<144x4xbf16>
    %cst_56 = arith.constant dense<0.000000e+00> : vector<16x4xf32>
    %492 = tpu.matmul %362, %491, %cst_56 {dimension_numbers = #tpu.dot_dimension_numbers<[1], [0], [0], [1], [0, 0, 1, 1], [], []>} : vector<16x144xbf16>, vector<144x4xbf16>, vector<16x4xf32> -> vector<16x4xf32>
    %493 = vector.broadcast %363 : vector<16x1xf32> to vector<16x4xf32>
    %494 = arith.addf %492, %493 : vector<16x4xf32>
    %cst_57 = arith.constant 0.000000e+00 : f32
    %495 = vector.broadcast %cst_57 : f32 to vector<16x4xf32>
    %496 = arith.maximumf %494, %495 : vector<16x4xf32>
    %497 = tpu.concatenate %247, %256, %265, %307, %316, %325, %364, %364, %364 in 0 : vector<16x4xbf16>, vector<16x4xbf16>, vector<16x4xbf16>, vector<16x4xbf16>, vector<16x4xbf16>, vector<16x4xbf16>, vector<16x4xbf16>, vector<16x4xbf16>, vector<16x4xbf16> -> vector<144x4xbf16>
    %cst_58 = arith.constant dense<0.000000e+00> : vector<16x4xf32>
    %498 = tpu.matmul %362, %497, %cst_58 {dimension_numbers = #tpu.dot_dimension_numbers<[1], [0], [0], [1], [0, 0, 1, 1], [], []>} : vector<16x144xbf16>, vector<144x4xbf16>, vector<16x4xf32> -> vector<16x4xf32>
    %499 = vector.broadcast %363 : vector<16x1xf32> to vector<16x4xf32>
    %500 = arith.addf %498, %499 : vector<16x4xf32>
    %cst_59 = arith.constant 0.000000e+00 : f32
    %501 = vector.broadcast %cst_59 : f32 to vector<16x4xf32>
    %502 = arith.maximumf %500, %501 : vector<16x4xf32>
    %503 = tpu.concatenate %256, %265, %274, %316, %325, %334, %364, %364, %364 in 0 : vector<16x4xbf16>, vector<16x4xbf16>, vector<16x4xbf16>, vector<16x4xbf16>, vector<16x4xbf16>, vector<16x4xbf16>, vector<16x4xbf16>, vector<16x4xbf16>, vector<16x4xbf16> -> vector<144x4xbf16>
    %cst_60 = arith.constant dense<0.000000e+00> : vector<16x4xf32>
    %504 = tpu.matmul %362, %503, %cst_60 {dimension_numbers = #tpu.dot_dimension_numbers<[1], [0], [0], [1], [0, 0, 1, 1], [], []>} : vector<16x144xbf16>, vector<144x4xbf16>, vector<16x4xf32> -> vector<16x4xf32>
    %505 = vector.broadcast %363 : vector<16x1xf32> to vector<16x4xf32>
    %506 = arith.addf %504, %505 : vector<16x4xf32>
    %cst_61 = arith.constant 0.000000e+00 : f32
    %507 = vector.broadcast %cst_61 : f32 to vector<16x4xf32>
    %508 = arith.maximumf %506, %507 : vector<16x4xf32>
    %509 = tpu.concatenate %265, %274, %283, %325, %334, %343, %364, %364, %364 in 0 : vector<16x4xbf16>, vector<16x4xbf16>, vector<16x4xbf16>, vector<16x4xbf16>, vector<16x4xbf16>, vector<16x4xbf16>, vector<16x4xbf16>, vector<16x4xbf16>, vector<16x4xbf16> -> vector<144x4xbf16>
    %cst_62 = arith.constant dense<0.000000e+00> : vector<16x4xf32>
    %510 = tpu.matmul %362, %509, %cst_62 {dimension_numbers = #tpu.dot_dimension_numbers<[1], [0], [0], [1], [0, 0, 1, 1], [], []>} : vector<16x144xbf16>, vector<144x4xbf16>, vector<16x4xf32> -> vector<16x4xf32>
    %511 = vector.broadcast %363 : vector<16x1xf32> to vector<16x4xf32>
    %512 = arith.addf %510, %511 : vector<16x4xf32>
    %cst_63 = arith.constant 0.000000e+00 : f32
    %513 = vector.broadcast %cst_63 : f32 to vector<16x4xf32>
    %514 = arith.maximumf %512, %513 : vector<16x4xf32>
    %515 = tpu.concatenate %274, %283, %292, %334, %343, %352, %364, %364, %364 in 0 : vector<16x4xbf16>, vector<16x4xbf16>, vector<16x4xbf16>, vector<16x4xbf16>, vector<16x4xbf16>, vector<16x4xbf16>, vector<16x4xbf16>, vector<16x4xbf16>, vector<16x4xbf16> -> vector<144x4xbf16>
    %cst_64 = arith.constant dense<0.000000e+00> : vector<16x4xf32>
    %516 = tpu.matmul %362, %515, %cst_64 {dimension_numbers = #tpu.dot_dimension_numbers<[1], [0], [0], [1], [0, 0, 1, 1], [], []>} : vector<16x144xbf16>, vector<144x4xbf16>, vector<16x4xf32> -> vector<16x4xf32>
    %517 = vector.broadcast %363 : vector<16x1xf32> to vector<16x4xf32>
    %518 = arith.addf %516, %517 : vector<16x4xf32>
    %cst_65 = arith.constant 0.000000e+00 : f32
    %519 = vector.broadcast %cst_65 : f32 to vector<16x4xf32>
    %520 = arith.maximumf %518, %519 : vector<16x4xf32>
    %521 = tpu.concatenate %283, %292, %301, %343, %352, %361, %364, %364, %364 in 0 : vector<16x4xbf16>, vector<16x4xbf16>, vector<16x4xbf16>, vector<16x4xbf16>, vector<16x4xbf16>, vector<16x4xbf16>, vector<16x4xbf16>, vector<16x4xbf16>, vector<16x4xbf16> -> vector<144x4xbf16>
    %cst_66 = arith.constant dense<0.000000e+00> : vector<16x4xf32>
    %522 = tpu.matmul %362, %521, %cst_66 {dimension_numbers = #tpu.dot_dimension_numbers<[1], [0], [0], [1], [0, 0, 1, 1], [], []>} : vector<16x144xbf16>, vector<144x4xbf16>, vector<16x4xf32> -> vector<16x4xf32>
    %523 = vector.broadcast %363 : vector<16x1xf32> to vector<16x4xf32>
    %524 = arith.addf %522, %523 : vector<16x4xf32>
    %cst_67 = arith.constant 0.000000e+00 : f32
    %525 = vector.broadcast %cst_67 : f32 to vector<16x4xf32>
    %526 = arith.maximumf %524, %525 : vector<16x4xf32>
    %527 = tpu.concatenate %292, %301, %364, %352, %361, %364, %364, %364, %364 in 0 : vector<16x4xbf16>, vector<16x4xbf16>, vector<16x4xbf16>, vector<16x4xbf16>, vector<16x4xbf16>, vector<16x4xbf16>, vector<16x4xbf16>, vector<16x4xbf16>, vector<16x4xbf16> -> vector<144x4xbf16>
    %cst_68 = arith.constant dense<0.000000e+00> : vector<16x4xf32>
    %528 = tpu.matmul %362, %527, %cst_68 {dimension_numbers = #tpu.dot_dimension_numbers<[1], [0], [0], [1], [0, 0, 1, 1], [], []>} : vector<16x144xbf16>, vector<144x4xbf16>, vector<16x4xf32> -> vector<16x4xf32>
    %529 = vector.broadcast %363 : vector<16x1xf32> to vector<16x4xf32>
    %530 = arith.addf %528, %529 : vector<16x4xf32>
    %cst_69 = arith.constant 0.000000e+00 : f32
    %531 = vector.broadcast %cst_69 : f32 to vector<16x4xf32>
    %532 = arith.maximumf %530, %531 : vector<16x4xf32>
    %533 = arith.maximumf %370, %376 : vector<16x4xf32>
    %534 = arith.maximumf %533, %412 : vector<16x4xf32>
    %535 = arith.maximumf %534, %418 : vector<16x4xf32>
    %536 = arith.truncf %535 : vector<16x4xf32> to vector<16x4xbf16>
    %537 = arith.maximumf %382, %388 : vector<16x4xf32>
    %538 = arith.maximumf %537, %394 : vector<16x4xf32>
    %539 = arith.maximumf %538, %424 : vector<16x4xf32>
    %540 = arith.maximumf %539, %430 : vector<16x4xf32>
    %541 = arith.maximumf %540, %436 : vector<16x4xf32>
    %542 = arith.truncf %541 : vector<16x4xf32> to vector<16x4xbf16>
    %543 = arith.maximumf %400, %406 : vector<16x4xf32>
    %544 = arith.maximumf %543, %442 : vector<16x4xf32>
    %545 = arith.maximumf %544, %448 : vector<16x4xf32>
    %546 = arith.truncf %545 : vector<16x4xf32> to vector<16x4xbf16>
    %547 = arith.maximumf %454, %460 : vector<16x4xf32>
    %548 = arith.maximumf %547, %496 : vector<16x4xf32>
    %549 = arith.maximumf %548, %502 : vector<16x4xf32>
    %550 = arith.truncf %549 : vector<16x4xf32> to vector<16x4xbf16>
    %551 = arith.maximumf %466, %472 : vector<16x4xf32>
    %552 = arith.maximumf %551, %478 : vector<16x4xf32>
    %553 = arith.maximumf %552, %508 : vector<16x4xf32>
    %554 = arith.maximumf %553, %514 : vector<16x4xf32>
    %555 = arith.maximumf %554, %520 : vector<16x4xf32>
    %556 = arith.truncf %555 : vector<16x4xf32> to vector<16x4xbf16>
    %557 = arith.maximumf %484, %490 : vector<16x4xf32>
    %558 = arith.maximumf %557, %526 : vector<16x4xf32>
    %559 = arith.maximumf %558, %532 : vector<16x4xf32>
    %560 = arith.truncf %559 : vector<16x4xf32> to vector<16x4xbf16>
    %561 = tpu.concatenate %536, %542, %546, %550, %556, %560 in 0 : vector<16x4xbf16>, vector<16x4xbf16>, vector<16x4xbf16>, vector<16x4xbf16>, vector<16x4xbf16>, vector<16x4xbf16> -> vector<96x4xbf16>
    %c0_70 = arith.constant 0 : index
    %c0_71 = arith.constant 0 : index
    %562 = vector.load %arg6[%c0_70, %c0_71] : memref<50x96xbf16, #tpu.memory_space<vmem>>, vector<50x96xbf16>
    %cst_72 = arith.constant dense<0.000000e+00> : vector<50x4xf32>
    %563 = tpu.matmul %562, %561, %cst_72 {dimension_numbers = #tpu.dot_dimension_numbers<[1], [0], [0], [1], [0, 0, 1, 1], [], []>} : vector<50x96xbf16>, vector<96x4xbf16>, vector<50x4xf32> -> vector<50x4xf32>
    %c0_73 = arith.constant 0 : index
    %c0_74 = arith.constant 0 : index
    %564 = vector.load %arg7[%c0_73, %c0_74] : memref<50x1xf32, #tpu.memory_space<vmem>>, vector<50x1xf32>
    %565 = vector.broadcast %564 : vector<50x1xf32> to vector<50x4xf32>
    %566 = arith.addf %563, %565 : vector<50x4xf32>
    %567 = vector.extract_strided_slice %566 {offsets = [0, 0], sizes = [50, 2], strides = [1, 1]} : vector<50x4xf32> to vector<50x2xf32>
    %568 = vector.extract_strided_slice %566 {offsets = [0, 2], sizes = [50, 2], strides = [1, 1]} : vector<50x4xf32> to vector<50x2xf32>
    %569 = arith.subf %567, %568 : vector<50x2xf32>
    %570 = math.absf %569 : vector<50x2xf32>
    %cst_75 = arith.constant dense<0.000000e+00> : vector<2xf32>
    %571 = vector.multi_reduction <add>, %570, %cst_75 [0] : vector<50x2xf32> to vector<2xf32>
    %572 = vector.shape_cast %571 : vector<2xf32> to vector<1x2xf32>
    %cst_76 = arith.constant 0.000000e+00 : f32
    %573 = vector.broadcast %cst_76 : f32 to vector<1x2xf32>
    %574 = arith.subf %573, %572 : vector<1x2xf32>
    %575 = math.exp %574 : vector<1x2xf32>
    %576 = tpu.concatenate %575, %575 in 1 : vector<1x2xf32>, vector<1x2xf32> -> vector<1x4xf32>
    %577 = tpu.concatenate %566, %576 in 0 : vector<50x4xf32>, vector<1x4xf32> -> vector<51x4xf32>
    %c0_77 = arith.constant 0 : index
    %c0_78 = arith.constant 0 : index
    %c0_79 = arith.constant 0 : index
    %578 = vector.load %arg8[%c0_77, %c0_78, %c0_79] : memref<1x51x4xf32, #tpu.memory_space<vmem>>, vector<1x51x4xf32>
    %579 = vector.shape_cast %578 : vector<1x51x4xf32> to vector<51x4xf32>
    %580 = vector.shape_cast %577 : vector<51x4xf32> to vector<1x51x4xf32>
    tpu.vector_store %arg8[%c0_77, %c0_78, %c0_79], %580 {strides = array<i32>} : memref<1x51x4xf32, #tpu.memory_space<vmem>>, vector<1x51x4xf32>,
    return
  }
  func.func @transform_0(%arg0: i32) -> (i32, i32, i32, i32, i32) {
    %c0_i32 = arith.constant 0 : i32
    %c0_i32_0 = arith.constant 0 : i32
    %c0_i32_1 = arith.constant 0 : i32
    %c0_i32_2 = arith.constant 0 : i32
    %c0_i32_3 = arith.constant 0 : i32
    return %arg0, %c0_i32, %c0_i32_0, %c0_i32_1, %c0_i32_2 : i32, i32, i32, i32, i32
  }
  func.func @transform_1(%arg0: i32) -> (i32, i32, i32) {
    %c0_i32 = arith.constant 0 : i32
    %c0_i32_0 = arith.constant 0 : i32
    %c0_i32_1 = arith.constant 0 : i32
    %c0_i32_2 = arith.constant 0 : i32
    return %c0_i32, %c0_i32_0, %c0_i32_1 : i32, i32, i32
  }
  func.func @transform_2(%arg0: i32) -> (i32, i32) {
    %c0_i32 = arith.constant 0 : i32
    %c0_i32_0 = arith.constant 0 : i32
    %c0_i32_1 = arith.constant 0 : i32
    return %c0_i32, %c0_i32_0 : i32, i32
  }
  func.func @transform_3(%arg0: i32) -> (i32, i32) {
    %c0_i32 = arith.constant 0 : i32
    %c0_i32_0 = arith.constant 0 : i32
    %c0_i32_1 = arith.constant 0 : i32
    return %c0_i32, %c0_i32_0 : i32, i32
  }
  func.func @transform_4(%arg0: i32) -> (i32, i32) {
    %c0_i32 = arith.constant 0 : i32
    %c0_i32_0 = arith.constant 0 : i32
    %c0_i32_1 = arith.constant 0 : i32
    return %c0_i32, %c0_i32_0 : i32, i32
  }
  func.func @transform_5(%arg0: i32) -> (i32, i32) {
    %c0_i32 = arith.constant 0 : i32
    %c0_i32_0 = arith.constant 0 : i32
    %c0_i32_1 = arith.constant 0 : i32
    return %c0_i32, %c0_i32_0 : i32, i32
  }
  func.func @transform_6(%arg0: i32) -> (i32, i32) {
    %c0_i32 = arith.constant 0 : i32
    %c0_i32_0 = arith.constant 0 : i32
    %c0_i32_1 = arith.constant 0 : i32
    return %c0_i32, %c0_i32_0 : i32, i32
  }
  func.func @transform_7(%arg0: i32) -> (i32, i32, i32) {
    %c0_i32 = arith.constant 0 : i32
    %c0_i32_0 = arith.constant 0 : i32
    %c0_i32_1 = arith.constant 0 : i32
    return %arg0, %c0_i32, %c0_i32_0 : i32, i32, i32
  }
}

</mosaic_0001>

<llo_original>
// kernel: tpu_custom_call.1
$region0: #{tpu_custom_call.1}
  #allocation0 [shape = 'u32[]', space=smem, size = 0x4, offset = 0x4, fixed_abs, tag = 'smem constant byte address 0x4 - core index']
  #allocation1 [shape = 'u32[144,128]{1,0:T(1,128)}', space=vmem, size = 0x12000, scoped, tag = 'internal scratch']
  %s0 = inlined_call_operand.vmem [shape: f32[1,14,22,1,4], index: 0, kind: input, shape index: {}]
  %s1 = inlined_call_operand.vmem [shape: f32[9,16,1], index: 1, kind: input, shape index: {}]
  %s2 = inlined_call_operand.vmem [shape: f32[16,1], index: 2, kind: input, shape index: {}]
  %s3 = inlined_call_operand.vmem [shape: bf16[16,144], index: 3, kind: input, shape index: {}]
  %s4 = inlined_call_operand.vmem [shape: f32[16,1], index: 4, kind: input, shape index: {}]
  %s5 = inlined_call_operand.vmem [shape: bf16[50,96], index: 5, kind: input, shape index: {}]
  %s6 = inlined_call_operand.vmem [shape: f32[50,1], index: 6, kind: input, shape index: {}]
  %s7 = inlined_call_operand.vmem [shape: f32[1,51,4], index: 7, kind: output, shape index: {}]
  %s8 = sld [smem:[#allocation0]]
  $region38: #{tpu_custom_call.1} parent=0
    _
  %s10 = ssub.s32 1, %s8
  %s11 = scalar_select 0, %s10, %s8
  // Predicated region
  $region2: #{tpu_custom_call.1} parent=0 // pred_check
    _
  $region3: #{tpu_custom_call.1} parent=0 // pred_check_branch
    %13 = sbr.rel (0) target = $region5
  $region4: #{tpu_custom_call.1} parent=0 // pred_region
    _
  $region5: #{tpu_custom_call.1} parent=0 // pred_fallthru
    _
  // Predicated region
  $region6: #{tpu_custom_call.1} parent=0 // pred_check
    _
  $region7: #{tpu_custom_call.1} parent=0 // pred_check_branch
    %15 = sbr.rel (0) target = $region9
  $region8: #{tpu_custom_call.1} parent=0 // pred_region
    _
  $region9: #{tpu_custom_call.1} parent=0 // pred_fallthru
    _
  // Predicated region
  $region10: #{tpu_custom_call.1} parent=0 // pred_check
    _
  $region11: #{tpu_custom_call.1} parent=0 // pred_check_branch
    %17 = sbr.rel (0) target = $region13
  $region12: #{tpu_custom_call.1} parent=0 // pred_region
    _
  $region13: #{tpu_custom_call.1} parent=0 // pred_fallthru
    _
  // Predicated region
  $region14: #{tpu_custom_call.1} parent=0 // pred_check
    _
  $region15: #{tpu_custom_call.1} parent=0 // pred_check_branch
    %19 = sbr.rel (0) target = $region17
  $region16: #{tpu_custom_call.1} parent=0 // pred_region
    _
  $region17: #{tpu_custom_call.1} parent=0 // pred_fallthru
    _
  // Predicated region
  $region18: #{tpu_custom_call.1} parent=0 // pred_check
    _
  $region19: #{tpu_custom_call.1} parent=0 // pred_check_branch
    %21 = sbr.rel (0) target = $region21
  $region20: #{tpu_custom_call.1} parent=0 // pred_region
    _
  $region21: #{tpu_custom_call.1} parent=0 // pred_fallthru
    _
  // Predicated region
  $region22: #{tpu_custom_call.1} parent=0 // pred_check
    _
  $region23: #{tpu_custom_call.1} parent=0 // pred_check_branch
    %23 = sbr.rel (0) target = $region25
  $region24: #{tpu_custom_call.1} parent=0 // pred_region
    _
  $region25: #{tpu_custom_call.1} parent=0 // pred_fallthru
    _
  // Predicated region
  $region26: #{tpu_custom_call.1} parent=0 // pred_check
    _
  $region27: #{tpu_custom_call.1} parent=0 // pred_check_branch
    %25 = sbr.rel (0) target = $region29
  $region28: #{tpu_custom_call.1} parent=0 // pred_region
    _
  $region29: #{tpu_custom_call.1} parent=0 // pred_fallthru
    _
  %v27 = vld [vmem:[%s0] sm:$0x1]
  %v28 = vld [vmem:[%s0 + $0x1] sm:$0x1]
  %v29 = vld [vmem:[%s0 + $0x2] sm:$0x1]
  %v30 = vld [vmem:[%s0 + $0x3] sm:$0x1]
  %v31 = vld [vmem:[%s0 + $0x4] sm:$0x1]
  %v32 = vld [vmem:[%s0 + $0x5] sm:$0x1]
  %v33 = vld [vmem:[%s0 + $0x6] sm:$0x1]
  %v34 = vld [vmem:[%s0 + $0x7] sm:$0x1]
  %v35 = vld [vmem:[%s0 + $0x8] sm:$0x1]
  %v36 = vld [vmem:[%s0 + $0x9] sm:$0x1]
  %v37 = vld [vmem:[%s0 + $0xa] sm:$0x1]
  %v38 = vld [vmem:[%s0 + $0xb] sm:$0x1]
  %v39 = vld [vmem:[%s0 + $0xc] sm:$0x1]
  %v40 = vld [vmem:[%s0 + $0xd] sm:$0x1]
  %v41 = vld [vmem:[%s0 + $0xe] sm:$0x1]
  %v42 = vld [vmem:[%s0 + $0xf] sm:$0x1]
  %v43 = vld [vmem:[%s0 + $0x10] sm:$0x1]
  %v44 = vld [vmem:[%s0 + $0x11] sm:$0x1]
  %v45 = vld [vmem:[%s0 + $0x12] sm:$0x1]
  %v46 = vld [vmem:[%s0 + $0x13] sm:$0x1]
  %v47 = vld [vmem:[%s0 + $0x14] sm:$0x1]
  %v48 = vld [vmem:[%s0 + $0x15] sm:$0x1]
  %v49 = vld [vmem:[%s0 + $0x16] sm:$0x1]
  %v50 = vld [vmem:[%s0 + $0x17] sm:$0x1]
  %v51 = vld [vmem:[%s0 + $0x18] sm:$0x1]
  %v52 = vld [vmem:[%s0 + $0x19] sm:$0x1]
  %v53 = vld [vmem:[%s0 + $0x1a] sm:$0x1]
  %v54 = vld [vmem:[%s0 + $0x1b] sm:$0x1]
  %v55 = vld [vmem:[%s0 + $0x1c] sm:$0x1]
  %v56 = vld [vmem:[%s0 + $0x1d] sm:$0x1]
  %v57 = vld [vmem:[%s0 + $0x1e] sm:$0x1]
  %v58 = vld [vmem:[%s0 + $0x1f] sm:$0x1]
  %v59 = vld [vmem:[%s0 + $0x20] sm:$0x1]
  %v60 = vld [vmem:[%s0 + $0x21] sm:$0x1]
  %v61 = vld [vmem:[%s0 + $0x22] sm:$0x1]
  %v62 = vld [vmem:[%s0 + $0x23] sm:$0x1]
  %v63 = vld [vmem:[%s0 + $0x24] sm:$0x1]
  %v64 = vld [vmem:[%s0 + $0x25] sm:$0x1]
  %v65 = vld [vmem:[%s0 + $0x26] sm:$0x1]
  %v66 = vld [vmem:[%s0 + $0x27] sm:$0x1]
  %v67 = vld [vmem:[%s0 + $0x28] sm:$0x1]
  %v68 = vld [vmem:[%s0 + $0x29] sm:$0x1]
  %v69 = vld [vmem:[%s0 + $0x2a] sm:$0x1]
  %v70 = vld [vmem:[%s0 + $0x2b] sm:$0x1]
  %v71 = vld [vmem:[%s0 + $0x2c] sm:$0x1]
  %v72 = vld [vmem:[%s0 + $0x2d] sm:$0x1]
  %v73 = vld [vmem:[%s0 + $0x2e] sm:$0x1]
  %v74 = vld [vmem:[%s0 + $0x2f] sm:$0x1]
  %v75 = vld [vmem:[%s0 + $0x30] sm:$0x1]
  %v76 = vld [vmem:[%s0 + $0x31] sm:$0x1]
  %v77 = vld [vmem:[%s0 + $0x32] sm:$0x1]
  %v78 = vld [vmem:[%s0 + $0x33] sm:$0x1]
  %v79 = vld [vmem:[%s0 + $0x34] sm:$0x1]
  %v80 = vld [vmem:[%s0 + $0x35] sm:$0x1]
  %v81 = vld [vmem:[%s0 + $0x36] sm:$0x1]
  %v82 = vld [vmem:[%s0 + $0x37] sm:$0x1]
  %v83 = vld [vmem:[%s0 + $0x38] sm:$0x1]
  %v84 = vld [vmem:[%s0 + $0x39] sm:$0x1]
  %v85 = vld [vmem:[%s0 + $0x3a] sm:$0x1]
  %v86 = vld [vmem:[%s0 + $0x3b] sm:$0x1]
  %v87 = vld [vmem:[%s0 + $0x3c] sm:$0x1]
  %v88 = vld [vmem:[%s0 + $0x3d] sm:$0x1]
  %v89 = vld [vmem:[%s0 + $0x3e] sm:$0x1]
  %v90 = vld [vmem:[%s0 + $0x3f] sm:$0x1]
  %v91 = vld [vmem:[%s0 + $0x40] sm:$0x1]
  %v92 = vld [vmem:[%s0 + $0x41] sm:$0x1]
  %v93 = vld [vmem:[%s0 + $0x42] sm:$0x1]
  %v94 = vld [vmem:[%s0 + $0x43] sm:$0x1]
  %v95 = vld [vmem:[%s0 + $0x44] sm:$0x1]
  %v96 = vld [vmem:[%s0 + $0x45] sm:$0x1]
  %v97 = vld [vmem:[%s0 + $0x46] sm:$0x1]
  %v98 = vld [vmem:[%s0 + $0x47] sm:$0x1]
  %v99 = vld [vmem:[%s0 + $0x48] sm:$0x1]
  %v100 = vld [vmem:[%s0 + $0x49] sm:$0x1]
  %v101 = vld [vmem:[%s0 + $0x4a] sm:$0x1]
  %v102 = vld [vmem:[%s0 + $0x4b] sm:$0x1]
  %v103 = vld [vmem:[%s0 + $0x4c] sm:$0x1]
  %v104 = vld [vmem:[%s0 + $0x4d] sm:$0x1]
  %v105 = vld [vmem:[%s0 + $0x4e] sm:$0x1]
  %v106 = vld [vmem:[%s0 + $0x4f] sm:$0x1]
  %v107 = vld [vmem:[%s0 + $0x50] sm:$0x1]
  %v108 = vld [vmem:[%s0 + $0x51] sm:$0x1]
  %v109 = vld [vmem:[%s0 + $0x52] sm:$0x1]
  %v110 = vld [vmem:[%s0 + $0x53] sm:$0x1]
  %v111 = vld [vmem:[%s0 + $0x54] sm:$0x1]
  %v112 = vld [vmem:[%s0 + $0x55] sm:$0x1]
  %v113 = vld [vmem:[%s0 + $0x56] sm:$0x1]
  %v114 = vld [vmem:[%s0 + $0x57] sm:$0x1]
  %v115 = vld [vmem:[%s0 + $0x58] sm:$0x1]
  %v116 = vld [vmem:[%s0 + $0x59] sm:$0x1]
  %v117 = vld [vmem:[%s0 + $0x5a] sm:$0x1]
  %v118 = vld [vmem:[%s0 + $0x5b] sm:$0x1]
  %v119 = vld [vmem:[%s0 + $0x5c] sm:$0x1]
  %v120 = vld [vmem:[%s0 + $0x5d] sm:$0x1]
  %v121 = vld [vmem:[%s0 + $0x5e] sm:$0x1]
  %v122 = vld [vmem:[%s0 + $0x5f] sm:$0x1]
  %v123 = vld [vmem:[%s0 + $0x60] sm:$0x1]
  %v124 = vld [vmem:[%s0 + $0x61] sm:$0x1]
  %v125 = vld [vmem:[%s0 + $0x62] sm:$0x1]
  %v126 = vld [vmem:[%s0 + $0x63] sm:$0x1]
  %v127 = vld [vmem:[%s0 + $0x64] sm:$0x1]
  %v128 = vld [vmem:[%s0 + $0x65] sm:$0x1]
  %v129 = vld [vmem:[%s0 + $0x66] sm:$0x1]
  %v130 = vld [vmem:[%s0 + $0x67] sm:$0x1]
  %v131 = vld [vmem:[%s0 + $0x68] sm:$0x1]
  %v132 = vld [vmem:[%s0 + $0x69] sm:$0x1]
  %v133 = vld [vmem:[%s0 + $0x6a] sm:$0x1]
  %v134 = vld [vmem:[%s0 + $0x6b] sm:$0x1]
  %v135 = vld [vmem:[%s0 + $0x6c] sm:$0x1]
  %v136 = vld [vmem:[%s0 + $0x6d] sm:$0x1]
  %v137 = vld [vmem:[%s0 + $0x6e] sm:$0x1]
  %v138 = vld [vmem:[%s0 + $0x6f] sm:$0x1]
  %v139 = vld [vmem:[%s0 + $0x70] sm:$0x1]
  %v140 = vld [vmem:[%s0 + $0x71] sm:$0x1]
  %v141 = vld [vmem:[%s0 + $0x72] sm:$0x1]
  %v142 = vld [vmem:[%s0 + $0x73] sm:$0x1]
  %v143 = vld [vmem:[%s0 + $0x74] sm:$0x1]
  %v144 = vld [vmem:[%s0 + $0x75] sm:$0x1]
  %v145 = vld [vmem:[%s0 + $0x76] sm:$0x1]
  %v146 = vld [vmem:[%s0 + $0x77] sm:$0x1]
  %v147 = vld [vmem:[%s0 + $0x78] sm:$0x1]
  %v148 = vld [vmem:[%s0 + $0x79] sm:$0x1]
  %v149 = vld [vmem:[%s0 + $0x7a] sm:$0x1]
  %v150 = vld [vmem:[%s0 + $0x7b] sm:$0x1]
  %v151 = vld [vmem:[%s0 + $0x7c] sm:$0x1]
  %v152 = vld [vmem:[%s0 + $0x7d] sm:$0x1]
  %v153 = vld [vmem:[%s0 + $0x7e] sm:$0x1]
  %v154 = vld [vmem:[%s0 + $0x7f] sm:$0x1]
  %v155 = vld [vmem:[%s0 + $0x80] sm:$0x1]
  %v156 = vld [vmem:[%s0 + $0x81] sm:$0x1]
  %v157 = vld [vmem:[%s0 + $0x82] sm:$0x1]
  %v158 = vld [vmem:[%s0 + $0x83] sm:$0x1]
  %v159 = vld [vmem:[%s0 + $0x84] sm:$0x1]
  %v160 = vld [vmem:[%s0 + $0x85] sm:$0x1]
  %v161 = vld [vmem:[%s0 + $0x86] sm:$0x1]
  %v162 = vld [vmem:[%s0 + $0x87] sm:$0x1]
  %v163 = vld [vmem:[%s0 + $0x88] sm:$0x1]
  %v164 = vld [vmem:[%s0 + $0x89] sm:$0x1]
  %v165 = vld [vmem:[%s0 + $0x8a] sm:$0x1]
  %v166 = vld [vmem:[%s0 + $0x8b] sm:$0x1]
  %v167 = vld [vmem:[%s0 + $0x8c] sm:$0x1]
  %v168 = vld [vmem:[%s0 + $0x8d] sm:$0x1]
  %v169 = vld [vmem:[%s0 + $0x8e] sm:$0x1]
  %v170 = vld [vmem:[%s0 + $0x8f] sm:$0x1]
  %v171 = vld [vmem:[%s0 + $0x90] sm:$0x1]
  %v172 = vld [vmem:[%s0 + $0x91] sm:$0x1]
  %v173 = vld [vmem:[%s0 + $0x92] sm:$0x1]
  %v174 = vld [vmem:[%s0 + $0x93] sm:$0x1]
  %v175 = vld [vmem:[%s0 + $0x94] sm:$0x1]
  %v176 = vld [vmem:[%s0 + $0x95] sm:$0x1]
  %v177 = vld [vmem:[%s0 + $0x96] sm:$0x1]
  %v178 = vld [vmem:[%s0 + $0x97] sm:$0x1]
  %v179 = vld [vmem:[%s0 + $0x98] sm:$0x1]
  %v180 = vld [vmem:[%s0 + $0x99] sm:$0x1]
  %v181 = vld [vmem:[%s0 + $0x9a] sm:$0x1]
  %v182 = vld [vmem:[%s0 + $0x9b] sm:$0x1]
  %v183 = vld [vmem:[%s0 + $0x9c] sm:$0x1]
  %v184 = vld [vmem:[%s0 + $0x9d] sm:$0x1]
  %v185 = vld [vmem:[%s0 + $0x9e] sm:$0x1]
  %v186 = vld [vmem:[%s0 + $0x9f] sm:$0x1]
  %v187 = vld [vmem:[%s0 + $0xa0] sm:$0x1]
  %v188 = vld [vmem:[%s0 + $0xa1] sm:$0x1]
  %v189 = vld [vmem:[%s0 + $0xa2] sm:$0x1]
  %v190 = vld [vmem:[%s0 + $0xa3] sm:$0x1]
  %v191 = vld [vmem:[%s0 + $0xa4] sm:$0x1]
  %v192 = vld [vmem:[%s0 + $0xa5] sm:$0x1]
  %v193 = vld [vmem:[%s0 + $0xa6] sm:$0x1]
  %v194 = vld [vmem:[%s0 + $0xa7] sm:$0x1]
  %v195 = vld [vmem:[%s0 + $0xa8] sm:$0x1]
  %v196 = vld [vmem:[%s0 + $0xa9] sm:$0x1]
  %v197 = vld [vmem:[%s0 + $0xaa] sm:$0x1]
  %v198 = vld [vmem:[%s0 + $0xab] sm:$0x1]
  %v199 = vld [vmem:[%s0 + $0xac] sm:$0x1]
  %v200 = vld [vmem:[%s0 + $0xad] sm:$0x1]
  %v201 = vld [vmem:[%s0 + $0xae] sm:$0x1]
  %v202 = vld [vmem:[%s0 + $0xaf] sm:$0x1]
  %v203 = vld [vmem:[%s0 + $0xb0] sm:$0x1]
  %v204 = vld [vmem:[%s0 + $0xb1] sm:$0x1]
  %v205 = vld [vmem:[%s0 + $0xb2] sm:$0x1]
  %v206 = vld [vmem:[%s0 + $0xb3] sm:$0x1]
  %v207 = vld [vmem:[%s0 + $0xb4] sm:$0x1]
  %v208 = vld [vmem:[%s0 + $0xb5] sm:$0x1]
  %v209 = vld [vmem:[%s0 + $0xb6] sm:$0x1]
  %v210 = vld [vmem:[%s0 + $0xb7] sm:$0x1]
  %v211 = vld [vmem:[%s0 + $0xb8] sm:$0x1]
  %v212 = vld [vmem:[%s0 + $0xb9] sm:$0x1]
  %v213 = vld [vmem:[%s0 + $0xba] sm:$0x1]
  %v214 = vld [vmem:[%s0 + $0xbb] sm:$0x1]
  %v215 = vld [vmem:[%s0 + $0xbc] sm:$0x1]
  %v216 = vld [vmem:[%s0 + $0xbd] sm:$0x1]
  %v217 = vld [vmem:[%s0 + $0xbe] sm:$0x1]
  %v218 = vld [vmem:[%s0 + $0xbf] sm:$0x1]
  %v219 = vld [vmem:[%s0 + $0xc0] sm:$0x1]
  %v220 = vld [vmem:[%s0 + $0xc1] sm:$0x1]
  %v221 = vld [vmem:[%s0 + $0xc2] sm:$0x1]
  %v222 = vld [vmem:[%s0 + $0xc3] sm:$0x1]
  %v223 = vld [vmem:[%s0 + $0xc4] sm:$0x1]
  %v224 = vld [vmem:[%s0 + $0xc5] sm:$0x1]
  %v225 = vld [vmem:[%s0 + $0xc6] sm:$0x1]
  %v226 = vld [vmem:[%s0 + $0xc7] sm:$0x1]
  %v227 = vld [vmem:[%s0 + $0xc8] sm:$0x1]
  %v228 = vld [vmem:[%s0 + $0xc9] sm:$0x1]
  %v229 = vld [vmem:[%s0 + $0xca] sm:$0x1]
  %v230 = vld [vmem:[%s0 + $0xcb] sm:$0x1]
  %v231 = vld [vmem:[%s0 + $0xcc] sm:$0x1]
  %v232 = vld [vmem:[%s0 + $0xcd] sm:$0x1]
  %v233 = vld [vmem:[%s0 + $0xce] sm:$0x1]
  %v234 = vld [vmem:[%s0 + $0xcf] sm:$0x1]
  %v235 = vld [vmem:[%s0 + $0xd0] sm:$0x1]
  %v236 = vld [vmem:[%s0 + $0xd1] sm:$0x1]
  %v237 = vld [vmem:[%s0 + $0xd2] sm:$0x1]
  %v238 = vld [vmem:[%s0 + $0xd3] sm:$0x1]
  %v239 = vld [vmem:[%s0 + $0xd4] sm:$0x1]
  %v240 = vld [vmem:[%s0 + $0xd5] sm:$0x1]
  %v241 = vld [vmem:[%s0 + $0xd6] sm:$0x1]
  %v242 = vld [vmem:[%s0 + $0xd7] sm:$0x1]
  %v243 = vld [vmem:[%s0 + $0xd8] sm:$0x1]
  %v244 = vld [vmem:[%s0 + $0xd9] sm:$0x1]
  %v245 = vld [vmem:[%s0 + $0xda] sm:$0x1]
  %v246 = vld [vmem:[%s0 + $0xdb] sm:$0x1]
  %v247 = vld [vmem:[%s0 + $0xdc] sm:$0x1]
  %v248 = vld [vmem:[%s0 + $0xdd] sm:$0x1]
  %v249 = vld [vmem:[%s0 + $0xde] sm:$0x1]
  %v250 = vld [vmem:[%s0 + $0xdf] sm:$0x1]
  %v251 = vld [vmem:[%s0 + $0xe0] sm:$0x1]
  %v252 = vld [vmem:[%s0 + $0xe1] sm:$0x1]
  %v253 = vld [vmem:[%s0 + $0xe2] sm:$0x1]
  %v254 = vld [vmem:[%s0 + $0xe3] sm:$0x1]
  %v255 = vld [vmem:[%s0 + $0xe4] sm:$0x1]
  %v256 = vld [vmem:[%s0 + $0xe5] sm:$0x1]
  %v257 = vld [vmem:[%s0 + $0xe6] sm:$0x1]
  %v258 = vld [vmem:[%s0 + $0xe7] sm:$0x1]
  %v259 = vld [vmem:[%s0 + $0xe8] sm:$0x1]
  %v260 = vld [vmem:[%s0 + $0xe9] sm:$0x1]
  %v261 = vld [vmem:[%s0 + $0xea] sm:$0x1]
  %v262 = vld [vmem:[%s0 + $0xeb] sm:$0x1]
  %v263 = vld [vmem:[%s0 + $0xec] sm:$0x1]
  %v264 = vld [vmem:[%s0 + $0xed] sm:$0x1]
  %v265 = vld [vmem:[%s0 + $0xee] sm:$0x1]
  %v266 = vld [vmem:[%s0 + $0xef] sm:$0x1]
  %v267 = vld [vmem:[%s0 + $0xf0] sm:$0x1]
  %v268 = vld [vmem:[%s0 + $0xf1] sm:$0x1]
  %v269 = vld [vmem:[%s0 + $0xf2] sm:$0x1]
  %v270 = vld [vmem:[%s0 + $0xf3] sm:$0x1]
  %v271 = vld [vmem:[%s0 + $0xf4] sm:$0x1]
  %v272 = vld [vmem:[%s0 + $0xf5] sm:$0x1]
  %v273 = vld [vmem:[%s0 + $0xf6] sm:$0x1]
  %v274 = vld [vmem:[%s0 + $0xf7] sm:$0x1]
  %v275 = vld [vmem:[%s0 + $0xf8] sm:$0x1]
  %v276 = vld [vmem:[%s0 + $0xf9] sm:$0x1]
  %v277 = vld [vmem:[%s0 + $0xfa] sm:$0x1]
  %v278 = vld [vmem:[%s0 + $0xfb] sm:$0x1]
  %v279 = vld [vmem:[%s0 + $0xfc] sm:$0x1]
  %v280 = vld [vmem:[%s0 + $0xfd] sm:$0x1]
  %v281 = vld [vmem:[%s0 + $0xfe] sm:$0x1]
  %v282 = vld [vmem:[%s0 + $0xff] sm:$0x1]
  %v283 = vld [vmem:[%s0 + $0x100] sm:$0x1]
  %v284 = vld [vmem:[%s0 + $0x101] sm:$0x1]
  %v285 = vld [vmem:[%s0 + $0x102] sm:$0x1]
  %v286 = vld [vmem:[%s0 + $0x103] sm:$0x1]
  %v287 = vld [vmem:[%s0 + $0x104] sm:$0x1]
  %v288 = vld [vmem:[%s0 + $0x105] sm:$0x1]
  %v289 = vld [vmem:[%s0 + $0x106] sm:$0x1]
  %v290 = vld [vmem:[%s0 + $0x107] sm:$0x1]
  %v291 = vld [vmem:[%s0 + $0x108] sm:$0x1]
  %v292 = vld [vmem:[%s0 + $0x109] sm:$0x1]
  %v293 = vld [vmem:[%s0 + $0x10a] sm:$0x1]
  %v294 = vld [vmem:[%s0 + $0x10b] sm:$0x1]
  %v295 = vld [vmem:[%s0 + $0x10c] sm:$0x1]
  %v296 = vld [vmem:[%s0 + $0x10d] sm:$0x1]
  %v297 = vld [vmem:[%s0 + $0x10e] sm:$0x1]
  %v298 = vld [vmem:[%s0 + $0x10f] sm:$0x1]
  %v299 = vld [vmem:[%s0 + $0x110] sm:$0x1]
  %v300 = vld [vmem:[%s0 + $0x111] sm:$0x1]
  %v301 = vld [vmem:[%s0 + $0x112] sm:$0x1]
  %v302 = vld [vmem:[%s0 + $0x113] sm:$0x1]
  %v303 = vld [vmem:[%s0 + $0x114] sm:$0x1]
  %v304 = vld [vmem:[%s0 + $0x115] sm:$0x1]
  %v305 = vld [vmem:[%s0 + $0x116] sm:$0x1]
  %v306 = vld [vmem:[%s0 + $0x117] sm:$0x1]
  %v307 = vld [vmem:[%s0 + $0x118] sm:$0x1]
  %v308 = vld [vmem:[%s0 + $0x119] sm:$0x1]
  %v309 = vld [vmem:[%s0 + $0x11a] sm:$0x1]
  %v310 = vld [vmem:[%s0 + $0x11b] sm:$0x1]
  %v311 = vld [vmem:[%s0 + $0x11c] sm:$0x1]
  %v312 = vld [vmem:[%s0 + $0x11d] sm:$0x1]
  %v313 = vld [vmem:[%s1] sm:$0xff]
  %v314 = vld [vmem:[%s1 + $0x8] sm:$0xff]
  %v315 = vld [vmem:[%s1 + $0x10] sm:$0xff]
  %v316 = vld [vmem:[%s1 + $0x18] sm:$0xff]
  %v317 = vld [vmem:[%s1 + $0x20] sm:$0xff]
  %v318 = vld [vmem:[%s1 + $0x28] sm:$0xff]
  %v319 = vld [vmem:[%s1 + $0x30] sm:$0xff]
  %v320 = vld [vmem:[%s1 + $0x38] sm:$0xff]
  %v321 = vld [vmem:[%s1 + $0x40] sm:$0xff]
  %v322 = vld [vmem:[%s1 + $0x48] sm:$0xff]
  %v323 = vld [vmem:[%s1 + $0x50] sm:$0xff]
  %v324 = vld [vmem:[%s1 + $0x58] sm:$0xff]
  %v325 = vld [vmem:[%s1 + $0x60] sm:$0xff]
  %v326 = vld [vmem:[%s1 + $0x68] sm:$0xff]
  %v327 = vld [vmem:[%s1 + $0x70] sm:$0xff]
  %v328 = vld [vmem:[%s1 + $0x78] sm:$0xff]
  %v329 = vld [vmem:[%s1 + $0x80] sm:$0xff]
  %v330 = vld [vmem:[%s1 + $0x88] sm:$0xff]
  %v551 = vlaneseq
  %v552 = vshrl.u32 %v551, 7
  %v553 = vsub.s32 0, %v552
  %v554 = vrot.slane %v27, %v553
  %v555 = vlaneseq
  %v556 = vshrl.u32 %v555, 7
  %v557 = vsub.s32 0, %v556
  %v558 = vrot.slane %v28, %v557
  %v559 = vlaneseq
  %v560 = vshrl.u32 %v559, 7
  %v561 = vsub.s32 0, %v560
  %v562 = vrot.slane %v29, %v561
  %v563 = vlaneseq
  %v564 = vshrl.u32 %v563, 7
  %v565 = vsub.s32 0, %v564
  %v566 = vrot.slane %v30, %v565
  %v567 = vlaneseq
  %v568 = vshrl.u32 %v567, 7
  %v569 = vsub.s32 0, %v568
  %v570 = vrot.slane %v31, %v569
  %v571 = vlaneseq
  %v572 = vshrl.u32 %v571, 7
  %v573 = vsub.s32 0, %v572
  %v574 = vrot.slane %v32, %v573
  %v575 = vlaneseq
  %v576 = vshrl.u32 %v575, 7
  %v577 = vsub.s32 0, %v576
  %v578 = vrot.slane %v33, %v577
  %v579 = vlaneseq
  %v580 = vshrl.u32 %v579, 7
  %v581 = vsub.s32 0, %v580
  %v582 = vrot.slane %v34, %v581
  %v583 = vlaneseq
  %v584 = vshrl.u32 %v583, 7
  %v585 = vsub.s32 0, %v584
  %v586 = vrot.slane %v35, %v585
  %v587 = vlaneseq
  %v588 = vshrl.u32 %v587, 7
  %v589 = vsub.s32 0, %v588
  %v590 = vrot.slane %v36, %v589
  %v591 = vlaneseq
  %v592 = vshrl.u32 %v591, 7
  %v593 = vsub.s32 0, %v592
  %v594 = vrot.slane %v37, %v593
  %v595 = vlaneseq
  %v596 = vshrl.u32 %v595, 7
  %v597 = vsub.s32 0, %v596
  %v598 = vrot.slane %v38, %v597
  %v599 = vlaneseq
  %v600 = vshrl.u32 %v599, 7
  %v601 = vsub.s32 0, %v600
  %v602 = vrot.slane %v39, %v601
  %v603 = vlaneseq
  %v604 = vshrl.u32 %v603, 7
  %v605 = vsub.s32 0, %v604
  %v606 = vrot.slane %v40, %v605
  %v607 = vlaneseq
  %v608 = vshrl.u32 %v607, 7
  %v609 = vsub.s32 0, %v608
  %v610 = vrot.slane %v41, %v609
  %v611 = vlaneseq
  %v612 = vshrl.u32 %v611, 7
  %v613 = vsub.s32 0, %v612
  %v614 = vrot.slane %v42, %v613
  %v615 = vlaneseq
  %v616 = vshrl.u32 %v615, 7
  %v617 = vsub.s32 0, %v616
  %v618 = vrot.slane %v43, %v617
  %v619 = vlaneseq
  %v620 = vshrl.u32 %v619, 7
  %v621 = vsub.s32 0, %v620
  %v622 = vrot.slane %v44, %v621
  %v623 = vlaneseq
  %v624 = vshrl.u32 %v623, 7
  %v625 = vsub.s32 0, %v624
  %v626 = vrot.slane %v45, %v625
  %v627 = vlaneseq
  %v628 = vshrl.u32 %v627, 7
  %v629 = vsub.s32 0, %v628
  %v630 = vrot.slane %v46, %v629
  %v631 = vlaneseq
  %v632 = vshrl.u32 %v631, 7
  %v633 = vsub.s32 0, %v632
  %v634 = vrot.slane %v49, %v633
  %v635 = vlaneseq
  %v636 = vshrl.u32 %v635, 7
  %v637 = vsub.s32 0, %v636
  %v638 = vrot.slane %v50, %v637
  %v639 = vlaneseq
  %v640 = vshrl.u32 %v639, 7
  %v641 = vsub.s32 0, %v640
  %v642 = vrot.slane %v51, %v641
  %v643 = vlaneseq
  %v644 = vshrl.u32 %v643, 7
  %v645 = vsub.s32 0, %v644
  %v646 = vrot.slane %v52, %v645
  %v647 = vlaneseq
  %v648 = vshrl.u32 %v647, 7
  %v649 = vsub.s32 0, %v648
  %v650 = vrot.slane %v53, %v649
  %v651 = vlaneseq
  %v652 = vshrl.u32 %v651, 7
  %v653 = vsub.s32 0, %v652
  %v654 = vrot.slane %v54, %v653
  %v655 = vlaneseq
  %v656 = vshrl.u32 %v655, 7
  %v657 = vsub.s32 0, %v656
  %v658 = vrot.slane %v55, %v657
  %v659 = vlaneseq
  %v660 = vshrl.u32 %v659, 7
  %v661 = vsub.s32 0, %v660
  %v662 = vrot.slane %v56, %v661
  %v663 = vlaneseq
  %v664 = vshrl.u32 %v663, 7
  %v665 = vsub.s32 0, %v664
  %v666 = vrot.slane %v57, %v665
  %v667 = vlaneseq
  %v668 = vshrl.u32 %v667, 7
  %v669 = vsub.s32 0, %v668
  %v670 = vrot.slane %v58, %v669
  %v671 = vlaneseq
  %v672 = vshrl.u32 %v671, 7
  %v673 = vsub.s32 0, %v672
  %v674 = vrot.slane %v59, %v673
  %v675 = vlaneseq
  %v676 = vshrl.u32 %v675, 7
  %v677 = vsub.s32 0, %v676
  %v678 = vrot.slane %v60, %v677
  %v679 = vlaneseq
  %v680 = vshrl.u32 %v679, 7
  %v681 = vsub.s32 0, %v680
  %v682 = vrot.slane %v61, %v681
  %v683 = vlaneseq
  %v684 = vshrl.u32 %v683, 7
  %v685 = vsub.s32 0, %v684
  %v686 = vrot.slane %v62, %v685
  %v687 = vlaneseq
  %v688 = vshrl.u32 %v687, 7
  %v689 = vsub.s32 0, %v688
  %v690 = vrot.slane %v63, %v689
  %v691 = vlaneseq
  %v692 = vshrl.u32 %v691, 7
  %v693 = vsub.s32 0, %v692
  %v694 = vrot.slane %v64, %v693
  %v695 = vlaneseq
  %v696 = vshrl.u32 %v695, 7
  %v697 = vsub.s32 0, %v696
  %v698 = vrot.slane %v65, %v697
  %v699 = vlaneseq
  %v700 = vshrl.u32 %v699, 7
  %v701 = vsub.s32 0, %v700
  %v702 = vrot.slane %v66, %v701
  %v703 = vlaneseq
  %v704 = vshrl.u32 %v703, 7
  %v705 = vsub.s32 0, %v704
  %v706 = vrot.slane %v67, %v705
  %v707 = vlaneseq
  %v708 = vshrl.u32 %v707, 7
  %v709 = vsub.s32 0, %v708
  %v710 = vrot.slane %v68, %v709
  %v711 = vlaneseq
  %v712 = vshrl.u32 %v711, 7
  %v713 = vsub.s32 0, %v712
  %v714 = vrot.slane %v71, %v713
  %v715 = vlaneseq
  %v716 = vshrl.u32 %v715, 7
  %v717 = vsub.s32 0, %v716
  %v718 = vrot.slane %v72, %v717
  %v719 = vlaneseq
  %v720 = vshrl.u32 %v719, 7
  %v721 = vsub.s32 0, %v720
  %v722 = vrot.slane %v73, %v721
  %v723 = vlaneseq
  %v724 = vshrl.u32 %v723, 7
  %v725 = vsub.s32 0, %v724
  %v726 = vrot.slane %v74, %v725
  %v727 = vlaneseq
  %v728 = vshrl.u32 %v727, 7
  %v729 = vsub.s32 0, %v728
  %v730 = vrot.slane %v75, %v729
  %v731 = vlaneseq
  %v732 = vshrl.u32 %v731, 7
  %v733 = vsub.s32 0, %v732
  %v734 = vrot.slane %v76, %v733
  %v735 = vlaneseq
  %v736 = vshrl.u32 %v735, 7
  %v737 = vsub.s32 0, %v736
  %v738 = vrot.slane %v77, %v737
  %v739 = vlaneseq
  %v740 = vshrl.u32 %v739, 7
  %v741 = vsub.s32 0, %v740
  %v742 = vrot.slane %v78, %v741
  %v743 = vlaneseq
  %v744 = vshrl.u32 %v743, 7
  %v745 = vsub.s32 0, %v744
  %v746 = vrot.slane %v79, %v745
  %v747 = vlaneseq
  %v748 = vshrl.u32 %v747, 7
  %v749 = vsub.s32 0, %v748
  %v750 = vrot.slane %v80, %v749
  %v751 = vlaneseq
  %v752 = vshrl.u32 %v751, 7
  %v753 = vsub.s32 0, %v752
  %v754 = vrot.slane %v81, %v753
  %v755 = vlaneseq
  %v756 = vshrl.u32 %v755, 7
  %v757 = vsub.s32 0, %v756
  %v758 = vrot.slane %v82, %v757
  %v759 = vlaneseq
  %v760 = vshrl.u32 %v759, 7
  %v761 = vsub.s32 0, %v760
  %v762 = vrot.slane %v83, %v761
  %v763 = vlaneseq
  %v764 = vshrl.u32 %v763, 7
  %v765 = vsub.s32 0, %v764
  %v766 = vrot.slane %v84, %v765
  %v767 = vlaneseq
  %v768 = vshrl.u32 %v767, 7
  %v769 = vsub.s32 0, %v768
  %v770 = vrot.slane %v85, %v769
  %v771 = vlaneseq
  %v772 = vshrl.u32 %v771, 7
  %v773 = vsub.s32 0, %v772
  %v774 = vrot.slane %v86, %v773
  %v775 = vlaneseq
  %v776 = vshrl.u32 %v775, 7
  %v777 = vsub.s32 0, %v776
  %v778 = vrot.slane %v87, %v777
  %v779 = vlaneseq
  %v780 = vshrl.u32 %v779, 7
  %v781 = vsub.s32 0, %v780
  %v782 = vrot.slane %v88, %v781
  %v783 = vlaneseq
  %v784 = vshrl.u32 %v783, 7
  %v785 = vsub.s32 0, %v784
  %v786 = vrot.slane %v89, %v785
  %v787 = vlaneseq
  %v788 = vshrl.u32 %v787, 7
  %v789 = vsub.s32 0, %v788
  %v790 = vrot.slane %v90, %v789
  %v791 = vlaneseq
  %v792 = vshrl.u32 %v791, 7
  %v793 = vsub.s32 0, %v792
  %v794 = vrot.slane %v93, %v793
  %v795 = vlaneseq
  %v796 = vshrl.u32 %v795, 7
  %v797 = vsub.s32 0, %v796
  %v798 = vrot.slane %v94, %v797
  %v799 = vlaneseq
  %v800 = vshrl.u32 %v799, 7
  %v801 = vsub.s32 0, %v800
  %v802 = vrot.slane %v95, %v801
  %v803 = vlaneseq
  %v804 = vshrl.u32 %v803, 7
  %v805 = vsub.s32 0, %v804
  %v806 = vrot.slane %v96, %v805
  %v807 = vlaneseq
  %v808 = vshrl.u32 %v807, 7
  %v809 = vsub.s32 0, %v808
  %v810 = vrot.slane %v97, %v809
  %v811 = vlaneseq
  %v812 = vshrl.u32 %v811, 7
  %v813 = vsub.s32 0, %v812
  %v814 = vrot.slane %v98, %v813
  %v815 = vlaneseq
  %v816 = vshrl.u32 %v815, 7
  %v817 = vsub.s32 0, %v816
  %v818 = vrot.slane %v99, %v817
  %v819 = vlaneseq
  %v820 = vshrl.u32 %v819, 7
  %v821 = vsub.s32 0, %v820
  %v822 = vrot.slane %v100, %v821
  %v823 = vlaneseq
  %v824 = vshrl.u32 %v823, 7
  %v825 = vsub.s32 0, %v824
  %v826 = vrot.slane %v101, %v825
  %v827 = vlaneseq
  %v828 = vshrl.u32 %v827, 7
  %v829 = vsub.s32 0, %v828
  %v830 = vrot.slane %v102, %v829
  %v831 = vlaneseq
  %v832 = vshrl.u32 %v831, 7
  %v833 = vsub.s32 0, %v832
  %v834 = vrot.slane %v103, %v833
  %v835 = vlaneseq
  %v836 = vshrl.u32 %v835, 7
  %v837 = vsub.s32 0, %v836
  %v838 = vrot.slane %v104, %v837
  %v839 = vlaneseq
  %v840 = vshrl.u32 %v839, 7
  %v841 = vsub.s32 0, %v840
  %v842 = vrot.slane %v105, %v841
  %v843 = vlaneseq
  %v844 = vshrl.u32 %v843, 7
  %v845 = vsub.s32 0, %v844
  %v846 = vrot.slane %v106, %v845
  %v847 = vlaneseq
  %v848 = vshrl.u32 %v847, 7
  %v849 = vsub.s32 0, %v848
  %v850 = vrot.slane %v107, %v849
  %v851 = vlaneseq
  %v852 = vshrl.u32 %v851, 7
  %v853 = vsub.s32 0, %v852
  %v854 = vrot.slane %v108, %v853
  %v855 = vlaneseq
  %v856 = vshrl.u32 %v855, 7
  %v857 = vsub.s32 0, %v856
  %v858 = vrot.slane %v109, %v857
  %v859 = vlaneseq
  %v860 = vshrl.u32 %v859, 7
  %v861 = vsub.s32 0, %v860
  %v862 = vrot.slane %v110, %v861
  %v863 = vlaneseq
  %v864 = vshrl.u32 %v863, 7
  %v865 = vsub.s32 0, %v864
  %v866 = vrot.slane %v111, %v865
  %v867 = vlaneseq
  %v868 = vshrl.u32 %v867, 7
  %v869 = vsub.s32 0, %v868
  %v870 = vrot.slane %v112, %v869
  %v871 = vlaneseq
  %v872 = vshrl.u32 %v871, 7
  %v873 = vsub.s32 0, %v872
  %v874 = vrot.slane %v115, %v873
  %v875 = vlaneseq
  %v876 = vshrl.u32 %v875, 7
  %v877 = vsub.s32 0, %v876
  %v878 = vrot.slane %v116, %v877
  %v879 = vlaneseq
  %v880 = vshrl.u32 %v879, 7
  %v881 = vsub.s32 0, %v880
  %v882 = vrot.slane %v117, %v881
  %v883 = vlaneseq
  %v884 = vshrl.u32 %v883, 7
  %v885 = vsub.s32 0, %v884
  %v886 = vrot.slane %v118, %v885
  %v887 = vlaneseq
  %v888 = vshrl.u32 %v887, 7
  %v889 = vsub.s32 0, %v888
  %v890 = vrot.slane %v119, %v889
  %v891 = vlaneseq
  %v892 = vshrl.u32 %v891, 7
  %v893 = vsub.s32 0, %v892
  %v894 = vrot.slane %v120, %v893
  %v895 = vlaneseq
  %v896 = vshrl.u32 %v895, 7
  %v897 = vsub.s32 0, %v896
  %v898 = vrot.slane %v121, %v897
  %v899 = vlaneseq
  %v900 = vshrl.u32 %v899, 7
  %v901 = vsub.s32 0, %v900
  %v902 = vrot.slane %v122, %v901
  %v903 = vlaneseq
  %v904 = vshrl.u32 %v903, 7
  %v905 = vsub.s32 0, %v904
  %v906 = vrot.slane %v123, %v905
  %v907 = vlaneseq
  %v908 = vshrl.u32 %v907, 7
  %v909 = vsub.s32 0, %v908
  %v910 = vrot.slane %v124, %v909
  %v911 = vlaneseq
  %v912 = vshrl.u32 %v911, 7
  %v913 = vsub.s32 0, %v912
  %v914 = vrot.slane %v125, %v913
  %v915 = vlaneseq
  %v916 = vshrl.u32 %v915, 7
  %v917 = vsub.s32 0, %v916
  %v918 = vrot.slane %v126, %v917
  %v919 = vlaneseq
  %v920 = vshrl.u32 %v919, 7
  %v921 = vsub.s32 0, %v920
  %v922 = vrot.slane %v127, %v921
  %v923 = vlaneseq
  %v924 = vshrl.u32 %v923, 7
  %v925 = vsub.s32 0, %v924
  %v926 = vrot.slane %v128, %v925
  %v927 = vlaneseq
  %v928 = vshrl.u32 %v927, 7
  %v929 = vsub.s32 0, %v928
  %v930 = vrot.slane %v129, %v929
  %v931 = vlaneseq
  %v932 = vshrl.u32 %v931, 7
  %v933 = vsub.s32 0, %v932
  %v934 = vrot.slane %v130, %v933
  %v935 = vlaneseq
  %v936 = vshrl.u32 %v935, 7
  %v937 = vsub.s32 0, %v936
  %v938 = vrot.slane %v131, %v937
  %v939 = vlaneseq
  %v940 = vshrl.u32 %v939, 7
  %v941 = vsub.s32 0, %v940
  %v942 = vrot.slane %v132, %v941
  %v943 = vlaneseq
  %v944 = vshrl.u32 %v943, 7
  %v945 = vsub.s32 0, %v944
  %v946 = vrot.slane %v133, %v945
  %v947 = vlaneseq
  %v948 = vshrl.u32 %v947, 7
  %v949 = vsub.s32 0, %v948
  %v950 = vrot.slane %v134, %v949
  %v951 = vlaneseq
  %v952 = vshrl.u32 %v951, 7
  %v953 = vsub.s32 0, %v952
  %v954 = vrot.slane %v137, %v953
  %v955 = vlaneseq
  %v956 = vshrl.u32 %v955, 7
  %v957 = vsub.s32 0, %v956
  %v958 = vrot.slane %v138, %v957
  %v959 = vlaneseq
  %v960 = vshrl.u32 %v959, 7
  %v961 = vsub.s32 0, %v960
  %v962 = vrot.slane %v139, %v961
  %v963 = vlaneseq
  %v964 = vshrl.u32 %v963, 7
  %v965 = vsub.s32 0, %v964
  %v966 = vrot.slane %v140, %v965
  %v967 = vlaneseq
  %v968 = vshrl.u32 %v967, 7
  %v969 = vsub.s32 0, %v968
  %v970 = vrot.slane %v141, %v969
  %v971 = vlaneseq
  %v972 = vshrl.u32 %v971, 7
  %v973 = vsub.s32 0, %v972
  %v974 = vrot.slane %v142, %v973
  %v975 = vlaneseq
  %v976 = vshrl.u32 %v975, 7
  %v977 = vsub.s32 0, %v976
  %v978 = vrot.slane %v143, %v977
  %v979 = vlaneseq
  %v980 = vshrl.u32 %v979, 7
  %v981 = vsub.s32 0, %v980
  %v982 = vrot.slane %v144, %v981
  %v983 = vlaneseq
  %v984 = vshrl.u32 %v983, 7
  %v985 = vsub.s32 0, %v984
  %v986 = vrot.slane %v145, %v985
  %v987 = vlaneseq
  %v988 = vshrl.u32 %v987, 7
  %v989 = vsub.s32 0, %v988
  %v990 = vrot.slane %v146, %v989
  %v991 = vlaneseq
  %v992 = vshrl.u32 %v991, 7
  %v993 = vsub.s32 0, %v992
  %v994 = vrot.slane %v147, %v993
  %v995 = vlaneseq
  %v996 = vshrl.u32 %v995, 7
  %v997 = vsub.s32 0, %v996
  %v998 = vrot.slane %v148, %v997
  %v999 = vlaneseq
  %v1000 = vshrl.u32 %v999, 7
  %v1001 = vsub.s32 0, %v1000
  %v1002 = vrot.slane %v149, %v1001
  %v1003 = vlaneseq
  %v1004 = vshrl.u32 %v1003, 7
  %v1005 = vsub.s32 0, %v1004
  %v1006 = vrot.slane %v150, %v1005
  %v1007 = vlaneseq
  %v1008 = vshrl.u32 %v1007, 7
  %v1009 = vsub.s32 0, %v1008
  %v1010 = vrot.slane %v151, %v1009
  %v1011 = vlaneseq
  %v1012 = vshrl.u32 %v1011, 7
  %v1013 = vsub.s32 0, %v1012
  %v1014 = vrot.slane %v152, %v1013
  %v1015 = vlaneseq
  %v1016 = vshrl.u32 %v1015, 7
  %v1017 = vsub.s32 0, %v1016
  %v1018 = vrot.slane %v153, %v1017
  %v1019 = vlaneseq
  %v1020 = vshrl.u32 %v1019, 7
  %v1021 = vsub.s32 0, %v1020
  %v1022 = vrot.slane %v154, %v1021
  %v1023 = vlaneseq
  %v1024 = vshrl.u32 %v1023, 7
  %v1025 = vsub.s32 0, %v1024
  %v1026 = vrot.slane %v155, %v1025
  %v1027 = vlaneseq
  %v1028 = vshrl.u32 %v1027, 7
  %v1029 = vsub.s32 0, %v1028
  %v1030 = vrot.slane %v156, %v1029
  %v1031 = vlaneseq
  %v1032 = vshrl.u32 %v1031, 7
  %v1033 = vsub.s32 0, %v1032
  %v1034 = vrot.slane %v159, %v1033
  %v1035 = vlaneseq
  %v1036 = vshrl.u32 %v1035, 7
  %v1037 = vsub.s32 0, %v1036
  %v1038 = vrot.slane %v160, %v1037
  %v1039 = vlaneseq
  %v1040 = vshrl.u32 %v1039, 7
  %v1041 = vsub.s32 0, %v1040
  %v1042 = vrot.slane %v161, %v1041
  %v1043 = vlaneseq
  %v1044 = vshrl.u32 %v1043, 7
  %v1045 = vsub.s32 0, %v1044
  %v1046 = vrot.slane %v162, %v1045
  %v1047 = vlaneseq
  %v1048 = vshrl.u32 %v1047, 7
  %v1049 = vsub.s32 0, %v1048
  %v1050 = vrot.slane %v163, %v1049
  %v1051 = vlaneseq
  %v1052 = vshrl.u32 %v1051, 7
  %v1053 = vsub.s32 0, %v1052
  %v1054 = vrot.slane %v164, %v1053
  %v1055 = vlaneseq
  %v1056 = vshrl.u32 %v1055, 7
  %v1057 = vsub.s32 0, %v1056
  %v1058 = vrot.slane %v165, %v1057
  %v1059 = vlaneseq
  %v1060 = vshrl.u32 %v1059, 7
  %v1061 = vsub.s32 0, %v1060
  %v1062 = vrot.slane %v166, %v1061
  %v1063 = vlaneseq
  %v1064 = vshrl.u32 %v1063, 7
  %v1065 = vsub.s32 0, %v1064
  %v1066 = vrot.slane %v167, %v1065
  %v1067 = vlaneseq
  %v1068 = vshrl.u32 %v1067, 7
  %v1069 = vsub.s32 0, %v1068
  %v1070 = vrot.slane %v168, %v1069
  %v1071 = vlaneseq
  %v1072 = vshrl.u32 %v1071, 7
  %v1073 = vsub.s32 0, %v1072
  %v1074 = vrot.slane %v169, %v1073
  %v1075 = vlaneseq
  %v1076 = vshrl.u32 %v1075, 7
  %v1077 = vsub.s32 0, %v1076
  %v1078 = vrot.slane %v170, %v1077
  %v1079 = vlaneseq
  %v1080 = vshrl.u32 %v1079, 7
  %v1081 = vsub.s32 0, %v1080
  %v1082 = vrot.slane %v171, %v1081
  %v1083 = vlaneseq
  %v1084 = vshrl.u32 %v1083, 7
  %v1085 = vsub.s32 0, %v1084
  %v1086 = vrot.slane %v172, %v1085
  %v1087 = vlaneseq
  %v1088 = vshrl.u32 %v1087, 7
  %v1089 = vsub.s32 0, %v1088
  %v1090 = vrot.slane %v173, %v1089
  %v1091 = vlaneseq
  %v1092 = vshrl.u32 %v1091, 7
  %v1093 = vsub.s32 0, %v1092
  %v1094 = vrot.slane %v174, %v1093
  %v1095 = vlaneseq
  %v1096 = vshrl.u32 %v1095, 7
  %v1097 = vsub.s32 0, %v1096
  %v1098 = vrot.slane %v175, %v1097
  %v1099 = vlaneseq
  %v1100 = vshrl.u32 %v1099, 7
  %v1101 = vsub.s32 0, %v1100
  %v1102 = vrot.slane %v176, %v1101
  %v1103 = vlaneseq
  %v1104 = vshrl.u32 %v1103, 7
  %v1105 = vsub.s32 0, %v1104
  %v1106 = vrot.slane %v177, %v1105
  %v1107 = vlaneseq
  %v1108 = vshrl.u32 %v1107, 7
  %v1109 = vsub.s32 0, %v1108
  %v1110 = vrot.slane %v178, %v1109
  %v1111 = vlaneseq
  %v1112 = vshrl.u32 %v1111, 7
  %v1113 = vsub.s32 0, %v1112
  %v1114 = vrot.slane %v181, %v1113
  %v1115 = vlaneseq
  %v1116 = vshrl.u32 %v1115, 7
  %v1117 = vsub.s32 0, %v1116
  %v1118 = vrot.slane %v182, %v1117
  %v1119 = vlaneseq
  %v1120 = vshrl.u32 %v1119, 7
  %v1121 = vsub.s32 0, %v1120
  %v1122 = vrot.slane %v183, %v1121
  %v1123 = vlaneseq
  %v1124 = vshrl.u32 %v1123, 7
  %v1125 = vsub.s32 0, %v1124
  %v1126 = vrot.slane %v184, %v1125
  %v1127 = vlaneseq
  %v1128 = vshrl.u32 %v1127, 7
  %v1129 = vsub.s32 0, %v1128
  %v1130 = vrot.slane %v185, %v1129
  %v1131 = vlaneseq
  %v1132 = vshrl.u32 %v1131, 7
  %v1133 = vsub.s32 0, %v1132
  %v1134 = vrot.slane %v186, %v1133
  %v1135 = vlaneseq
  %v1136 = vshrl.u32 %v1135, 7
  %v1137 = vsub.s32 0, %v1136
  %v1138 = vrot.slane %v187, %v1137
  %v1139 = vlaneseq
  %v1140 = vshrl.u32 %v1139, 7
  %v1141 = vsub.s32 0, %v1140
  %v1142 = vrot.slane %v188, %v1141
  %v1143 = vlaneseq
  %v1144 = vshrl.u32 %v1143, 7
  %v1145 = vsub.s32 0, %v1144
  %v1146 = vrot.slane %v189, %v1145
  %v1147 = vlaneseq
  %v1148 = vshrl.u32 %v1147, 7
  %v1149 = vsub.s32 0, %v1148
  %v1150 = vrot.slane %v190, %v1149
  %v1151 = vlaneseq
  %v1152 = vshrl.u32 %v1151, 7
  %v1153 = vsub.s32 0, %v1152
  %v1154 = vrot.slane %v191, %v1153
  %v1155 = vlaneseq
  %v1156 = vshrl.u32 %v1155, 7
  %v1157 = vsub.s32 0, %v1156
  %v1158 = vrot.slane %v192, %v1157
  %v1159 = vlaneseq
  %v1160 = vshrl.u32 %v1159, 7
  %v1161 = vsub.s32 0, %v1160
  %v1162 = vrot.slane %v193, %v1161
  %v1163 = vlaneseq
  %v1164 = vshrl.u32 %v1163, 7
  %v1165 = vsub.s32 0, %v1164
  %v1166 = vrot.slane %v194, %v1165
  %v1167 = vlaneseq
  %v1168 = vshrl.u32 %v1167, 7
  %v1169 = vsub.s32 0, %v1168
  %v1170 = vrot.slane %v195, %v1169
  %v1171 = vlaneseq
  %v1172 = vshrl.u32 %v1171, 7
  %v1173 = vsub.s32 0, %v1172
  %v1174 = vrot.slane %v196, %v1173
  %v1175 = vlaneseq
  %v1176 = vshrl.u32 %v1175, 7
  %v1177 = vsub.s32 0, %v1176
  %v1178 = vrot.slane %v197, %v1177
  %v1179 = vlaneseq
  %v1180 = vshrl.u32 %v1179, 7
  %v1181 = vsub.s32 0, %v1180
  %v1182 = vrot.slane %v198, %v1181
  %v1183 = vlaneseq
  %v1184 = vshrl.u32 %v1183, 7
  %v1185 = vsub.s32 0, %v1184
  %v1186 = vrot.slane %v199, %v1185
  %v1187 = vlaneseq
  %v1188 = vshrl.u32 %v1187, 7
  %v1189 = vsub.s32 0, %v1188
  %v1190 = vrot.slane %v200, %v1189
  %v1191 = vlaneseq
  %v1192 = vshrl.u32 %v1191, 7
  %v1193 = vsub.s32 0, %v1192
  %v1194 = vrot.slane %v203, %v1193
  %v1195 = vlaneseq
  %v1196 = vshrl.u32 %v1195, 7
  %v1197 = vsub.s32 0, %v1196
  %v1198 = vrot.slane %v204, %v1197
  %v1199 = vlaneseq
  %v1200 = vshrl.u32 %v1199, 7
  %v1201 = vsub.s32 0, %v1200
  %v1202 = vrot.slane %v205, %v1201
  %v1203 = vlaneseq
  %v1204 = vshrl.u32 %v1203, 7
  %v1205 = vsub.s32 0, %v1204
  %v1206 = vrot.slane %v206, %v1205
  %v1207 = vlaneseq
  %v1208 = vshrl.u32 %v1207, 7
  %v1209 = vsub.s32 0, %v1208
  %v1210 = vrot.slane %v207, %v1209
  %v1211 = vlaneseq
  %v1212 = vshrl.u32 %v1211, 7
  %v1213 = vsub.s32 0, %v1212
  %v1214 = vrot.slane %v208, %v1213
  %v1215 = vlaneseq
  %v1216 = vshrl.u32 %v1215, 7
  %v1217 = vsub.s32 0, %v1216
  %v1218 = vrot.slane %v209, %v1217
  %v1219 = vlaneseq
  %v1220 = vshrl.u32 %v1219, 7
  %v1221 = vsub.s32 0, %v1220
  %v1222 = vrot.slane %v210, %v1221
  %v1223 = vlaneseq
  %v1224 = vshrl.u32 %v1223, 7
  %v1225 = vsub.s32 0, %v1224
  %v1226 = vrot.slane %v211, %v1225
  %v1227 = vlaneseq
  %v1228 = vshrl.u32 %v1227, 7
  %v1229 = vsub.s32 0, %v1228
  %v1230 = vrot.slane %v212, %v1229
  %v1231 = vlaneseq
  %v1232 = vshrl.u32 %v1231, 7
  %v1233 = vsub.s32 0, %v1232
  %v1234 = vrot.slane %v213, %v1233
  %v1235 = vlaneseq
  %v1236 = vshrl.u32 %v1235, 7
  %v1237 = vsub.s32 0, %v1236
  %v1238 = vrot.slane %v214, %v1237
  %v1239 = vlaneseq
  %v1240 = vshrl.u32 %v1239, 7
  %v1241 = vsub.s32 0, %v1240
  %v1242 = vrot.slane %v215, %v1241
  %v1243 = vlaneseq
  %v1244 = vshrl.u32 %v1243, 7
  %v1245 = vsub.s32 0, %v1244
  %v1246 = vrot.slane %v216, %v1245
  %v1247 = vlaneseq
  %v1248 = vshrl.u32 %v1247, 7
  %v1249 = vsub.s32 0, %v1248
  %v1250 = vrot.slane %v217, %v1249
  %v1251 = vlaneseq
  %v1252 = vshrl.u32 %v1251, 7
  %v1253 = vsub.s32 0, %v1252
  %v1254 = vrot.slane %v218, %v1253
  %v1255 = vlaneseq
  %v1256 = vshrl.u32 %v1255, 7
  %v1257 = vsub.s32 0, %v1256
  %v1258 = vrot.slane %v219, %v1257
  %v1259 = vlaneseq
  %v1260 = vshrl.u32 %v1259, 7
  %v1261 = vsub.s32 0, %v1260
  %v1262 = vrot.slane %v220, %v1261
  %v1263 = vlaneseq
  %v1264 = vshrl.u32 %v1263, 7
  %v1265 = vsub.s32 0, %v1264
  %v1266 = vrot.slane %v221, %v1265
  %v1267 = vlaneseq
  %v1268 = vshrl.u32 %v1267, 7
  %v1269 = vsub.s32 0, %v1268
  %v1270 = vrot.slane %v222, %v1269
  %v1271 = vlaneseq
  %v1272 = vshrl.u32 %v1271, 7
  %v1273 = vsub.s32 0, %v1272
  %v1274 = vrot.slane %v225, %v1273
  %v1275 = vlaneseq
  %v1276 = vshrl.u32 %v1275, 7
  %v1277 = vsub.s32 0, %v1276
  %v1278 = vrot.slane %v226, %v1277
  %v1279 = vlaneseq
  %v1280 = vshrl.u32 %v1279, 7
  %v1281 = vsub.s32 0, %v1280
  %v1282 = vrot.slane %v227, %v1281
  %v1283 = vlaneseq
  %v1284 = vshrl.u32 %v1283, 7
  %v1285 = vsub.s32 0, %v1284
  %v1286 = vrot.slane %v228, %v1285
  %v1287 = vlaneseq
  %v1288 = vshrl.u32 %v1287, 7
  %v1289 = vsub.s32 0, %v1288
  %v1290 = vrot.slane %v229, %v1289
  %v1291 = vlaneseq
  %v1292 = vshrl.u32 %v1291, 7
  %v1293 = vsub.s32 0, %v1292
  %v1294 = vrot.slane %v230, %v1293
  %v1295 = vlaneseq
  %v1296 = vshrl.u32 %v1295, 7
  %v1297 = vsub.s32 0, %v1296
  %v1298 = vrot.slane %v231, %v1297
  %v1299 = vlaneseq
  %v1300 = vshrl.u32 %v1299, 7
  %v1301 = vsub.s32 0, %v1300
  %v1302 = vrot.slane %v232, %v1301
  %v1303 = vlaneseq
  %v1304 = vshrl.u32 %v1303, 7
  %v1305 = vsub.s32 0, %v1304
  %v1306 = vrot.slane %v233, %v1305
  %v1307 = vlaneseq
  %v1308 = vshrl.u32 %v1307, 7
  %v1309 = vsub.s32 0, %v1308
  %v1310 = vrot.slane %v234, %v1309
  %v1311 = vlaneseq
  %v1312 = vshrl.u32 %v1311, 7
  %v1313 = vsub.s32 0, %v1312
  %v1314 = vrot.slane %v235, %v1313
  %v1315 = vlaneseq
  %v1316 = vshrl.u32 %v1315, 7
  %v1317 = vsub.s32 0, %v1316
  %v1318 = vrot.slane %v236, %v1317
  %v1319 = vlaneseq
  %v1320 = vshrl.u32 %v1319, 7
  %v1321 = vsub.s32 0, %v1320
  %v1322 = vrot.slane %v237, %v1321
  %v1323 = vlaneseq
  %v1324 = vshrl.u32 %v1323, 7
  %v1325 = vsub.s32 0, %v1324
  %v1326 = vrot.slane %v238, %v1325
  %v1327 = vlaneseq
  %v1328 = vshrl.u32 %v1327, 7
  %v1329 = vsub.s32 0, %v1328
  %v1330 = vrot.slane %v239, %v1329
  %v1331 = vlaneseq
  %v1332 = vshrl.u32 %v1331, 7
  %v1333 = vsub.s32 0, %v1332
  %v1334 = vrot.slane %v240, %v1333
  %v1335 = vlaneseq
  %v1336 = vshrl.u32 %v1335, 7
  %v1337 = vsub.s32 0, %v1336
  %v1338 = vrot.slane %v241, %v1337
  %v1339 = vlaneseq
  %v1340 = vshrl.u32 %v1339, 7
  %v1341 = vsub.s32 0, %v1340
  %v1342 = vrot.slane %v242, %v1341
  %v1343 = vlaneseq
  %v1344 = vshrl.u32 %v1343, 7
  %v1345 = vsub.s32 0, %v1344
  %v1346 = vrot.slane %v243, %v1345
  %v1347 = vlaneseq
  %v1348 = vshrl.u32 %v1347, 7
  %v1349 = vsub.s32 0, %v1348
  %v1350 = vrot.slane %v244, %v1349
  %v1351 = vlaneseq
  %v1352 = vshrl.u32 %v1351, 7
  %v1353 = vsub.s32 0, %v1352
  %v1354 = vrot.slane %v247, %v1353
  %v1355 = vlaneseq
  %v1356 = vshrl.u32 %v1355, 7
  %v1357 = vsub.s32 0, %v1356
  %v1358 = vrot.slane %v248, %v1357
  %v1359 = vlaneseq
  %v1360 = vshrl.u32 %v1359, 7
  %v1361 = vsub.s32 0, %v1360
  %v1362 = vrot.slane %v249, %v1361
  %v1363 = vlaneseq
  %v1364 = vshrl.u32 %v1363, 7
  %v1365 = vsub.s32 0, %v1364
  %v1366 = vrot.slane %v250, %v1365
  %v1367 = vlaneseq
  %v1368 = vshrl.u32 %v1367, 7
  %v1369 = vsub.s32 0, %v1368
  %v1370 = vrot.slane %v251, %v1369
  %v1371 = vlaneseq
  %v1372 = vshrl.u32 %v1371, 7
  %v1373 = vsub.s32 0, %v1372
  %v1374 = vrot.slane %v252, %v1373
  %v1375 = vlaneseq
  %v1376 = vshrl.u32 %v1375, 7
  %v1377 = vsub.s32 0, %v1376
  %v1378 = vrot.slane %v253, %v1377
  %v1379 = vlaneseq
  %v1380 = vshrl.u32 %v1379, 7
  %v1381 = vsub.s32 0, %v1380
  %v1382 = vrot.slane %v254, %v1381
  %v1383 = vlaneseq
  %v1384 = vshrl.u32 %v1383, 7
  %v1385 = vsub.s32 0, %v1384
  %v1386 = vrot.slane %v255, %v1385
  %v1387 = vlaneseq
  %v1388 = vshrl.u32 %v1387, 7
  %v1389 = vsub.s32 0, %v1388
  %v1390 = vrot.slane %v256, %v1389
  %v1391 = vlaneseq
  %v1392 = vshrl.u32 %v1391, 7
  %v1393 = vsub.s32 0, %v1392
  %v1394 = vrot.slane %v257, %v1393
  %v1395 = vlaneseq
  %v1396 = vshrl.u32 %v1395, 7
  %v1397 = vsub.s32 0, %v1396
  %v1398 = vrot.slane %v258, %v1397
  %v1399 = vlaneseq
  %v1400 = vshrl.u32 %v1399, 7
  %v1401 = vsub.s32 0, %v1400
  %v1402 = vrot.slane %v259, %v1401
  %v1403 = vlaneseq
  %v1404 = vshrl.u32 %v1403, 7
  %v1405 = vsub.s32 0, %v1404
  %v1406 = vrot.slane %v260, %v1405
  %v1407 = vlaneseq
  %v1408 = vshrl.u32 %v1407, 7
  %v1409 = vsub.s32 0, %v1408
  %v1410 = vrot.slane %v261, %v1409
  %v1411 = vlaneseq
  %v1412 = vshrl.u32 %v1411, 7
  %v1413 = vsub.s32 0, %v1412
  %v1414 = vrot.slane %v262, %v1413
  %v1415 = vlaneseq
  %v1416 = vshrl.u32 %v1415, 7
  %v1417 = vsub.s32 0, %v1416
  %v1418 = vrot.slane %v263, %v1417
  %v1419 = vlaneseq
  %v1420 = vshrl.u32 %v1419, 7
  %v1421 = vsub.s32 0, %v1420
  %v1422 = vrot.slane %v264, %v1421
  %v1423 = vlaneseq
  %v1424 = vshrl.u32 %v1423, 7
  %v1425 = vsub.s32 0, %v1424
  %v1426 = vrot.slane %v265, %v1425
  %v1427 = vlaneseq
  %v1428 = vshrl.u32 %v1427, 7
  %v1429 = vsub.s32 0, %v1428
  %v1430 = vrot.slane %v266, %v1429
  %1652 = vset.pattern.permute.xlu0 0
  %1653 = vperm.xlu0 %1652, %v313
  %v1654 = vpop.permute.xlu0 %1653
  %1657 = vset.pattern.permute.xlu0 0
  %1658 = vperm.xlu0 %1657, %v314
  %v1659 = vpop.permute.xlu0 %1658
  %v1661 = vmul.f32 %v554, %v1654
  %v1662 = vmul.f32 %v554, %v1659
  %v1663 = vmul.f32 %v558, %v1654
  %v1664 = vmul.f32 %v558, %v1659
  %v1665 = vmul.f32 %v562, %v1654
  %v1666 = vmul.f32 %v562, %v1659
  %v1667 = vmul.f32 %v566, %v1654
  %v1668 = vmul.f32 %v566, %v1659
  %v1669 = vmul.f32 %v570, %v1654
  %v1670 = vmul.f32 %v570, %v1659
  %v1671 = vmul.f32 %v574, %v1654
  %v1672 = vmul.f32 %v574, %v1659
  %v1673 = vmul.f32 %v578, %v1654
  %v1674 = vmul.f32 %v578, %v1659
  %v1675 = vmul.f32 %v582, %v1654
  %v1676 = vmul.f32 %v582, %v1659
  %v1677 = vmul.f32 %v586, %v1654
  %v1678 = vmul.f32 %v586, %v1659
  %v1679 = vmul.f32 %v590, %v1654
  %v1680 = vmul.f32 %v590, %v1659
  %v1681 = vmul.f32 %v594, %v1654
  %v1682 = vmul.f32 %v594, %v1659
  %v1683 = vmul.f32 %v598, %v1654
  %v1684 = vmul.f32 %v598, %v1659
  %v1685 = vmul.f32 %v602, %v1654
  %v1686 = vmul.f32 %v602, %v1659
  %v1687 = vmul.f32 %v606, %v1654
  %v1688 = vmul.f32 %v606, %v1659
  %v1689 = vmul.f32 %v610, %v1654
  %v1690 = vmul.f32 %v610, %v1659
  %v1691 = vmul.f32 %v614, %v1654
  %v1692 = vmul.f32 %v614, %v1659
  %v1693 = vmul.f32 %v618, %v1654
  %v1694 = vmul.f32 %v618, %v1659
  %v1695 = vmul.f32 %v622, %v1654
  %v1696 = vmul.f32 %v622, %v1659
  %v1697 = vmul.f32 %v626, %v1654
  %v1698 = vmul.f32 %v626, %v1659
  %v1699 = vmul.f32 %v630, %v1654
  %v1700 = vmul.f32 %v630, %v1659
  %v1701 = vmul.f32 %v634, %v1654
  %v1702 = vmul.f32 %v634, %v1659
  %v1703 = vmul.f32 %v638, %v1654
  %v1704 = vmul.f32 %v638, %v1659
  %v1705 = vmul.f32 %v642, %v1654
  %v1706 = vmul.f32 %v642, %v1659
  %v1707 = vmul.f32 %v646, %v1654
  %v1708 = vmul.f32 %v646, %v1659
  %v1709 = vmul.f32 %v650, %v1654
  %v1710 = vmul.f32 %v650, %v1659
  %v1711 = vmul.f32 %v654, %v1654
  %v1712 = vmul.f32 %v654, %v1659
  %v1713 = vmul.f32 %v658, %v1654
  %v1714 = vmul.f32 %v658, %v1659
  %v1715 = vmul.f32 %v662, %v1654
  %v1716 = vmul.f32 %v662, %v1659
  %v1717 = vmul.f32 %v666, %v1654
  %v1718 = vmul.f32 %v666, %v1659
  %v1719 = vmul.f32 %v670, %v1654
  %v1720 = vmul.f32 %v670, %v1659
  %v1721 = vmul.f32 %v674, %v1654
  %v1722 = vmul.f32 %v674, %v1659
  %v1723 = vmul.f32 %v678, %v1654
  %v1724 = vmul.f32 %v678, %v1659
  %v1725 = vmul.f32 %v682, %v1654
  %v1726 = vmul.f32 %v682, %v1659
  %v1727 = vmul.f32 %v686, %v1654
  %v1728 = vmul.f32 %v686, %v1659
  %v1729 = vmul.f32 %v690, %v1654
  %v1730 = vmul.f32 %v690, %v1659
  %v1731 = vmul.f32 %v694, %v1654
  %v1732 = vmul.f32 %v694, %v1659
  %v1733 = vmul.f32 %v698, %v1654
  %v1734 = vmul.f32 %v698, %v1659
  %v1735 = vmul.f32 %v702, %v1654
  %v1736 = vmul.f32 %v702, %v1659
  %v1737 = vmul.f32 %v706, %v1654
  %v1738 = vmul.f32 %v706, %v1659
  %v1739 = vmul.f32 %v710, %v1654
  %v1740 = vmul.f32 %v710, %v1659
  %v1741 = vmul.f32 %v714, %v1654
  %v1742 = vmul.f32 %v714, %v1659
  %v1743 = vmul.f32 %v718, %v1654
  %v1744 = vmul.f32 %v718, %v1659
  %v1745 = vmul.f32 %v722, %v1654
  %v1746 = vmul.f32 %v722, %v1659
  %v1747 = vmul.f32 %v726, %v1654
  %v1748 = vmul.f32 %v726, %v1659
  %v1749 = vmul.f32 %v730, %v1654
  %v1750 = vmul.f32 %v730, %v1659
  %v1751 = vmul.f32 %v734, %v1654
  %v1752 = vmul.f32 %v734, %v1659
  %v1753 = vmul.f32 %v738, %v1654
  %v1754 = vmul.f32 %v738, %v1659
  %v1755 = vmul.f32 %v742, %v1654
  %v1756 = vmul.f32 %v742, %v1659
  %v1757 = vmul.f32 %v746, %v1654
  %v1758 = vmul.f32 %v746, %v1659
  %v1759 = vmul.f32 %v750, %v1654
  %v1760 = vmul.f32 %v750, %v1659
  %v1761 = vmul.f32 %v754, %v1654
  %v1762 = vmul.f32 %v754, %v1659
  %v1763 = vmul.f32 %v758, %v1654
  %v1764 = vmul.f32 %v758, %v1659
  %v1765 = vmul.f32 %v762, %v1654
  %v1766 = vmul.f32 %v762, %v1659
  %v1767 = vmul.f32 %v766, %v1654
  %v1768 = vmul.f32 %v766, %v1659
  %v1769 = vmul.f32 %v770, %v1654
  %v1770 = vmul.f32 %v770, %v1659
  %v1771 = vmul.f32 %v774, %v1654
  %v1772 = vmul.f32 %v774, %v1659
  %v1773 = vmul.f32 %v778, %v1654
  %v1774 = vmul.f32 %v778, %v1659
  %v1775 = vmul.f32 %v782, %v1654
  %v1776 = vmul.f32 %v782, %v1659
  %v1777 = vmul.f32 %v786, %v1654
  %v1778 = vmul.f32 %v786, %v1659
  %v1779 = vmul.f32 %v790, %v1654
  %v1780 = vmul.f32 %v790, %v1659
  %v1781 = vmul.f32 %v794, %v1654
  %v1782 = vmul.f32 %v794, %v1659
  %v1783 = vmul.f32 %v798, %v1654
  %v1784 = vmul.f32 %v798, %v1659
  %v1785 = vmul.f32 %v802, %v1654
  %v1786 = vmul.f32 %v802, %v1659
  %v1787 = vmul.f32 %v806, %v1654
  %v1788 = vmul.f32 %v806, %v1659
  %v1789 = vmul.f32 %v810, %v1654
  %v1790 = vmul.f32 %v810, %v1659
  %v1791 = vmul.f32 %v814, %v1654
  %v1792 = vmul.f32 %v814, %v1659
  %v1793 = vmul.f32 %v818, %v1654
  %v1794 = vmul.f32 %v818, %v1659
  %v1795 = vmul.f32 %v822, %v1654
  %v1796 = vmul.f32 %v822, %v1659
  %v1797 = vmul.f32 %v826, %v1654
  %v1798 = vmul.f32 %v826, %v1659
  %v1799 = vmul.f32 %v830, %v1654
  %v1800 = vmul.f32 %v830, %v1659
  %v1801 = vmul.f32 %v834, %v1654
  %v1802 = vmul.f32 %v834, %v1659
  %v1803 = vmul.f32 %v838, %v1654
  %v1804 = vmul.f32 %v838, %v1659
  %v1805 = vmul.f32 %v842, %v1654
  %v1806 = vmul.f32 %v842, %v1659
  %v1807 = vmul.f32 %v846, %v1654
  %v1808 = vmul.f32 %v846, %v1659
  %v1809 = vmul.f32 %v850, %v1654
  %v1810 = vmul.f32 %v850, %v1659
  %v1811 = vmul.f32 %v854, %v1654
  %v1812 = vmul.f32 %v854, %v1659
  %v1813 = vmul.f32 %v858, %v1654
  %v1814 = vmul.f32 %v858, %v1659
  %v1815 = vmul.f32 %v862, %v1654
  %v1816 = vmul.f32 %v862, %v1659
  %v1817 = vmul.f32 %v866, %v1654
  %v1818 = vmul.f32 %v866, %v1659
  %v1819 = vmul.f32 %v870, %v1654
  %v1820 = vmul.f32 %v870, %v1659
  %v1821 = vmul.f32 %v874, %v1654
  %v1822 = vmul.f32 %v874, %v1659
  %v1823 = vmul.f32 %v878, %v1654
  %v1824 = vmul.f32 %v878, %v1659
  %v1825 = vmul.f32 %v882, %v1654
  %v1826 = vmul.f32 %v882, %v1659
  %v1827 = vmul.f32 %v886, %v1654
  %v1828 = vmul.f32 %v886, %v1659
  %v1829 = vmul.f32 %v890, %v1654
  %v1830 = vmul.f32 %v890, %v1659
  %v1831 = vmul.f32 %v894, %v1654
  %v1832 = vmul.f32 %v894, %v1659
  %v1833 = vmul.f32 %v898, %v1654
  %v1834 = vmul.f32 %v898, %v1659
  %v1835 = vmul.f32 %v902, %v1654
  %v1836 = vmul.f32 %v902, %v1659
  %v1837 = vmul.f32 %v906, %v1654
  %v1838 = vmul.f32 %v906, %v1659
  %v1839 = vmul.f32 %v910, %v1654
  %v1840 = vmul.f32 %v910, %v1659
  %v1841 = vmul.f32 %v914, %v1654
  %v1842 = vmul.f32 %v914, %v1659
  %v1843 = vmul.f32 %v918, %v1654
  %v1844 = vmul.f32 %v918, %v1659
  %v1845 = vmul.f32 %v922, %v1654
  %v1846 = vmul.f32 %v922, %v1659
  %v1847 = vmul.f32 %v926, %v1654
  %v1848 = vmul.f32 %v926, %v1659
  %v1849 = vmul.f32 %v930, %v1654
  %v1850 = vmul.f32 %v930, %v1659
  %v1851 = vmul.f32 %v934, %v1654
  %v1852 = vmul.f32 %v934, %v1659
  %v1853 = vmul.f32 %v938, %v1654
  %v1854 = vmul.f32 %v938, %v1659
  %v1855 = vmul.f32 %v942, %v1654
  %v1856 = vmul.f32 %v942, %v1659
  %v1857 = vmul.f32 %v946, %v1654
  %v1858 = vmul.f32 %v946, %v1659
  %v1859 = vmul.f32 %v950, %v1654
  %v1860 = vmul.f32 %v950, %v1659
  %v1861 = vmul.f32 %v954, %v1654
  %v1862 = vmul.f32 %v954, %v1659
  %v1863 = vmul.f32 %v958, %v1654
  %v1864 = vmul.f32 %v958, %v1659
  %v1865 = vmul.f32 %v962, %v1654
  %v1866 = vmul.f32 %v962, %v1659
  %v1867 = vmul.f32 %v966, %v1654
  %v1868 = vmul.f32 %v966, %v1659
  %v1869 = vmul.f32 %v970, %v1654
  %v1870 = vmul.f32 %v970, %v1659
  %v1871 = vmul.f32 %v974, %v1654
  %v1872 = vmul.f32 %v974, %v1659
  %v1873 = vmul.f32 %v978, %v1654
  %v1874 = vmul.f32 %v978, %v1659
  %v1875 = vmul.f32 %v982, %v1654
  %v1876 = vmul.f32 %v982, %v1659
  %v1877 = vmul.f32 %v986, %v1654
  %v1878 = vmul.f32 %v986, %v1659
  %v1879 = vmul.f32 %v990, %v1654
  %v1880 = vmul.f32 %v990, %v1659
  %v1881 = vmul.f32 %v994, %v1654
  %v1882 = vmul.f32 %v994, %v1659
  %v1883 = vmul.f32 %v998, %v1654
  %v1884 = vmul.f32 %v998, %v1659
  %v1885 = vmul.f32 %v1002, %v1654
  %v1886 = vmul.f32 %v1002, %v1659
  %v1887 = vmul.f32 %v1006, %v1654
  %v1888 = vmul.f32 %v1006, %v1659
  %v1889 = vmul.f32 %v1010, %v1654
  %v1890 = vmul.f32 %v1010, %v1659
  %v1891 = vmul.f32 %v1014, %v1654
  %v1892 = vmul.f32 %v1014, %v1659
  %v1893 = vmul.f32 %v1018, %v1654
  %v1894 = vmul.f32 %v1018, %v1659
  %v1895 = vmul.f32 %v1022, %v1654
  %v1896 = vmul.f32 %v1022, %v1659
  %v1897 = vmul.f32 %v1026, %v1654
  %v1898 = vmul.f32 %v1026, %v1659
  %v1899 = vmul.f32 %v1030, %v1654
  %v1900 = vmul.f32 %v1030, %v1659
  %v1901 = vmul.f32 %v1034, %v1654
  %v1902 = vmul.f32 %v1034, %v1659
  %v1903 = vmul.f32 %v1038, %v1654
  %v1904 = vmul.f32 %v1038, %v1659
  %v1905 = vmul.f32 %v1042, %v1654
  %v1906 = vmul.f32 %v1042, %v1659
  %v1907 = vmul.f32 %v1046, %v1654
  %v1908 = vmul.f32 %v1046, %v1659
  %v1909 = vmul.f32 %v1050, %v1654
  %v1910 = vmul.f32 %v1050, %v1659
  %v1911 = vmul.f32 %v1054, %v1654
  %v1912 = vmul.f32 %v1054, %v1659
  %v1913 = vmul.f32 %v1058, %v1654
  %v1914 = vmul.f32 %v1058, %v1659
  %v1915 = vmul.f32 %v1062, %v1654
  %v1916 = vmul.f32 %v1062, %v1659
  %v1917 = vmul.f32 %v1066, %v1654
  %v1918 = vmul.f32 %v1066, %v1659
  %v1919 = vmul.f32 %v1070, %v1654
  %v1920 = vmul.f32 %v1070, %v1659
  %v1921 = vmul.f32 %v1074, %v1654
  %v1922 = vmul.f32 %v1074, %v1659
  %v1923 = vmul.f32 %v1078, %v1654
  %v1924 = vmul.f32 %v1078, %v1659
  %v1925 = vmul.f32 %v1082, %v1654
  %v1926 = vmul.f32 %v1082, %v1659
  %v1927 = vmul.f32 %v1086, %v1654
  %v1928 = vmul.f32 %v1086, %v1659
  %v1929 = vmul.f32 %v1090, %v1654
  %v1930 = vmul.f32 %v1090, %v1659
  %v1931 = vmul.f32 %v1094, %v1654
  %v1932 = vmul.f32 %v1094, %v1659
  %v1933 = vmul.f32 %v1098, %v1654
  %v1934 = vmul.f32 %v1098, %v1659
  %v1935 = vmul.f32 %v1102, %v1654
  %v1936 = vmul.f32 %v1102, %v1659
  %v1937 = vmul.f32 %v1106, %v1654
  %v1938 = vmul.f32 %v1106, %v1659
  %v1939 = vmul.f32 %v1110, %v1654
  %v1940 = vmul.f32 %v1110, %v1659
  %v1941 = vmul.f32 %v1114, %v1654
  %v1942 = vmul.f32 %v1114, %v1659
  %v1943 = vmul.f32 %v1118, %v1654
  %v1944 = vmul.f32 %v1118, %v1659
  %v1945 = vmul.f32 %v1122, %v1654
  %v1946 = vmul.f32 %v1122, %v1659
  %v1947 = vmul.f32 %v1126, %v1654
  %v1948 = vmul.f32 %v1126, %v1659
  %v1949 = vmul.f32 %v1130, %v1654
  %v1950 = vmul.f32 %v1130, %v1659
  %v1951 = vmul.f32 %v1134, %v1654
  %v1952 = vmul.f32 %v1134, %v1659
  %v1953 = vmul.f32 %v1138, %v1654
  %v1954 = vmul.f32 %v1138, %v1659
  %v1955 = vmul.f32 %v1142, %v1654
  %v1956 = vmul.f32 %v1142, %v1659
  %v1957 = vmul.f32 %v1146, %v1654
  %v1958 = vmul.f32 %v1146, %v1659
  %v1959 = vmul.f32 %v1150, %v1654
  %v1960 = vmul.f32 %v1150, %v1659
  %v1961 = vmul.f32 %v1154, %v1654
  %v1962 = vmul.f32 %v1154, %v1659
  %v1963 = vmul.f32 %v1158, %v1654
  %v1964 = vmul.f32 %v1158, %v1659
  %v1965 = vmul.f32 %v1162, %v1654
  %v1966 = vmul.f32 %v1162, %v1659
  %v1967 = vmul.f32 %v1166, %v1654
  %v1968 = vmul.f32 %v1166, %v1659
  %v1969 = vmul.f32 %v1170, %v1654
  %v1970 = vmul.f32 %v1170, %v1659
  %v1971 = vmul.f32 %v1174, %v1654
  %v1972 = vmul.f32 %v1174, %v1659
  %v1973 = vmul.f32 %v1178, %v1654
  %v1974 = vmul.f32 %v1178, %v1659
  %v1975 = vmul.f32 %v1182, %v1654
  %v1976 = vmul.f32 %v1182, %v1659
  %v1977 = vmul.f32 %v1186, %v1654
  %v1978 = vmul.f32 %v1186, %v1659
  %v1979 = vmul.f32 %v1190, %v1654
  %v1980 = vmul.f32 %v1190, %v1659
  %v1981 = vmul.f32 %v1194, %v1654
  %v1982 = vmul.f32 %v1194, %v1659
  %v1983 = vmul.f32 %v1198, %v1654
  %v1984 = vmul.f32 %v1198, %v1659
  %v1985 = vmul.f32 %v1202, %v1654
  %v1986 = vmul.f32 %v1202, %v1659
  %v1987 = vmul.f32 %v1206, %v1654
  %v1988 = vmul.f32 %v1206, %v1659
  %v1989 = vmul.f32 %v1210, %v1654
  %v1990 = vmul.f32 %v1210, %v1659
  %v1991 = vmul.f32 %v1214, %v1654
  %v1992 = vmul.f32 %v1214, %v1659
  %v1993 = vmul.f32 %v1218, %v1654
  %v1994 = vmul.f32 %v1218, %v1659
  %v1995 = vmul.f32 %v1222, %v1654
  %v1996 = vmul.f32 %v1222, %v1659
  %v1997 = vmul.f32 %v1226, %v1654
  %v1998 = vmul.f32 %v1226, %v1659
  %v1999 = vmul.f32 %v1230, %v1654
  %v2000 = vmul.f32 %v1230, %v1659
  %v2001 = vmul.f32 %v1234, %v1654
  %v2002 = vmul.f32 %v1234, %v1659
  %v2003 = vmul.f32 %v1238, %v1654
  %v2004 = vmul.f32 %v1238, %v1659
  %v2005 = vmul.f32 %v1242, %v1654
  %v2006 = vmul.f32 %v1242, %v1659
  %v2007 = vmul.f32 %v1246, %v1654
  %v2008 = vmul.f32 %v1246, %v1659
  %v2009 = vmul.f32 %v1250, %v1654
  %v2010 = vmul.f32 %v1250, %v1659
  %v2011 = vmul.f32 %v1254, %v1654
  %v2012 = vmul.f32 %v1254, %v1659
  %v2013 = vmul.f32 %v1258, %v1654
  %v2014 = vmul.f32 %v1258, %v1659
  %v2015 = vmul.f32 %v1262, %v1654
  %v2016 = vmul.f32 %v1262, %v1659
  %v2017 = vmul.f32 %v1266, %v1654
  %v2018 = vmul.f32 %v1266, %v1659
  %v2019 = vmul.f32 %v1270, %v1654
  %v2020 = vmul.f32 %v1270, %v1659
  %v2021 = vmul.f32 %v1274, %v1654
  %v2022 = vmul.f32 %v1274, %v1659
  %v2023 = vmul.f32 %v1278, %v1654
  %v2024 = vmul.f32 %v1278, %v1659
  %v2025 = vmul.f32 %v1282, %v1654
  %v2026 = vmul.f32 %v1282, %v1659
  %v2027 = vmul.f32 %v1286, %v1654
  %v2028 = vmul.f32 %v1286, %v1659
  %v2029 = vmul.f32 %v1290, %v1654
  %v2030 = vmul.f32 %v1290, %v1659
  %v2031 = vmul.f32 %v1294, %v1654
  %v2032 = vmul.f32 %v1294, %v1659
  %v2033 = vmul.f32 %v1298, %v1654
  %v2034 = vmul.f32 %v1298, %v1659
  %v2035 = vmul.f32 %v1302, %v1654
  %v2036 = vmul.f32 %v1302, %v1659
  %v2037 = vmul.f32 %v1306, %v1654
  %v2038 = vmul.f32 %v1306, %v1659
  %v2039 = vmul.f32 %v1310, %v1654
  %v2040 = vmul.f32 %v1310, %v1659
  %v2041 = vmul.f32 %v1314, %v1654
  %v2042 = vmul.f32 %v1314, %v1659
  %v2043 = vmul.f32 %v1318, %v1654
  %v2044 = vmul.f32 %v1318, %v1659
  %v2045 = vmul.f32 %v1322, %v1654
  %v2046 = vmul.f32 %v1322, %v1659
  %v2047 = vmul.f32 %v1326, %v1654
  %v2048 = vmul.f32 %v1326, %v1659
  %v2049 = vmul.f32 %v1330, %v1654
  %v2050 = vmul.f32 %v1330, %v1659
  %v2051 = vmul.f32 %v1334, %v1654
  %v2052 = vmul.f32 %v1334, %v1659
  %v2053 = vmul.f32 %v1338, %v1654
  %v2054 = vmul.f32 %v1338, %v1659
  %v2055 = vmul.f32 %v1342, %v1654
  %v2056 = vmul.f32 %v1342, %v1659
  %v2057 = vmul.f32 %v1346, %v1654
  %v2058 = vmul.f32 %v1346, %v1659
  %v2059 = vmul.f32 %v1350, %v1654
  %v2060 = vmul.f32 %v1350, %v1659
  %v2061 = vmul.f32 %v1354, %v1654
  %v2062 = vmul.f32 %v1354, %v1659
  %v2063 = vmul.f32 %v1358, %v1654
  %v2064 = vmul.f32 %v1358, %v1659
  %v2065 = vmul.f32 %v1362, %v1654
  %v2066 = vmul.f32 %v1362, %v1659
  %v2067 = vmul.f32 %v1366, %v1654
  %v2068 = vmul.f32 %v1366, %v1659
  %v2069 = vmul.f32 %v1370, %v1654
  %v2070 = vmul.f32 %v1370, %v1659
  %v2071 = vmul.f32 %v1374, %v1654
  %v2072 = vmul.f32 %v1374, %v1659
  %v2073 = vmul.f32 %v1378, %v1654
  %v2074 = vmul.f32 %v1378, %v1659
  %v2075 = vmul.f32 %v1382, %v1654
  %v2076 = vmul.f32 %v1382, %v1659
  %v2077 = vmul.f32 %v1386, %v1654
  %v2078 = vmul.f32 %v1386, %v1659
  %v2079 = vmul.f32 %v1390, %v1654
  %v2080 = vmul.f32 %v1390, %v1659
  %v2081 = vmul.f32 %v1394, %v1654
  %v2082 = vmul.f32 %v1394, %v1659
  %v2083 = vmul.f32 %v1398, %v1654
  %v2084 = vmul.f32 %v1398, %v1659
  %v2085 = vmul.f32 %v1402, %v1654
  %v2086 = vmul.f32 %v1402, %v1659
  %v2087 = vmul.f32 %v1406, %v1654
  %v2088 = vmul.f32 %v1406, %v1659
  %v2089 = vmul.f32 %v1410, %v1654
  %v2090 = vmul.f32 %v1410, %v1659
  %v2091 = vmul.f32 %v1414, %v1654
  %v2092 = vmul.f32 %v1414, %v1659
  %v2093 = vmul.f32 %v1418, %v1654
  %v2094 = vmul.f32 %v1418, %v1659
  %v2095 = vmul.f32 %v1422, %v1654
  %v2096 = vmul.f32 %v1422, %v1659
  %v2097 = vmul.f32 %v1426, %v1654
  %v2098 = vmul.f32 %v1426, %v1659
  %v2099 = vmul.f32 %v1430, %v1654
  %v2100 = vmul.f32 %v1430, %v1659
  %v2112 = vlaneseq
  %v2113 = vshrl.u32 %v2112, 7
  %v2114 = vsub.s32 0, %v2113
  %v2115 = vrot.slane %v47, %v2114
  %v2116 = vlaneseq
  %v2117 = vshrl.u32 %v2116, 7
  %v2118 = vsub.s32 0, %v2117
  %v2119 = vrot.slane %v69, %v2118
  %v2120 = vlaneseq
  %v2121 = vshrl.u32 %v2120, 7
  %v2122 = vsub.s32 0, %v2121
  %v2123 = vrot.slane %v91, %v2122
  %v2124 = vlaneseq
  %v2125 = vshrl.u32 %v2124, 7
  %v2126 = vsub.s32 0, %v2125
  %v2127 = vrot.slane %v113, %v2126
  %v2128 = vlaneseq
  %v2129 = vshrl.u32 %v2128, 7
  %v2130 = vsub.s32 0, %v2129
  %v2131 = vrot.slane %v135, %v2130
  %v2132 = vlaneseq
  %v2133 = vshrl.u32 %v2132, 7
  %v2134 = vsub.s32 0, %v2133
  %v2135 = vrot.slane %v157, %v2134
  %v2136 = vlaneseq
  %v2137 = vshrl.u32 %v2136, 7
  %v2138 = vsub.s32 0, %v2137
  %v2139 = vrot.slane %v179, %v2138
  %v2140 = vlaneseq
  %v2141 = vshrl.u32 %v2140, 7
  %v2142 = vsub.s32 0, %v2141
  %v2143 = vrot.slane %v201, %v2142
  %v2144 = vlaneseq
  %v2145 = vshrl.u32 %v2144, 7
  %v2146 = vsub.s32 0, %v2145
  %v2147 = vrot.slane %v223, %v2146
  %v2148 = vlaneseq
  %v2149 = vshrl.u32 %v2148, 7
  %v2150 = vsub.s32 0, %v2149
  %v2151 = vrot.slane %v245, %v2150
  %v2152 = vlaneseq
  %v2153 = vshrl.u32 %v2152, 7
  %v2154 = vsub.s32 0, %v2153
  %v2155 = vrot.slane %v267, %v2154
  %2168 = vset.pattern.permute.xlu0 0
  %2169 = vperm.xlu0 %2168, %v315
  %v2170 = vpop.permute.xlu0 %2169
  %2173 = vset.pattern.permute.xlu0 0
  %2174 = vperm.xlu0 %2173, %v316
  %v2175 = vpop.permute.xlu0 %2174
  %v2177 = vmul.f32 %v558, %v2170
  %v2178 = vmul.f32 %v558, %v2175
  %v2179 = vmul.f32 %v562, %v2170
  %v2180 = vmul.f32 %v562, %v2175
  %v2181 = vmul.f32 %v566, %v2170
  %v2182 = vmul.f32 %v566, %v2175
  %v2183 = vmul.f32 %v570, %v2170
  %v2184 = vmul.f32 %v570, %v2175
  %v2185 = vmul.f32 %v574, %v2170
  %v2186 = vmul.f32 %v574, %v2175
  %v2187 = vmul.f32 %v578, %v2170
  %v2188 = vmul.f32 %v578, %v2175
  %v2189 = vmul.f32 %v582, %v2170
  %v2190 = vmul.f32 %v582, %v2175
  %v2191 = vmul.f32 %v586, %v2170
  %v2192 = vmul.f32 %v586, %v2175
  %v2193 = vmul.f32 %v590, %v2170
  %v2194 = vmul.f32 %v590, %v2175
  %v2195 = vmul.f32 %v594, %v2170
  %v2196 = vmul.f32 %v594, %v2175
  %v2197 = vmul.f32 %v598, %v2170
  %v2198 = vmul.f32 %v598, %v2175
  %v2199 = vmul.f32 %v602, %v2170
  %v2200 = vmul.f32 %v602, %v2175
  %v2201 = vmul.f32 %v606, %v2170
  %v2202 = vmul.f32 %v606, %v2175
  %v2203 = vmul.f32 %v610, %v2170
  %v2204 = vmul.f32 %v610, %v2175
  %v2205 = vmul.f32 %v614, %v2170
  %v2206 = vmul.f32 %v614, %v2175
  %v2207 = vmul.f32 %v618, %v2170
  %v2208 = vmul.f32 %v618, %v2175
  %v2209 = vmul.f32 %v622, %v2170
  %v2210 = vmul.f32 %v622, %v2175
  %v2211 = vmul.f32 %v626, %v2170
  %v2212 = vmul.f32 %v626, %v2175
  %v2213 = vmul.f32 %v630, %v2170
  %v2214 = vmul.f32 %v630, %v2175
  %v2215 = vmul.f32 %v2115, %v2170
  %v2216 = vmul.f32 %v2115, %v2175
  %v2217 = vmul.f32 %v638, %v2170
  %v2218 = vmul.f32 %v638, %v2175
  %v2219 = vmul.f32 %v642, %v2170
  %v2220 = vmul.f32 %v642, %v2175
  %v2221 = vmul.f32 %v646, %v2170
  %v2222 = vmul.f32 %v646, %v2175
  %v2223 = vmul.f32 %v650, %v2170
  %v2224 = vmul.f32 %v650, %v2175
  %v2225 = vmul.f32 %v654, %v2170
  %v2226 = vmul.f32 %v654, %v2175
  %v2227 = vmul.f32 %v658, %v2170
  %v2228 = vmul.f32 %v658, %v2175
  %v2229 = vmul.f32 %v662, %v2170
  %v2230 = vmul.f32 %v662, %v2175
  %v2231 = vmul.f32 %v666, %v2170
  %v2232 = vmul.f32 %v666, %v2175
  %v2233 = vmul.f32 %v670, %v2170
  %v2234 = vmul.f32 %v670, %v2175
  %v2235 = vmul.f32 %v674, %v2170
  %v2236 = vmul.f32 %v674, %v2175
  %v2237 = vmul.f32 %v678, %v2170
  %v2238 = vmul.f32 %v678, %v2175
  %v2239 = vmul.f32 %v682, %v2170
  %v2240 = vmul.f32 %v682, %v2175
  %v2241 = vmul.f32 %v686, %v2170
  %v2242 = vmul.f32 %v686, %v2175
  %v2243 = vmul.f32 %v690, %v2170
  %v2244 = vmul.f32 %v690, %v2175
  %v2245 = vmul.f32 %v694, %v2170
  %v2246 = vmul.f32 %v694, %v2175
  %v2247 = vmul.f32 %v698, %v2170
  %v2248 = vmul.f32 %v698, %v2175
  %v2249 = vmul.f32 %v702, %v2170
  %v2250 = vmul.f32 %v702, %v2175
  %v2251 = vmul.f32 %v706, %v2170
  %v2252 = vmul.f32 %v706, %v2175
  %v2253 = vmul.f32 %v710, %v2170
  %v2254 = vmul.f32 %v710, %v2175
  %v2255 = vmul.f32 %v2119, %v2170
  %v2256 = vmul.f32 %v2119, %v2175
  %v2257 = vmul.f32 %v718, %v2170
  %v2258 = vmul.f32 %v718, %v2175
  %v2259 = vmul.f32 %v722, %v2170
  %v2260 = vmul.f32 %v722, %v2175
  %v2261 = vmul.f32 %v726, %v2170
  %v2262 = vmul.f32 %v726, %v2175
  %v2263 = vmul.f32 %v730, %v2170
  %v2264 = vmul.f32 %v730, %v2175
  %v2265 = vmul.f32 %v734, %v2170
  %v2266 = vmul.f32 %v734, %v2175
  %v2267 = vmul.f32 %v738, %v2170
  %v2268 = vmul.f32 %v738, %v2175
  %v2269 = vmul.f32 %v742, %v2170
  %v2270 = vmul.f32 %v742, %v2175
  %v2271 = vmul.f32 %v746, %v2170
  %v2272 = vmul.f32 %v746, %v2175
  %v2273 = vmul.f32 %v750, %v2170
  %v2274 = vmul.f32 %v750, %v2175
  %v2275 = vmul.f32 %v754, %v2170
  %v2276 = vmul.f32 %v754, %v2175
  %v2277 = vmul.f32 %v758, %v2170
  %v2278 = vmul.f32 %v758, %v2175
  %v2279 = vmul.f32 %v762, %v2170
  %v2280 = vmul.f32 %v762, %v2175
  %v2281 = vmul.f32 %v766, %v2170
  %v2282 = vmul.f32 %v766, %v2175
  %v2283 = vmul.f32 %v770, %v2170
  %v2284 = vmul.f32 %v770, %v2175
  %v2285 = vmul.f32 %v774, %v2170
  %v2286 = vmul.f32 %v774, %v2175
  %v2287 = vmul.f32 %v778, %v2170
  %v2288 = vmul.f32 %v778, %v2175
  %v2289 = vmul.f32 %v782, %v2170
  %v2290 = vmul.f32 %v782, %v2175
  %v2291 = vmul.f32 %v786, %v2170
  %v2292 = vmul.f32 %v786, %v2175
  %v2293 = vmul.f32 %v790, %v2170
  %v2294 = vmul.f32 %v790, %v2175
  %v2295 = vmul.f32 %v2123, %v2170
  %v2296 = vmul.f32 %v2123, %v2175
  %v2297 = vmul.f32 %v798, %v2170
  %v2298 = vmul.f32 %v798, %v2175
  %v2299 = vmul.f32 %v802, %v2170
  %v2300 = vmul.f32 %v802, %v2175
  %v2301 = vmul.f32 %v806, %v2170
  %v2302 = vmul.f32 %v806, %v2175
  %v2303 = vmul.f32 %v810, %v2170
  %v2304 = vmul.f32 %v810, %v2175
  %v2305 = vmul.f32 %v814, %v2170
  %v2306 = vmul.f32 %v814, %v2175
  %v2307 = vmul.f32 %v818, %v2170
  %v2308 = vmul.f32 %v818, %v2175
  %v2309 = vmul.f32 %v822, %v2170
  %v2310 = vmul.f32 %v822, %v2175
  %v2311 = vmul.f32 %v826, %v2170
  %v2312 = vmul.f32 %v826, %v2175
  %v2313 = vmul.f32 %v830, %v2170
  %v2314 = vmul.f32 %v830, %v2175
  %v2315 = vmul.f32 %v834, %v2170
  %v2316 = vmul.f32 %v834, %v2175
  %v2317 = vmul.f32 %v838, %v2170
  %v2318 = vmul.f32 %v838, %v2175
  %v2319 = vmul.f32 %v842, %v2170
  %v2320 = vmul.f32 %v842, %v2175
  %v2321 = vmul.f32 %v846, %v2170
  %v2322 = vmul.f32 %v846, %v2175
  %v2323 = vmul.f32 %v850, %v2170
  %v2324 = vmul.f32 %v850, %v2175
  %v2325 = vmul.f32 %v854, %v2170
  %v2326 = vmul.f32 %v854, %v2175
  %v2327 = vmul.f32 %v858, %v2170
  %v2328 = vmul.f32 %v858, %v2175
  %v2329 = vmul.f32 %v862, %v2170
  %v2330 = vmul.f32 %v862, %v2175
  %v2331 = vmul.f32 %v866, %v2170
  %v2332 = vmul.f32 %v866, %v2175
  %v2333 = vmul.f32 %v870, %v2170
  %v2334 = vmul.f32 %v870, %v2175
  %v2335 = vmul.f32 %v2127, %v2170
  %v2336 = vmul.f32 %v2127, %v2175
  %v2337 = vmul.f32 %v878, %v2170
  %v2338 = vmul.f32 %v878, %v2175
  %v2339 = vmul.f32 %v882, %v2170
  %v2340 = vmul.f32 %v882, %v2175
  %v2341 = vmul.f32 %v886, %v2170
  %v2342 = vmul.f32 %v886, %v2175
  %v2343 = vmul.f32 %v890, %v2170
  %v2344 = vmul.f32 %v890, %v2175
  %v2345 = vmul.f32 %v894, %v2170
  %v2346 = vmul.f32 %v894, %v2175
  %v2347 = vmul.f32 %v898, %v2170
  %v2348 = vmul.f32 %v898, %v2175
  %v2349 = vmul.f32 %v902, %v2170
  %v2350 = vmul.f32 %v902, %v2175
  %v2351 = vmul.f32 %v906, %v2170
  %v2352 = vmul.f32 %v906, %v2175
  %v2353 = vmul.f32 %v910, %v2170
  %v2354 = vmul.f32 %v910, %v2175
  %v2355 = vmul.f32 %v914, %v2170
  %v2356 = vmul.f32 %v914, %v2175
  %v2357 = vmul.f32 %v918, %v2170
  %v2358 = vmul.f32 %v918, %v2175
  %v2359 = vmul.f32 %v922, %v2170
  %v2360 = vmul.f32 %v922, %v2175
  %v2361 = vmul.f32 %v926, %v2170
  %v2362 = vmul.f32 %v926, %v2175
  %v2363 = vmul.f32 %v930, %v2170
  %v2364 = vmul.f32 %v930, %v2175
  %v2365 = vmul.f32 %v934, %v2170
  %v2366 = vmul.f32 %v934, %v2175
  %v2367 = vmul.f32 %v938, %v2170
  %v2368 = vmul.f32 %v938, %v2175
  %v2369 = vmul.f32 %v942, %v2170
  %v2370 = vmul.f32 %v942, %v2175
  %v2371 = vmul.f32 %v946, %v2170
  %v2372 = vmul.f32 %v946, %v2175
  %v2373 = vmul.f32 %v950, %v2170
  %v2374 = vmul.f32 %v950, %v2175
  %v2375 = vmul.f32 %v2131, %v2170
  %v2376 = vmul.f32 %v2131, %v2175
  %v2377 = vmul.f32 %v958, %v2170
  %v2378 = vmul.f32 %v958, %v2175
  %v2379 = vmul.f32 %v962, %v2170
  %v2380 = vmul.f32 %v962, %v2175
  %v2381 = vmul.f32 %v966, %v2170
  %v2382 = vmul.f32 %v966, %v2175
  %v2383 = vmul.f32 %v970, %v2170
  %v2384 = vmul.f32 %v970, %v2175
  %v2385 = vmul.f32 %v974, %v2170
  %v2386 = vmul.f32 %v974, %v2175
  %v2387 = vmul.f32 %v978, %v2170
  %v2388 = vmul.f32 %v978, %v2175
  %v2389 = vmul.f32 %v982, %v2170
  %v2390 = vmul.f32 %v982, %v2175
  %v2391 = vmul.f32 %v986, %v2170
  %v2392 = vmul.f32 %v986, %v2175
  %v2393 = vmul.f32 %v990, %v2170
  %v2394 = vmul.f32 %v990, %v2175
  %v2395 = vmul.f32 %v994, %v2170
  %v2396 = vmul.f32 %v994, %v2175
  %v2397 = vmul.f32 %v998, %v2170
  %v2398 = vmul.f32 %v998, %v2175
  %v2399 = vmul.f32 %v1002, %v2170
  %v2400 = vmul.f32 %v1002, %v2175
  %v2401 = vmul.f32 %v1006, %v2170
  %v2402 = vmul.f32 %v1006, %v2175
  %v2403 = vmul.f32 %v1010, %v2170
  %v2404 = vmul.f32 %v1010, %v2175
  %v2405 = vmul.f32 %v1014, %v2170
  %v2406 = vmul.f32 %v1014, %v2175
  %v2407 = vmul.f32 %v1018, %v2170
  %v2408 = vmul.f32 %v1018, %v2175
  %v2409 = vmul.f32 %v1022, %v2170
  %v2410 = vmul.f32 %v1022, %v2175
  %v2411 = vmul.f32 %v1026, %v2170
  %v2412 = vmul.f32 %v1026, %v2175
  %v2413 = vmul.f32 %v1030, %v2170
  %v2414 = vmul.f32 %v1030, %v2175
  %v2415 = vmul.f32 %v2135, %v2170
  %v2416 = vmul.f32 %v2135, %v2175
  %v2417 = vmul.f32 %v1038, %v2170
  %v2418 = vmul.f32 %v1038, %v2175
  %v2419 = vmul.f32 %v1042, %v2170
  %v2420 = vmul.f32 %v1042, %v2175
  %v2421 = vmul.f32 %v1046, %v2170
  %v2422 = vmul.f32 %v1046, %v2175
  %v2423 = vmul.f32 %v1050, %v2170
  %v2424 = vmul.f32 %v1050, %v2175
  %v2425 = vmul.f32 %v1054, %v2170
  %v2426 = vmul.f32 %v1054, %v2175
  %v2427 = vmul.f32 %v1058, %v2170
  %v2428 = vmul.f32 %v1058, %v2175
  %v2429 = vmul.f32 %v1062, %v2170
  %v2430 = vmul.f32 %v1062, %v2175
  %v2431 = vmul.f32 %v1066, %v2170
  %v2432 = vmul.f32 %v1066, %v2175
  %v2433 = vmul.f32 %v1070, %v2170
  %v2434 = vmul.f32 %v1070, %v2175
  %v2435 = vmul.f32 %v1074, %v2170
  %v2436 = vmul.f32 %v1074, %v2175
  %v2437 = vmul.f32 %v1078, %v2170
  %v2438 = vmul.f32 %v1078, %v2175
  %v2439 = vmul.f32 %v1082, %v2170
  %v2440 = vmul.f32 %v1082, %v2175
  %v2441 = vmul.f32 %v1086, %v2170
  %v2442 = vmul.f32 %v1086, %v2175
  %v2443 = vmul.f32 %v1090, %v2170
  %v2444 = vmul.f32 %v1090, %v2175
  %v2445 = vmul.f32 %v1094, %v2170
  %v2446 = vmul.f32 %v1094, %v2175
  %v2447 = vmul.f32 %v1098, %v2170
  %v2448 = vmul.f32 %v1098, %v2175
  %v2449 = vmul.f32 %v1102, %v2170
  %v2450 = vmul.f32 %v1102, %v2175
  %v2451 = vmul.f32 %v1106, %v2170
  %v2452 = vmul.f32 %v1106, %v2175
  %v2453 = vmul.f32 %v1110, %v2170
  %v2454 = vmul.f32 %v1110, %v2175
  %v2455 = vmul.f32 %v2139, %v2170
  %v2456 = vmul.f32 %v2139, %v2175
  %v2457 = vmul.f32 %v1118, %v2170
  %v2458 = vmul.f32 %v1118, %v2175
  %v2459 = vmul.f32 %v1122, %v2170
  %v2460 = vmul.f32 %v1122, %v2175
  %v2461 = vmul.f32 %v1126, %v2170
  %v2462 = vmul.f32 %v1126, %v2175
  %v2463 = vmul.f32 %v1130, %v2170
  %v2464 = vmul.f32 %v1130, %v2175
  %v2465 = vmul.f32 %v1134, %v2170
  %v2466 = vmul.f32 %v1134, %v2175
  %v2467 = vmul.f32 %v1138, %v2170
  %v2468 = vmul.f32 %v1138, %v2175
  %v2469 = vmul.f32 %v1142, %v2170
  %v2470 = vmul.f32 %v1142, %v2175
  %v2471 = vmul.f32 %v1146, %v2170
  %v2472 = vmul.f32 %v1146, %v2175
  %v2473 = vmul.f32 %v1150, %v2170
  %v2474 = vmul.f32 %v1150, %v2175
  %v2475 = vmul.f32 %v1154, %v2170
  %v2476 = vmul.f32 %v1154, %v2175
  %v2477 = vmul.f32 %v1158, %v2170
  %v2478 = vmul.f32 %v1158, %v2175
  %v2479 = vmul.f32 %v1162, %v2170
  %v2480 = vmul.f32 %v1162, %v2175
  %v2481 = vmul.f32 %v1166, %v2170
  %v2482 = vmul.f32 %v1166, %v2175
  %v2483 = vmul.f32 %v1170, %v2170
  %v2484 = vmul.f32 %v1170, %v2175
  %v2485 = vmul.f32 %v1174, %v2170
  %v2486 = vmul.f32 %v1174, %v2175
  %v2487 = vmul.f32 %v1178, %v2170
  %v2488 = vmul.f32 %v1178, %v2175
  %v2489 = vmul.f32 %v1182, %v2170
  %v2490 = vmul.f32 %v1182, %v2175
  %v2491 = vmul.f32 %v1186, %v2170
  %v2492 = vmul.f32 %v1186, %v2175
  %v2493 = vmul.f32 %v1190, %v2170
  %v2494 = vmul.f32 %v1190, %v2175
  %v2495 = vmul.f32 %v2143, %v2170
  %v2496 = vmul.f32 %v2143, %v2175
  %v2497 = vmul.f32 %v1198, %v2170
  %v2498 = vmul.f32 %v1198, %v2175
  %v2499 = vmul.f32 %v1202, %v2170
  %v2500 = vmul.f32 %v1202, %v2175
  %v2501 = vmul.f32 %v1206, %v2170
  %v2502 = vmul.f32 %v1206, %v2175
  %v2503 = vmul.f32 %v1210, %v2170
  %v2504 = vmul.f32 %v1210, %v2175
  %v2505 = vmul.f32 %v1214, %v2170
  %v2506 = vmul.f32 %v1214, %v2175
  %v2507 = vmul.f32 %v1218, %v2170
  %v2508 = vmul.f32 %v1218, %v2175
  %v2509 = vmul.f32 %v1222, %v2170
  %v2510 = vmul.f32 %v1222, %v2175
  %v2511 = vmul.f32 %v1226, %v2170
  %v2512 = vmul.f32 %v1226, %v2175
  %v2513 = vmul.f32 %v1230, %v2170
  %v2514 = vmul.f32 %v1230, %v2175
  %v2515 = vmul.f32 %v1234, %v2170
  %v2516 = vmul.f32 %v1234, %v2175
  %v2517 = vmul.f32 %v1238, %v2170
  %v2518 = vmul.f32 %v1238, %v2175
  %v2519 = vmul.f32 %v1242, %v2170
  %v2520 = vmul.f32 %v1242, %v2175
  %v2521 = vmul.f32 %v1246, %v2170
  %v2522 = vmul.f32 %v1246, %v2175
  %v2523 = vmul.f32 %v1250, %v2170
  %v2524 = vmul.f32 %v1250, %v2175
  %v2525 = vmul.f32 %v1254, %v2170
  %v2526 = vmul.f32 %v1254, %v2175
  %v2527 = vmul.f32 %v1258, %v2170
  %v2528 = vmul.f32 %v1258, %v2175
  %v2529 = vmul.f32 %v1262, %v2170
  %v2530 = vmul.f32 %v1262, %v2175
  %v2531 = vmul.f32 %v1266, %v2170
  %v2532 = vmul.f32 %v1266, %v2175
  %v2533 = vmul.f32 %v1270, %v2170
  %v2534 = vmul.f32 %v1270, %v2175
  %v2535 = vmul.f32 %v2147, %v2170
  %v2536 = vmul.f32 %v2147, %v2175
  %v2537 = vmul.f32 %v1278, %v2170
  %v2538 = vmul.f32 %v1278, %v2175
  %v2539 = vmul.f32 %v1282, %v2170
  %v2540 = vmul.f32 %v1282, %v2175
  %v2541 = vmul.f32 %v1286, %v2170
  %v2542 = vmul.f32 %v1286, %v2175
  %v2543 = vmul.f32 %v1290, %v2170
  %v2544 = vmul.f32 %v1290, %v2175
  %v2545 = vmul.f32 %v1294, %v2170
  %v2546 = vmul.f32 %v1294, %v2175
  %v2547 = vmul.f32 %v1298, %v2170
  %v2548 = vmul.f32 %v1298, %v2175
  %v2549 = vmul.f32 %v1302, %v2170
  %v2550 = vmul.f32 %v1302, %v2175
  %v2551 = vmul.f32 %v1306, %v2170
  %v2552 = vmul.f32 %v1306, %v2175
  %v2553 = vmul.f32 %v1310, %v2170
  %v2554 = vmul.f32 %v1310, %v2175
  %v2555 = vmul.f32 %v1314, %v2170
  %v2556 = vmul.f32 %v1314, %v2175
  %v2557 = vmul.f32 %v1318, %v2170
  %v2558 = vmul.f32 %v1318, %v2175
  %v2559 = vmul.f32 %v1322, %v2170
  %v2560 = vmul.f32 %v1322, %v2175
  %v2561 = vmul.f32 %v1326, %v2170
  %v2562 = vmul.f32 %v1326, %v2175
  %v2563 = vmul.f32 %v1330, %v2170
  %v2564 = vmul.f32 %v1330, %v2175
  %v2565 = vmul.f32 %v1334, %v2170
  %v2566 = vmul.f32 %v1334, %v2175
  %v2567 = vmul.f32 %v1338, %v2170
  %v2568 = vmul.f32 %v1338, %v2175
  %v2569 = vmul.f32 %v1342, %v2170
  %v2570 = vmul.f32 %v1342, %v2175
  %v2571 = vmul.f32 %v1346, %v2170
  %v2572 = vmul.f32 %v1346, %v2175
  %v2573 = vmul.f32 %v1350, %v2170
  %v2574 = vmul.f32 %v1350, %v2175
  %v2575 = vmul.f32 %v2151, %v2170
  %v2576 = vmul.f32 %v2151, %v2175
  %v2577 = vmul.f32 %v1358, %v2170
  %v2578 = vmul.f32 %v1358, %v2175
  %v2579 = vmul.f32 %v1362, %v2170
  %v2580 = vmul.f32 %v1362, %v2175
  %v2581 = vmul.f32 %v1366, %v2170
  %v2582 = vmul.f32 %v1366, %v2175
  %v2583 = vmul.f32 %v1370, %v2170
  %v2584 = vmul.f32 %v1370, %v2175
  %v2585 = vmul.f32 %v1374, %v2170
  %v2586 = vmul.f32 %v1374, %v2175
  %v2587 = vmul.f32 %v1378, %v2170
  %v2588 = vmul.f32 %v1378, %v2175
  %v2589 = vmul.f32 %v1382, %v2170
  %v2590 = vmul.f32 %v1382, %v2175
  %v2591 = vmul.f32 %v1386, %v2170
  %v2592 = vmul.f32 %v1386, %v2175
  %v2593 = vmul.f32 %v1390, %v2170
  %v2594 = vmul.f32 %v1390, %v2175
  %v2595 = vmul.f32 %v1394, %v2170
  %v2596 = vmul.f32 %v1394, %v2175
  %v2597 = vmul.f32 %v1398, %v2170
  %v2598 = vmul.f32 %v1398, %v2175
  %v2599 = vmul.f32 %v1402, %v2170
  %v2600 = vmul.f32 %v1402, %v2175
  %v2601 = vmul.f32 %v1406, %v2170
  %v2602 = vmul.f32 %v1406, %v2175
  %v2603 = vmul.f32 %v1410, %v2170
  %v2604 = vmul.f32 %v1410, %v2175
  %v2605 = vmul.f32 %v1414, %v2170
  %v2606 = vmul.f32 %v1414, %v2175
  %v2607 = vmul.f32 %v1418, %v2170
  %v2608 = vmul.f32 %v1418, %v2175
  %v2609 = vmul.f32 %v1422, %v2170
  %v2610 = vmul.f32 %v1422, %v2175
  %v2611 = vmul.f32 %v1426, %v2170
  %v2612 = vmul.f32 %v1426, %v2175
  %v2613 = vmul.f32 %v1430, %v2170
  %v2614 = vmul.f32 %v1430, %v2175
  %v2615 = vmul.f32 %v2155, %v2170
  %v2616 = vmul.f32 %v2155, %v2175
  %v2617 = vadd.f32 %v1661, %v2177
  %v2618 = vadd.f32 %v1662, %v2178
  %v2619 = vadd.f32 %v1663, %v2179
  %v2620 = vadd.f32 %v1664, %v2180
  %v2621 = vadd.f32 %v1665, %v2181
  %v2622 = vadd.f32 %v1666, %v2182
  %v2623 = vadd.f32 %v1667, %v2183
  %v2624 = vadd.f32 %v1668, %v2184
  %v2625 = vadd.f32 %v1669, %v2185
  %v2626 = vadd.f32 %v1670, %v2186
  %v2627 = vadd.f32 %v1671, %v2187
  %v2628 = vadd.f32 %v1672, %v2188
  %v2629 = vadd.f32 %v1673, %v2189
  %v2630 = vadd.f32 %v1674, %v2190
  %v2631 = vadd.f32 %v1675, %v2191
  %v2632 = vadd.f32 %v1676, %v2192
  %v2633 = vadd.f32 %v1677, %v2193
  %v2634 = vadd.f32 %v1678, %v2194
  %v2635 = vadd.f32 %v1679, %v2195
  %v2636 = vadd.f32 %v1680, %v2196
  %v2637 = vadd.f32 %v1681, %v2197
  %v2638 = vadd.f32 %v1682, %v2198
  %v2639 = vadd.f32 %v1683, %v2199
  %v2640 = vadd.f32 %v1684, %v2200
  %v2641 = vadd.f32 %v1685, %v2201
  %v2642 = vadd.f32 %v1686, %v2202
  %v2643 = vadd.f32 %v1687, %v2203
  %v2644 = vadd.f32 %v1688, %v2204
  %v2645 = vadd.f32 %v1689, %v2205
  %v2646 = vadd.f32 %v1690, %v2206
  %v2647 = vadd.f32 %v1691, %v2207
  %v2648 = vadd.f32 %v1692, %v2208
  %v2649 = vadd.f32 %v1693, %v2209
  %v2650 = vadd.f32 %v1694, %v2210
  %v2651 = vadd.f32 %v1695, %v2211
  %v2652 = vadd.f32 %v1696, %v2212
  %v2653 = vadd.f32 %v1697, %v2213
  %v2654 = vadd.f32 %v1698, %v2214
  %v2655 = vadd.f32 %v1699, %v2215
  %v2656 = vadd.f32 %v1700, %v2216
  %v2657 = vadd.f32 %v1701, %v2217
  %v2658 = vadd.f32 %v1702, %v2218
  %v2659 = vadd.f32 %v1703, %v2219
  %v2660 = vadd.f32 %v1704, %v2220
  %v2661 = vadd.f32 %v1705, %v2221
  %v2662 = vadd.f32 %v1706, %v2222
  %v2663 = vadd.f32 %v1707, %v2223
  %v2664 = vadd.f32 %v1708, %v2224
  %v2665 = vadd.f32 %v1709, %v2225
  %v2666 = vadd.f32 %v1710, %v2226
  %v2667 = vadd.f32 %v1711, %v2227
  %v2668 = vadd.f32 %v1712, %v2228
  %v2669 = vadd.f32 %v1713, %v2229
  %v2670 = vadd.f32 %v1714, %v2230
  %v2671 = vadd.f32 %v1715, %v2231
  %v2672 = vadd.f32 %v1716, %v2232
  %v2673 = vadd.f32 %v1717, %v2233
  %v2674 = vadd.f32 %v1718, %v2234
  %v2675 = vadd.f32 %v1719, %v2235
  %v2676 = vadd.f32 %v1720, %v2236
  %v2677 = vadd.f32 %v1721, %v2237
  %v2678 = vadd.f32 %v1722, %v2238
  %v2679 = vadd.f32 %v1723, %v2239
  %v2680 = vadd.f32 %v1724, %v2240
  %v2681 = vadd.f32 %v1725, %v2241
  %v2682 = vadd.f32 %v1726, %v2242
  %v2683 = vadd.f32 %v1727, %v2243
  %v2684 = vadd.f32 %v1728, %v2244
  %v2685 = vadd.f32 %v1729, %v2245
  %v2686 = vadd.f32 %v1730, %v2246
  %v2687 = vadd.f32 %v1731, %v2247
  %v2688 = vadd.f32 %v1732, %v2248
  %v2689 = vadd.f32 %v1733, %v2249
  %v2690 = vadd.f32 %v1734, %v2250
  %v2691 = vadd.f32 %v1735, %v2251
  %v2692 = vadd.f32 %v1736, %v2252
  %v2693 = vadd.f32 %v1737, %v2253
  %v2694 = vadd.f32 %v1738, %v2254
  %v2695 = vadd.f32 %v1739, %v2255
  %v2696 = vadd.f32 %v1740, %v2256
  %v2697 = vadd.f32 %v1741, %v2257
  %v2698 = vadd.f32 %v1742, %v2258
  %v2699 = vadd.f32 %v1743, %v2259
  %v2700 = vadd.f32 %v1744, %v2260
  %v2701 = vadd.f32 %v1745, %v2261
  %v2702 = vadd.f32 %v1746, %v2262
  %v2703 = vadd.f32 %v1747, %v2263
  %v2704 = vadd.f32 %v1748, %v2264
  %v2705 = vadd.f32 %v1749, %v2265
  %v2706 = vadd.f32 %v1750, %v2266
  %v2707 = vadd.f32 %v1751, %v2267
  %v2708 = vadd.f32 %v1752, %v2268
  %v2709 = vadd.f32 %v1753, %v2269
  %v2710 = vadd.f32 %v1754, %v2270
  %v2711 = vadd.f32 %v1755, %v2271
  %v2712 = vadd.f32 %v1756, %v2272
  %v2713 = vadd.f32 %v1757, %v2273
  %v2714 = vadd.f32 %v1758, %v2274
  %v2715 = vadd.f32 %v1759, %v2275
  %v2716 = vadd.f32 %v1760, %v2276
  %v2717 = vadd.f32 %v1761, %v2277
  %v2718 = vadd.f32 %v1762, %v2278
  %v2719 = vadd.f32 %v1763, %v2279
  %v2720 = vadd.f32 %v1764, %v2280
  %v2721 = vadd.f32 %v1765, %v2281
  %v2722 = vadd.f32 %v1766, %v2282
  %v2723 = vadd.f32 %v1767, %v2283
  %v2724 = vadd.f32 %v1768, %v2284
  %v2725 = vadd.f32 %v1769, %v2285
  %v2726 = vadd.f32 %v1770, %v2286
  %v2727 = vadd.f32 %v1771, %v2287
  %v2728 = vadd.f32 %v1772, %v2288
  %v2729 = vadd.f32 %v1773, %v2289
  %v2730 = vadd.f32 %v1774, %v2290
  %v2731 = vadd.f32 %v1775, %v2291
  %v2732 = vadd.f32 %v1776, %v2292
  %v2733 = vadd.f32 %v1777, %v2293
  %v2734 = vadd.f32 %v1778, %v2294
  %v2735 = vadd.f32 %v1779, %v2295
  %v2736 = vadd.f32 %v1780, %v2296
  %v2737 = vadd.f32 %v1781, %v2297
  %v2738 = vadd.f32 %v1782, %v2298
  %v2739 = vadd.f32 %v1783, %v2299
  %v2740 = vadd.f32 %v1784, %v2300
  %v2741 = vadd.f32 %v1785, %v2301
  %v2742 = vadd.f32 %v1786, %v2302
  %v2743 = vadd.f32 %v1787, %v2303
  %v2744 = vadd.f32 %v1788, %v2304
  %v2745 = vadd.f32 %v1789, %v2305
  %v2746 = vadd.f32 %v1790, %v2306
  %v2747 = vadd.f32 %v1791, %v2307
  %v2748 = vadd.f32 %v1792, %v2308
  %v2749 = vadd.f32 %v1793, %v2309
  %v2750 = vadd.f32 %v1794, %v2310
  %v2751 = vadd.f32 %v1795, %v2311
  %v2752 = vadd.f32 %v1796, %v2312
  %v2753 = vadd.f32 %v1797, %v2313
  %v2754 = vadd.f32 %v1798, %v2314
  %v2755 = vadd.f32 %v1799, %v2315
  %v2756 = vadd.f32 %v1800, %v2316
  %v2757 = vadd.f32 %v1801, %v2317
  %v2758 = vadd.f32 %v1802, %v2318
  %v2759 = vadd.f32 %v1803, %v2319
  %v2760 = vadd.f32 %v1804, %v2320
  %v2761 = vadd.f32 %v1805, %v2321
  %v2762 = vadd.f32 %v1806, %v2322
  %v2763 = vadd.f32 %v1807, %v2323
  %v2764 = vadd.f32 %v1808, %v2324
  %v2765 = vadd.f32 %v1809, %v2325
  %v2766 = vadd.f32 %v1810, %v2326
  %v2767 = vadd.f32 %v1811, %v2327
  %v2768 = vadd.f32 %v1812, %v2328
  %v2769 = vadd.f32 %v1813, %v2329
  %v2770 = vadd.f32 %v1814, %v2330
  %v2771 = vadd.f32 %v1815, %v2331
  %v2772 = vadd.f32 %v1816, %v2332
  %v2773 = vadd.f32 %v1817, %v2333
  %v2774 = vadd.f32 %v1818, %v2334
  %v2775 = vadd.f32 %v1819, %v2335
  %v2776 = vadd.f32 %v1820, %v2336
  %v2777 = vadd.f32 %v1821, %v2337
  %v2778 = vadd.f32 %v1822, %v2338
  %v2779 = vadd.f32 %v1823, %v2339
  %v2780 = vadd.f32 %v1824, %v2340
  %v2781 = vadd.f32 %v1825, %v2341
  %v2782 = vadd.f32 %v1826, %v2342
  %v2783 = vadd.f32 %v1827, %v2343
  %v2784 = vadd.f32 %v1828, %v2344
  %v2785 = vadd.f32 %v1829, %v2345
  %v2786 = vadd.f32 %v1830, %v2346
  %v2787 = vadd.f32 %v1831, %v2347
  %v2788 = vadd.f32 %v1832, %v2348
  %v2789 = vadd.f32 %v1833, %v2349
  %v2790 = vadd.f32 %v1834, %v2350
  %v2791 = vadd.f32 %v1835, %v2351
  %v2792 = vadd.f32 %v1836, %v2352
  %v2793 = vadd.f32 %v1837, %v2353
  %v2794 = vadd.f32 %v1838, %v2354
  %v2795 = vadd.f32 %v1839, %v2355
  %v2796 = vadd.f32 %v1840, %v2356
  %v2797 = vadd.f32 %v1841, %v2357
  %v2798 = vadd.f32 %v1842, %v2358
  %v2799 = vadd.f32 %v1843, %v2359
  %v2800 = vadd.f32 %v1844, %v2360
  %v2801 = vadd.f32 %v1845, %v2361
  %v2802 = vadd.f32 %v1846, %v2362
  %v2803 = vadd.f32 %v1847, %v2363
  %v2804 = vadd.f32 %v1848, %v2364
  %v2805 = vadd.f32 %v1849, %v2365
  %v2806 = vadd.f32 %v1850, %v2366
  %v2807 = vadd.f32 %v1851, %v2367
  %v2808 = vadd.f32 %v1852, %v2368
  %v2809 = vadd.f32 %v1853, %v2369
  %v2810 = vadd.f32 %v1854, %v2370
  %v2811 = vadd.f32 %v1855, %v2371
  %v2812 = vadd.f32 %v1856, %v2372
  %v2813 = vadd.f32 %v1857, %v2373
  %v2814 = vadd.f32 %v1858, %v2374
  %v2815 = vadd.f32 %v1859, %v2375
  %v2816 = vadd.f32 %v1860, %v2376
  %v2817 = vadd.f32 %v1861, %v2377
  %v2818 = vadd.f32 %v1862, %v2378
  %v2819 = vadd.f32 %v1863, %v2379
  %v2820 = vadd.f32 %v1864, %v2380
  %v2821 = vadd.f32 %v1865, %v2381
  %v2822 = vadd.f32 %v1866, %v2382
  %v2823 = vadd.f32 %v1867, %v2383
  %v2824 = vadd.f32 %v1868, %v2384
  %v2825 = vadd.f32 %v1869, %v2385
  %v2826 = vadd.f32 %v1870, %v2386
  %v2827 = vadd.f32 %v1871, %v2387
  %v2828 = vadd.f32 %v1872, %v2388
  %v2829 = vadd.f32 %v1873, %v2389
  %v2830 = vadd.f32 %v1874, %v2390
  %v2831 = vadd.f32 %v1875, %v2391
  %v2832 = vadd.f32 %v1876, %v2392
  %v2833 = vadd.f32 %v1877, %v2393
  %v2834 = vadd.f32 %v1878, %v2394
  %v2835 = vadd.f32 %v1879, %v2395
  %v2836 = vadd.f32 %v1880, %v2396
  %v2837 = vadd.f32 %v1881, %v2397
  %v2838 = vadd.f32 %v1882, %v2398
  %v2839 = vadd.f32 %v1883, %v2399
  %v2840 = vadd.f32 %v1884, %v2400
  %v2841 = vadd.f32 %v1885, %v2401
  %v2842 = vadd.f32 %v1886, %v2402
  %v2843 = vadd.f32 %v1887, %v2403
  %v2844 = vadd.f32 %v1888, %v2404
  %v2845 = vadd.f32 %v1889, %v2405
  %v2846 = vadd.f32 %v1890, %v2406
  %v2847 = vadd.f32 %v1891, %v2407
  %v2848 = vadd.f32 %v1892, %v2408
  %v2849 = vadd.f32 %v1893, %v2409
  %v2850 = vadd.f32 %v1894, %v2410
  %v2851 = vadd.f32 %v1895, %v2411
  %v2852 = vadd.f32 %v1896, %v2412
  %v2853 = vadd.f32 %v1897, %v2413
  %v2854 = vadd.f32 %v1898, %v2414
  %v2855 = vadd.f32 %v1899, %v2415
  %v2856 = vadd.f32 %v1900, %v2416
  %v2857 = vadd.f32 %v1901, %v2417
  %v2858 = vadd.f32 %v1902, %v2418
  %v2859 = vadd.f32 %v1903, %v2419
  %v2860 = vadd.f32 %v1904, %v2420
  %v2861 = vadd.f32 %v1905, %v2421
  %v2862 = vadd.f32 %v1906, %v2422
  %v2863 = vadd.f32 %v1907, %v2423
  %v2864 = vadd.f32 %v1908, %v2424
  %v2865 = vadd.f32 %v1909, %v2425
  %v2866 = vadd.f32 %v1910, %v2426
  %v2867 = vadd.f32 %v1911, %v2427
  %v2868 = vadd.f32 %v1912, %v2428
  %v2869 = vadd.f32 %v1913, %v2429
  %v2870 = vadd.f32 %v1914, %v2430
  %v2871 = vadd.f32 %v1915, %v2431
  %v2872 = vadd.f32 %v1916, %v2432
  %v2873 = vadd.f32 %v1917, %v2433
  %v2874 = vadd.f32 %v1918, %v2434
  %v2875 = vadd.f32 %v1919, %v2435
  %v2876 = vadd.f32 %v1920, %v2436
  %v2877 = vadd.f32 %v1921, %v2437
  %v2878 = vadd.f32 %v1922, %v2438
  %v2879 = vadd.f32 %v1923, %v2439
  %v2880 = vadd.f32 %v1924, %v2440
  %v2881 = vadd.f32 %v1925, %v2441
  %v2882 = vadd.f32 %v1926, %v2442
  %v2883 = vadd.f32 %v1927, %v2443
  %v2884 = vadd.f32 %v1928, %v2444
  %v2885 = vadd.f32 %v1929, %v2445
  %v2886 = vadd.f32 %v1930, %v2446
  %v2887 = vadd.f32 %v1931, %v2447
  %v2888 = vadd.f32 %v1932, %v2448
  %v2889 = vadd.f32 %v1933, %v2449
  %v2890 = vadd.f32 %v1934, %v2450
  %v2891 = vadd.f32 %v1935, %v2451
  %v2892 = vadd.f32 %v1936, %v2452
  %v2893 = vadd.f32 %v1937, %v2453
  %v2894 = vadd.f32 %v1938, %v2454
  %v2895 = vadd.f32 %v1939, %v2455
  %v2896 = vadd.f32 %v1940, %v2456
  %v2897 = vadd.f32 %v1941, %v2457
  %v2898 = vadd.f32 %v1942, %v2458
  %v2899 = vadd.f32 %v1943, %v2459
  %v2900 = vadd.f32 %v1944, %v2460
  %v2901 = vadd.f32 %v1945, %v2461
  %v2902 = vadd.f32 %v1946, %v2462
  %v2903 = vadd.f32 %v1947, %v2463
  %v2904 = vadd.f32 %v1948, %v2464
  %v2905 = vadd.f32 %v1949, %v2465
  %v2906 = vadd.f32 %v1950, %v2466
  %v2907 = vadd.f32 %v1951, %v2467
  %v2908 = vadd.f32 %v1952, %v2468
  %v2909 = vadd.f32 %v1953, %v2469
  %v2910 = vadd.f32 %v1954, %v2470
  %v2911 = vadd.f32 %v1955, %v2471
  %v2912 = vadd.f32 %v1956, %v2472
  %v2913 = vadd.f32 %v1957, %v2473
  %v2914 = vadd.f32 %v1958, %v2474
  %v2915 = vadd.f32 %v1959, %v2475
  %v2916 = vadd.f32 %v1960, %v2476
  %v2917 = vadd.f32 %v1961, %v2477
  %v2918 = vadd.f32 %v1962, %v2478
  %v2919 = vadd.f32 %v1963, %v2479
  %v2920 = vadd.f32 %v1964, %v2480
  %v2921 = vadd.f32 %v1965, %v2481
  %v2922 = vadd.f32 %v1966, %v2482
  %v2923 = vadd.f32 %v1967, %v2483
  %v2924 = vadd.f32 %v1968, %v2484
  %v2925 = vadd.f32 %v1969, %v2485
  %v2926 = vadd.f32 %v1970, %v2486
  %v2927 = vadd.f32 %v1971, %v2487
  %v2928 = vadd.f32 %v1972, %v2488
  %v2929 = vadd.f32 %v1973, %v2489
  %v2930 = vadd.f32 %v1974, %v2490
  %v2931 = vadd.f32 %v1975, %v2491
  %v2932 = vadd.f32 %v1976, %v2492
  %v2933 = vadd.f32 %v1977, %v2493
  %v2934 = vadd.f32 %v1978, %v2494
  %v2935 = vadd.f32 %v1979, %v2495
  %v2936 = vadd.f32 %v1980, %v2496
  %v2937 = vadd.f32 %v1981, %v2497
  %v2938 = vadd.f32 %v1982, %v2498
  %v2939 = vadd.f32 %v1983, %v2499
  %v2940 = vadd.f32 %v1984, %v2500
  %v2941 = vadd.f32 %v1985, %v2501
  %v2942 = vadd.f32 %v1986, %v2502
  %v2943 = vadd.f32 %v1987, %v2503
  %v2944 = vadd.f32 %v1988, %v2504
  %v2945 = vadd.f32 %v1989, %v2505
  %v2946 = vadd.f32 %v1990, %v2506
  %v2947 = vadd.f32 %v1991, %v2507
  %v2948 = vadd.f32 %v1992, %v2508
  %v2949 = vadd.f32 %v1993, %v2509
  %v2950 = vadd.f32 %v1994, %v2510
  %v2951 = vadd.f32 %v1995, %v2511
  %v2952 = vadd.f32 %v1996, %v2512
  %v2953 = vadd.f32 %v1997, %v2513
  %v2954 = vadd.f32 %v1998, %v2514
  %v2955 = vadd.f32 %v1999, %v2515
  %v2956 = vadd.f32 %v2000, %v2516
  %v2957 = vadd.f32 %v2001, %v2517
  %v2958 = vadd.f32 %v2002, %v2518
  %v2959 = vadd.f32 %v2003, %v2519
  %v2960 = vadd.f32 %v2004, %v2520
  %v2961 = vadd.f32 %v2005, %v2521
  %v2962 = vadd.f32 %v2006, %v2522
  %v2963 = vadd.f32 %v2007, %v2523
  %v2964 = vadd.f32 %v2008, %v2524
  %v2965 = vadd.f32 %v2009, %v2525
  %v2966 = vadd.f32 %v2010, %v2526
  %v2967 = vadd.f32 %v2011, %v2527
  %v2968 = vadd.f32 %v2012, %v2528
  %v2969 = vadd.f32 %v2013, %v2529
  %v2970 = vadd.f32 %v2014, %v2530
  %v2971 = vadd.f32 %v2015, %v2531
  %v2972 = vadd.f32 %v2016, %v2532
  %v2973 = vadd.f32 %v2017, %v2533
  %v2974 = vadd.f32 %v2018, %v2534
  %v2975 = vadd.f32 %v2019, %v2535
  %v2976 = vadd.f32 %v2020, %v2536
  %v2977 = vadd.f32 %v2021, %v2537
  %v2978 = vadd.f32 %v2022, %v2538
  %v2979 = vadd.f32 %v2023, %v2539
  %v2980 = vadd.f32 %v2024, %v2540
  %v2981 = vadd.f32 %v2025, %v2541
  %v2982 = vadd.f32 %v2026, %v2542
  %v2983 = vadd.f32 %v2027, %v2543
  %v2984 = vadd.f32 %v2028, %v2544
  %v2985 = vadd.f32 %v2029, %v2545
  %v2986 = vadd.f32 %v2030, %v2546
  %v2987 = vadd.f32 %v2031, %v2547
  %v2988 = vadd.f32 %v2032, %v2548
  %v2989 = vadd.f32 %v2033, %v2549
  %v2990 = vadd.f32 %v2034, %v2550
  %v2991 = vadd.f32 %v2035, %v2551
  %v2992 = vadd.f32 %v2036, %v2552
  %v2993 = vadd.f32 %v2037, %v2553
  %v2994 = vadd.f32 %v2038, %v2554
  %v2995 = vadd.f32 %v2039, %v2555
  %v2996 = vadd.f32 %v2040, %v2556
  %v2997 = vadd.f32 %v2041, %v2557
  %v2998 = vadd.f32 %v2042, %v2558
  %v2999 = vadd.f32 %v2043, %v2559
  %v3000 = vadd.f32 %v2044, %v2560
  %v3001 = vadd.f32 %v2045, %v2561
  %v3002 = vadd.f32 %v2046, %v2562
  %v3003 = vadd.f32 %v2047, %v2563
  %v3004 = vadd.f32 %v2048, %v2564
  %v3005 = vadd.f32 %v2049, %v2565
  %v3006 = vadd.f32 %v2050, %v2566
  %v3007 = vadd.f32 %v2051, %v2567
  %v3008 = vadd.f32 %v2052, %v2568
  %v3009 = vadd.f32 %v2053, %v2569
  %v3010 = vadd.f32 %v2054, %v2570
  %v3011 = vadd.f32 %v2055, %v2571
  %v3012 = vadd.f32 %v2056, %v2572
  %v3013 = vadd.f32 %v2057, %v2573
  %v3014 = vadd.f32 %v2058, %v2574
  %v3015 = vadd.f32 %v2059, %v2575
  %v3016 = vadd.f32 %v2060, %v2576
  %v3017 = vadd.f32 %v2061, %v2577
  %v3018 = vadd.f32 %v2062, %v2578
  %v3019 = vadd.f32 %v2063, %v2579
  %v3020 = vadd.f32 %v2064, %v2580
  %v3021 = vadd.f32 %v2065, %v2581
  %v3022 = vadd.f32 %v2066, %v2582
  %v3023 = vadd.f32 %v2067, %v2583
  %v3024 = vadd.f32 %v2068, %v2584
  %v3025 = vadd.f32 %v2069, %v2585
  %v3026 = vadd.f32 %v2070, %v2586
  %v3027 = vadd.f32 %v2071, %v2587
  %v3028 = vadd.f32 %v2072, %v2588
  %v3029 = vadd.f32 %v2073, %v2589
  %v3030 = vadd.f32 %v2074, %v2590
  %v3031 = vadd.f32 %v2075, %v2591
  %v3032 = vadd.f32 %v2076, %v2592
  %v3033 = vadd.f32 %v2077, %v2593
  %v3034 = vadd.f32 %v2078, %v2594
  %v3035 = vadd.f32 %v2079, %v2595
  %v3036 = vadd.f32 %v2080, %v2596
  %v3037 = vadd.f32 %v2081, %v2597
  %v3038 = vadd.f32 %v2082, %v2598
  %v3039 = vadd.f32 %v2083, %v2599
  %v3040 = vadd.f32 %v2084, %v2600
  %v3041 = vadd.f32 %v2085, %v2601
  %v3042 = vadd.f32 %v2086, %v2602
  %v3043 = vadd.f32 %v2087, %v2603
  %v3044 = vadd.f32 %v2088, %v2604
  %v3045 = vadd.f32 %v2089, %v2605
  %v3046 = vadd.f32 %v2090, %v2606
  %v3047 = vadd.f32 %v2091, %v2607
  %v3048 = vadd.f32 %v2092, %v2608
  %v3049 = vadd.f32 %v2093, %v2609
  %v3050 = vadd.f32 %v2094, %v2610
  %v3051 = vadd.f32 %v2095, %v2611
  %v3052 = vadd.f32 %v2096, %v2612
  %v3053 = vadd.f32 %v2097, %v2613
  %v3054 = vadd.f32 %v2098, %v2614
  %v3055 = vadd.f32 %v2099, %v2615
  %v3056 = vadd.f32 %v2100, %v2616
  %v3068 = vlaneseq
  %v3069 = vshrl.u32 %v3068, 7
  %v3070 = vsub.s32 0, %v3069
  %v3071 = vrot.slane %v48, %v3070
  %v3072 = vlaneseq
  %v3073 = vshrl.u32 %v3072, 7
  %v3074 = vsub.s32 0, %v3073
  %v3075 = vrot.slane %v70, %v3074
  %v3076 = vlaneseq
  %v3077 = vshrl.u32 %v3076, 7
  %v3078 = vsub.s32 0, %v3077
  %v3079 = vrot.slane %v92, %v3078
  %v3080 = vlaneseq
  %v3081 = vshrl.u32 %v3080, 7
  %v3082 = vsub.s32 0, %v3081
  %v3083 = vrot.slane %v114, %v3082
  %v3084 = vlaneseq
  %v3085 = vshrl.u32 %v3084, 7
  %v3086 = vsub.s32 0, %v3085
  %v3087 = vrot.slane %v136, %v3086
  %v3088 = vlaneseq
  %v3089 = vshrl.u32 %v3088, 7
  %v3090 = vsub.s32 0, %v3089
  %v3091 = vrot.slane %v158, %v3090
  %v3092 = vlaneseq
  %v3093 = vshrl.u32 %v3092, 7
  %v3094 = vsub.s32 0, %v3093
  %v3095 = vrot.slane %v180, %v3094
  %v3096 = vlaneseq
  %v3097 = vshrl.u32 %v3096, 7
  %v3098 = vsub.s32 0, %v3097
  %v3099 = vrot.slane %v202, %v3098
  %v3100 = vlaneseq
  %v3101 = vshrl.u32 %v3100, 7
  %v3102 = vsub.s32 0, %v3101
  %v3103 = vrot.slane %v224, %v3102
  %v3104 = vlaneseq
  %v3105 = vshrl.u32 %v3104, 7
  %v3106 = vsub.s32 0, %v3105
  %v3107 = vrot.slane %v246, %v3106
  %v3108 = vlaneseq
  %v3109 = vshrl.u32 %v3108, 7
  %v3110 = vsub.s32 0, %v3109
  %v3111 = vrot.slane %v268, %v3110
  %3124 = vset.pattern.permute.xlu0 0
  %3125 = vperm.xlu0 %3124, %v317
  %v3126 = vpop.permute.xlu0 %3125
  %3129 = vset.pattern.permute.xlu0 0
  %3130 = vperm.xlu0 %3129, %v318
  %v3131 = vpop.permute.xlu0 %3130
  %v3133 = vmul.f32 %v562, %v3126
  %v3134 = vmul.f32 %v562, %v3131
  %v3135 = vmul.f32 %v566, %v3126
  %v3136 = vmul.f32 %v566, %v3131
  %v3137 = vmul.f32 %v570, %v3126
  %v3138 = vmul.f32 %v570, %v3131
  %v3139 = vmul.f32 %v574, %v3126
  %v3140 = vmul.f32 %v574, %v3131
  %v3141 = vmul.f32 %v578, %v3126
  %v3142 = vmul.f32 %v578, %v3131
  %v3143 = vmul.f32 %v582, %v3126
  %v3144 = vmul.f32 %v582, %v3131
  %v3145 = vmul.f32 %v586, %v3126
  %v3146 = vmul.f32 %v586, %v3131
  %v3147 = vmul.f32 %v590, %v3126
  %v3148 = vmul.f32 %v590, %v3131
  %v3149 = vmul.f32 %v594, %v3126
  %v3150 = vmul.f32 %v594, %v3131
  %v3151 = vmul.f32 %v598, %v3126
  %v3152 = vmul.f32 %v598, %v3131
  %v3153 = vmul.f32 %v602, %v3126
  %v3154 = vmul.f32 %v602, %v3131
  %v3155 = vmul.f32 %v606, %v3126
  %v3156 = vmul.f32 %v606, %v3131
  %v3157 = vmul.f32 %v610, %v3126
  %v3158 = vmul.f32 %v610, %v3131
  %v3159 = vmul.f32 %v614, %v3126
  %v3160 = vmul.f32 %v614, %v3131
  %v3161 = vmul.f32 %v618, %v3126
  %v3162 = vmul.f32 %v618, %v3131
  %v3163 = vmul.f32 %v622, %v3126
  %v3164 = vmul.f32 %v622, %v3131
  %v3165 = vmul.f32 %v626, %v3126
  %v3166 = vmul.f32 %v626, %v3131
  %v3167 = vmul.f32 %v630, %v3126
  %v3168 = vmul.f32 %v630, %v3131
  %v3169 = vmul.f32 %v2115, %v3126
  %v3170 = vmul.f32 %v2115, %v3131
  %v3171 = vmul.f32 %v3071, %v3126
  %v3172 = vmul.f32 %v3071, %v3131
  %v3173 = vmul.f32 %v642, %v3126
  %v3174 = vmul.f32 %v642, %v3131
  %v3175 = vmul.f32 %v646, %v3126
  %v3176 = vmul.f32 %v646, %v3131
  %v3177 = vmul.f32 %v650, %v3126
  %v3178 = vmul.f32 %v650, %v3131
  %v3179 = vmul.f32 %v654, %v3126
  %v3180 = vmul.f32 %v654, %v3131
  %v3181 = vmul.f32 %v658, %v3126
  %v3182 = vmul.f32 %v658, %v3131
  %v3183 = vmul.f32 %v662, %v3126
  %v3184 = vmul.f32 %v662, %v3131
  %v3185 = vmul.f32 %v666, %v3126
  %v3186 = vmul.f32 %v666, %v3131
  %v3187 = vmul.f32 %v670, %v3126
  %v3188 = vmul.f32 %v670, %v3131
  %v3189 = vmul.f32 %v674, %v3126
  %v3190 = vmul.f32 %v674, %v3131
  %v3191 = vmul.f32 %v678, %v3126
  %v3192 = vmul.f32 %v678, %v3131
  %v3193 = vmul.f32 %v682, %v3126
  %v3194 = vmul.f32 %v682, %v3131
  %v3195 = vmul.f32 %v686, %v3126
  %v3196 = vmul.f32 %v686, %v3131
  %v3197 = vmul.f32 %v690, %v3126
  %v3198 = vmul.f32 %v690, %v3131
  %v3199 = vmul.f32 %v694, %v3126
  %v3200 = vmul.f32 %v694, %v3131
  %v3201 = vmul.f32 %v698, %v3126
  %v3202 = vmul.f32 %v698, %v3131
  %v3203 = vmul.f32 %v702, %v3126
  %v3204 = vmul.f32 %v702, %v3131
  %v3205 = vmul.f32 %v706, %v3126
  %v3206 = vmul.f32 %v706, %v3131
  %v3207 = vmul.f32 %v710, %v3126
  %v3208 = vmul.f32 %v710, %v3131
  %v3209 = vmul.f32 %v2119, %v3126
  %v3210 = vmul.f32 %v2119, %v3131
  %v3211 = vmul.f32 %v3075, %v3126
  %v3212 = vmul.f32 %v3075, %v3131
  %v3213 = vmul.f32 %v722, %v3126
  %v3214 = vmul.f32 %v722, %v3131
  %v3215 = vmul.f32 %v726, %v3126
  %v3216 = vmul.f32 %v726, %v3131
  %v3217 = vmul.f32 %v730, %v3126
  %v3218 = vmul.f32 %v730, %v3131
  %v3219 = vmul.f32 %v734, %v3126
  %v3220 = vmul.f32 %v734, %v3131
  %v3221 = vmul.f32 %v738, %v3126
  %v3222 = vmul.f32 %v738, %v3131
  %v3223 = vmul.f32 %v742, %v3126
  %v3224 = vmul.f32 %v742, %v3131
  %v3225 = vmul.f32 %v746, %v3126
  %v3226 = vmul.f32 %v746, %v3131
  %v3227 = vmul.f32 %v750, %v3126
  %v3228 = vmul.f32 %v750, %v3131
  %v3229 = vmul.f32 %v754, %v3126
  %v3230 = vmul.f32 %v754, %v3131
  %v3231 = vmul.f32 %v758, %v3126
  %v3232 = vmul.f32 %v758, %v3131
  %v3233 = vmul.f32 %v762, %v3126
  %v3234 = vmul.f32 %v762, %v3131
  %v3235 = vmul.f32 %v766, %v3126
  %v3236 = vmul.f32 %v766, %v3131
  %v3237 = vmul.f32 %v770, %v3126
  %v3238 = vmul.f32 %v770, %v3131
  %v3239 = vmul.f32 %v774, %v3126
  %v3240 = vmul.f32 %v774, %v3131
  %v3241 = vmul.f32 %v778, %v3126
  %v3242 = vmul.f32 %v778, %v3131
  %v3243 = vmul.f32 %v782, %v3126
  %v3244 = vmul.f32 %v782, %v3131
  %v3245 = vmul.f32 %v786, %v3126
  %v3246 = vmul.f32 %v786, %v3131
  %v3247 = vmul.f32 %v790, %v3126
  %v3248 = vmul.f32 %v790, %v3131
  %v3249 = vmul.f32 %v2123, %v3126
  %v3250 = vmul.f32 %v2123, %v3131
  %v3251 = vmul.f32 %v3079, %v3126
  %v3252 = vmul.f32 %v3079, %v3131
  %v3253 = vmul.f32 %v802, %v3126
  %v3254 = vmul.f32 %v802, %v3131
  %v3255 = vmul.f32 %v806, %v3126
  %v3256 = vmul.f32 %v806, %v3131
  %v3257 = vmul.f32 %v810, %v3126
  %v3258 = vmul.f32 %v810, %v3131
  %v3259 = vmul.f32 %v814, %v3126
  %v3260 = vmul.f32 %v814, %v3131
  %v3261 = vmul.f32 %v818, %v3126
  %v3262 = vmul.f32 %v818, %v3131
  %v3263 = vmul.f32 %v822, %v3126
  %v3264 = vmul.f32 %v822, %v3131
  %v3265 = vmul.f32 %v826, %v3126
  %v3266 = vmul.f32 %v826, %v3131
  %v3267 = vmul.f32 %v830, %v3126
  %v3268 = vmul.f32 %v830, %v3131
  %v3269 = vmul.f32 %v834, %v3126
  %v3270 = vmul.f32 %v834, %v3131
  %v3271 = vmul.f32 %v838, %v3126
  %v3272 = vmul.f32 %v838, %v3131
  %v3273 = vmul.f32 %v842, %v3126
  %v3274 = vmul.f32 %v842, %v3131
  %v3275 = vmul.f32 %v846, %v3126
  %v3276 = vmul.f32 %v846, %v3131
  %v3277 = vmul.f32 %v850, %v3126
  %v3278 = vmul.f32 %v850, %v3131
  %v3279 = vmul.f32 %v854, %v3126
  %v3280 = vmul.f32 %v854, %v3131
  %v3281 = vmul.f32 %v858, %v3126
  %v3282 = vmul.f32 %v858, %v3131
  %v3283 = vmul.f32 %v862, %v3126
  %v3284 = vmul.f32 %v862, %v3131
  %v3285 = vmul.f32 %v866, %v3126
  %v3286 = vmul.f32 %v866, %v3131
  %v3287 = vmul.f32 %v870, %v3126
  %v3288 = vmul.f32 %v870, %v3131
  %v3289 = vmul.f32 %v2127, %v3126
  %v3290 = vmul.f32 %v2127, %v3131
  %v3291 = vmul.f32 %v3083, %v3126
  %v3292 = vmul.f32 %v3083, %v3131
  %v3293 = vmul.f32 %v882, %v3126
  %v3294 = vmul.f32 %v882, %v3131
  %v3295 = vmul.f32 %v886, %v3126
  %v3296 = vmul.f32 %v886, %v3131
  %v3297 = vmul.f32 %v890, %v3126
  %v3298 = vmul.f32 %v890, %v3131
  %v3299 = vmul.f32 %v894, %v3126
  %v3300 = vmul.f32 %v894, %v3131
  %v3301 = vmul.f32 %v898, %v3126
  %v3302 = vmul.f32 %v898, %v3131
  %v3303 = vmul.f32 %v902, %v3126
  %v3304 = vmul.f32 %v902, %v3131
  %v3305 = vmul.f32 %v906, %v3126
  %v3306 = vmul.f32 %v906, %v3131
  %v3307 = vmul.f32 %v910, %v3126
  %v3308 = vmul.f32 %v910, %v3131
  %v3309 = vmul.f32 %v914, %v3126
  %v3310 = vmul.f32 %v914, %v3131
  %v3311 = vmul.f32 %v918, %v3126
  %v3312 = vmul.f32 %v918, %v3131
  %v3313 = vmul.f32 %v922, %v3126
  %v3314 = vmul.f32 %v922, %v3131
  %v3315 = vmul.f32 %v926, %v3126
  %v3316 = vmul.f32 %v926, %v3131
  %v3317 = vmul.f32 %v930, %v3126
  %v3318 = vmul.f32 %v930, %v3131
  %v3319 = vmul.f32 %v934, %v3126
  %v3320 = vmul.f32 %v934, %v3131
  %v3321 = vmul.f32 %v938, %v3126
  %v3322 = vmul.f32 %v938, %v3131
  %v3323 = vmul.f32 %v942, %v3126
  %v3324 = vmul.f32 %v942, %v3131
  %v3325 = vmul.f32 %v946, %v3126
  %v3326 = vmul.f32 %v946, %v3131
  %v3327 = vmul.f32 %v950, %v3126
  %v3328 = vmul.f32 %v950, %v3131
  %v3329 = vmul.f32 %v2131, %v3126
  %v3330 = vmul.f32 %v2131, %v3131
  %v3331 = vmul.f32 %v3087, %v3126
  %v3332 = vmul.f32 %v3087, %v3131
  %v3333 = vmul.f32 %v962, %v3126
  %v3334 = vmul.f32 %v962, %v3131
  %v3335 = vmul.f32 %v966, %v3126
  %v3336 = vmul.f32 %v966, %v3131
  %v3337 = vmul.f32 %v970, %v3126
  %v3338 = vmul.f32 %v970, %v3131
  %v3339 = vmul.f32 %v974, %v3126
  %v3340 = vmul.f32 %v974, %v3131
  %v3341 = vmul.f32 %v978, %v3126
  %v3342 = vmul.f32 %v978, %v3131
  %v3343 = vmul.f32 %v982, %v3126
  %v3344 = vmul.f32 %v982, %v3131
  %v3345 = vmul.f32 %v986, %v3126
  %v3346 = vmul.f32 %v986, %v3131
  %v3347 = vmul.f32 %v990, %v3126
  %v3348 = vmul.f32 %v990, %v3131
  %v3349 = vmul.f32 %v994, %v3126
  %v3350 = vmul.f32 %v994, %v3131
  %v3351 = vmul.f32 %v998, %v3126
  %v3352 = vmul.f32 %v998, %v3131
  %v3353 = vmul.f32 %v1002, %v3126
  %v3354 = vmul.f32 %v1002, %v3131
  %v3355 = vmul.f32 %v1006, %v3126
  %v3356 = vmul.f32 %v1006, %v3131
  %v3357 = vmul.f32 %v1010, %v3126
  %v3358 = vmul.f32 %v1010, %v3131
  %v3359 = vmul.f32 %v1014, %v3126
  %v3360 = vmul.f32 %v1014, %v3131
  %v3361 = vmul.f32 %v1018, %v3126
  %v3362 = vmul.f32 %v1018, %v3131
  %v3363 = vmul.f32 %v1022, %v3126
  %v3364 = vmul.f32 %v1022, %v3131
  %v3365 = vmul.f32 %v1026, %v3126
  %v3366 = vmul.f32 %v1026, %v3131
  %v3367 = vmul.f32 %v1030, %v3126
  %v3368 = vmul.f32 %v1030, %v3131
  %v3369 = vmul.f32 %v2135, %v3126
  %v3370 = vmul.f32 %v2135, %v3131
  %v3371 = vmul.f32 %v3091, %v3126
  %v3372 = vmul.f32 %v3091, %v3131
  %v3373 = vmul.f32 %v1042, %v3126
  %v3374 = vmul.f32 %v1042, %v3131
  %v3375 = vmul.f32 %v1046, %v3126
  %v3376 = vmul.f32 %v1046, %v3131
  %v3377 = vmul.f32 %v1050, %v3126
  %v3378 = vmul.f32 %v1050, %v3131
  %v3379 = vmul.f32 %v1054, %v3126
  %v3380 = vmul.f32 %v1054, %v3131
  %v3381 = vmul.f32 %v1058, %v3126
  %v3382 = vmul.f32 %v1058, %v3131
  %v3383 = vmul.f32 %v1062, %v3126
  %v3384 = vmul.f32 %v1062, %v3131
  %v3385 = vmul.f32 %v1066, %v3126
  %v3386 = vmul.f32 %v1066, %v3131
  %v3387 = vmul.f32 %v1070, %v3126
  %v3388 = vmul.f32 %v1070, %v3131
  %v3389 = vmul.f32 %v1074, %v3126
  %v3390 = vmul.f32 %v1074, %v3131
  %v3391 = vmul.f32 %v1078, %v3126
  %v3392 = vmul.f32 %v1078, %v3131
  %v3393 = vmul.f32 %v1082, %v3126
  %v3394 = vmul.f32 %v1082, %v3131
  %v3395 = vmul.f32 %v1086, %v3126
  %v3396 = vmul.f32 %v1086, %v3131
  %v3397 = vmul.f32 %v1090, %v3126
  %v3398 = vmul.f32 %v1090, %v3131
  %v3399 = vmul.f32 %v1094, %v3126
  %v3400 = vmul.f32 %v1094, %v3131
  %v3401 = vmul.f32 %v1098, %v3126
  %v3402 = vmul.f32 %v1098, %v3131
  %v3403 = vmul.f32 %v1102, %v3126
  %v3404 = vmul.f32 %v1102, %v3131
  %v3405 = vmul.f32 %v1106, %v3126
  %v3406 = vmul.f32 %v1106, %v3131
  %v3407 = vmul.f32 %v1110, %v3126
  %v3408 = vmul.f32 %v1110, %v3131
  %v3409 = vmul.f32 %v2139, %v3126
  %v3410 = vmul.f32 %v2139, %v3131
  %v3411 = vmul.f32 %v3095, %v3126
  %v3412 = vmul.f32 %v3095, %v3131
  %v3413 = vmul.f32 %v1122, %v3126
  %v3414 = vmul.f32 %v1122, %v3131
  %v3415 = vmul.f32 %v1126, %v3126
  %v3416 = vmul.f32 %v1126, %v3131
  %v3417 = vmul.f32 %v1130, %v3126
  %v3418 = vmul.f32 %v1130, %v3131
  %v3419 = vmul.f32 %v1134, %v3126
  %v3420 = vmul.f32 %v1134, %v3131
  %v3421 = vmul.f32 %v1138, %v3126
  %v3422 = vmul.f32 %v1138, %v3131
  %v3423 = vmul.f32 %v1142, %v3126
  %v3424 = vmul.f32 %v1142, %v3131
  %v3425 = vmul.f32 %v1146, %v3126
  %v3426 = vmul.f32 %v1146, %v3131
  %v3427 = vmul.f32 %v1150, %v3126
  %v3428 = vmul.f32 %v1150, %v3131
  %v3429 = vmul.f32 %v1154, %v3126
  %v3430 = vmul.f32 %v1154, %v3131
  %v3431 = vmul.f32 %v1158, %v3126
  %v3432 = vmul.f32 %v1158, %v3131
  %v3433 = vmul.f32 %v1162, %v3126
  %v3434 = vmul.f32 %v1162, %v3131
  %v3435 = vmul.f32 %v1166, %v3126
  %v3436 = vmul.f32 %v1166, %v3131
  %v3437 = vmul.f32 %v1170, %v3126
  %v3438 = vmul.f32 %v1170, %v3131
  %v3439 = vmul.f32 %v1174, %v3126
  %v3440 = vmul.f32 %v1174, %v3131
  %v3441 = vmul.f32 %v1178, %v3126
  %v3442 = vmul.f32 %v1178, %v3131
  %v3443 = vmul.f32 %v1182, %v3126
  %v3444 = vmul.f32 %v1182, %v3131
  %v3445 = vmul.f32 %v1186, %v3126
  %v3446 = vmul.f32 %v1186, %v3131
  %v3447 = vmul.f32 %v1190, %v3126
  %v3448 = vmul.f32 %v1190, %v3131
  %v3449 = vmul.f32 %v2143, %v3126
  %v3450 = vmul.f32 %v2143, %v3131
  %v3451 = vmul.f32 %v3099, %v3126
  %v3452 = vmul.f32 %v3099, %v3131
  %v3453 = vmul.f32 %v1202, %v3126
  %v3454 = vmul.f32 %v1202, %v3131
  %v3455 = vmul.f32 %v1206, %v3126
  %v3456 = vmul.f32 %v1206, %v3131
  %v3457 = vmul.f32 %v1210, %v3126
  %v3458 = vmul.f32 %v1210, %v3131
  %v3459 = vmul.f32 %v1214, %v3126
  %v3460 = vmul.f32 %v1214, %v3131
  %v3461 = vmul.f32 %v1218, %v3126
  %v3462 = vmul.f32 %v1218, %v3131
  %v3463 = vmul.f32 %v1222, %v3126
  %v3464 = vmul.f32 %v1222, %v3131
  %v3465 = vmul.f32 %v1226, %v3126
  %v3466 = vmul.f32 %v1226, %v3131
  %v3467 = vmul.f32 %v1230, %v3126
  %v3468 = vmul.f32 %v1230, %v3131
  %v3469 = vmul.f32 %v1234, %v3126
  %v3470 = vmul.f32 %v1234, %v3131
  %v3471 = vmul.f32 %v1238, %v3126
  %v3472 = vmul.f32 %v1238, %v3131
  %v3473 = vmul.f32 %v1242, %v3126
  %v3474 = vmul.f32 %v1242, %v3131
  %v3475 = vmul.f32 %v1246, %v3126
  %v3476 = vmul.f32 %v1246, %v3131
  %v3477 = vmul.f32 %v1250, %v3126
  %v3478 = vmul.f32 %v1250, %v3131
  %v3479 = vmul.f32 %v1254, %v3126
  %v3480 = vmul.f32 %v1254, %v3131
  %v3481 = vmul.f32 %v1258, %v3126
  %v3482 = vmul.f32 %v1258, %v3131
  %v3483 = vmul.f32 %v1262, %v3126
  %v3484 = vmul.f32 %v1262, %v3131
  %v3485 = vmul.f32 %v1266, %v3126
  %v3486 = vmul.f32 %v1266, %v3131
  %v3487 = vmul.f32 %v1270, %v3126
  %v3488 = vmul.f32 %v1270, %v3131
  %v3489 = vmul.f32 %v2147, %v3126
  %v3490 = vmul.f32 %v2147, %v3131
  %v3491 = vmul.f32 %v3103, %v3126
  %v3492 = vmul.f32 %v3103, %v3131
  %v3493 = vmul.f32 %v1282, %v3126
  %v3494 = vmul.f32 %v1282, %v3131
  %v3495 = vmul.f32 %v1286, %v3126
  %v3496 = vmul.f32 %v1286, %v3131
  %v3497 = vmul.f32 %v1290, %v3126
  %v3498 = vmul.f32 %v1290, %v3131
  %v3499 = vmul.f32 %v1294, %v3126
  %v3500 = vmul.f32 %v1294, %v3131
  %v3501 = vmul.f32 %v1298, %v3126
  %v3502 = vmul.f32 %v1298, %v3131
  %v3503 = vmul.f32 %v1302, %v3126
  %v3504 = vmul.f32 %v1302, %v3131
  %v3505 = vmul.f32 %v1306, %v3126
  %v3506 = vmul.f32 %v1306, %v3131
  %v3507 = vmul.f32 %v1310, %v3126
  %v3508 = vmul.f32 %v1310, %v3131
  %v3509 = vmul.f32 %v1314, %v3126
  %v3510 = vmul.f32 %v1314, %v3131
  %v3511 = vmul.f32 %v1318, %v3126
  %v3512 = vmul.f32 %v1318, %v3131
  %v3513 = vmul.f32 %v1322, %v3126
  %v3514 = vmul.f32 %v1322, %v3131
  %v3515 = vmul.f32 %v1326, %v3126
  %v3516 = vmul.f32 %v1326, %v3131
  %v3517 = vmul.f32 %v1330, %v3126
  %v3518 = vmul.f32 %v1330, %v3131
  %v3519 = vmul.f32 %v1334, %v3126
  %v3520 = vmul.f32 %v1334, %v3131
  %v3521 = vmul.f32 %v1338, %v3126
  %v3522 = vmul.f32 %v1338, %v3131
  %v3523 = vmul.f32 %v1342, %v3126
  %v3524 = vmul.f32 %v1342, %v3131
  %v3525 = vmul.f32 %v1346, %v3126
  %v3526 = vmul.f32 %v1346, %v3131
  %v3527 = vmul.f32 %v1350, %v3126
  %v3528 = vmul.f32 %v1350, %v3131
  %v3529 = vmul.f32 %v2151, %v3126
  %v3530 = vmul.f32 %v2151, %v3131
  %v3531 = vmul.f32 %v3107, %v3126
  %v3532 = vmul.f32 %v3107, %v3131
  %v3533 = vmul.f32 %v1362, %v3126
  %v3534 = vmul.f32 %v1362, %v3131
  %v3535 = vmul.f32 %v1366, %v3126
  %v3536 = vmul.f32 %v1366, %v3131
  %v3537 = vmul.f32 %v1370, %v3126
  %v3538 = vmul.f32 %v1370, %v3131
  %v3539 = vmul.f32 %v1374, %v3126
  %v3540 = vmul.f32 %v1374, %v3131
  %v3541 = vmul.f32 %v1378, %v3126
  %v3542 = vmul.f32 %v1378, %v3131
  %v3543 = vmul.f32 %v1382, %v3126
  %v3544 = vmul.f32 %v1382, %v3131
  %v3545 = vmul.f32 %v1386, %v3126
  %v3546 = vmul.f32 %v1386, %v3131
  %v3547 = vmul.f32 %v1390, %v3126
  %v3548 = vmul.f32 %v1390, %v3131
  %v3549 = vmul.f32 %v1394, %v3126
  %v3550 = vmul.f32 %v1394, %v3131
  %v3551 = vmul.f32 %v1398, %v3126
  %v3552 = vmul.f32 %v1398, %v3131
  %v3553 = vmul.f32 %v1402, %v3126
  %v3554 = vmul.f32 %v1402, %v3131
  %v3555 = vmul.f32 %v1406, %v3126
  %v3556 = vmul.f32 %v1406, %v3131
  %v3557 = vmul.f32 %v1410, %v3126
  %v3558 = vmul.f32 %v1410, %v3131
  %v3559 = vmul.f32 %v1414, %v3126
  %v3560 = vmul.f32 %v1414, %v3131
  %v3561 = vmul.f32 %v1418, %v3126
  %v3562 = vmul.f32 %v1418, %v3131
  %v3563 = vmul.f32 %v1422, %v3126
  %v3564 = vmul.f32 %v1422, %v3131
  %v3565 = vmul.f32 %v1426, %v3126
  %v3566 = vmul.f32 %v1426, %v3131
  %v3567 = vmul.f32 %v1430, %v3126
  %v3568 = vmul.f32 %v1430, %v3131
  %v3569 = vmul.f32 %v2155, %v3126
  %v3570 = vmul.f32 %v2155, %v3131
  %v3571 = vmul.f32 %v3111, %v3126
  %v3572 = vmul.f32 %v3111, %v3131
  %v3573 = vadd.f32 %v2617, %v3133
  %v3574 = vadd.f32 %v2618, %v3134
  %v3575 = vadd.f32 %v2619, %v3135
  %v3576 = vadd.f32 %v2620, %v3136
  %v3577 = vadd.f32 %v2621, %v3137
  %v3578 = vadd.f32 %v2622, %v3138
  %v3579 = vadd.f32 %v2623, %v3139
  %v3580 = vadd.f32 %v2624, %v3140
  %v3581 = vadd.f32 %v2625, %v3141
  %v3582 = vadd.f32 %v2626, %v3142
  %v3583 = vadd.f32 %v2627, %v3143
  %v3584 = vadd.f32 %v2628, %v3144
  %v3585 = vadd.f32 %v2629, %v3145
  %v3586 = vadd.f32 %v2630, %v3146
  %v3587 = vadd.f32 %v2631, %v3147
  %v3588 = vadd.f32 %v2632, %v3148
  %v3589 = vadd.f32 %v2633, %v3149
  %v3590 = vadd.f32 %v2634, %v3150
  %v3591 = vadd.f32 %v2635, %v3151
  %v3592 = vadd.f32 %v2636, %v3152
  %v3593 = vadd.f32 %v2637, %v3153
  %v3594 = vadd.f32 %v2638, %v3154
  %v3595 = vadd.f32 %v2639, %v3155
  %v3596 = vadd.f32 %v2640, %v3156
  %v3597 = vadd.f32 %v2641, %v3157
  %v3598 = vadd.f32 %v2642, %v3158
  %v3599 = vadd.f32 %v2643, %v3159
  %v3600 = vadd.f32 %v2644, %v3160
  %v3601 = vadd.f32 %v2645, %v3161
  %v3602 = vadd.f32 %v2646, %v3162
  %v3603 = vadd.f32 %v2647, %v3163
  %v3604 = vadd.f32 %v2648, %v3164
  %v3605 = vadd.f32 %v2649, %v3165
  %v3606 = vadd.f32 %v2650, %v3166
  %v3607 = vadd.f32 %v2651, %v3167
  %v3608 = vadd.f32 %v2652, %v3168
  %v3609 = vadd.f32 %v2653, %v3169
  %v3610 = vadd.f32 %v2654, %v3170
  %v3611 = vadd.f32 %v2655, %v3171
  %v3612 = vadd.f32 %v2656, %v3172
  %v3613 = vadd.f32 %v2657, %v3173
  %v3614 = vadd.f32 %v2658, %v3174
  %v3615 = vadd.f32 %v2659, %v3175
  %v3616 = vadd.f32 %v2660, %v3176
  %v3617 = vadd.f32 %v2661, %v3177
  %v3618 = vadd.f32 %v2662, %v3178
  %v3619 = vadd.f32 %v2663, %v3179
  %v3620 = vadd.f32 %v2664, %v3180
  %v3621 = vadd.f32 %v2665, %v3181
  %v3622 = vadd.f32 %v2666, %v3182
  %v3623 = vadd.f32 %v2667, %v3183
  %v3624 = vadd.f32 %v2668, %v3184
  %v3625 = vadd.f32 %v2669, %v3185
  %v3626 = vadd.f32 %v2670, %v3186
  %v3627 = vadd.f32 %v2671, %v3187
  %v3628 = vadd.f32 %v2672, %v3188
  %v3629 = vadd.f32 %v2673, %v3189
  %v3630 = vadd.f32 %v2674, %v3190
  %v3631 = vadd.f32 %v2675, %v3191
  %v3632 = vadd.f32 %v2676, %v3192
  %v3633 = vadd.f32 %v2677, %v3193
  %v3634 = vadd.f32 %v2678, %v3194
  %v3635 = vadd.f32 %v2679, %v3195
  %v3636 = vadd.f32 %v2680, %v3196
  %v3637 = vadd.f32 %v2681, %v3197
  %v3638 = vadd.f32 %v2682, %v3198
  %v3639 = vadd.f32 %v2683, %v3199
  %v3640 = vadd.f32 %v2684, %v3200
  %v3641 = vadd.f32 %v2685, %v3201
  %v3642 = vadd.f32 %v2686, %v3202
  %v3643 = vadd.f32 %v2687, %v3203
  %v3644 = vadd.f32 %v2688, %v3204
  %v3645 = vadd.f32 %v2689, %v3205
  %v3646 = vadd.f32 %v2690, %v3206
  %v3647 = vadd.f32 %v2691, %v3207
  %v3648 = vadd.f32 %v2692, %v3208
  %v3649 = vadd.f32 %v2693, %v3209
  %v3650 = vadd.f32 %v2694, %v3210
  %v3651 = vadd.f32 %v2695, %v3211
  %v3652 = vadd.f32 %v2696, %v3212
  %v3653 = vadd.f32 %v2697, %v3213
  %v3654 = vadd.f32 %v2698, %v3214
  %v3655 = vadd.f32 %v2699, %v3215
  %v3656 = vadd.f32 %v2700, %v3216
  %v3657 = vadd.f32 %v2701, %v3217
  %v3658 = vadd.f32 %v2702, %v3218
  %v3659 = vadd.f32 %v2703, %v3219
  %v3660 = vadd.f32 %v2704, %v3220
  %v3661 = vadd.f32 %v2705, %v3221
  %v3662 = vadd.f32 %v2706, %v3222
  %v3663 = vadd.f32 %v2707, %v3223
  %v3664 = vadd.f32 %v2708, %v3224
  %v3665 = vadd.f32 %v2709, %v3225
  %v3666 = vadd.f32 %v2710, %v3226
  %v3667 = vadd.f32 %v2711, %v3227
  %v3668 = vadd.f32 %v2712, %v3228
  %v3669 = vadd.f32 %v2713, %v3229
  %v3670 = vadd.f32 %v2714, %v3230
  %v3671 = vadd.f32 %v2715, %v3231
  %v3672 = vadd.f32 %v2716, %v3232
  %v3673 = vadd.f32 %v2717, %v3233
  %v3674 = vadd.f32 %v2718, %v3234
  %v3675 = vadd.f32 %v2719, %v3235
  %v3676 = vadd.f32 %v2720, %v3236
  %v3677 = vadd.f32 %v2721, %v3237
  %v3678 = vadd.f32 %v2722, %v3238
  %v3679 = vadd.f32 %v2723, %v3239
  %v3680 = vadd.f32 %v2724, %v3240
  %v3681 = vadd.f32 %v2725, %v3241
  %v3682 = vadd.f32 %v2726, %v3242
  %v3683 = vadd.f32 %v2727, %v3243
  %v3684 = vadd.f32 %v2728, %v3244
  %v3685 = vadd.f32 %v2729, %v3245
  %v3686 = vadd.f32 %v2730, %v3246
  %v3687 = vadd.f32 %v2731, %v3247
  %v3688 = vadd.f32 %v2732, %v3248
  %v3689 = vadd.f32 %v2733, %v3249
  %v3690 = vadd.f32 %v2734, %v3250
  %v3691 = vadd.f32 %v2735, %v3251
  %v3692 = vadd.f32 %v2736, %v3252
  %v3693 = vadd.f32 %v2737, %v3253
  %v3694 = vadd.f32 %v2738, %v3254
  %v3695 = vadd.f32 %v2739, %v3255
  %v3696 = vadd.f32 %v2740, %v3256
  %v3697 = vadd.f32 %v2741, %v3257
  %v3698 = vadd.f32 %v2742, %v3258
  %v3699 = vadd.f32 %v2743, %v3259
  %v3700 = vadd.f32 %v2744, %v3260
  %v3701 = vadd.f32 %v2745, %v3261
  %v3702 = vadd.f32 %v2746, %v3262
  %v3703 = vadd.f32 %v2747, %v3263
  %v3704 = vadd.f32 %v2748, %v3264
  %v3705 = vadd.f32 %v2749, %v3265
  %v3706 = vadd.f32 %v2750, %v3266
  %v3707 = vadd.f32 %v2751, %v3267
  %v3708 = vadd.f32 %v2752, %v3268
  %v3709 = vadd.f32 %v2753, %v3269
  %v3710 = vadd.f32 %v2754, %v3270
  %v3711 = vadd.f32 %v2755, %v3271
  %v3712 = vadd.f32 %v2756, %v3272
  %v3713 = vadd.f32 %v2757, %v3273
  %v3714 = vadd.f32 %v2758, %v3274
  %v3715 = vadd.f32 %v2759, %v3275
  %v3716 = vadd.f32 %v2760, %v3276
  %v3717 = vadd.f32 %v2761, %v3277
  %v3718 = vadd.f32 %v2762, %v3278
  %v3719 = vadd.f32 %v2763, %v3279
  %v3720 = vadd.f32 %v2764, %v3280
  %v3721 = vadd.f32 %v2765, %v3281
  %v3722 = vadd.f32 %v2766, %v3282
  %v3723 = vadd.f32 %v2767, %v3283
  %v3724 = vadd.f32 %v2768, %v3284
  %v3725 = vadd.f32 %v2769, %v3285
  %v3726 = vadd.f32 %v2770, %v3286
  %v3727 = vadd.f32 %v2771, %v3287
  %v3728 = vadd.f32 %v2772, %v3288
  %v3729 = vadd.f32 %v2773, %v3289
  %v3730 = vadd.f32 %v2774, %v3290
  %v3731 = vadd.f32 %v2775, %v3291
  %v3732 = vadd.f32 %v2776, %v3292
  %v3733 = vadd.f32 %v2777, %v3293
  %v3734 = vadd.f32 %v2778, %v3294
  %v3735 = vadd.f32 %v2779, %v3295
  %v3736 = vadd.f32 %v2780, %v3296
  %v3737 = vadd.f32 %v2781, %v3297
  %v3738 = vadd.f32 %v2782, %v3298
  %v3739 = vadd.f32 %v2783, %v3299
  %v3740 = vadd.f32 %v2784, %v3300
  %v3741 = vadd.f32 %v2785, %v3301
  %v3742 = vadd.f32 %v2786, %v3302
  %v3743 = vadd.f32 %v2787, %v3303
  %v3744 = vadd.f32 %v2788, %v3304
  %v3745 = vadd.f32 %v2789, %v3305
  %v3746 = vadd.f32 %v2790, %v3306
  %v3747 = vadd.f32 %v2791, %v3307
  %v3748 = vadd.f32 %v2792, %v3308
  %v3749 = vadd.f32 %v2793, %v3309
  %v3750 = vadd.f32 %v2794, %v3310
  %v3751 = vadd.f32 %v2795, %v3311
  %v3752 = vadd.f32 %v2796, %v3312
  %v3753 = vadd.f32 %v2797, %v3313
  %v3754 = vadd.f32 %v2798, %v3314
  %v3755 = vadd.f32 %v2799, %v3315
  %v3756 = vadd.f32 %v2800, %v3316
  %v3757 = vadd.f32 %v2801, %v3317
  %v3758 = vadd.f32 %v2802, %v3318
  %v3759 = vadd.f32 %v2803, %v3319
  %v3760 = vadd.f32 %v2804, %v3320
  %v3761 = vadd.f32 %v2805, %v3321
  %v3762 = vadd.f32 %v2806, %v3322
  %v3763 = vadd.f32 %v2807, %v3323
  %v3764 = vadd.f32 %v2808, %v3324
  %v3765 = vadd.f32 %v2809, %v3325
  %v3766 = vadd.f32 %v2810, %v3326
  %v3767 = vadd.f32 %v2811, %v3327
  %v3768 = vadd.f32 %v2812, %v3328
  %v3769 = vadd.f32 %v2813, %v3329
  %v3770 = vadd.f32 %v2814, %v3330
  %v3771 = vadd.f32 %v2815, %v3331
  %v3772 = vadd.f32 %v2816, %v3332
  %v3773 = vadd.f32 %v2817, %v3333
  %v3774 = vadd.f32 %v2818, %v3334
  %v3775 = vadd.f32 %v2819, %v3335
  %v3776 = vadd.f32 %v2820, %v3336
  %v3777 = vadd.f32 %v2821, %v3337
  %v3778 = vadd.f32 %v2822, %v3338
  %v3779 = vadd.f32 %v2823, %v3339
  %v3780 = vadd.f32 %v2824, %v3340
  %v3781 = vadd.f32 %v2825, %v3341
  %v3782 = vadd.f32 %v2826, %v3342
  %v3783 = vadd.f32 %v2827, %v3343
  %v3784 = vadd.f32 %v2828, %v3344
  %v3785 = vadd.f32 %v2829, %v3345
  %v3786 = vadd.f32 %v2830, %v3346
  %v3787 = vadd.f32 %v2831, %v3347
  %v3788 = vadd.f32 %v2832, %v3348
  %v3789 = vadd.f32 %v2833, %v3349
  %v3790 = vadd.f32 %v2834, %v3350
  %v3791 = vadd.f32 %v2835, %v3351
  %v3792 = vadd.f32 %v2836, %v3352
  %v3793 = vadd.f32 %v2837, %v3353
  %v3794 = vadd.f32 %v2838, %v3354
  %v3795 = vadd.f32 %v2839, %v3355
  %v3796 = vadd.f32 %v2840, %v3356
  %v3797 = vadd.f32 %v2841, %v3357
  %v3798 = vadd.f32 %v2842, %v3358
  %v3799 = vadd.f32 %v2843, %v3359
  %v3800 = vadd.f32 %v2844, %v3360
  %v3801 = vadd.f32 %v2845, %v3361
  %v3802 = vadd.f32 %v2846, %v3362
  %v3803 = vadd.f32 %v2847, %v3363
  %v3804 = vadd.f32 %v2848, %v3364
  %v3805 = vadd.f32 %v2849, %v3365
  %v3806 = vadd.f32 %v2850, %v3366
  %v3807 = vadd.f32 %v2851, %v3367
  %v3808 = vadd.f32 %v2852, %v3368
  %v3809 = vadd.f32 %v2853, %v3369
  %v3810 = vadd.f32 %v2854, %v3370
  %v3811 = vadd.f32 %v2855, %v3371
  %v3812 = vadd.f32 %v2856, %v3372
  %v3813 = vadd.f32 %v2857, %v3373
  %v3814 = vadd.f32 %v2858, %v3374
  %v3815 = vadd.f32 %v2859, %v3375
  %v3816 = vadd.f32 %v2860, %v3376
  %v3817 = vadd.f32 %v2861, %v3377
  %v3818 = vadd.f32 %v2862, %v3378
  %v3819 = vadd.f32 %v2863, %v3379
  %v3820 = vadd.f32 %v2864, %v3380
  %v3821 = vadd.f32 %v2865, %v3381
  %v3822 = vadd.f32 %v2866, %v3382
  %v3823 = vadd.f32 %v2867, %v3383
  %v3824 = vadd.f32 %v2868, %v3384
  %v3825 = vadd.f32 %v2869, %v3385
  %v3826 = vadd.f32 %v2870, %v3386
  %v3827 = vadd.f32 %v2871, %v3387
  %v3828 = vadd.f32 %v2872, %v3388
  %v3829 = vadd.f32 %v2873, %v3389
  %v3830 = vadd.f32 %v2874, %v3390
  %v3831 = vadd.f32 %v2875, %v3391
  %v3832 = vadd.f32 %v2876, %v3392
  %v3833 = vadd.f32 %v2877, %v3393
  %v3834 = vadd.f32 %v2878, %v3394
  %v3835 = vadd.f32 %v2879, %v3395
  %v3836 = vadd.f32 %v2880, %v3396
  %v3837 = vadd.f32 %v2881, %v3397
  %v3838 = vadd.f32 %v2882, %v3398
  %v3839 = vadd.f32 %v2883, %v3399
  %v3840 = vadd.f32 %v2884, %v3400
  %v3841 = vadd.f32 %v2885, %v3401
  %v3842 = vadd.f32 %v2886, %v3402
  %v3843 = vadd.f32 %v2887, %v3403
  %v3844 = vadd.f32 %v2888, %v3404
  %v3845 = vadd.f32 %v2889, %v3405
  %v3846 = vadd.f32 %v2890, %v3406
  %v3847 = vadd.f32 %v2891, %v3407
  %v3848 = vadd.f32 %v2892, %v3408
  %v3849 = vadd.f32 %v2893, %v3409
  %v3850 = vadd.f32 %v2894, %v3410
  %v3851 = vadd.f32 %v2895, %v3411
  %v3852 = vadd.f32 %v2896, %v3412
  %v3853 = vadd.f32 %v2897, %v3413
  %v3854 = vadd.f32 %v2898, %v3414
  %v3855 = vadd.f32 %v2899, %v3415
  %v3856 = vadd.f32 %v2900, %v3416
  %v3857 = vadd.f32 %v2901, %v3417
  %v3858 = vadd.f32 %v2902, %v3418
  %v3859 = vadd.f32 %v2903, %v3419
  %v3860 = vadd.f32 %v2904, %v3420
  %v3861 = vadd.f32 %v2905, %v3421
  %v3862 = vadd.f32 %v2906, %v3422
  %v3863 = vadd.f32 %v2907, %v3423
  %v3864 = vadd.f32 %v2908, %v3424
  %v3865 = vadd.f32 %v2909, %v3425
  %v3866 = vadd.f32 %v2910, %v3426
  %v3867 = vadd.f32 %v2911, %v3427
  %v3868 = vadd.f32 %v2912, %v3428
  %v3869 = vadd.f32 %v2913, %v3429
  %v3870 = vadd.f32 %v2914, %v3430
  %v3871 = vadd.f32 %v2915, %v3431
  %v3872 = vadd.f32 %v2916, %v3432
  %v3873 = vadd.f32 %v2917, %v3433
  %v3874 = vadd.f32 %v2918, %v3434
  %v3875 = vadd.f32 %v2919, %v3435
  %v3876 = vadd.f32 %v2920, %v3436
  %v3877 = vadd.f32 %v2921, %v3437
  %v3878 = vadd.f32 %v2922, %v3438
  %v3879 = vadd.f32 %v2923, %v3439
  %v3880 = vadd.f32 %v2924, %v3440
  %v3881 = vadd.f32 %v2925, %v3441
  %v3882 = vadd.f32 %v2926, %v3442
  %v3883 = vadd.f32 %v2927, %v3443
  %v3884 = vadd.f32 %v2928, %v3444
  %v3885 = vadd.f32 %v2929, %v3445
  %v3886 = vadd.f32 %v2930, %v3446
  %v3887 = vadd.f32 %v2931, %v3447
  %v3888 = vadd.f32 %v2932, %v3448
  %v3889 = vadd.f32 %v2933, %v3449
  %v3890 = vadd.f32 %v2934, %v3450
  %v3891 = vadd.f32 %v2935, %v3451
  %v3892 = vadd.f32 %v2936, %v3452
  %v3893 = vadd.f32 %v2937, %v3453
  %v3894 = vadd.f32 %v2938, %v3454
  %v3895 = vadd.f32 %v2939, %v3455
  %v3896 = vadd.f32 %v2940, %v3456
  %v3897 = vadd.f32 %v2941, %v3457
  %v3898 = vadd.f32 %v2942, %v3458
  %v3899 = vadd.f32 %v2943, %v3459
  %v3900 = vadd.f32 %v2944, %v3460
  %v3901 = vadd.f32 %v2945, %v3461
  %v3902 = vadd.f32 %v2946, %v3462
  %v3903 = vadd.f32 %v2947, %v3463
  %v3904 = vadd.f32 %v2948, %v3464
  %v3905 = vadd.f32 %v2949, %v3465
  %v3906 = vadd.f32 %v2950, %v3466
  %v3907 = vadd.f32 %v2951, %v3467
  %v3908 = vadd.f32 %v2952, %v3468
  %v3909 = vadd.f32 %v2953, %v3469
  %v3910 = vadd.f32 %v2954, %v3470
  %v3911 = vadd.f32 %v2955, %v3471
  %v3912 = vadd.f32 %v2956, %v3472
  %v3913 = vadd.f32 %v2957, %v3473
  %v3914 = vadd.f32 %v2958, %v3474
  %v3915 = vadd.f32 %v2959, %v3475
  %v3916 = vadd.f32 %v2960, %v3476
  %v3917 = vadd.f32 %v2961, %v3477
  %v3918 = vadd.f32 %v2962, %v3478
  %v3919 = vadd.f32 %v2963, %v3479
  %v3920 = vadd.f32 %v2964, %v3480
  %v3921 = vadd.f32 %v2965, %v3481
  %v3922 = vadd.f32 %v2966, %v3482
  %v3923 = vadd.f32 %v2967, %v3483
  %v3924 = vadd.f32 %v2968, %v3484
  %v3925 = vadd.f32 %v2969, %v3485
  %v3926 = vadd.f32 %v2970, %v3486
  %v3927 = vadd.f32 %v2971, %v3487
  %v3928 = vadd.f32 %v2972, %v3488
  %v3929 = vadd.f32 %v2973, %v3489
  %v3930 = vadd.f32 %v2974, %v3490
  %v3931 = vadd.f32 %v2975, %v3491
  %v3932 = vadd.f32 %v2976, %v3492
  %v3933 = vadd.f32 %v2977, %v3493
  %v3934 = vadd.f32 %v2978, %v3494
  %v3935 = vadd.f32 %v2979, %v3495
  %v3936 = vadd.f32 %v2980, %v3496
  %v3937 = vadd.f32 %v2981, %v3497
  %v3938 = vadd.f32 %v2982, %v3498
  %v3939 = vadd.f32 %v2983, %v3499
  %v3940 = vadd.f32 %v2984, %v3500
  %v3941 = vadd.f32 %v2985, %v3501
  %v3942 = vadd.f32 %v2986, %v3502
  %v3943 = vadd.f32 %v2987, %v3503
  %v3944 = vadd.f32 %v2988, %v3504
  %v3945 = vadd.f32 %v2989, %v3505
  %v3946 = vadd.f32 %v2990, %v3506
  %v3947 = vadd.f32 %v2991, %v3507
  %v3948 = vadd.f32 %v2992, %v3508
  %v3949 = vadd.f32 %v2993, %v3509
  %v3950 = vadd.f32 %v2994, %v3510
  %v3951 = vadd.f32 %v2995, %v3511
  %v3952 = vadd.f32 %v2996, %v3512
  %v3953 = vadd.f32 %v2997, %v3513
  %v3954 = vadd.f32 %v2998, %v3514
  %v3955 = vadd.f32 %v2999, %v3515
  %v3956 = vadd.f32 %v3000, %v3516
  %v3957 = vadd.f32 %v3001, %v3517
  %v3958 = vadd.f32 %v3002, %v3518
  %v3959 = vadd.f32 %v3003, %v3519
  %v3960 = vadd.f32 %v3004, %v3520
  %v3961 = vadd.f32 %v3005, %v3521
  %v3962 = vadd.f32 %v3006, %v3522
  %v3963 = vadd.f32 %v3007, %v3523
  %v3964 = vadd.f32 %v3008, %v3524
  %v3965 = vadd.f32 %v3009, %v3525
  %v3966 = vadd.f32 %v3010, %v3526
  %v3967 = vadd.f32 %v3011, %v3527
  %v3968 = vadd.f32 %v3012, %v3528
  %v3969 = vadd.f32 %v3013, %v3529
  %v3970 = vadd.f32 %v3014, %v3530
  %v3971 = vadd.f32 %v3015, %v3531
  %v3972 = vadd.f32 %v3016, %v3532
  %v3973 = vadd.f32 %v3017, %v3533
  %v3974 = vadd.f32 %v3018, %v3534
  %v3975 = vadd.f32 %v3019, %v3535
  %v3976 = vadd.f32 %v3020, %v3536
  %v3977 = vadd.f32 %v3021, %v3537
  %v3978 = vadd.f32 %v3022, %v3538
  %v3979 = vadd.f32 %v3023, %v3539
  %v3980 = vadd.f32 %v3024, %v3540
  %v3981 = vadd.f32 %v3025, %v3541
  %v3982 = vadd.f32 %v3026, %v3542
  %v3983 = vadd.f32 %v3027, %v3543
  %v3984 = vadd.f32 %v3028, %v3544
  %v3985 = vadd.f32 %v3029, %v3545
  %v3986 = vadd.f32 %v3030, %v3546
  %v3987 = vadd.f32 %v3031, %v3547
  %v3988 = vadd.f32 %v3032, %v3548
  %v3989 = vadd.f32 %v3033, %v3549
  %v3990 = vadd.f32 %v3034, %v3550
  %v3991 = vadd.f32 %v3035, %v3551
  %v3992 = vadd.f32 %v3036, %v3552
  %v3993 = vadd.f32 %v3037, %v3553
  %v3994 = vadd.f32 %v3038, %v3554
  %v3995 = vadd.f32 %v3039, %v3555
  %v3996 = vadd.f32 %v3040, %v3556
  %v3997 = vadd.f32 %v3041, %v3557
  %v3998 = vadd.f32 %v3042, %v3558
  %v3999 = vadd.f32 %v3043, %v3559
  %v4000 = vadd.f32 %v3044, %v3560
  %v4001 = vadd.f32 %v3045, %v3561
  %v4002 = vadd.f32 %v3046, %v3562
  %v4003 = vadd.f32 %v3047, %v3563
  %v4004 = vadd.f32 %v3048, %v3564
  %v4005 = vadd.f32 %v3049, %v3565
  %v4006 = vadd.f32 %v3050, %v3566
  %v4007 = vadd.f32 %v3051, %v3567
  %v4008 = vadd.f32 %v3052, %v3568
  %v4009 = vadd.f32 %v3053, %v3569
  %v4010 = vadd.f32 %v3054, %v3570
  %v4011 = vadd.f32 %v3055, %v3571
  %v4012 = vadd.f32 %v3056, %v3572
  %v4033 = vlaneseq
  %v4034 = vshrl.u32 %v4033, 7
  %v4035 = vsub.s32 0, %v4034
  %v4036 = vrot.slane %v269, %v4035
  %v4037 = vlaneseq
  %v4038 = vshrl.u32 %v4037, 7
  %v4039 = vsub.s32 0, %v4038
  %v4040 = vrot.slane %v270, %v4039
  %v4041 = vlaneseq
  %v4042 = vshrl.u32 %v4041, 7
  %v4043 = vsub.s32 0, %v4042
  %v4044 = vrot.slane %v271, %v4043
  %v4045 = vlaneseq
  %v4046 = vshrl.u32 %v4045, 7
  %v4047 = vsub.s32 0, %v4046
  %v4048 = vrot.slane %v272, %v4047
  %v4049 = vlaneseq
  %v4050 = vshrl.u32 %v4049, 7
  %v4051 = vsub.s32 0, %v4050
  %v4052 = vrot.slane %v273, %v4051
  %v4053 = vlaneseq
  %v4054 = vshrl.u32 %v4053, 7
  %v4055 = vsub.s32 0, %v4054
  %v4056 = vrot.slane %v274, %v4055
  %v4057 = vlaneseq
  %v4058 = vshrl.u32 %v4057, 7
  %v4059 = vsub.s32 0, %v4058
  %v4060 = vrot.slane %v275, %v4059
  %v4061 = vlaneseq
  %v4062 = vshrl.u32 %v4061, 7
  %v4063 = vsub.s32 0, %v4062
  %v4064 = vrot.slane %v276, %v4063
  %v4065 = vlaneseq
  %v4066 = vshrl.u32 %v4065, 7
  %v4067 = vsub.s32 0, %v4066
  %v4068 = vrot.slane %v277, %v4067
  %v4069 = vlaneseq
  %v4070 = vshrl.u32 %v4069, 7
  %v4071 = vsub.s32 0, %v4070
  %v4072 = vrot.slane %v278, %v4071
  %v4073 = vlaneseq
  %v4074 = vshrl.u32 %v4073, 7
  %v4075 = vsub.s32 0, %v4074
  %v4076 = vrot.slane %v279, %v4075
  %v4077 = vlaneseq
  %v4078 = vshrl.u32 %v4077, 7
  %v4079 = vsub.s32 0, %v4078
  %v4080 = vrot.slane %v280, %v4079
  %v4081 = vlaneseq
  %v4082 = vshrl.u32 %v4081, 7
  %v4083 = vsub.s32 0, %v4082
  %v4084 = vrot.slane %v281, %v4083
  %v4085 = vlaneseq
  %v4086 = vshrl.u32 %v4085, 7
  %v4087 = vsub.s32 0, %v4086
  %v4088 = vrot.slane %v282, %v4087
  %v4089 = vlaneseq
  %v4090 = vshrl.u32 %v4089, 7
  %v4091 = vsub.s32 0, %v4090
  %v4092 = vrot.slane %v283, %v4091
  %v4093 = vlaneseq
  %v4094 = vshrl.u32 %v4093, 7
  %v4095 = vsub.s32 0, %v4094
  %v4096 = vrot.slane %v284, %v4095
  %v4097 = vlaneseq
  %v4098 = vshrl.u32 %v4097, 7
  %v4099 = vsub.s32 0, %v4098
  %v4100 = vrot.slane %v285, %v4099
  %v4101 = vlaneseq
  %v4102 = vshrl.u32 %v4101, 7
  %v4103 = vsub.s32 0, %v4102
  %v4104 = vrot.slane %v286, %v4103
  %v4105 = vlaneseq
  %v4106 = vshrl.u32 %v4105, 7
  %v4107 = vsub.s32 0, %v4106
  %v4108 = vrot.slane %v287, %v4107
  %v4109 = vlaneseq
  %v4110 = vshrl.u32 %v4109, 7
  %v4111 = vsub.s32 0, %v4110
  %v4112 = vrot.slane %v288, %v4111
  %4134 = vset.pattern.permute.xlu0 0
  %4135 = vperm.xlu0 %4134, %v319
  %v4136 = vpop.permute.xlu0 %4135
  %4139 = vset.pattern.permute.xlu0 0
  %4140 = vperm.xlu0 %4139, %v320
  %v4141 = vpop.permute.xlu0 %4140
  %v4143 = vmul.f32 %v634, %v4136
  %v4144 = vmul.f32 %v634, %v4141
  %v4145 = vmul.f32 %v638, %v4136
  %v4146 = vmul.f32 %v638, %v4141
  %v4147 = vmul.f32 %v642, %v4136
  %v4148 = vmul.f32 %v642, %v4141
  %v4149 = vmul.f32 %v646, %v4136
  %v4150 = vmul.f32 %v646, %v4141
  %v4151 = vmul.f32 %v650, %v4136
  %v4152 = vmul.f32 %v650, %v4141
  %v4153 = vmul.f32 %v654, %v4136
  %v4154 = vmul.f32 %v654, %v4141
  %v4155 = vmul.f32 %v658, %v4136
  %v4156 = vmul.f32 %v658, %v4141
  %v4157 = vmul.f32 %v662, %v4136
  %v4158 = vmul.f32 %v662, %v4141
  %v4159 = vmul.f32 %v666, %v4136
  %v4160 = vmul.f32 %v666, %v4141
  %v4161 = vmul.f32 %v670, %v4136
  %v4162 = vmul.f32 %v670, %v4141
  %v4163 = vmul.f32 %v674, %v4136
  %v4164 = vmul.f32 %v674, %v4141
  %v4165 = vmul.f32 %v678, %v4136
  %v4166 = vmul.f32 %v678, %v4141
  %v4167 = vmul.f32 %v682, %v4136
  %v4168 = vmul.f32 %v682, %v4141
  %v4169 = vmul.f32 %v686, %v4136
  %v4170 = vmul.f32 %v686, %v4141
  %v4171 = vmul.f32 %v690, %v4136
  %v4172 = vmul.f32 %v690, %v4141
  %v4173 = vmul.f32 %v694, %v4136
  %v4174 = vmul.f32 %v694, %v4141
  %v4175 = vmul.f32 %v698, %v4136
  %v4176 = vmul.f32 %v698, %v4141
  %v4177 = vmul.f32 %v702, %v4136
  %v4178 = vmul.f32 %v702, %v4141
  %v4179 = vmul.f32 %v706, %v4136
  %v4180 = vmul.f32 %v706, %v4141
  %v4181 = vmul.f32 %v710, %v4136
  %v4182 = vmul.f32 %v710, %v4141
  %v4183 = vmul.f32 %v714, %v4136
  %v4184 = vmul.f32 %v714, %v4141
  %v4185 = vmul.f32 %v718, %v4136
  %v4186 = vmul.f32 %v718, %v4141
  %v4187 = vmul.f32 %v722, %v4136
  %v4188 = vmul.f32 %v722, %v4141
  %v4189 = vmul.f32 %v726, %v4136
  %v4190 = vmul.f32 %v726, %v4141
  %v4191 = vmul.f32 %v730, %v4136
  %v4192 = vmul.f32 %v730, %v4141
  %v4193 = vmul.f32 %v734, %v4136
  %v4194 = vmul.f32 %v734, %v4141
  %v4195 = vmul.f32 %v738, %v4136
  %v4196 = vmul.f32 %v738, %v4141
  %v4197 = vmul.f32 %v742, %v4136
  %v4198 = vmul.f32 %v742, %v4141
  %v4199 = vmul.f32 %v746, %v4136
  %v4200 = vmul.f32 %v746, %v4141
  %v4201 = vmul.f32 %v750, %v4136
  %v4202 = vmul.f32 %v750, %v4141
  %v4203 = vmul.f32 %v754, %v4136
  %v4204 = vmul.f32 %v754, %v4141
  %v4205 = vmul.f32 %v758, %v4136
  %v4206 = vmul.f32 %v758, %v4141
  %v4207 = vmul.f32 %v762, %v4136
  %v4208 = vmul.f32 %v762, %v4141
  %v4209 = vmul.f32 %v766, %v4136
  %v4210 = vmul.f32 %v766, %v4141
  %v4211 = vmul.f32 %v770, %v4136
  %v4212 = vmul.f32 %v770, %v4141
  %v4213 = vmul.f32 %v774, %v4136
  %v4214 = vmul.f32 %v774, %v4141
  %v4215 = vmul.f32 %v778, %v4136
  %v4216 = vmul.f32 %v778, %v4141
  %v4217 = vmul.f32 %v782, %v4136
  %v4218 = vmul.f32 %v782, %v4141
  %v4219 = vmul.f32 %v786, %v4136
  %v4220 = vmul.f32 %v786, %v4141
  %v4221 = vmul.f32 %v790, %v4136
  %v4222 = vmul.f32 %v790, %v4141
  %v4223 = vmul.f32 %v794, %v4136
  %v4224 = vmul.f32 %v794, %v4141
  %v4225 = vmul.f32 %v798, %v4136
  %v4226 = vmul.f32 %v798, %v4141
  %v4227 = vmul.f32 %v802, %v4136
  %v4228 = vmul.f32 %v802, %v4141
  %v4229 = vmul.f32 %v806, %v4136
  %v4230 = vmul.f32 %v806, %v4141
  %v4231 = vmul.f32 %v810, %v4136
  %v4232 = vmul.f32 %v810, %v4141
  %v4233 = vmul.f32 %v814, %v4136
  %v4234 = vmul.f32 %v814, %v4141
  %v4235 = vmul.f32 %v818, %v4136
  %v4236 = vmul.f32 %v818, %v4141
  %v4237 = vmul.f32 %v822, %v4136
  %v4238 = vmul.f32 %v822, %v4141
  %v4239 = vmul.f32 %v826, %v4136
  %v4240 = vmul.f32 %v826, %v4141
  %v4241 = vmul.f32 %v830, %v4136
  %v4242 = vmul.f32 %v830, %v4141
  %v4243 = vmul.f32 %v834, %v4136
  %v4244 = vmul.f32 %v834, %v4141
  %v4245 = vmul.f32 %v838, %v4136
  %v4246 = vmul.f32 %v838, %v4141
  %v4247 = vmul.f32 %v842, %v4136
  %v4248 = vmul.f32 %v842, %v4141
  %v4249 = vmul.f32 %v846, %v4136
  %v4250 = vmul.f32 %v846, %v4141
  %v4251 = vmul.f32 %v850, %v4136
  %v4252 = vmul.f32 %v850, %v4141
  %v4253 = vmul.f32 %v854, %v4136
  %v4254 = vmul.f32 %v854, %v4141
  %v4255 = vmul.f32 %v858, %v4136
  %v4256 = vmul.f32 %v858, %v4141
  %v4257 = vmul.f32 %v862, %v4136
  %v4258 = vmul.f32 %v862, %v4141
  %v4259 = vmul.f32 %v866, %v4136
  %v4260 = vmul.f32 %v866, %v4141
  %v4261 = vmul.f32 %v870, %v4136
  %v4262 = vmul.f32 %v870, %v4141
  %v4263 = vmul.f32 %v874, %v4136
  %v4264 = vmul.f32 %v874, %v4141
  %v4265 = vmul.f32 %v878, %v4136
  %v4266 = vmul.f32 %v878, %v4141
  %v4267 = vmul.f32 %v882, %v4136
  %v4268 = vmul.f32 %v882, %v4141
  %v4269 = vmul.f32 %v886, %v4136
  %v4270 = vmul.f32 %v886, %v4141
  %v4271 = vmul.f32 %v890, %v4136
  %v4272 = vmul.f32 %v890, %v4141
  %v4273 = vmul.f32 %v894, %v4136
  %v4274 = vmul.f32 %v894, %v4141
  %v4275 = vmul.f32 %v898, %v4136
  %v4276 = vmul.f32 %v898, %v4141
  %v4277 = vmul.f32 %v902, %v4136
  %v4278 = vmul.f32 %v902, %v4141
  %v4279 = vmul.f32 %v906, %v4136
  %v4280 = vmul.f32 %v906, %v4141
  %v4281 = vmul.f32 %v910, %v4136
  %v4282 = vmul.f32 %v910, %v4141
  %v4283 = vmul.f32 %v914, %v4136
  %v4284 = vmul.f32 %v914, %v4141
  %v4285 = vmul.f32 %v918, %v4136
  %v4286 = vmul.f32 %v918, %v4141
  %v4287 = vmul.f32 %v922, %v4136
  %v4288 = vmul.f32 %v922, %v4141
  %v4289 = vmul.f32 %v926, %v4136
  %v4290 = vmul.f32 %v926, %v4141
  %v4291 = vmul.f32 %v930, %v4136
  %v4292 = vmul.f32 %v930, %v4141
  %v4293 = vmul.f32 %v934, %v4136
  %v4294 = vmul.f32 %v934, %v4141
  %v4295 = vmul.f32 %v938, %v4136
  %v4296 = vmul.f32 %v938, %v4141
  %v4297 = vmul.f32 %v942, %v4136
  %v4298 = vmul.f32 %v942, %v4141
  %v4299 = vmul.f32 %v946, %v4136
  %v4300 = vmul.f32 %v946, %v4141
  %v4301 = vmul.f32 %v950, %v4136
  %v4302 = vmul.f32 %v950, %v4141
  %v4303 = vmul.f32 %v954, %v4136
  %v4304 = vmul.f32 %v954, %v4141
  %v4305 = vmul.f32 %v958, %v4136
  %v4306 = vmul.f32 %v958, %v4141
  %v4307 = vmul.f32 %v962, %v4136
  %v4308 = vmul.f32 %v962, %v4141
  %v4309 = vmul.f32 %v966, %v4136
  %v4310 = vmul.f32 %v966, %v4141
  %v4311 = vmul.f32 %v970, %v4136
  %v4312 = vmul.f32 %v970, %v4141
  %v4313 = vmul.f32 %v974, %v4136
  %v4314 = vmul.f32 %v974, %v4141
  %v4315 = vmul.f32 %v978, %v4136
  %v4316 = vmul.f32 %v978, %v4141
  %v4317 = vmul.f32 %v982, %v4136
  %v4318 = vmul.f32 %v982, %v4141
  %v4319 = vmul.f32 %v986, %v4136
  %v4320 = vmul.f32 %v986, %v4141
  %v4321 = vmul.f32 %v990, %v4136
  %v4322 = vmul.f32 %v990, %v4141
  %v4323 = vmul.f32 %v994, %v4136
  %v4324 = vmul.f32 %v994, %v4141
  %v4325 = vmul.f32 %v998, %v4136
  %v4326 = vmul.f32 %v998, %v4141
  %v4327 = vmul.f32 %v1002, %v4136
  %v4328 = vmul.f32 %v1002, %v4141
  %v4329 = vmul.f32 %v1006, %v4136
  %v4330 = vmul.f32 %v1006, %v4141
  %v4331 = vmul.f32 %v1010, %v4136
  %v4332 = vmul.f32 %v1010, %v4141
  %v4333 = vmul.f32 %v1014, %v4136
  %v4334 = vmul.f32 %v1014, %v4141
  %v4335 = vmul.f32 %v1018, %v4136
  %v4336 = vmul.f32 %v1018, %v4141
  %v4337 = vmul.f32 %v1022, %v4136
  %v4338 = vmul.f32 %v1022, %v4141
  %v4339 = vmul.f32 %v1026, %v4136
  %v4340 = vmul.f32 %v1026, %v4141
  %v4341 = vmul.f32 %v1030, %v4136
  %v4342 = vmul.f32 %v1030, %v4141
  %v4343 = vmul.f32 %v1034, %v4136
  %v4344 = vmul.f32 %v1034, %v4141
  %v4345 = vmul.f32 %v1038, %v4136
  %v4346 = vmul.f32 %v1038, %v4141
  %v4347 = vmul.f32 %v1042, %v4136
  %v4348 = vmul.f32 %v1042, %v4141
  %v4349 = vmul.f32 %v1046, %v4136
  %v4350 = vmul.f32 %v1046, %v4141
  %v4351 = vmul.f32 %v1050, %v4136
  %v4352 = vmul.f32 %v1050, %v4141
  %v4353 = vmul.f32 %v1054, %v4136
  %v4354 = vmul.f32 %v1054, %v4141
  %v4355 = vmul.f32 %v1058, %v4136
  %v4356 = vmul.f32 %v1058, %v4141
  %v4357 = vmul.f32 %v1062, %v4136
  %v4358 = vmul.f32 %v1062, %v4141
  %v4359 = vmul.f32 %v1066, %v4136
  %v4360 = vmul.f32 %v1066, %v4141
  %v4361 = vmul.f32 %v1070, %v4136
  %v4362 = vmul.f32 %v1070, %v4141
  %v4363 = vmul.f32 %v1074, %v4136
  %v4364 = vmul.f32 %v1074, %v4141
  %v4365 = vmul.f32 %v1078, %v4136
  %v4366 = vmul.f32 %v1078, %v4141
  %v4367 = vmul.f32 %v1082, %v4136
  %v4368 = vmul.f32 %v1082, %v4141
  %v4369 = vmul.f32 %v1086, %v4136
  %v4370 = vmul.f32 %v1086, %v4141
  %v4371 = vmul.f32 %v1090, %v4136
  %v4372 = vmul.f32 %v1090, %v4141
  %v4373 = vmul.f32 %v1094, %v4136
  %v4374 = vmul.f32 %v1094, %v4141
  %v4375 = vmul.f32 %v1098, %v4136
  %v4376 = vmul.f32 %v1098, %v4141
  %v4377 = vmul.f32 %v1102, %v4136
  %v4378 = vmul.f32 %v1102, %v4141
  %v4379 = vmul.f32 %v1106, %v4136
  %v4380 = vmul.f32 %v1106, %v4141
  %v4381 = vmul.f32 %v1110, %v4136
  %v4382 = vmul.f32 %v1110, %v4141
  %v4383 = vmul.f32 %v1114, %v4136
  %v4384 = vmul.f32 %v1114, %v4141
  %v4385 = vmul.f32 %v1118, %v4136
  %v4386 = vmul.f32 %v1118, %v4141
  %v4387 = vmul.f32 %v1122, %v4136
  %v4388 = vmul.f32 %v1122, %v4141
  %v4389 = vmul.f32 %v1126, %v4136
  %v4390 = vmul.f32 %v1126, %v4141
  %v4391 = vmul.f32 %v1130, %v4136
  %v4392 = vmul.f32 %v1130, %v4141
  %v4393 = vmul.f32 %v1134, %v4136
  %v4394 = vmul.f32 %v1134, %v4141
  %v4395 = vmul.f32 %v1138, %v4136
  %v4396 = vmul.f32 %v1138, %v4141
  %v4397 = vmul.f32 %v1142, %v4136
  %v4398 = vmul.f32 %v1142, %v4141
  %v4399 = vmul.f32 %v1146, %v4136
  %v4400 = vmul.f32 %v1146, %v4141
  %v4401 = vmul.f32 %v1150, %v4136
  %v4402 = vmul.f32 %v1150, %v4141
  %v4403 = vmul.f32 %v1154, %v4136
  %v4404 = vmul.f32 %v1154, %v4141
  %v4405 = vmul.f32 %v1158, %v4136
  %v4406 = vmul.f32 %v1158, %v4141
  %v4407 = vmul.f32 %v1162, %v4136
  %v4408 = vmul.f32 %v1162, %v4141
  %v4409 = vmul.f32 %v1166, %v4136
  %v4410 = vmul.f32 %v1166, %v4141
  %v4411 = vmul.f32 %v1170, %v4136
  %v4412 = vmul.f32 %v1170, %v4141
  %v4413 = vmul.f32 %v1174, %v4136
  %v4414 = vmul.f32 %v1174, %v4141
  %v4415 = vmul.f32 %v1178, %v4136
  %v4416 = vmul.f32 %v1178, %v4141
  %v4417 = vmul.f32 %v1182, %v4136
  %v4418 = vmul.f32 %v1182, %v4141
  %v4419 = vmul.f32 %v1186, %v4136
  %v4420 = vmul.f32 %v1186, %v4141
  %v4421 = vmul.f32 %v1190, %v4136
  %v4422 = vmul.f32 %v1190, %v4141
  %v4423 = vmul.f32 %v1194, %v4136
  %v4424 = vmul.f32 %v1194, %v4141
  %v4425 = vmul.f32 %v1198, %v4136
  %v4426 = vmul.f32 %v1198, %v4141
  %v4427 = vmul.f32 %v1202, %v4136
  %v4428 = vmul.f32 %v1202, %v4141
  %v4429 = vmul.f32 %v1206, %v4136
  %v4430 = vmul.f32 %v1206, %v4141
  %v4431 = vmul.f32 %v1210, %v4136
  %v4432 = vmul.f32 %v1210, %v4141
  %v4433 = vmul.f32 %v1214, %v4136
  %v4434 = vmul.f32 %v1214, %v4141
  %v4435 = vmul.f32 %v1218, %v4136
  %v4436 = vmul.f32 %v1218, %v4141
  %v4437 = vmul.f32 %v1222, %v4136
  %v4438 = vmul.f32 %v1222, %v4141
  %v4439 = vmul.f32 %v1226, %v4136
  %v4440 = vmul.f32 %v1226, %v4141
  %v4441 = vmul.f32 %v1230, %v4136
  %v4442 = vmul.f32 %v1230, %v4141
  %v4443 = vmul.f32 %v1234, %v4136
  %v4444 = vmul.f32 %v1234, %v4141
  %v4445 = vmul.f32 %v1238, %v4136
  %v4446 = vmul.f32 %v1238, %v4141
  %v4447 = vmul.f32 %v1242, %v4136
  %v4448 = vmul.f32 %v1242, %v4141
  %v4449 = vmul.f32 %v1246, %v4136
  %v4450 = vmul.f32 %v1246, %v4141
  %v4451 = vmul.f32 %v1250, %v4136
  %v4452 = vmul.f32 %v1250, %v4141
  %v4453 = vmul.f32 %v1254, %v4136
  %v4454 = vmul.f32 %v1254, %v4141
  %v4455 = vmul.f32 %v1258, %v4136
  %v4456 = vmul.f32 %v1258, %v4141
  %v4457 = vmul.f32 %v1262, %v4136
  %v4458 = vmul.f32 %v1262, %v4141
  %v4459 = vmul.f32 %v1266, %v4136
  %v4460 = vmul.f32 %v1266, %v4141
  %v4461 = vmul.f32 %v1270, %v4136
  %v4462 = vmul.f32 %v1270, %v4141
  %v4463 = vmul.f32 %v1274, %v4136
  %v4464 = vmul.f32 %v1274, %v4141
  %v4465 = vmul.f32 %v1278, %v4136
  %v4466 = vmul.f32 %v1278, %v4141
  %v4467 = vmul.f32 %v1282, %v4136
  %v4468 = vmul.f32 %v1282, %v4141
  %v4469 = vmul.f32 %v1286, %v4136
  %v4470 = vmul.f32 %v1286, %v4141
  %v4471 = vmul.f32 %v1290, %v4136
  %v4472 = vmul.f32 %v1290, %v4141
  %v4473 = vmul.f32 %v1294, %v4136
  %v4474 = vmul.f32 %v1294, %v4141
  %v4475 = vmul.f32 %v1298, %v4136
  %v4476 = vmul.f32 %v1298, %v4141
  %v4477 = vmul.f32 %v1302, %v4136
  %v4478 = vmul.f32 %v1302, %v4141
  %v4479 = vmul.f32 %v1306, %v4136
  %v4480 = vmul.f32 %v1306, %v4141
  %v4481 = vmul.f32 %v1310, %v4136
  %v4482 = vmul.f32 %v1310, %v4141
  %v4483 = vmul.f32 %v1314, %v4136
  %v4484 = vmul.f32 %v1314, %v4141
  %v4485 = vmul.f32 %v1318, %v4136
  %v4486 = vmul.f32 %v1318, %v4141
  %v4487 = vmul.f32 %v1322, %v4136
  %v4488 = vmul.f32 %v1322, %v4141
  %v4489 = vmul.f32 %v1326, %v4136
  %v4490 = vmul.f32 %v1326, %v4141
  %v4491 = vmul.f32 %v1330, %v4136
  %v4492 = vmul.f32 %v1330, %v4141
  %v4493 = vmul.f32 %v1334, %v4136
  %v4494 = vmul.f32 %v1334, %v4141
  %v4495 = vmul.f32 %v1338, %v4136
  %v4496 = vmul.f32 %v1338, %v4141
  %v4497 = vmul.f32 %v1342, %v4136
  %v4498 = vmul.f32 %v1342, %v4141
  %v4499 = vmul.f32 %v1346, %v4136
  %v4500 = vmul.f32 %v1346, %v4141
  %v4501 = vmul.f32 %v1350, %v4136
  %v4502 = vmul.f32 %v1350, %v4141
  %v4503 = vmul.f32 %v1354, %v4136
  %v4504 = vmul.f32 %v1354, %v4141
  %v4505 = vmul.f32 %v1358, %v4136
  %v4506 = vmul.f32 %v1358, %v4141
  %v4507 = vmul.f32 %v1362, %v4136
  %v4508 = vmul.f32 %v1362, %v4141
  %v4509 = vmul.f32 %v1366, %v4136
  %v4510 = vmul.f32 %v1366, %v4141
  %v4511 = vmul.f32 %v1370, %v4136
  %v4512 = vmul.f32 %v1370, %v4141
  %v4513 = vmul.f32 %v1374, %v4136
  %v4514 = vmul.f32 %v1374, %v4141
  %v4515 = vmul.f32 %v1378, %v4136
  %v4516 = vmul.f32 %v1378, %v4141
  %v4517 = vmul.f32 %v1382, %v4136
  %v4518 = vmul.f32 %v1382, %v4141
  %v4519 = vmul.f32 %v1386, %v4136
  %v4520 = vmul.f32 %v1386, %v4141
  %v4521 = vmul.f32 %v1390, %v4136
  %v4522 = vmul.f32 %v1390, %v4141
  %v4523 = vmul.f32 %v1394, %v4136
  %v4524 = vmul.f32 %v1394, %v4141
  %v4525 = vmul.f32 %v1398, %v4136
  %v4526 = vmul.f32 %v1398, %v4141
  %v4527 = vmul.f32 %v1402, %v4136
  %v4528 = vmul.f32 %v1402, %v4141
  %v4529 = vmul.f32 %v1406, %v4136
  %v4530 = vmul.f32 %v1406, %v4141
  %v4531 = vmul.f32 %v1410, %v4136
  %v4532 = vmul.f32 %v1410, %v4141
  %v4533 = vmul.f32 %v1414, %v4136
  %v4534 = vmul.f32 %v1414, %v4141
  %v4535 = vmul.f32 %v1418, %v4136
  %v4536 = vmul.f32 %v1418, %v4141
  %v4537 = vmul.f32 %v1422, %v4136
  %v4538 = vmul.f32 %v1422, %v4141
  %v4539 = vmul.f32 %v1426, %v4136
  %v4540 = vmul.f32 %v1426, %v4141
  %v4541 = vmul.f32 %v1430, %v4136
  %v4542 = vmul.f32 %v1430, %v4141
  %v4543 = vmul.f32 %v4036, %v4136
  %v4544 = vmul.f32 %v4036, %v4141
  %v4545 = vmul.f32 %v4040, %v4136
  %v4546 = vmul.f32 %v4040, %v4141
  %v4547 = vmul.f32 %v4044, %v4136
  %v4548 = vmul.f32 %v4044, %v4141
  %v4549 = vmul.f32 %v4048, %v4136
  %v4550 = vmul.f32 %v4048, %v4141
  %v4551 = vmul.f32 %v4052, %v4136
  %v4552 = vmul.f32 %v4052, %v4141
  %v4553 = vmul.f32 %v4056, %v4136
  %v4554 = vmul.f32 %v4056, %v4141
  %v4555 = vmul.f32 %v4060, %v4136
  %v4556 = vmul.f32 %v4060, %v4141
  %v4557 = vmul.f32 %v4064, %v4136
  %v4558 = vmul.f32 %v4064, %v4141
  %v4559 = vmul.f32 %v4068, %v4136
  %v4560 = vmul.f32 %v4068, %v4141
  %v4561 = vmul.f32 %v4072, %v4136
  %v4562 = vmul.f32 %v4072, %v4141
  %v4563 = vmul.f32 %v4076, %v4136
  %v4564 = vmul.f32 %v4076, %v4141
  %v4565 = vmul.f32 %v4080, %v4136
  %v4566 = vmul.f32 %v4080, %v4141
  %v4567 = vmul.f32 %v4084, %v4136
  %v4568 = vmul.f32 %v4084, %v4141
  %v4569 = vmul.f32 %v4088, %v4136
  %v4570 = vmul.f32 %v4088, %v4141
  %v4571 = vmul.f32 %v4092, %v4136
  %v4572 = vmul.f32 %v4092, %v4141
  %v4573 = vmul.f32 %v4096, %v4136
  %v4574 = vmul.f32 %v4096, %v4141
  %v4575 = vmul.f32 %v4100, %v4136
  %v4576 = vmul.f32 %v4100, %v4141
  %v4577 = vmul.f32 %v4104, %v4136
  %v4578 = vmul.f32 %v4104, %v4141
  %v4579 = vmul.f32 %v4108, %v4136
  %v4580 = vmul.f32 %v4108, %v4141
  %v4581 = vmul.f32 %v4112, %v4136
  %v4582 = vmul.f32 %v4112, %v4141
  %v4583 = vadd.f32 %v3573, %v4143
  %v4584 = vadd.f32 %v3574, %v4144
  %v4585 = vadd.f32 %v3575, %v4145
  %v4586 = vadd.f32 %v3576, %v4146
  %v4587 = vadd.f32 %v3577, %v4147
  %v4588 = vadd.f32 %v3578, %v4148
  %v4589 = vadd.f32 %v3579, %v4149
  %v4590 = vadd.f32 %v3580, %v4150
  %v4591 = vadd.f32 %v3581, %v4151
  %v4592 = vadd.f32 %v3582, %v4152
  %v4593 = vadd.f32 %v3583, %v4153
  %v4594 = vadd.f32 %v3584, %v4154
  %v4595 = vadd.f32 %v3585, %v4155
  %v4596 = vadd.f32 %v3586, %v4156
  %v4597 = vadd.f32 %v3587, %v4157
  %v4598 = vadd.f32 %v3588, %v4158
  %v4599 = vadd.f32 %v3589, %v4159
  %v4600 = vadd.f32 %v3590, %v4160
  %v4601 = vadd.f32 %v3591, %v4161
  %v4602 = vadd.f32 %v3592, %v4162
  %v4603 = vadd.f32 %v3593, %v4163
  %v4604 = vadd.f32 %v3594, %v4164
  %v4605 = vadd.f32 %v3595, %v4165
  %v4606 = vadd.f32 %v3596, %v4166
  %v4607 = vadd.f32 %v3597, %v4167
  %v4608 = vadd.f32 %v3598, %v4168
  %v4609 = vadd.f32 %v3599, %v4169
  %v4610 = vadd.f32 %v3600, %v4170
  %v4611 = vadd.f32 %v3601, %v4171
  %v4612 = vadd.f32 %v3602, %v4172
  %v4613 = vadd.f32 %v3603, %v4173
  %v4614 = vadd.f32 %v3604, %v4174
  %v4615 = vadd.f32 %v3605, %v4175
  %v4616 = vadd.f32 %v3606, %v4176
  %v4617 = vadd.f32 %v3607, %v4177
  %v4618 = vadd.f32 %v3608, %v4178
  %v4619 = vadd.f32 %v3609, %v4179
  %v4620 = vadd.f32 %v3610, %v4180
  %v4621 = vadd.f32 %v3611, %v4181
  %v4622 = vadd.f32 %v3612, %v4182
  %v4623 = vadd.f32 %v3613, %v4183
  %v4624 = vadd.f32 %v3614, %v4184
  %v4625 = vadd.f32 %v3615, %v4185
  %v4626 = vadd.f32 %v3616, %v4186
  %v4627 = vadd.f32 %v3617, %v4187
  %v4628 = vadd.f32 %v3618, %v4188
  %v4629 = vadd.f32 %v3619, %v4189
  %v4630 = vadd.f32 %v3620, %v4190
  %v4631 = vadd.f32 %v3621, %v4191
  %v4632 = vadd.f32 %v3622, %v4192
  %v4633 = vadd.f32 %v3623, %v4193
  %v4634 = vadd.f32 %v3624, %v4194
  %v4635 = vadd.f32 %v3625, %v4195
  %v4636 = vadd.f32 %v3626, %v4196
  %v4637 = vadd.f32 %v3627, %v4197
  %v4638 = vadd.f32 %v3628, %v4198
  %v4639 = vadd.f32 %v3629, %v4199
  %v4640 = vadd.f32 %v3630, %v4200
  %v4641 = vadd.f32 %v3631, %v4201
  %v4642 = vadd.f32 %v3632, %v4202
  %v4643 = vadd.f32 %v3633, %v4203
  %v4644 = vadd.f32 %v3634, %v4204
  %v4645 = vadd.f32 %v3635, %v4205
  %v4646 = vadd.f32 %v3636, %v4206
  %v4647 = vadd.f32 %v3637, %v4207
  %v4648 = vadd.f32 %v3638, %v4208
  %v4649 = vadd.f32 %v3639, %v4209
  %v4650 = vadd.f32 %v3640, %v4210
  %v4651 = vadd.f32 %v3641, %v4211
  %v4652 = vadd.f32 %v3642, %v4212
  %v4653 = vadd.f32 %v3643, %v4213
  %v4654 = vadd.f32 %v3644, %v4214
  %v4655 = vadd.f32 %v3645, %v4215
  %v4656 = vadd.f32 %v3646, %v4216
  %v4657 = vadd.f32 %v3647, %v4217
  %v4658 = vadd.f32 %v3648, %v4218
  %v4659 = vadd.f32 %v3649, %v4219
  %v4660 = vadd.f32 %v3650, %v4220
  %v4661 = vadd.f32 %v3651, %v4221
  %v4662 = vadd.f32 %v3652, %v4222
  %v4663 = vadd.f32 %v3653, %v4223
  %v4664 = vadd.f32 %v3654, %v4224
  %v4665 = vadd.f32 %v3655, %v4225
  %v4666 = vadd.f32 %v3656, %v4226
  %v4667 = vadd.f32 %v3657, %v4227
  %v4668 = vadd.f32 %v3658, %v4228
  %v4669 = vadd.f32 %v3659, %v4229
  %v4670 = vadd.f32 %v3660, %v4230
  %v4671 = vadd.f32 %v3661, %v4231
  %v4672 = vadd.f32 %v3662, %v4232
  %v4673 = vadd.f32 %v3663, %v4233
  %v4674 = vadd.f32 %v3664, %v4234
  %v4675 = vadd.f32 %v3665, %v4235
  %v4676 = vadd.f32 %v3666, %v4236
  %v4677 = vadd.f32 %v3667, %v4237
  %v4678 = vadd.f32 %v3668, %v4238
  %v4679 = vadd.f32 %v3669, %v4239
  %v4680 = vadd.f32 %v3670, %v4240
  %v4681 = vadd.f32 %v3671, %v4241
  %v4682 = vadd.f32 %v3672, %v4242
  %v4683 = vadd.f32 %v3673, %v4243
  %v4684 = vadd.f32 %v3674, %v4244
  %v4685 = vadd.f32 %v3675, %v4245
  %v4686 = vadd.f32 %v3676, %v4246
  %v4687 = vadd.f32 %v3677, %v4247
  %v4688 = vadd.f32 %v3678, %v4248
  %v4689 = vadd.f32 %v3679, %v4249
  %v4690 = vadd.f32 %v3680, %v4250
  %v4691 = vadd.f32 %v3681, %v4251
  %v4692 = vadd.f32 %v3682, %v4252
  %v4693 = vadd.f32 %v3683, %v4253
  %v4694 = vadd.f32 %v3684, %v4254
  %v4695 = vadd.f32 %v3685, %v4255
  %v4696 = vadd.f32 %v3686, %v4256
  %v4697 = vadd.f32 %v3687, %v4257
  %v4698 = vadd.f32 %v3688, %v4258
  %v4699 = vadd.f32 %v3689, %v4259
  %v4700 = vadd.f32 %v3690, %v4260
  %v4701 = vadd.f32 %v3691, %v4261
  %v4702 = vadd.f32 %v3692, %v4262
  %v4703 = vadd.f32 %v3693, %v4263
  %v4704 = vadd.f32 %v3694, %v4264
  %v4705 = vadd.f32 %v3695, %v4265
  %v4706 = vadd.f32 %v3696, %v4266
  %v4707 = vadd.f32 %v3697, %v4267
  %v4708 = vadd.f32 %v3698, %v4268
  %v4709 = vadd.f32 %v3699, %v4269
  %v4710 = vadd.f32 %v3700, %v4270
  %v4711 = vadd.f32 %v3701, %v4271
  %v4712 = vadd.f32 %v3702, %v4272
  %v4713 = vadd.f32 %v3703, %v4273
  %v4714 = vadd.f32 %v3704, %v4274
  %v4715 = vadd.f32 %v3705, %v4275
  %v4716 = vadd.f32 %v3706, %v4276
  %v4717 = vadd.f32 %v3707, %v4277
  %v4718 = vadd.f32 %v3708, %v4278
  %v4719 = vadd.f32 %v3709, %v4279
  %v4720 = vadd.f32 %v3710, %v4280
  %v4721 = vadd.f32 %v3711, %v4281
  %v4722 = vadd.f32 %v3712, %v4282
  %v4723 = vadd.f32 %v3713, %v4283
  %v4724 = vadd.f32 %v3714, %v4284
  %v4725 = vadd.f32 %v3715, %v4285
  %v4726 = vadd.f32 %v3716, %v4286
  %v4727 = vadd.f32 %v3717, %v4287
  %v4728 = vadd.f32 %v3718, %v4288
  %v4729 = vadd.f32 %v3719, %v4289
  %v4730 = vadd.f32 %v3720, %v4290
  %v4731 = vadd.f32 %v3721, %v4291
  %v4732 = vadd.f32 %v3722, %v4292
  %v4733 = vadd.f32 %v3723, %v4293
  %v4734 = vadd.f32 %v3724, %v4294
  %v4735 = vadd.f32 %v3725, %v4295
  %v4736 = vadd.f32 %v3726, %v4296
  %v4737 = vadd.f32 %v3727, %v4297
  %v4738 = vadd.f32 %v3728, %v4298
  %v4739 = vadd.f32 %v3729, %v4299
  %v4740 = vadd.f32 %v3730, %v4300
  %v4741 = vadd.f32 %v3731, %v4301
  %v4742 = vadd.f32 %v3732, %v4302
  %v4743 = vadd.f32 %v3733, %v4303
  %v4744 = vadd.f32 %v3734, %v4304
  %v4745 = vadd.f32 %v3735, %v4305
  %v4746 = vadd.f32 %v3736, %v4306
  %v4747 = vadd.f32 %v3737, %v4307
  %v4748 = vadd.f32 %v3738, %v4308
  %v4749 = vadd.f32 %v3739, %v4309
  %v4750 = vadd.f32 %v3740, %v4310
  %v4751 = vadd.f32 %v3741, %v4311
  %v4752 = vadd.f32 %v3742, %v4312
  %v4753 = vadd.f32 %v3743, %v4313
  %v4754 = vadd.f32 %v3744, %v4314
  %v4755 = vadd.f32 %v3745, %v4315
  %v4756 = vadd.f32 %v3746, %v4316
  %v4757 = vadd.f32 %v3747, %v4317
  %v4758 = vadd.f32 %v3748, %v4318
  %v4759 = vadd.f32 %v3749, %v4319
  %v4760 = vadd.f32 %v3750, %v4320
  %v4761 = vadd.f32 %v3751, %v4321
  %v4762 = vadd.f32 %v3752, %v4322
  %v4763 = vadd.f32 %v3753, %v4323
  %v4764 = vadd.f32 %v3754, %v4324
  %v4765 = vadd.f32 %v3755, %v4325
  %v4766 = vadd.f32 %v3756, %v4326
  %v4767 = vadd.f32 %v3757, %v4327
  %v4768 = vadd.f32 %v3758, %v4328
  %v4769 = vadd.f32 %v3759, %v4329
  %v4770 = vadd.f32 %v3760, %v4330
  %v4771 = vadd.f32 %v3761, %v4331
  %v4772 = vadd.f32 %v3762, %v4332
  %v4773 = vadd.f32 %v3763, %v4333
  %v4774 = vadd.f32 %v3764, %v4334
  %v4775 = vadd.f32 %v3765, %v4335
  %v4776 = vadd.f32 %v3766, %v4336
  %v4777 = vadd.f32 %v3767, %v4337
  %v4778 = vadd.f32 %v3768, %v4338
  %v4779 = vadd.f32 %v3769, %v4339
  %v4780 = vadd.f32 %v3770, %v4340
  %v4781 = vadd.f32 %v3771, %v4341
  %v4782 = vadd.f32 %v3772, %v4342
  %v4783 = vadd.f32 %v3773, %v4343
  %v4784 = vadd.f32 %v3774, %v4344
  %v4785 = vadd.f32 %v3775, %v4345
  %v4786 = vadd.f32 %v3776, %v4346
  %v4787 = vadd.f32 %v3777, %v4347
  %v4788 = vadd.f32 %v3778, %v4348
  %v4789 = vadd.f32 %v3779, %v4349
  %v4790 = vadd.f32 %v3780, %v4350
  %v4791 = vadd.f32 %v3781, %v4351
  %v4792 = vadd.f32 %v3782, %v4352
  %v4793 = vadd.f32 %v3783, %v4353
  %v4794 = vadd.f32 %v3784, %v4354
  %v4795 = vadd.f32 %v3785, %v4355
  %v4796 = vadd.f32 %v3786, %v4356
  %v4797 = vadd.f32 %v3787, %v4357
  %v4798 = vadd.f32 %v3788, %v4358
  %v4799 = vadd.f32 %v3789, %v4359
  %v4800 = vadd.f32 %v3790, %v4360
  %v4801 = vadd.f32 %v3791, %v4361
  %v4802 = vadd.f32 %v3792, %v4362
  %v4803 = vadd.f32 %v3793, %v4363
  %v4804 = vadd.f32 %v3794, %v4364
  %v4805 = vadd.f32 %v3795, %v4365
  %v4806 = vadd.f32 %v3796, %v4366
  %v4807 = vadd.f32 %v3797, %v4367
  %v4808 = vadd.f32 %v3798, %v4368
  %v4809 = vadd.f32 %v3799, %v4369
  %v4810 = vadd.f32 %v3800, %v4370
  %v4811 = vadd.f32 %v3801, %v4371
  %v4812 = vadd.f32 %v3802, %v4372
  %v4813 = vadd.f32 %v3803, %v4373
  %v4814 = vadd.f32 %v3804, %v4374
  %v4815 = vadd.f32 %v3805, %v4375
  %v4816 = vadd.f32 %v3806, %v4376
  %v4817 = vadd.f32 %v3807, %v4377
  %v4818 = vadd.f32 %v3808, %v4378
  %v4819 = vadd.f32 %v3809, %v4379
  %v4820 = vadd.f32 %v3810, %v4380
  %v4821 = vadd.f32 %v3811, %v4381
  %v4822 = vadd.f32 %v3812, %v4382
  %v4823 = vadd.f32 %v3813, %v4383
  %v4824 = vadd.f32 %v3814, %v4384
  %v4825 = vadd.f32 %v3815, %v4385
  %v4826 = vadd.f32 %v3816, %v4386
  %v4827 = vadd.f32 %v3817, %v4387
  %v4828 = vadd.f32 %v3818, %v4388
  %v4829 = vadd.f32 %v3819, %v4389
  %v4830 = vadd.f32 %v3820, %v4390
  %v4831 = vadd.f32 %v3821, %v4391
  %v4832 = vadd.f32 %v3822, %v4392
  %v4833 = vadd.f32 %v3823, %v4393
  %v4834 = vadd.f32 %v3824, %v4394
  %v4835 = vadd.f32 %v3825, %v4395
  %v4836 = vadd.f32 %v3826, %v4396
  %v4837 = vadd.f32 %v3827, %v4397
  %v4838 = vadd.f32 %v3828, %v4398
  %v4839 = vadd.f32 %v3829, %v4399
  %v4840 = vadd.f32 %v3830, %v4400
  %v4841 = vadd.f32 %v3831, %v4401
  %v4842 = vadd.f32 %v3832, %v4402
  %v4843 = vadd.f32 %v3833, %v4403
  %v4844 = vadd.f32 %v3834, %v4404
  %v4845 = vadd.f32 %v3835, %v4405
  %v4846 = vadd.f32 %v3836, %v4406
  %v4847 = vadd.f32 %v3837, %v4407
  %v4848 = vadd.f32 %v3838, %v4408
  %v4849 = vadd.f32 %v3839, %v4409
  %v4850 = vadd.f32 %v3840, %v4410
  %v4851 = vadd.f32 %v3841, %v4411
  %v4852 = vadd.f32 %v3842, %v4412
  %v4853 = vadd.f32 %v3843, %v4413
  %v4854 = vadd.f32 %v3844, %v4414
  %v4855 = vadd.f32 %v3845, %v4415
  %v4856 = vadd.f32 %v3846, %v4416
  %v4857 = vadd.f32 %v3847, %v4417
  %v4858 = vadd.f32 %v3848, %v4418
  %v4859 = vadd.f32 %v3849, %v4419
  %v4860 = vadd.f32 %v3850, %v4420
  %v4861 = vadd.f32 %v3851, %v4421
  %v4862 = vadd.f32 %v3852, %v4422
  %v4863 = vadd.f32 %v3853, %v4423
  %v4864 = vadd.f32 %v3854, %v4424
  %v4865 = vadd.f32 %v3855, %v4425
  %v4866 = vadd.f32 %v3856, %v4426
  %v4867 = vadd.f32 %v3857, %v4427
  %v4868 = vadd.f32 %v3858, %v4428
  %v4869 = vadd.f32 %v3859, %v4429
  %v4870 = vadd.f32 %v3860, %v4430
  %v4871 = vadd.f32 %v3861, %v4431
  %v4872 = vadd.f32 %v3862, %v4432
  %v4873 = vadd.f32 %v3863, %v4433
  %v4874 = vadd.f32 %v3864, %v4434
  %v4875 = vadd.f32 %v3865, %v4435
  %v4876 = vadd.f32 %v3866, %v4436
  %v4877 = vadd.f32 %v3867, %v4437
  %v4878 = vadd.f32 %v3868, %v4438
  %v4879 = vadd.f32 %v3869, %v4439
  %v4880 = vadd.f32 %v3870, %v4440
  %v4881 = vadd.f32 %v3871, %v4441
  %v4882 = vadd.f32 %v3872, %v4442
  %v4883 = vadd.f32 %v3873, %v4443
  %v4884 = vadd.f32 %v3874, %v4444
  %v4885 = vadd.f32 %v3875, %v4445
  %v4886 = vadd.f32 %v3876, %v4446
  %v4887 = vadd.f32 %v3877, %v4447
  %v4888 = vadd.f32 %v3878, %v4448
  %v4889 = vadd.f32 %v3879, %v4449
  %v4890 = vadd.f32 %v3880, %v4450
  %v4891 = vadd.f32 %v3881, %v4451
  %v4892 = vadd.f32 %v3882, %v4452
  %v4893 = vadd.f32 %v3883, %v4453
  %v4894 = vadd.f32 %v3884, %v4454
  %v4895 = vadd.f32 %v3885, %v4455
  %v4896 = vadd.f32 %v3886, %v4456
  %v4897 = vadd.f32 %v3887, %v4457
  %v4898 = vadd.f32 %v3888, %v4458
  %v4899 = vadd.f32 %v3889, %v4459
  %v4900 = vadd.f32 %v3890, %v4460
  %v4901 = vadd.f32 %v3891, %v4461
  %v4902 = vadd.f32 %v3892, %v4462
  %v4903 = vadd.f32 %v3893, %v4463
  %v4904 = vadd.f32 %v3894, %v4464
  %v4905 = vadd.f32 %v3895, %v4465
  %v4906 = vadd.f32 %v3896, %v4466
  %v4907 = vadd.f32 %v3897, %v4467
  %v4908 = vadd.f32 %v3898, %v4468
  %v4909 = vadd.f32 %v3899, %v4469
  %v4910 = vadd.f32 %v3900, %v4470
  %v4911 = vadd.f32 %v3901, %v4471
  %v4912 = vadd.f32 %v3902, %v4472
  %v4913 = vadd.f32 %v3903, %v4473
  %v4914 = vadd.f32 %v3904, %v4474
  %v4915 = vadd.f32 %v3905, %v4475
  %v4916 = vadd.f32 %v3906, %v4476
  %v4917 = vadd.f32 %v3907, %v4477
  %v4918 = vadd.f32 %v3908, %v4478
  %v4919 = vadd.f32 %v3909, %v4479
  %v4920 = vadd.f32 %v3910, %v4480
  %v4921 = vadd.f32 %v3911, %v4481
  %v4922 = vadd.f32 %v3912, %v4482
  %v4923 = vadd.f32 %v3913, %v4483
  %v4924 = vadd.f32 %v3914, %v4484
  %v4925 = vadd.f32 %v3915, %v4485
  %v4926 = vadd.f32 %v3916, %v4486
  %v4927 = vadd.f32 %v3917, %v4487
  %v4928 = vadd.f32 %v3918, %v4488
  %v4929 = vadd.f32 %v3919, %v4489
  %v4930 = vadd.f32 %v3920, %v4490
  %v4931 = vadd.f32 %v3921, %v4491
  %v4932 = vadd.f32 %v3922, %v4492
  %v4933 = vadd.f32 %v3923, %v4493
  %v4934 = vadd.f32 %v3924, %v4494
  %v4935 = vadd.f32 %v3925, %v4495
  %v4936 = vadd.f32 %v3926, %v4496
  %v4937 = vadd.f32 %v3927, %v4497
  %v4938 = vadd.f32 %v3928, %v4498
  %v4939 = vadd.f32 %v3929, %v4499
  %v4940 = vadd.f32 %v3930, %v4500
  %v4941 = vadd.f32 %v3931, %v4501
  %v4942 = vadd.f32 %v3932, %v4502
  %v4943 = vadd.f32 %v3933, %v4503
  %v4944 = vadd.f32 %v3934, %v4504
  %v4945 = vadd.f32 %v3935, %v4505
  %v4946 = vadd.f32 %v3936, %v4506
  %v4947 = vadd.f32 %v3937, %v4507
  %v4948 = vadd.f32 %v3938, %v4508
  %v4949 = vadd.f32 %v3939, %v4509
  %v4950 = vadd.f32 %v3940, %v4510
  %v4951 = vadd.f32 %v3941, %v4511
  %v4952 = vadd.f32 %v3942, %v4512
  %v4953 = vadd.f32 %v3943, %v4513
  %v4954 = vadd.f32 %v3944, %v4514
  %v4955 = vadd.f32 %v3945, %v4515
  %v4956 = vadd.f32 %v3946, %v4516
  %v4957 = vadd.f32 %v3947, %v4517
  %v4958 = vadd.f32 %v3948, %v4518
  %v4959 = vadd.f32 %v3949, %v4519
  %v4960 = vadd.f32 %v3950, %v4520
  %v4961 = vadd.f32 %v3951, %v4521
  %v4962 = vadd.f32 %v3952, %v4522
  %v4963 = vadd.f32 %v3953, %v4523
  %v4964 = vadd.f32 %v3954, %v4524
  %v4965 = vadd.f32 %v3955, %v4525
  %v4966 = vadd.f32 %v3956, %v4526
  %v4967 = vadd.f32 %v3957, %v4527
  %v4968 = vadd.f32 %v3958, %v4528
  %v4969 = vadd.f32 %v3959, %v4529
  %v4970 = vadd.f32 %v3960, %v4530
  %v4971 = vadd.f32 %v3961, %v4531
  %v4972 = vadd.f32 %v3962, %v4532
  %v4973 = vadd.f32 %v3963, %v4533
  %v4974 = vadd.f32 %v3964, %v4534
  %v4975 = vadd.f32 %v3965, %v4535
  %v4976 = vadd.f32 %v3966, %v4536
  %v4977 = vadd.f32 %v3967, %v4537
  %v4978 = vadd.f32 %v3968, %v4538
  %v4979 = vadd.f32 %v3969, %v4539
  %v4980 = vadd.f32 %v3970, %v4540
  %v4981 = vadd.f32 %v3971, %v4541
  %v4982 = vadd.f32 %v3972, %v4542
  %v4983 = vadd.f32 %v3973, %v4543
  %v4984 = vadd.f32 %v3974, %v4544
  %v4985 = vadd.f32 %v3975, %v4545
  %v4986 = vadd.f32 %v3976, %v4546
  %v4987 = vadd.f32 %v3977, %v4547
  %v4988 = vadd.f32 %v3978, %v4548
  %v4989 = vadd.f32 %v3979, %v4549
  %v4990 = vadd.f32 %v3980, %v4550
  %v4991 = vadd.f32 %v3981, %v4551
  %v4992 = vadd.f32 %v3982, %v4552
  %v4993 = vadd.f32 %v3983, %v4553
  %v4994 = vadd.f32 %v3984, %v4554
  %v4995 = vadd.f32 %v3985, %v4555
  %v4996 = vadd.f32 %v3986, %v4556
  %v4997 = vadd.f32 %v3987, %v4557
  %v4998 = vadd.f32 %v3988, %v4558
  %v4999 = vadd.f32 %v3989, %v4559
  %v5000 = vadd.f32 %v3990, %v4560
  %v5001 = vadd.f32 %v3991, %v4561
  %v5002 = vadd.f32 %v3992, %v4562
  %v5003 = vadd.f32 %v3993, %v4563
  %v5004 = vadd.f32 %v3994, %v4564
  %v5005 = vadd.f32 %v3995, %v4565
  %v5006 = vadd.f32 %v3996, %v4566
  %v5007 = vadd.f32 %v3997, %v4567
  %v5008 = vadd.f32 %v3998, %v4568
  %v5009 = vadd.f32 %v3999, %v4569
  %v5010 = vadd.f32 %v4000, %v4570
  %v5011 = vadd.f32 %v4001, %v4571
  %v5012 = vadd.f32 %v4002, %v4572
  %v5013 = vadd.f32 %v4003, %v4573
  %v5014 = vadd.f32 %v4004, %v4574
  %v5015 = vadd.f32 %v4005, %v4575
  %v5016 = vadd.f32 %v4006, %v4576
  %v5017 = vadd.f32 %v4007, %v4577
  %v5018 = vadd.f32 %v4008, %v4578
  %v5019 = vadd.f32 %v4009, %v4579
  %v5020 = vadd.f32 %v4010, %v4580
  %v5021 = vadd.f32 %v4011, %v4581
  %v5022 = vadd.f32 %v4012, %v4582
  %v5024 = vlaneseq
  %v5025 = vshrl.u32 %v5024, 7
  %v5026 = vsub.s32 0, %v5025
  %v5027 = vrot.slane %v289, %v5026
  %5030 = vset.pattern.permute.xlu0 0
  %5031 = vperm.xlu0 %5030, %v321
  %v5032 = vpop.permute.xlu0 %5031
  %5035 = vset.pattern.permute.xlu0 0
  %5036 = vperm.xlu0 %5035, %v322
  %v5037 = vpop.permute.xlu0 %5036
  %v5039 = vmul.f32 %v638, %v5032
  %v5040 = vmul.f32 %v638, %v5037
  %v5041 = vmul.f32 %v642, %v5032
  %v5042 = vmul.f32 %v642, %v5037
  %v5043 = vmul.f32 %v646, %v5032
  %v5044 = vmul.f32 %v646, %v5037
  %v5045 = vmul.f32 %v650, %v5032
  %v5046 = vmul.f32 %v650, %v5037
  %v5047 = vmul.f32 %v654, %v5032
  %v5048 = vmul.f32 %v654, %v5037
  %v5049 = vmul.f32 %v658, %v5032
  %v5050 = vmul.f32 %v658, %v5037
  %v5051 = vmul.f32 %v662, %v5032
  %v5052 = vmul.f32 %v662, %v5037
  %v5053 = vmul.f32 %v666, %v5032
  %v5054 = vmul.f32 %v666, %v5037
  %v5055 = vmul.f32 %v670, %v5032
  %v5056 = vmul.f32 %v670, %v5037
  %v5057 = vmul.f32 %v674, %v5032
  %v5058 = vmul.f32 %v674, %v5037
  %v5059 = vmul.f32 %v678, %v5032
  %v5060 = vmul.f32 %v678, %v5037
  %v5061 = vmul.f32 %v682, %v5032
  %v5062 = vmul.f32 %v682, %v5037
  %v5063 = vmul.f32 %v686, %v5032
  %v5064 = vmul.f32 %v686, %v5037
  %v5065 = vmul.f32 %v690, %v5032
  %v5066 = vmul.f32 %v690, %v5037
  %v5067 = vmul.f32 %v694, %v5032
  %v5068 = vmul.f32 %v694, %v5037
  %v5069 = vmul.f32 %v698, %v5032
  %v5070 = vmul.f32 %v698, %v5037
  %v5071 = vmul.f32 %v702, %v5032
  %v5072 = vmul.f32 %v702, %v5037
  %v5073 = vmul.f32 %v706, %v5032
  %v5074 = vmul.f32 %v706, %v5037
  %v5075 = vmul.f32 %v710, %v5032
  %v5076 = vmul.f32 %v710, %v5037
  %v5077 = vmul.f32 %v2119, %v5032
  %v5078 = vmul.f32 %v2119, %v5037
  %v5079 = vmul.f32 %v718, %v5032
  %v5080 = vmul.f32 %v718, %v5037
  %v5081 = vmul.f32 %v722, %v5032
  %v5082 = vmul.f32 %v722, %v5037
  %v5083 = vmul.f32 %v726, %v5032
  %v5084 = vmul.f32 %v726, %v5037
  %v5085 = vmul.f32 %v730, %v5032
  %v5086 = vmul.f32 %v730, %v5037
  %v5087 = vmul.f32 %v734, %v5032
  %v5088 = vmul.f32 %v734, %v5037
  %v5089 = vmul.f32 %v738, %v5032
  %v5090 = vmul.f32 %v738, %v5037
  %v5091 = vmul.f32 %v742, %v5032
  %v5092 = vmul.f32 %v742, %v5037
  %v5093 = vmul.f32 %v746, %v5032
  %v5094 = vmul.f32 %v746, %v5037
  %v5095 = vmul.f32 %v750, %v5032
  %v5096 = vmul.f32 %v750, %v5037
  %v5097 = vmul.f32 %v754, %v5032
  %v5098 = vmul.f32 %v754, %v5037
  %v5099 = vmul.f32 %v758, %v5032
  %v5100 = vmul.f32 %v758, %v5037
  %v5101 = vmul.f32 %v762, %v5032
  %v5102 = vmul.f32 %v762, %v5037
  %v5103 = vmul.f32 %v766, %v5032
  %v5104 = vmul.f32 %v766, %v5037
  %v5105 = vmul.f32 %v770, %v5032
  %v5106 = vmul.f32 %v770, %v5037
  %v5107 = vmul.f32 %v774, %v5032
  %v5108 = vmul.f32 %v774, %v5037
  %v5109 = vmul.f32 %v778, %v5032
  %v5110 = vmul.f32 %v778, %v5037
  %v5111 = vmul.f32 %v782, %v5032
  %v5112 = vmul.f32 %v782, %v5037
  %v5113 = vmul.f32 %v786, %v5032
  %v5114 = vmul.f32 %v786, %v5037
  %v5115 = vmul.f32 %v790, %v5032
  %v5116 = vmul.f32 %v790, %v5037
  %v5117 = vmul.f32 %v2123, %v5032
  %v5118 = vmul.f32 %v2123, %v5037
  %v5119 = vmul.f32 %v798, %v5032
  %v5120 = vmul.f32 %v798, %v5037
  %v5121 = vmul.f32 %v802, %v5032
  %v5122 = vmul.f32 %v802, %v5037
  %v5123 = vmul.f32 %v806, %v5032
  %v5124 = vmul.f32 %v806, %v5037
  %v5125 = vmul.f32 %v810, %v5032
  %v5126 = vmul.f32 %v810, %v5037
  %v5127 = vmul.f32 %v814, %v5032
  %v5128 = vmul.f32 %v814, %v5037
  %v5129 = vmul.f32 %v818, %v5032
  %v5130 = vmul.f32 %v818, %v5037
  %v5131 = vmul.f32 %v822, %v5032
  %v5132 = vmul.f32 %v822, %v5037
  %v5133 = vmul.f32 %v826, %v5032
  %v5134 = vmul.f32 %v826, %v5037
  %v5135 = vmul.f32 %v830, %v5032
  %v5136 = vmul.f32 %v830, %v5037
  %v5137 = vmul.f32 %v834, %v5032
  %v5138 = vmul.f32 %v834, %v5037
  %v5139 = vmul.f32 %v838, %v5032
  %v5140 = vmul.f32 %v838, %v5037
  %v5141 = vmul.f32 %v842, %v5032
  %v5142 = vmul.f32 %v842, %v5037
  %v5143 = vmul.f32 %v846, %v5032
  %v5144 = vmul.f32 %v846, %v5037
  %v5145 = vmul.f32 %v850, %v5032
  %v5146 = vmul.f32 %v850, %v5037
  %v5147 = vmul.f32 %v854, %v5032
  %v5148 = vmul.f32 %v854, %v5037
  %v5149 = vmul.f32 %v858, %v5032
  %v5150 = vmul.f32 %v858, %v5037
  %v5151 = vmul.f32 %v862, %v5032
  %v5152 = vmul.f32 %v862, %v5037
  %v5153 = vmul.f32 %v866, %v5032
  %v5154 = vmul.f32 %v866, %v5037
  %v5155 = vmul.f32 %v870, %v5032
  %v5156 = vmul.f32 %v870, %v5037
  %v5157 = vmul.f32 %v2127, %v5032
  %v5158 = vmul.f32 %v2127, %v5037
  %v5159 = vmul.f32 %v878, %v5032
  %v5160 = vmul.f32 %v878, %v5037
  %v5161 = vmul.f32 %v882, %v5032
  %v5162 = vmul.f32 %v882, %v5037
  %v5163 = vmul.f32 %v886, %v5032
  %v5164 = vmul.f32 %v886, %v5037
  %v5165 = vmul.f32 %v890, %v5032
  %v5166 = vmul.f32 %v890, %v5037
  %v5167 = vmul.f32 %v894, %v5032
  %v5168 = vmul.f32 %v894, %v5037
  %v5169 = vmul.f32 %v898, %v5032
  %v5170 = vmul.f32 %v898, %v5037
  %v5171 = vmul.f32 %v902, %v5032
  %v5172 = vmul.f32 %v902, %v5037
  %v5173 = vmul.f32 %v906, %v5032
  %v5174 = vmul.f32 %v906, %v5037
  %v5175 = vmul.f32 %v910, %v5032
  %v5176 = vmul.f32 %v910, %v5037
  %v5177 = vmul.f32 %v914, %v5032
  %v5178 = vmul.f32 %v914, %v5037
  %v5179 = vmul.f32 %v918, %v5032
  %v5180 = vmul.f32 %v918, %v5037
  %v5181 = vmul.f32 %v922, %v5032
  %v5182 = vmul.f32 %v922, %v5037
  %v5183 = vmul.f32 %v926, %v5032
  %v5184 = vmul.f32 %v926, %v5037
  %v5185 = vmul.f32 %v930, %v5032
  %v5186 = vmul.f32 %v930, %v5037
  %v5187 = vmul.f32 %v934, %v5032
  %v5188 = vmul.f32 %v934, %v5037
  %v5189 = vmul.f32 %v938, %v5032
  %v5190 = vmul.f32 %v938, %v5037
  %v5191 = vmul.f32 %v942, %v5032
  %v5192 = vmul.f32 %v942, %v5037
  %v5193 = vmul.f32 %v946, %v5032
  %v5194 = vmul.f32 %v946, %v5037
  %v5195 = vmul.f32 %v950, %v5032
  %v5196 = vmul.f32 %v950, %v5037
  %v5197 = vmul.f32 %v2131, %v5032
  %v5198 = vmul.f32 %v2131, %v5037
  %v5199 = vmul.f32 %v958, %v5032
  %v5200 = vmul.f32 %v958, %v5037
  %v5201 = vmul.f32 %v962, %v5032
  %v5202 = vmul.f32 %v962, %v5037
  %v5203 = vmul.f32 %v966, %v5032
  %v5204 = vmul.f32 %v966, %v5037
  %v5205 = vmul.f32 %v970, %v5032
  %v5206 = vmul.f32 %v970, %v5037
  %v5207 = vmul.f32 %v974, %v5032
  %v5208 = vmul.f32 %v974, %v5037
  %v5209 = vmul.f32 %v978, %v5032
  %v5210 = vmul.f32 %v978, %v5037
  %v5211 = vmul.f32 %v982, %v5032
  %v5212 = vmul.f32 %v982, %v5037
  %v5213 = vmul.f32 %v986, %v5032
  %v5214 = vmul.f32 %v986, %v5037
  %v5215 = vmul.f32 %v990, %v5032
  %v5216 = vmul.f32 %v990, %v5037
  %v5217 = vmul.f32 %v994, %v5032
  %v5218 = vmul.f32 %v994, %v5037
  %v5219 = vmul.f32 %v998, %v5032
  %v5220 = vmul.f32 %v998, %v5037
  %v5221 = vmul.f32 %v1002, %v5032
  %v5222 = vmul.f32 %v1002, %v5037
  %v5223 = vmul.f32 %v1006, %v5032
  %v5224 = vmul.f32 %v1006, %v5037
  %v5225 = vmul.f32 %v1010, %v5032
  %v5226 = vmul.f32 %v1010, %v5037
  %v5227 = vmul.f32 %v1014, %v5032
  %v5228 = vmul.f32 %v1014, %v5037
  %v5229 = vmul.f32 %v1018, %v5032
  %v5230 = vmul.f32 %v1018, %v5037
  %v5231 = vmul.f32 %v1022, %v5032
  %v5232 = vmul.f32 %v1022, %v5037
  %v5233 = vmul.f32 %v1026, %v5032
  %v5234 = vmul.f32 %v1026, %v5037
  %v5235 = vmul.f32 %v1030, %v5032
  %v5236 = vmul.f32 %v1030, %v5037
  %v5237 = vmul.f32 %v2135, %v5032
  %v5238 = vmul.f32 %v2135, %v5037
  %v5239 = vmul.f32 %v1038, %v5032
  %v5240 = vmul.f32 %v1038, %v5037
  %v5241 = vmul.f32 %v1042, %v5032
  %v5242 = vmul.f32 %v1042, %v5037
  %v5243 = vmul.f32 %v1046, %v5032
  %v5244 = vmul.f32 %v1046, %v5037
  %v5245 = vmul.f32 %v1050, %v5032
  %v5246 = vmul.f32 %v1050, %v5037
  %v5247 = vmul.f32 %v1054, %v5032
  %v5248 = vmul.f32 %v1054, %v5037
  %v5249 = vmul.f32 %v1058, %v5032
  %v5250 = vmul.f32 %v1058, %v5037
  %v5251 = vmul.f32 %v1062, %v5032
  %v5252 = vmul.f32 %v1062, %v5037
  %v5253 = vmul.f32 %v1066, %v5032
  %v5254 = vmul.f32 %v1066, %v5037
  %v5255 = vmul.f32 %v1070, %v5032
  %v5256 = vmul.f32 %v1070, %v5037
  %v5257 = vmul.f32 %v1074, %v5032
  %v5258 = vmul.f32 %v1074, %v5037
  %v5259 = vmul.f32 %v1078, %v5032
  %v5260 = vmul.f32 %v1078, %v5037
  %v5261 = vmul.f32 %v1082, %v5032
  %v5262 = vmul.f32 %v1082, %v5037
  %v5263 = vmul.f32 %v1086, %v5032
  %v5264 = vmul.f32 %v1086, %v5037
  %v5265 = vmul.f32 %v1090, %v5032
  %v5266 = vmul.f32 %v1090, %v5037
  %v5267 = vmul.f32 %v1094, %v5032
  %v5268 = vmul.f32 %v1094, %v5037
  %v5269 = vmul.f32 %v1098, %v5032
  %v5270 = vmul.f32 %v1098, %v5037
  %v5271 = vmul.f32 %v1102, %v5032
  %v5272 = vmul.f32 %v1102, %v5037
  %v5273 = vmul.f32 %v1106, %v5032
  %v5274 = vmul.f32 %v1106, %v5037
  %v5275 = vmul.f32 %v1110, %v5032
  %v5276 = vmul.f32 %v1110, %v5037
  %v5277 = vmul.f32 %v2139, %v5032
  %v5278 = vmul.f32 %v2139, %v5037
  %v5279 = vmul.f32 %v1118, %v5032
  %v5280 = vmul.f32 %v1118, %v5037
  %v5281 = vmul.f32 %v1122, %v5032
  %v5282 = vmul.f32 %v1122, %v5037
  %v5283 = vmul.f32 %v1126, %v5032
  %v5284 = vmul.f32 %v1126, %v5037
  %v5285 = vmul.f32 %v1130, %v5032
  %v5286 = vmul.f32 %v1130, %v5037
  %v5287 = vmul.f32 %v1134, %v5032
  %v5288 = vmul.f32 %v1134, %v5037
  %v5289 = vmul.f32 %v1138, %v5032
  %v5290 = vmul.f32 %v1138, %v5037
  %v5291 = vmul.f32 %v1142, %v5032
  %v5292 = vmul.f32 %v1142, %v5037
  %v5293 = vmul.f32 %v1146, %v5032
  %v5294 = vmul.f32 %v1146, %v5037
  %v5295 = vmul.f32 %v1150, %v5032
  %v5296 = vmul.f32 %v1150, %v5037
  %v5297 = vmul.f32 %v1154, %v5032
  %v5298 = vmul.f32 %v1154, %v5037
  %v5299 = vmul.f32 %v1158, %v5032
  %v5300 = vmul.f32 %v1158, %v5037
  %v5301 = vmul.f32 %v1162, %v5032
  %v5302 = vmul.f32 %v1162, %v5037
  %v5303 = vmul.f32 %v1166, %v5032
  %v5304 = vmul.f32 %v1166, %v5037
  %v5305 = vmul.f32 %v1170, %v5032
  %v5306 = vmul.f32 %v1170, %v5037
  %v5307 = vmul.f32 %v1174, %v5032
  %v5308 = vmul.f32 %v1174, %v5037
  %v5309 = vmul.f32 %v1178, %v5032
  %v5310 = vmul.f32 %v1178, %v5037
  %v5311 = vmul.f32 %v1182, %v5032
  %v5312 = vmul.f32 %v1182, %v5037
  %v5313 = vmul.f32 %v1186, %v5032
  %v5314 = vmul.f32 %v1186, %v5037
  %v5315 = vmul.f32 %v1190, %v5032
  %v5316 = vmul.f32 %v1190, %v5037
  %v5317 = vmul.f32 %v2143, %v5032
  %v5318 = vmul.f32 %v2143, %v5037
  %v5319 = vmul.f32 %v1198, %v5032
  %v5320 = vmul.f32 %v1198, %v5037
  %v5321 = vmul.f32 %v1202, %v5032
  %v5322 = vmul.f32 %v1202, %v5037
  %v5323 = vmul.f32 %v1206, %v5032
  %v5324 = vmul.f32 %v1206, %v5037
  %v5325 = vmul.f32 %v1210, %v5032
  %v5326 = vmul.f32 %v1210, %v5037
  %v5327 = vmul.f32 %v1214, %v5032
  %v5328 = vmul.f32 %v1214, %v5037
  %v5329 = vmul.f32 %v1218, %v5032
  %v5330 = vmul.f32 %v1218, %v5037
  %v5331 = vmul.f32 %v1222, %v5032
  %v5332 = vmul.f32 %v1222, %v5037
  %v5333 = vmul.f32 %v1226, %v5032
  %v5334 = vmul.f32 %v1226, %v5037
  %v5335 = vmul.f32 %v1230, %v5032
  %v5336 = vmul.f32 %v1230, %v5037
  %v5337 = vmul.f32 %v1234, %v5032
  %v5338 = vmul.f32 %v1234, %v5037
  %v5339 = vmul.f32 %v1238, %v5032
  %v5340 = vmul.f32 %v1238, %v5037
  %v5341 = vmul.f32 %v1242, %v5032
  %v5342 = vmul.f32 %v1242, %v5037
  %v5343 = vmul.f32 %v1246, %v5032
  %v5344 = vmul.f32 %v1246, %v5037
  %v5345 = vmul.f32 %v1250, %v5032
  %v5346 = vmul.f32 %v1250, %v5037
  %v5347 = vmul.f32 %v1254, %v5032
  %v5348 = vmul.f32 %v1254, %v5037
  %v5349 = vmul.f32 %v1258, %v5032
  %v5350 = vmul.f32 %v1258, %v5037
  %v5351 = vmul.f32 %v1262, %v5032
  %v5352 = vmul.f32 %v1262, %v5037
  %v5353 = vmul.f32 %v1266, %v5032
  %v5354 = vmul.f32 %v1266, %v5037
  %v5355 = vmul.f32 %v1270, %v5032
  %v5356 = vmul.f32 %v1270, %v5037
  %v5357 = vmul.f32 %v2147, %v5032
  %v5358 = vmul.f32 %v2147, %v5037
  %v5359 = vmul.f32 %v1278, %v5032
  %v5360 = vmul.f32 %v1278, %v5037
  %v5361 = vmul.f32 %v1282, %v5032
  %v5362 = vmul.f32 %v1282, %v5037
  %v5363 = vmul.f32 %v1286, %v5032
  %v5364 = vmul.f32 %v1286, %v5037
  %v5365 = vmul.f32 %v1290, %v5032
  %v5366 = vmul.f32 %v1290, %v5037
  %v5367 = vmul.f32 %v1294, %v5032
  %v5368 = vmul.f32 %v1294, %v5037
  %v5369 = vmul.f32 %v1298, %v5032
  %v5370 = vmul.f32 %v1298, %v5037
  %v5371 = vmul.f32 %v1302, %v5032
  %v5372 = vmul.f32 %v1302, %v5037
  %v5373 = vmul.f32 %v1306, %v5032
  %v5374 = vmul.f32 %v1306, %v5037
  %v5375 = vmul.f32 %v1310, %v5032
  %v5376 = vmul.f32 %v1310, %v5037
  %v5377 = vmul.f32 %v1314, %v5032
  %v5378 = vmul.f32 %v1314, %v5037
  %v5379 = vmul.f32 %v1318, %v5032
  %v5380 = vmul.f32 %v1318, %v5037
  %v5381 = vmul.f32 %v1322, %v5032
  %v5382 = vmul.f32 %v1322, %v5037
  %v5383 = vmul.f32 %v1326, %v5032
  %v5384 = vmul.f32 %v1326, %v5037
  %v5385 = vmul.f32 %v1330, %v5032
  %v5386 = vmul.f32 %v1330, %v5037
  %v5387 = vmul.f32 %v1334, %v5032
  %v5388 = vmul.f32 %v1334, %v5037
  %v5389 = vmul.f32 %v1338, %v5032
  %v5390 = vmul.f32 %v1338, %v5037
  %v5391 = vmul.f32 %v1342, %v5032
  %v5392 = vmul.f32 %v1342, %v5037
  %v5393 = vmul.f32 %v1346, %v5032
  %v5394 = vmul.f32 %v1346, %v5037
  %v5395 = vmul.f32 %v1350, %v5032
  %v5396 = vmul.f32 %v1350, %v5037
  %v5397 = vmul.f32 %v2151, %v5032
  %v5398 = vmul.f32 %v2151, %v5037
  %v5399 = vmul.f32 %v1358, %v5032
  %v5400 = vmul.f32 %v1358, %v5037
  %v5401 = vmul.f32 %v1362, %v5032
  %v5402 = vmul.f32 %v1362, %v5037
  %v5403 = vmul.f32 %v1366, %v5032
  %v5404 = vmul.f32 %v1366, %v5037
  %v5405 = vmul.f32 %v1370, %v5032
  %v5406 = vmul.f32 %v1370, %v5037
  %v5407 = vmul.f32 %v1374, %v5032
  %v5408 = vmul.f32 %v1374, %v5037
  %v5409 = vmul.f32 %v1378, %v5032
  %v5410 = vmul.f32 %v1378, %v5037
  %v5411 = vmul.f32 %v1382, %v5032
  %v5412 = vmul.f32 %v1382, %v5037
  %v5413 = vmul.f32 %v1386, %v5032
  %v5414 = vmul.f32 %v1386, %v5037
  %v5415 = vmul.f32 %v1390, %v5032
  %v5416 = vmul.f32 %v1390, %v5037
  %v5417 = vmul.f32 %v1394, %v5032
  %v5418 = vmul.f32 %v1394, %v5037
  %v5419 = vmul.f32 %v1398, %v5032
  %v5420 = vmul.f32 %v1398, %v5037
  %v5421 = vmul.f32 %v1402, %v5032
  %v5422 = vmul.f32 %v1402, %v5037
  %v5423 = vmul.f32 %v1406, %v5032
  %v5424 = vmul.f32 %v1406, %v5037
  %v5425 = vmul.f32 %v1410, %v5032
  %v5426 = vmul.f32 %v1410, %v5037
  %v5427 = vmul.f32 %v1414, %v5032
  %v5428 = vmul.f32 %v1414, %v5037
  %v5429 = vmul.f32 %v1418, %v5032
  %v5430 = vmul.f32 %v1418, %v5037
  %v5431 = vmul.f32 %v1422, %v5032
  %v5432 = vmul.f32 %v1422, %v5037
  %v5433 = vmul.f32 %v1426, %v5032
  %v5434 = vmul.f32 %v1426, %v5037
  %v5435 = vmul.f32 %v1430, %v5032
  %v5436 = vmul.f32 %v1430, %v5037
  %v5437 = vmul.f32 %v2155, %v5032
  %v5438 = vmul.f32 %v2155, %v5037
  %v5439 = vmul.f32 %v4040, %v5032
  %v5440 = vmul.f32 %v4040, %v5037
  %v5441 = vmul.f32 %v4044, %v5032
  %v5442 = vmul.f32 %v4044, %v5037
  %v5443 = vmul.f32 %v4048, %v5032
  %v5444 = vmul.f32 %v4048, %v5037
  %v5445 = vmul.f32 %v4052, %v5032
  %v5446 = vmul.f32 %v4052, %v5037
  %v5447 = vmul.f32 %v4056, %v5032
  %v5448 = vmul.f32 %v4056, %v5037
  %v5449 = vmul.f32 %v4060, %v5032
  %v5450 = vmul.f32 %v4060, %v5037
  %v5451 = vmul.f32 %v4064, %v5032
  %v5452 = vmul.f32 %v4064, %v5037
  %v5453 = vmul.f32 %v4068, %v5032
  %v5454 = vmul.f32 %v4068, %v5037
  %v5455 = vmul.f32 %v4072, %v5032
  %v5456 = vmul.f32 %v4072, %v5037
  %v5457 = vmul.f32 %v4076, %v5032
  %v5458 = vmul.f32 %v4076, %v5037
  %v5459 = vmul.f32 %v4080, %v5032
  %v5460 = vmul.f32 %v4080, %v5037
  %v5461 = vmul.f32 %v4084, %v5032
  %v5462 = vmul.f32 %v4084, %v5037
  %v5463 = vmul.f32 %v4088, %v5032
  %v5464 = vmul.f32 %v4088, %v5037
  %v5465 = vmul.f32 %v4092, %v5032
  %v5466 = vmul.f32 %v4092, %v5037
  %v5467 = vmul.f32 %v4096, %v5032
  %v5468 = vmul.f32 %v4096, %v5037
  %v5469 = vmul.f32 %v4100, %v5032
  %v5470 = vmul.f32 %v4100, %v5037
  %v5471 = vmul.f32 %v4104, %v5032
  %v5472 = vmul.f32 %v4104, %v5037
  %v5473 = vmul.f32 %v4108, %v5032
  %v5474 = vmul.f32 %v4108, %v5037
  %v5475 = vmul.f32 %v4112, %v5032
  %v5476 = vmul.f32 %v4112, %v5037
  %v5477 = vmul.f32 %v5027, %v5032
  %v5478 = vmul.f32 %v5027, %v5037
  %v5479 = vadd.f32 %v4583, %v5039
  %v5480 = vadd.f32 %v4584, %v5040
  %v5481 = vadd.f32 %v4585, %v5041
  %v5482 = vadd.f32 %v4586, %v5042
  %v5483 = vadd.f32 %v4587, %v5043
  %v5484 = vadd.f32 %v4588, %v5044
  %v5485 = vadd.f32 %v4589, %v5045
  %v5486 = vadd.f32 %v4590, %v5046
  %v5487 = vadd.f32 %v4591, %v5047
  %v5488 = vadd.f32 %v4592, %v5048
  %v5489 = vadd.f32 %v4593, %v5049
  %v5490 = vadd.f32 %v4594, %v5050
  %v5491 = vadd.f32 %v4595, %v5051
  %v5492 = vadd.f32 %v4596, %v5052
  %v5493 = vadd.f32 %v4597, %v5053
  %v5494 = vadd.f32 %v4598, %v5054
  %v5495 = vadd.f32 %v4599, %v5055
  %v5496 = vadd.f32 %v4600, %v5056
  %v5497 = vadd.f32 %v4601, %v5057
  %v5498 = vadd.f32 %v4602, %v5058
  %v5499 = vadd.f32 %v4603, %v5059
  %v5500 = vadd.f32 %v4604, %v5060
  %v5501 = vadd.f32 %v4605, %v5061
  %v5502 = vadd.f32 %v4606, %v5062
  %v5503 = vadd.f32 %v4607, %v5063
  %v5504 = vadd.f32 %v4608, %v5064
  %v5505 = vadd.f32 %v4609, %v5065
  %v5506 = vadd.f32 %v4610, %v5066
  %v5507 = vadd.f32 %v4611, %v5067
  %v5508 = vadd.f32 %v4612, %v5068
  %v5509 = vadd.f32 %v4613, %v5069
  %v5510 = vadd.f32 %v4614, %v5070
  %v5511 = vadd.f32 %v4615, %v5071
  %v5512 = vadd.f32 %v4616, %v5072
  %v5513 = vadd.f32 %v4617, %v5073
  %v5514 = vadd.f32 %v4618, %v5074
  %v5515 = vadd.f32 %v4619, %v5075
  %v5516 = vadd.f32 %v4620, %v5076
  %v5517 = vadd.f32 %v4621, %v5077
  %v5518 = vadd.f32 %v4622, %v5078
  %v5519 = vadd.f32 %v4623, %v5079
  %v5520 = vadd.f32 %v4624, %v5080
  %v5521 = vadd.f32 %v4625, %v5081
  %v5522 = vadd.f32 %v4626, %v5082
  %v5523 = vadd.f32 %v4627, %v5083
  %v5524 = vadd.f32 %v4628, %v5084
  %v5525 = vadd.f32 %v4629, %v5085
  %v5526 = vadd.f32 %v4630, %v5086
  %v5527 = vadd.f32 %v4631, %v5087
  %v5528 = vadd.f32 %v4632, %v5088
  %v5529 = vadd.f32 %v4633, %v5089
  %v5530 = vadd.f32 %v4634, %v5090
  %v5531 = vadd.f32 %v4635, %v5091
  %v5532 = vadd.f32 %v4636, %v5092
  %v5533 = vadd.f32 %v4637, %v5093
  %v5534 = vadd.f32 %v4638, %v5094
  %v5535 = vadd.f32 %v4639, %v5095
  %v5536 = vadd.f32 %v4640, %v5096
  %v5537 = vadd.f32 %v4641, %v5097
  %v5538 = vadd.f32 %v4642, %v5098
  %v5539 = vadd.f32 %v4643, %v5099
  %v5540 = vadd.f32 %v4644, %v5100
  %v5541 = vadd.f32 %v4645, %v5101
  %v5542 = vadd.f32 %v4646, %v5102
  %v5543 = vadd.f32 %v4647, %v5103
  %v5544 = vadd.f32 %v4648, %v5104
  %v5545 = vadd.f32 %v4649, %v5105
  %v5546 = vadd.f32 %v4650, %v5106
  %v5547 = vadd.f32 %v4651, %v5107
  %v5548 = vadd.f32 %v4652, %v5108
  %v5549 = vadd.f32 %v4653, %v5109
  %v5550 = vadd.f32 %v4654, %v5110
  %v5551 = vadd.f32 %v4655, %v5111
  %v5552 = vadd.f32 %v4656, %v5112
  %v5553 = vadd.f32 %v4657, %v5113
  %v5554 = vadd.f32 %v4658, %v5114
  %v5555 = vadd.f32 %v4659, %v5115
  %v5556 = vadd.f32 %v4660, %v5116
  %v5557 = vadd.f32 %v4661, %v5117
  %v5558 = vadd.f32 %v4662, %v5118
  %v5559 = vadd.f32 %v4663, %v5119
  %v5560 = vadd.f32 %v4664, %v5120
  %v5561 = vadd.f32 %v4665, %v5121
  %v5562 = vadd.f32 %v4666, %v5122
  %v5563 = vadd.f32 %v4667, %v5123
  %v5564 = vadd.f32 %v4668, %v5124
  %v5565 = vadd.f32 %v4669, %v5125
  %v5566 = vadd.f32 %v4670, %v5126
  %v5567 = vadd.f32 %v4671, %v5127
  %v5568 = vadd.f32 %v4672, %v5128
  %v5569 = vadd.f32 %v4673, %v5129
  %v5570 = vadd.f32 %v4674, %v5130
  %v5571 = vadd.f32 %v4675, %v5131
  %v5572 = vadd.f32 %v4676, %v5132
  %v5573 = vadd.f32 %v4677, %v5133
  %v5574 = vadd.f32 %v4678, %v5134
  %v5575 = vadd.f32 %v4679, %v5135
  %v5576 = vadd.f32 %v4680, %v5136
  %v5577 = vadd.f32 %v4681, %v5137
  %v5578 = vadd.f32 %v4682, %v5138
  %v5579 = vadd.f32 %v4683, %v5139
  %v5580 = vadd.f32 %v4684, %v5140
  %v5581 = vadd.f32 %v4685, %v5141
  %v5582 = vadd.f32 %v4686, %v5142
  %v5583 = vadd.f32 %v4687, %v5143
  %v5584 = vadd.f32 %v4688, %v5144
  %v5585 = vadd.f32 %v4689, %v5145
  %v5586 = vadd.f32 %v4690, %v5146
  %v5587 = vadd.f32 %v4691, %v5147
  %v5588 = vadd.f32 %v4692, %v5148
  %v5589 = vadd.f32 %v4693, %v5149
  %v5590 = vadd.f32 %v4694, %v5150
  %v5591 = vadd.f32 %v4695, %v5151
  %v5592 = vadd.f32 %v4696, %v5152
  %v5593 = vadd.f32 %v4697, %v5153
  %v5594 = vadd.f32 %v4698, %v5154
  %v5595 = vadd.f32 %v4699, %v5155
  %v5596 = vadd.f32 %v4700, %v5156
  %v5597 = vadd.f32 %v4701, %v5157
  %v5598 = vadd.f32 %v4702, %v5158
  %v5599 = vadd.f32 %v4703, %v5159
  %v5600 = vadd.f32 %v4704, %v5160
  %v5601 = vadd.f32 %v4705, %v5161
  %v5602 = vadd.f32 %v4706, %v5162
  %v5603 = vadd.f32 %v4707, %v5163
  %v5604 = vadd.f32 %v4708, %v5164
  %v5605 = vadd.f32 %v4709, %v5165
  %v5606 = vadd.f32 %v4710, %v5166
  %v5607 = vadd.f32 %v4711, %v5167
  %v5608 = vadd.f32 %v4712, %v5168
  %v5609 = vadd.f32 %v4713, %v5169
  %v5610 = vadd.f32 %v4714, %v5170
  %v5611 = vadd.f32 %v4715, %v5171
  %v5612 = vadd.f32 %v4716, %v5172
  %v5613 = vadd.f32 %v4717, %v5173
  %v5614 = vadd.f32 %v4718, %v5174
  %v5615 = vadd.f32 %v4719, %v5175
  %v5616 = vadd.f32 %v4720, %v5176
  %v5617 = vadd.f32 %v4721, %v5177
  %v5618 = vadd.f32 %v4722, %v5178
  %v5619 = vadd.f32 %v4723, %v5179
  %v5620 = vadd.f32 %v4724, %v5180
  %v5621 = vadd.f32 %v4725, %v5181
  %v5622 = vadd.f32 %v4726, %v5182
  %v5623 = vadd.f32 %v4727, %v5183
  %v5624 = vadd.f32 %v4728, %v5184
  %v5625 = vadd.f32 %v4729, %v5185
  %v5626 = vadd.f32 %v4730, %v5186
  %v5627 = vadd.f32 %v4731, %v5187
  %v5628 = vadd.f32 %v4732, %v5188
  %v5629 = vadd.f32 %v4733, %v5189
  %v5630 = vadd.f32 %v4734, %v5190
  %v5631 = vadd.f32 %v4735, %v5191
  %v5632 = vadd.f32 %v4736, %v5192
  %v5633 = vadd.f32 %v4737, %v5193
  %v5634 = vadd.f32 %v4738, %v5194
  %v5635 = vadd.f32 %v4739, %v5195
  %v5636 = vadd.f32 %v4740, %v5196
  %v5637 = vadd.f32 %v4741, %v5197
  %v5638 = vadd.f32 %v4742, %v5198
  %v5639 = vadd.f32 %v4743, %v5199
  %v5640 = vadd.f32 %v4744, %v5200
  %v5641 = vadd.f32 %v4745, %v5201
  %v5642 = vadd.f32 %v4746, %v5202
  %v5643 = vadd.f32 %v4747, %v5203
  %v5644 = vadd.f32 %v4748, %v5204
  %v5645 = vadd.f32 %v4749, %v5205
  %v5646 = vadd.f32 %v4750, %v5206
  %v5647 = vadd.f32 %v4751, %v5207
  %v5648 = vadd.f32 %v4752, %v5208
  %v5649 = vadd.f32 %v4753, %v5209
  %v5650 = vadd.f32 %v4754, %v5210
  %v5651 = vadd.f32 %v4755, %v5211
  %v5652 = vadd.f32 %v4756, %v5212
  %v5653 = vadd.f32 %v4757, %v5213
  %v5654 = vadd.f32 %v4758, %v5214
  %v5655 = vadd.f32 %v4759, %v5215
  %v5656 = vadd.f32 %v4760, %v5216
  %v5657 = vadd.f32 %v4761, %v5217
  %v5658 = vadd.f32 %v4762, %v5218
  %v5659 = vadd.f32 %v4763, %v5219
  %v5660 = vadd.f32 %v4764, %v5220
  %v5661 = vadd.f32 %v4765, %v5221
  %v5662 = vadd.f32 %v4766, %v5222
  %v5663 = vadd.f32 %v4767, %v5223
  %v5664 = vadd.f32 %v4768, %v5224
  %v5665 = vadd.f32 %v4769, %v5225
  %v5666 = vadd.f32 %v4770, %v5226
  %v5667 = vadd.f32 %v4771, %v5227
  %v5668 = vadd.f32 %v4772, %v5228
  %v5669 = vadd.f32 %v4773, %v5229
  %v5670 = vadd.f32 %v4774, %v5230
  %v5671 = vadd.f32 %v4775, %v5231
  %v5672 = vadd.f32 %v4776, %v5232
  %v5673 = vadd.f32 %v4777, %v5233
  %v5674 = vadd.f32 %v4778, %v5234
  %v5675 = vadd.f32 %v4779, %v5235
  %v5676 = vadd.f32 %v4780, %v5236
  %v5677 = vadd.f32 %v4781, %v5237
  %v5678 = vadd.f32 %v4782, %v5238
  %v5679 = vadd.f32 %v4783, %v5239
  %v5680 = vadd.f32 %v4784, %v5240
  %v5681 = vadd.f32 %v4785, %v5241
  %v5682 = vadd.f32 %v4786, %v5242
  %v5683 = vadd.f32 %v4787, %v5243
  %v5684 = vadd.f32 %v4788, %v5244
  %v5685 = vadd.f32 %v4789, %v5245
  %v5686 = vadd.f32 %v4790, %v5246
  %v5687 = vadd.f32 %v4791, %v5247
  %v5688 = vadd.f32 %v4792, %v5248
  %v5689 = vadd.f32 %v4793, %v5249
  %v5690 = vadd.f32 %v4794, %v5250
  %v5691 = vadd.f32 %v4795, %v5251
  %v5692 = vadd.f32 %v4796, %v5252
  %v5693 = vadd.f32 %v4797, %v5253
  %v5694 = vadd.f32 %v4798, %v5254
  %v5695 = vadd.f32 %v4799, %v5255
  %v5696 = vadd.f32 %v4800, %v5256
  %v5697 = vadd.f32 %v4801, %v5257
  %v5698 = vadd.f32 %v4802, %v5258
  %v5699 = vadd.f32 %v4803, %v5259
  %v5700 = vadd.f32 %v4804, %v5260
  %v5701 = vadd.f32 %v4805, %v5261
  %v5702 = vadd.f32 %v4806, %v5262
  %v5703 = vadd.f32 %v4807, %v5263
  %v5704 = vadd.f32 %v4808, %v5264
  %v5705 = vadd.f32 %v4809, %v5265
  %v5706 = vadd.f32 %v4810, %v5266
  %v5707 = vadd.f32 %v4811, %v5267
  %v5708 = vadd.f32 %v4812, %v5268
  %v5709 = vadd.f32 %v4813, %v5269
  %v5710 = vadd.f32 %v4814, %v5270
  %v5711 = vadd.f32 %v4815, %v5271
  %v5712 = vadd.f32 %v4816, %v5272
  %v5713 = vadd.f32 %v4817, %v5273
  %v5714 = vadd.f32 %v4818, %v5274
  %v5715 = vadd.f32 %v4819, %v5275
  %v5716 = vadd.f32 %v4820, %v5276
  %v5717 = vadd.f32 %v4821, %v5277
  %v5718 = vadd.f32 %v4822, %v5278
  %v5719 = vadd.f32 %v4823, %v5279
  %v5720 = vadd.f32 %v4824, %v5280
  %v5721 = vadd.f32 %v4825, %v5281
  %v5722 = vadd.f32 %v4826, %v5282
  %v5723 = vadd.f32 %v4827, %v5283
  %v5724 = vadd.f32 %v4828, %v5284
  %v5725 = vadd.f32 %v4829, %v5285
  %v5726 = vadd.f32 %v4830, %v5286
  %v5727 = vadd.f32 %v4831, %v5287
  %v5728 = vadd.f32 %v4832, %v5288
  %v5729 = vadd.f32 %v4833, %v5289
  %v5730 = vadd.f32 %v4834, %v5290
  %v5731 = vadd.f32 %v4835, %v5291
  %v5732 = vadd.f32 %v4836, %v5292
  %v5733 = vadd.f32 %v4837, %v5293
  %v5734 = vadd.f32 %v4838, %v5294
  %v5735 = vadd.f32 %v4839, %v5295
  %v5736 = vadd.f32 %v4840, %v5296
  %v5737 = vadd.f32 %v4841, %v5297
  %v5738 = vadd.f32 %v4842, %v5298
  %v5739 = vadd.f32 %v4843, %v5299
  %v5740 = vadd.f32 %v4844, %v5300
  %v5741 = vadd.f32 %v4845, %v5301
  %v5742 = vadd.f32 %v4846, %v5302
  %v5743 = vadd.f32 %v4847, %v5303
  %v5744 = vadd.f32 %v4848, %v5304
  %v5745 = vadd.f32 %v4849, %v5305
  %v5746 = vadd.f32 %v4850, %v5306
  %v5747 = vadd.f32 %v4851, %v5307
  %v5748 = vadd.f32 %v4852, %v5308
  %v5749 = vadd.f32 %v4853, %v5309
  %v5750 = vadd.f32 %v4854, %v5310
  %v5751 = vadd.f32 %v4855, %v5311
  %v5752 = vadd.f32 %v4856, %v5312
  %v5753 = vadd.f32 %v4857, %v5313
  %v5754 = vadd.f32 %v4858, %v5314
  %v5755 = vadd.f32 %v4859, %v5315
  %v5756 = vadd.f32 %v4860, %v5316
  %v5757 = vadd.f32 %v4861, %v5317
  %v5758 = vadd.f32 %v4862, %v5318
  %v5759 = vadd.f32 %v4863, %v5319
  %v5760 = vadd.f32 %v4864, %v5320
  %v5761 = vadd.f32 %v4865, %v5321
  %v5762 = vadd.f32 %v4866, %v5322
  %v5763 = vadd.f32 %v4867, %v5323
  %v5764 = vadd.f32 %v4868, %v5324
  %v5765 = vadd.f32 %v4869, %v5325
  %v5766 = vadd.f32 %v4870, %v5326
  %v5767 = vadd.f32 %v4871, %v5327
  %v5768 = vadd.f32 %v4872, %v5328
  %v5769 = vadd.f32 %v4873, %v5329
  %v5770 = vadd.f32 %v4874, %v5330
  %v5771 = vadd.f32 %v4875, %v5331
  %v5772 = vadd.f32 %v4876, %v5332
  %v5773 = vadd.f32 %v4877, %v5333
  %v5774 = vadd.f32 %v4878, %v5334
  %v5775 = vadd.f32 %v4879, %v5335
  %v5776 = vadd.f32 %v4880, %v5336
  %v5777 = vadd.f32 %v4881, %v5337
  %v5778 = vadd.f32 %v4882, %v5338
  %v5779 = vadd.f32 %v4883, %v5339
  %v5780 = vadd.f32 %v4884, %v5340
  %v5781 = vadd.f32 %v4885, %v5341
  %v5782 = vadd.f32 %v4886, %v5342
  %v5783 = vadd.f32 %v4887, %v5343
  %v5784 = vadd.f32 %v4888, %v5344
  %v5785 = vadd.f32 %v4889, %v5345
  %v5786 = vadd.f32 %v4890, %v5346
  %v5787 = vadd.f32 %v4891, %v5347
  %v5788 = vadd.f32 %v4892, %v5348
  %v5789 = vadd.f32 %v4893, %v5349
  %v5790 = vadd.f32 %v4894, %v5350
  %v5791 = vadd.f32 %v4895, %v5351
  %v5792 = vadd.f32 %v4896, %v5352
  %v5793 = vadd.f32 %v4897, %v5353
  %v5794 = vadd.f32 %v4898, %v5354
  %v5795 = vadd.f32 %v4899, %v5355
  %v5796 = vadd.f32 %v4900, %v5356
  %v5797 = vadd.f32 %v4901, %v5357
  %v5798 = vadd.f32 %v4902, %v5358
  %v5799 = vadd.f32 %v4903, %v5359
  %v5800 = vadd.f32 %v4904, %v5360
  %v5801 = vadd.f32 %v4905, %v5361
  %v5802 = vadd.f32 %v4906, %v5362
  %v5803 = vadd.f32 %v4907, %v5363
  %v5804 = vadd.f32 %v4908, %v5364
  %v5805 = vadd.f32 %v4909, %v5365
  %v5806 = vadd.f32 %v4910, %v5366
  %v5807 = vadd.f32 %v4911, %v5367
  %v5808 = vadd.f32 %v4912, %v5368
  %v5809 = vadd.f32 %v4913, %v5369
  %v5810 = vadd.f32 %v4914, %v5370
  %v5811 = vadd.f32 %v4915, %v5371
  %v5812 = vadd.f32 %v4916, %v5372
  %v5813 = vadd.f32 %v4917, %v5373
  %v5814 = vadd.f32 %v4918, %v5374
  %v5815 = vadd.f32 %v4919, %v5375
  %v5816 = vadd.f32 %v4920, %v5376
  %v5817 = vadd.f32 %v4921, %v5377
  %v5818 = vadd.f32 %v4922, %v5378
  %v5819 = vadd.f32 %v4923, %v5379
  %v5820 = vadd.f32 %v4924, %v5380
  %v5821 = vadd.f32 %v4925, %v5381
  %v5822 = vadd.f32 %v4926, %v5382
  %v5823 = vadd.f32 %v4927, %v5383
  %v5824 = vadd.f32 %v4928, %v5384
  %v5825 = vadd.f32 %v4929, %v5385
  %v5826 = vadd.f32 %v4930, %v5386
  %v5827 = vadd.f32 %v4931, %v5387
  %v5828 = vadd.f32 %v4932, %v5388
  %v5829 = vadd.f32 %v4933, %v5389
  %v5830 = vadd.f32 %v4934, %v5390
  %v5831 = vadd.f32 %v4935, %v5391
  %v5832 = vadd.f32 %v4936, %v5392
  %v5833 = vadd.f32 %v4937, %v5393
  %v5834 = vadd.f32 %v4938, %v5394
  %v5835 = vadd.f32 %v4939, %v5395
  %v5836 = vadd.f32 %v4940, %v5396
  %v5837 = vadd.f32 %v4941, %v5397
  %v5838 = vadd.f32 %v4942, %v5398
  %v5839 = vadd.f32 %v4943, %v5399
  %v5840 = vadd.f32 %v4944, %v5400
  %v5841 = vadd.f32 %v4945, %v5401
  %v5842 = vadd.f32 %v4946, %v5402
  %v5843 = vadd.f32 %v4947, %v5403
  %v5844 = vadd.f32 %v4948, %v5404
  %v5845 = vadd.f32 %v4949, %v5405
  %v5846 = vadd.f32 %v4950, %v5406
  %v5847 = vadd.f32 %v4951, %v5407
  %v5848 = vadd.f32 %v4952, %v5408
  %v5849 = vadd.f32 %v4953, %v5409
  %v5850 = vadd.f32 %v4954, %v5410
  %v5851 = vadd.f32 %v4955, %v5411
  %v5852 = vadd.f32 %v4956, %v5412
  %v5853 = vadd.f32 %v4957, %v5413
  %v5854 = vadd.f32 %v4958, %v5414
  %v5855 = vadd.f32 %v4959, %v5415
  %v5856 = vadd.f32 %v4960, %v5416
  %v5857 = vadd.f32 %v4961, %v5417
  %v5858 = vadd.f32 %v4962, %v5418
  %v5859 = vadd.f32 %v4963, %v5419
  %v5860 = vadd.f32 %v4964, %v5420
  %v5861 = vadd.f32 %v4965, %v5421
  %v5862 = vadd.f32 %v4966, %v5422
  %v5863 = vadd.f32 %v4967, %v5423
  %v5864 = vadd.f32 %v4968, %v5424
  %v5865 = vadd.f32 %v4969, %v5425
  %v5866 = vadd.f32 %v4970, %v5426
  %v5867 = vadd.f32 %v4971, %v5427
  %v5868 = vadd.f32 %v4972, %v5428
  %v5869 = vadd.f32 %v4973, %v5429
  %v5870 = vadd.f32 %v4974, %v5430
  %v5871 = vadd.f32 %v4975, %v5431
  %v5872 = vadd.f32 %v4976, %v5432
  %v5873 = vadd.f32 %v4977, %v5433
  %v5874 = vadd.f32 %v4978, %v5434
  %v5875 = vadd.f32 %v4979, %v5435
  %v5876 = vadd.f32 %v4980, %v5436
  %v5877 = vadd.f32 %v4981, %v5437
  %v5878 = vadd.f32 %v4982, %v5438
  %v5879 = vadd.f32 %v4983, %v5439
  %v5880 = vadd.f32 %v4984, %v5440
  %v5881 = vadd.f32 %v4985, %v5441
  %v5882 = vadd.f32 %v4986, %v5442
  %v5883 = vadd.f32 %v4987, %v5443
  %v5884 = vadd.f32 %v4988, %v5444
  %v5885 = vadd.f32 %v4989, %v5445
  %v5886 = vadd.f32 %v4990, %v5446
  %v5887 = vadd.f32 %v4991, %v5447
  %v5888 = vadd.f32 %v4992, %v5448
  %v5889 = vadd.f32 %v4993, %v5449
  %v5890 = vadd.f32 %v4994, %v5450
  %v5891 = vadd.f32 %v4995, %v5451
  %v5892 = vadd.f32 %v4996, %v5452
  %v5893 = vadd.f32 %v4997, %v5453
  %v5894 = vadd.f32 %v4998, %v5454
  %v5895 = vadd.f32 %v4999, %v5455
  %v5896 = vadd.f32 %v5000, %v5456
  %v5897 = vadd.f32 %v5001, %v5457
  %v5898 = vadd.f32 %v5002, %v5458
  %v5899 = vadd.f32 %v5003, %v5459
  %v5900 = vadd.f32 %v5004, %v5460
  %v5901 = vadd.f32 %v5005, %v5461
  %v5902 = vadd.f32 %v5006, %v5462
  %v5903 = vadd.f32 %v5007, %v5463
  %v5904 = vadd.f32 %v5008, %v5464
  %v5905 = vadd.f32 %v5009, %v5465
  %v5906 = vadd.f32 %v5010, %v5466
  %v5907 = vadd.f32 %v5011, %v5467
  %v5908 = vadd.f32 %v5012, %v5468
  %v5909 = vadd.f32 %v5013, %v5469
  %v5910 = vadd.f32 %v5014, %v5470
  %v5911 = vadd.f32 %v5015, %v5471
  %v5912 = vadd.f32 %v5016, %v5472
  %v5913 = vadd.f32 %v5017, %v5473
  %v5914 = vadd.f32 %v5018, %v5474
  %v5915 = vadd.f32 %v5019, %v5475
  %v5916 = vadd.f32 %v5020, %v5476
  %v5917 = vadd.f32 %v5021, %v5477
  %v5918 = vadd.f32 %v5022, %v5478
  %v5920 = vlaneseq
  %v5921 = vshrl.u32 %v5920, 7
  %v5922 = vsub.s32 0, %v5921
  %v5923 = vrot.slane %v290, %v5922
  %5926 = vset.pattern.permute.xlu0 0
  %5927 = vperm.xlu0 %5926, %v323
  %v5928 = vpop.permute.xlu0 %5927
  %5931 = vset.pattern.permute.xlu0 0
  %5932 = vperm.xlu0 %5931, %v324
  %v5933 = vpop.permute.xlu0 %5932
  %v5935 = vmul.f32 %v642, %v5928
  %v5936 = vmul.f32 %v642, %v5933
  %v5937 = vmul.f32 %v646, %v5928
  %v5938 = vmul.f32 %v646, %v5933
  %v5939 = vmul.f32 %v650, %v5928
  %v5940 = vmul.f32 %v650, %v5933
  %v5941 = vmul.f32 %v654, %v5928
  %v5942 = vmul.f32 %v654, %v5933
  %v5943 = vmul.f32 %v658, %v5928
  %v5944 = vmul.f32 %v658, %v5933
  %v5945 = vmul.f32 %v662, %v5928
  %v5946 = vmul.f32 %v662, %v5933
  %v5947 = vmul.f32 %v666, %v5928
  %v5948 = vmul.f32 %v666, %v5933
  %v5949 = vmul.f32 %v670, %v5928
  %v5950 = vmul.f32 %v670, %v5933
  %v5951 = vmul.f32 %v674, %v5928
  %v5952 = vmul.f32 %v674, %v5933
  %v5953 = vmul.f32 %v678, %v5928
  %v5954 = vmul.f32 %v678, %v5933
  %v5955 = vmul.f32 %v682, %v5928
  %v5956 = vmul.f32 %v682, %v5933
  %v5957 = vmul.f32 %v686, %v5928
  %v5958 = vmul.f32 %v686, %v5933
  %v5959 = vmul.f32 %v690, %v5928
  %v5960 = vmul.f32 %v690, %v5933
  %v5961 = vmul.f32 %v694, %v5928
  %v5962 = vmul.f32 %v694, %v5933
  %v5963 = vmul.f32 %v698, %v5928
  %v5964 = vmul.f32 %v698, %v5933
  %v5965 = vmul.f32 %v702, %v5928
  %v5966 = vmul.f32 %v702, %v5933
  %v5967 = vmul.f32 %v706, %v5928
  %v5968 = vmul.f32 %v706, %v5933
  %v5969 = vmul.f32 %v710, %v5928
  %v5970 = vmul.f32 %v710, %v5933
  %v5971 = vmul.f32 %v2119, %v5928
  %v5972 = vmul.f32 %v2119, %v5933
  %v5973 = vmul.f32 %v3075, %v5928
  %v5974 = vmul.f32 %v3075, %v5933
  %v5975 = vmul.f32 %v722, %v5928
  %v5976 = vmul.f32 %v722, %v5933
  %v5977 = vmul.f32 %v726, %v5928
  %v5978 = vmul.f32 %v726, %v5933
  %v5979 = vmul.f32 %v730, %v5928
  %v5980 = vmul.f32 %v730, %v5933
  %v5981 = vmul.f32 %v734, %v5928
  %v5982 = vmul.f32 %v734, %v5933
  %v5983 = vmul.f32 %v738, %v5928
  %v5984 = vmul.f32 %v738, %v5933
  %v5985 = vmul.f32 %v742, %v5928
  %v5986 = vmul.f32 %v742, %v5933
  %v5987 = vmul.f32 %v746, %v5928
  %v5988 = vmul.f32 %v746, %v5933
  %v5989 = vmul.f32 %v750, %v5928
  %v5990 = vmul.f32 %v750, %v5933
  %v5991 = vmul.f32 %v754, %v5928
  %v5992 = vmul.f32 %v754, %v5933
  %v5993 = vmul.f32 %v758, %v5928
  %v5994 = vmul.f32 %v758, %v5933
  %v5995 = vmul.f32 %v762, %v5928
  %v5996 = vmul.f32 %v762, %v5933
  %v5997 = vmul.f32 %v766, %v5928
  %v5998 = vmul.f32 %v766, %v5933
  %v5999 = vmul.f32 %v770, %v5928
  %v6000 = vmul.f32 %v770, %v5933
  %v6001 = vmul.f32 %v774, %v5928
  %v6002 = vmul.f32 %v774, %v5933
  %v6003 = vmul.f32 %v778, %v5928
  %v6004 = vmul.f32 %v778, %v5933
  %v6005 = vmul.f32 %v782, %v5928
  %v6006 = vmul.f32 %v782, %v5933
  %v6007 = vmul.f32 %v786, %v5928
  %v6008 = vmul.f32 %v786, %v5933
  %v6009 = vmul.f32 %v790, %v5928
  %v6010 = vmul.f32 %v790, %v5933
  %v6011 = vmul.f32 %v2123, %v5928
  %v6012 = vmul.f32 %v2123, %v5933
  %v6013 = vmul.f32 %v3079, %v5928
  %v6014 = vmul.f32 %v3079, %v5933
  %v6015 = vmul.f32 %v802, %v5928
  %v6016 = vmul.f32 %v802, %v5933
  %v6017 = vmul.f32 %v806, %v5928
  %v6018 = vmul.f32 %v806, %v5933
  %v6019 = vmul.f32 %v810, %v5928
  %v6020 = vmul.f32 %v810, %v5933
  %v6021 = vmul.f32 %v814, %v5928
  %v6022 = vmul.f32 %v814, %v5933
  %v6023 = vmul.f32 %v818, %v5928
  %v6024 = vmul.f32 %v818, %v5933
  %v6025 = vmul.f32 %v822, %v5928
  %v6026 = vmul.f32 %v822, %v5933
  %v6027 = vmul.f32 %v826, %v5928
  %v6028 = vmul.f32 %v826, %v5933
  %v6029 = vmul.f32 %v830, %v5928
  %v6030 = vmul.f32 %v830, %v5933
  %v6031 = vmul.f32 %v834, %v5928
  %v6032 = vmul.f32 %v834, %v5933
  %v6033 = vmul.f32 %v838, %v5928
  %v6034 = vmul.f32 %v838, %v5933
  %v6035 = vmul.f32 %v842, %v5928
  %v6036 = vmul.f32 %v842, %v5933
  %v6037 = vmul.f32 %v846, %v5928
  %v6038 = vmul.f32 %v846, %v5933
  %v6039 = vmul.f32 %v850, %v5928
  %v6040 = vmul.f32 %v850, %v5933
  %v6041 = vmul.f32 %v854, %v5928
  %v6042 = vmul.f32 %v854, %v5933
  %v6043 = vmul.f32 %v858, %v5928
  %v6044 = vmul.f32 %v858, %v5933
  %v6045 = vmul.f32 %v862, %v5928
  %v6046 = vmul.f32 %v862, %v5933
  %v6047 = vmul.f32 %v866, %v5928
  %v6048 = vmul.f32 %v866, %v5933
  %v6049 = vmul.f32 %v870, %v5928
  %v6050 = vmul.f32 %v870, %v5933
  %v6051 = vmul.f32 %v2127, %v5928
  %v6052 = vmul.f32 %v2127, %v5933
  %v6053 = vmul.f32 %v3083, %v5928
  %v6054 = vmul.f32 %v3083, %v5933
  %v6055 = vmul.f32 %v882, %v5928
  %v6056 = vmul.f32 %v882, %v5933
  %v6057 = vmul.f32 %v886, %v5928
  %v6058 = vmul.f32 %v886, %v5933
  %v6059 = vmul.f32 %v890, %v5928
  %v6060 = vmul.f32 %v890, %v5933
  %v6061 = vmul.f32 %v894, %v5928
  %v6062 = vmul.f32 %v894, %v5933
  %v6063 = vmul.f32 %v898, %v5928
  %v6064 = vmul.f32 %v898, %v5933
  %v6065 = vmul.f32 %v902, %v5928
  %v6066 = vmul.f32 %v902, %v5933
  %v6067 = vmul.f32 %v906, %v5928
  %v6068 = vmul.f32 %v906, %v5933
  %v6069 = vmul.f32 %v910, %v5928
  %v6070 = vmul.f32 %v910, %v5933
  %v6071 = vmul.f32 %v914, %v5928
  %v6072 = vmul.f32 %v914, %v5933
  %v6073 = vmul.f32 %v918, %v5928
  %v6074 = vmul.f32 %v918, %v5933
  %v6075 = vmul.f32 %v922, %v5928
  %v6076 = vmul.f32 %v922, %v5933
  %v6077 = vmul.f32 %v926, %v5928
  %v6078 = vmul.f32 %v926, %v5933
  %v6079 = vmul.f32 %v930, %v5928
  %v6080 = vmul.f32 %v930, %v5933
  %v6081 = vmul.f32 %v934, %v5928
  %v6082 = vmul.f32 %v934, %v5933
  %v6083 = vmul.f32 %v938, %v5928
  %v6084 = vmul.f32 %v938, %v5933
  %v6085 = vmul.f32 %v942, %v5928
  %v6086 = vmul.f32 %v942, %v5933
  %v6087 = vmul.f32 %v946, %v5928
  %v6088 = vmul.f32 %v946, %v5933
  %v6089 = vmul.f32 %v950, %v5928
  %v6090 = vmul.f32 %v950, %v5933
  %v6091 = vmul.f32 %v2131, %v5928
  %v6092 = vmul.f32 %v2131, %v5933
  %v6093 = vmul.f32 %v3087, %v5928
  %v6094 = vmul.f32 %v3087, %v5933
  %v6095 = vmul.f32 %v962, %v5928
  %v6096 = vmul.f32 %v962, %v5933
  %v6097 = vmul.f32 %v966, %v5928
  %v6098 = vmul.f32 %v966, %v5933
  %v6099 = vmul.f32 %v970, %v5928
  %v6100 = vmul.f32 %v970, %v5933
  %v6101 = vmul.f32 %v974, %v5928
  %v6102 = vmul.f32 %v974, %v5933
  %v6103 = vmul.f32 %v978, %v5928
  %v6104 = vmul.f32 %v978, %v5933
  %v6105 = vmul.f32 %v982, %v5928
  %v6106 = vmul.f32 %v982, %v5933
  %v6107 = vmul.f32 %v986, %v5928
  %v6108 = vmul.f32 %v986, %v5933
  %v6109 = vmul.f32 %v990, %v5928
  %v6110 = vmul.f32 %v990, %v5933
  %v6111 = vmul.f32 %v994, %v5928
  %v6112 = vmul.f32 %v994, %v5933
  %v6113 = vmul.f32 %v998, %v5928
  %v6114 = vmul.f32 %v998, %v5933
  %v6115 = vmul.f32 %v1002, %v5928
  %v6116 = vmul.f32 %v1002, %v5933
  %v6117 = vmul.f32 %v1006, %v5928
  %v6118 = vmul.f32 %v1006, %v5933
  %v6119 = vmul.f32 %v1010, %v5928
  %v6120 = vmul.f32 %v1010, %v5933
  %v6121 = vmul.f32 %v1014, %v5928
  %v6122 = vmul.f32 %v1014, %v5933
  %v6123 = vmul.f32 %v1018, %v5928
  %v6124 = vmul.f32 %v1018, %v5933
  %v6125 = vmul.f32 %v1022, %v5928
  %v6126 = vmul.f32 %v1022, %v5933
  %v6127 = vmul.f32 %v1026, %v5928
  %v6128 = vmul.f32 %v1026, %v5933
  %v6129 = vmul.f32 %v1030, %v5928
  %v6130 = vmul.f32 %v1030, %v5933
  %v6131 = vmul.f32 %v2135, %v5928
  %v6132 = vmul.f32 %v2135, %v5933
  %v6133 = vmul.f32 %v3091, %v5928
  %v6134 = vmul.f32 %v3091, %v5933
  %v6135 = vmul.f32 %v1042, %v5928
  %v6136 = vmul.f32 %v1042, %v5933
  %v6137 = vmul.f32 %v1046, %v5928
  %v6138 = vmul.f32 %v1046, %v5933
  %v6139 = vmul.f32 %v1050, %v5928
  %v6140 = vmul.f32 %v1050, %v5933
  %v6141 = vmul.f32 %v1054, %v5928
  %v6142 = vmul.f32 %v1054, %v5933
  %v6143 = vmul.f32 %v1058, %v5928
  %v6144 = vmul.f32 %v1058, %v5933
  %v6145 = vmul.f32 %v1062, %v5928
  %v6146 = vmul.f32 %v1062, %v5933
  %v6147 = vmul.f32 %v1066, %v5928
  %v6148 = vmul.f32 %v1066, %v5933
  %v6149 = vmul.f32 %v1070, %v5928
  %v6150 = vmul.f32 %v1070, %v5933
  %v6151 = vmul.f32 %v1074, %v5928
  %v6152 = vmul.f32 %v1074, %v5933
  %v6153 = vmul.f32 %v1078, %v5928
  %v6154 = vmul.f32 %v1078, %v5933
  %v6155 = vmul.f32 %v1082, %v5928
  %v6156 = vmul.f32 %v1082, %v5933
  %v6157 = vmul.f32 %v1086, %v5928
  %v6158 = vmul.f32 %v1086, %v5933
  %v6159 = vmul.f32 %v1090, %v5928
  %v6160 = vmul.f32 %v1090, %v5933
  %v6161 = vmul.f32 %v1094, %v5928
  %v6162 = vmul.f32 %v1094, %v5933
  %v6163 = vmul.f32 %v1098, %v5928
  %v6164 = vmul.f32 %v1098, %v5933
  %v6165 = vmul.f32 %v1102, %v5928
  %v6166 = vmul.f32 %v1102, %v5933
  %v6167 = vmul.f32 %v1106, %v5928
  %v6168 = vmul.f32 %v1106, %v5933
  %v6169 = vmul.f32 %v1110, %v5928
  %v6170 = vmul.f32 %v1110, %v5933
  %v6171 = vmul.f32 %v2139, %v5928
  %v6172 = vmul.f32 %v2139, %v5933
  %v6173 = vmul.f32 %v3095, %v5928
  %v6174 = vmul.f32 %v3095, %v5933
  %v6175 = vmul.f32 %v1122, %v5928
  %v6176 = vmul.f32 %v1122, %v5933
  %v6177 = vmul.f32 %v1126, %v5928
  %v6178 = vmul.f32 %v1126, %v5933
  %v6179 = vmul.f32 %v1130, %v5928
  %v6180 = vmul.f32 %v1130, %v5933
  %v6181 = vmul.f32 %v1134, %v5928
  %v6182 = vmul.f32 %v1134, %v5933
  %v6183 = vmul.f32 %v1138, %v5928
  %v6184 = vmul.f32 %v1138, %v5933
  %v6185 = vmul.f32 %v1142, %v5928
  %v6186 = vmul.f32 %v1142, %v5933
  %v6187 = vmul.f32 %v1146, %v5928
  %v6188 = vmul.f32 %v1146, %v5933
  %v6189 = vmul.f32 %v1150, %v5928
  %v6190 = vmul.f32 %v1150, %v5933
  %v6191 = vmul.f32 %v1154, %v5928
  %v6192 = vmul.f32 %v1154, %v5933
  %v6193 = vmul.f32 %v1158, %v5928
  %v6194 = vmul.f32 %v1158, %v5933
  %v6195 = vmul.f32 %v1162, %v5928
  %v6196 = vmul.f32 %v1162, %v5933
  %v6197 = vmul.f32 %v1166, %v5928
  %v6198 = vmul.f32 %v1166, %v5933
  %v6199 = vmul.f32 %v1170, %v5928
  %v6200 = vmul.f32 %v1170, %v5933
  %v6201 = vmul.f32 %v1174, %v5928
  %v6202 = vmul.f32 %v1174, %v5933
  %v6203 = vmul.f32 %v1178, %v5928
  %v6204 = vmul.f32 %v1178, %v5933
  %v6205 = vmul.f32 %v1182, %v5928
  %v6206 = vmul.f32 %v1182, %v5933
  %v6207 = vmul.f32 %v1186, %v5928
  %v6208 = vmul.f32 %v1186, %v5933
  %v6209 = vmul.f32 %v1190, %v5928
  %v6210 = vmul.f32 %v1190, %v5933
  %v6211 = vmul.f32 %v2143, %v5928
  %v6212 = vmul.f32 %v2143, %v5933
  %v6213 = vmul.f32 %v3099, %v5928
  %v6214 = vmul.f32 %v3099, %v5933
  %v6215 = vmul.f32 %v1202, %v5928
  %v6216 = vmul.f32 %v1202, %v5933
  %v6217 = vmul.f32 %v1206, %v5928
  %v6218 = vmul.f32 %v1206, %v5933
  %v6219 = vmul.f32 %v1210, %v5928
  %v6220 = vmul.f32 %v1210, %v5933
  %v6221 = vmul.f32 %v1214, %v5928
  %v6222 = vmul.f32 %v1214, %v5933
  %v6223 = vmul.f32 %v1218, %v5928
  %v6224 = vmul.f32 %v1218, %v5933
  %v6225 = vmul.f32 %v1222, %v5928
  %v6226 = vmul.f32 %v1222, %v5933
  %v6227 = vmul.f32 %v1226, %v5928
  %v6228 = vmul.f32 %v1226, %v5933
  %v6229 = vmul.f32 %v1230, %v5928
  %v6230 = vmul.f32 %v1230, %v5933
  %v6231 = vmul.f32 %v1234, %v5928
  %v6232 = vmul.f32 %v1234, %v5933
  %v6233 = vmul.f32 %v1238, %v5928
  %v6234 = vmul.f32 %v1238, %v5933
  %v6235 = vmul.f32 %v1242, %v5928
  %v6236 = vmul.f32 %v1242, %v5933
  %v6237 = vmul.f32 %v1246, %v5928
  %v6238 = vmul.f32 %v1246, %v5933
  %v6239 = vmul.f32 %v1250, %v5928
  %v6240 = vmul.f32 %v1250, %v5933
  %v6241 = vmul.f32 %v1254, %v5928
  %v6242 = vmul.f32 %v1254, %v5933
  %v6243 = vmul.f32 %v1258, %v5928
  %v6244 = vmul.f32 %v1258, %v5933
  %v6245 = vmul.f32 %v1262, %v5928
  %v6246 = vmul.f32 %v1262, %v5933
  %v6247 = vmul.f32 %v1266, %v5928
  %v6248 = vmul.f32 %v1266, %v5933
  %v6249 = vmul.f32 %v1270, %v5928
  %v6250 = vmul.f32 %v1270, %v5933
  %v6251 = vmul.f32 %v2147, %v5928
  %v6252 = vmul.f32 %v2147, %v5933
  %v6253 = vmul.f32 %v3103, %v5928
  %v6254 = vmul.f32 %v3103, %v5933
  %v6255 = vmul.f32 %v1282, %v5928
  %v6256 = vmul.f32 %v1282, %v5933
  %v6257 = vmul.f32 %v1286, %v5928
  %v6258 = vmul.f32 %v1286, %v5933
  %v6259 = vmul.f32 %v1290, %v5928
  %v6260 = vmul.f32 %v1290, %v5933
  %v6261 = vmul.f32 %v1294, %v5928
  %v6262 = vmul.f32 %v1294, %v5933
  %v6263 = vmul.f32 %v1298, %v5928
  %v6264 = vmul.f32 %v1298, %v5933
  %v6265 = vmul.f32 %v1302, %v5928
  %v6266 = vmul.f32 %v1302, %v5933
  %v6267 = vmul.f32 %v1306, %v5928
  %v6268 = vmul.f32 %v1306, %v5933
  %v6269 = vmul.f32 %v1310, %v5928
  %v6270 = vmul.f32 %v1310, %v5933
  %v6271 = vmul.f32 %v1314, %v5928
  %v6272 = vmul.f32 %v1314, %v5933
  %v6273 = vmul.f32 %v1318, %v5928
  %v6274 = vmul.f32 %v1318, %v5933
  %v6275 = vmul.f32 %v1322, %v5928
  %v6276 = vmul.f32 %v1322, %v5933
  %v6277 = vmul.f32 %v1326, %v5928
  %v6278 = vmul.f32 %v1326, %v5933
  %v6279 = vmul.f32 %v1330, %v5928
  %v6280 = vmul.f32 %v1330, %v5933
  %v6281 = vmul.f32 %v1334, %v5928
  %v6282 = vmul.f32 %v1334, %v5933
  %v6283 = vmul.f32 %v1338, %v5928
  %v6284 = vmul.f32 %v1338, %v5933
  %v6285 = vmul.f32 %v1342, %v5928
  %v6286 = vmul.f32 %v1342, %v5933
  %v6287 = vmul.f32 %v1346, %v5928
  %v6288 = vmul.f32 %v1346, %v5933
  %v6289 = vmul.f32 %v1350, %v5928
  %v6290 = vmul.f32 %v1350, %v5933
  %v6291 = vmul.f32 %v2151, %v5928
  %v6292 = vmul.f32 %v2151, %v5933
  %v6293 = vmul.f32 %v3107, %v5928
  %v6294 = vmul.f32 %v3107, %v5933
  %v6295 = vmul.f32 %v1362, %v5928
  %v6296 = vmul.f32 %v1362, %v5933
  %v6297 = vmul.f32 %v1366, %v5928
  %v6298 = vmul.f32 %v1366, %v5933
  %v6299 = vmul.f32 %v1370, %v5928
  %v6300 = vmul.f32 %v1370, %v5933
  %v6301 = vmul.f32 %v1374, %v5928
  %v6302 = vmul.f32 %v1374, %v5933
  %v6303 = vmul.f32 %v1378, %v5928
  %v6304 = vmul.f32 %v1378, %v5933
  %v6305 = vmul.f32 %v1382, %v5928
  %v6306 = vmul.f32 %v1382, %v5933
  %v6307 = vmul.f32 %v1386, %v5928
  %v6308 = vmul.f32 %v1386, %v5933
  %v6309 = vmul.f32 %v1390, %v5928
  %v6310 = vmul.f32 %v1390, %v5933
  %v6311 = vmul.f32 %v1394, %v5928
  %v6312 = vmul.f32 %v1394, %v5933
  %v6313 = vmul.f32 %v1398, %v5928
  %v6314 = vmul.f32 %v1398, %v5933
  %v6315 = vmul.f32 %v1402, %v5928
  %v6316 = vmul.f32 %v1402, %v5933
  %v6317 = vmul.f32 %v1406, %v5928
  %v6318 = vmul.f32 %v1406, %v5933
  %v6319 = vmul.f32 %v1410, %v5928
  %v6320 = vmul.f32 %v1410, %v5933
  %v6321 = vmul.f32 %v1414, %v5928
  %v6322 = vmul.f32 %v1414, %v5933
  %v6323 = vmul.f32 %v1418, %v5928
  %v6324 = vmul.f32 %v1418, %v5933
  %v6325 = vmul.f32 %v1422, %v5928
  %v6326 = vmul.f32 %v1422, %v5933
  %v6327 = vmul.f32 %v1426, %v5928
  %v6328 = vmul.f32 %v1426, %v5933
  %v6329 = vmul.f32 %v1430, %v5928
  %v6330 = vmul.f32 %v1430, %v5933
  %v6331 = vmul.f32 %v2155, %v5928
  %v6332 = vmul.f32 %v2155, %v5933
  %v6333 = vmul.f32 %v3111, %v5928
  %v6334 = vmul.f32 %v3111, %v5933
  %v6335 = vmul.f32 %v4044, %v5928
  %v6336 = vmul.f32 %v4044, %v5933
  %v6337 = vmul.f32 %v4048, %v5928
  %v6338 = vmul.f32 %v4048, %v5933
  %v6339 = vmul.f32 %v4052, %v5928
  %v6340 = vmul.f32 %v4052, %v5933
  %v6341 = vmul.f32 %v4056, %v5928
  %v6342 = vmul.f32 %v4056, %v5933
  %v6343 = vmul.f32 %v4060, %v5928
  %v6344 = vmul.f32 %v4060, %v5933
  %v6345 = vmul.f32 %v4064, %v5928
  %v6346 = vmul.f32 %v4064, %v5933
  %v6347 = vmul.f32 %v4068, %v5928
  %v6348 = vmul.f32 %v4068, %v5933
  %v6349 = vmul.f32 %v4072, %v5928
  %v6350 = vmul.f32 %v4072, %v5933
  %v6351 = vmul.f32 %v4076, %v5928
  %v6352 = vmul.f32 %v4076, %v5933
  %v6353 = vmul.f32 %v4080, %v5928
  %v6354 = vmul.f32 %v4080, %v5933
  %v6355 = vmul.f32 %v4084, %v5928
  %v6356 = vmul.f32 %v4084, %v5933
  %v6357 = vmul.f32 %v4088, %v5928
  %v6358 = vmul.f32 %v4088, %v5933
  %v6359 = vmul.f32 %v4092, %v5928
  %v6360 = vmul.f32 %v4092, %v5933
  %v6361 = vmul.f32 %v4096, %v5928
  %v6362 = vmul.f32 %v4096, %v5933
  %v6363 = vmul.f32 %v4100, %v5928
  %v6364 = vmul.f32 %v4100, %v5933
  %v6365 = vmul.f32 %v4104, %v5928
  %v6366 = vmul.f32 %v4104, %v5933
  %v6367 = vmul.f32 %v4108, %v5928
  %v6368 = vmul.f32 %v4108, %v5933
  %v6369 = vmul.f32 %v4112, %v5928
  %v6370 = vmul.f32 %v4112, %v5933
  %v6371 = vmul.f32 %v5027, %v5928
  %v6372 = vmul.f32 %v5027, %v5933
  %v6373 = vmul.f32 %v5923, %v5928
  %v6374 = vmul.f32 %v5923, %v5933
  %v6375 = vadd.f32 %v5479, %v5935
  %v6376 = vadd.f32 %v5480, %v5936
  %v6377 = vadd.f32 %v5481, %v5937
  %v6378 = vadd.f32 %v5482, %v5938
  %v6379 = vadd.f32 %v5483, %v5939
  %v6380 = vadd.f32 %v5484, %v5940
  %v6381 = vadd.f32 %v5485, %v5941
  %v6382 = vadd.f32 %v5486, %v5942
  %v6383 = vadd.f32 %v5487, %v5943
  %v6384 = vadd.f32 %v5488, %v5944
  %v6385 = vadd.f32 %v5489, %v5945
  %v6386 = vadd.f32 %v5490, %v5946
  %v6387 = vadd.f32 %v5491, %v5947
  %v6388 = vadd.f32 %v5492, %v5948
  %v6389 = vadd.f32 %v5493, %v5949
  %v6390 = vadd.f32 %v5494, %v5950
  %v6391 = vadd.f32 %v5495, %v5951
  %v6392 = vadd.f32 %v5496, %v5952
  %v6393 = vadd.f32 %v5497, %v5953
  %v6394 = vadd.f32 %v5498, %v5954
  %v6395 = vadd.f32 %v5499, %v5955
  %v6396 = vadd.f32 %v5500, %v5956
  %v6397 = vadd.f32 %v5501, %v5957
  %v6398 = vadd.f32 %v5502, %v5958
  %v6399 = vadd.f32 %v5503, %v5959
  %v6400 = vadd.f32 %v5504, %v5960
  %v6401 = vadd.f32 %v5505, %v5961
  %v6402 = vadd.f32 %v5506, %v5962
  %v6403 = vadd.f32 %v5507, %v5963
  %v6404 = vadd.f32 %v5508, %v5964
  %v6405 = vadd.f32 %v5509, %v5965
  %v6406 = vadd.f32 %v5510, %v5966
  %v6407 = vadd.f32 %v5511, %v5967
  %v6408 = vadd.f32 %v5512, %v5968
  %v6409 = vadd.f32 %v5513, %v5969
  %v6410 = vadd.f32 %v5514, %v5970
  %v6411 = vadd.f32 %v5515, %v5971
  %v6412 = vadd.f32 %v5516, %v5972
  %v6413 = vadd.f32 %v5517, %v5973
  %v6414 = vadd.f32 %v5518, %v5974
  %v6415 = vadd.f32 %v5519, %v5975
  %v6416 = vadd.f32 %v5520, %v5976
  %v6417 = vadd.f32 %v5521, %v5977
  %v6418 = vadd.f32 %v5522, %v5978
  %v6419 = vadd.f32 %v5523, %v5979
  %v6420 = vadd.f32 %v5524, %v5980
  %v6421 = vadd.f32 %v5525, %v5981
  %v6422 = vadd.f32 %v5526, %v5982
  %v6423 = vadd.f32 %v5527, %v5983
  %v6424 = vadd.f32 %v5528, %v5984
  %v6425 = vadd.f32 %v5529, %v5985
  %v6426 = vadd.f32 %v5530, %v5986
  %v6427 = vadd.f32 %v5531, %v5987
  %v6428 = vadd.f32 %v5532, %v5988
  %v6429 = vadd.f32 %v5533, %v5989
  %v6430 = vadd.f32 %v5534, %v5990
  %v6431 = vadd.f32 %v5535, %v5991
  %v6432 = vadd.f32 %v5536, %v5992
  %v6433 = vadd.f32 %v5537, %v5993
  %v6434 = vadd.f32 %v5538, %v5994
  %v6435 = vadd.f32 %v5539, %v5995
  %v6436 = vadd.f32 %v5540, %v5996
  %v6437 = vadd.f32 %v5541, %v5997
  %v6438 = vadd.f32 %v5542, %v5998
  %v6439 = vadd.f32 %v5543, %v5999
  %v6440 = vadd.f32 %v5544, %v6000
  %v6441 = vadd.f32 %v5545, %v6001
  %v6442 = vadd.f32 %v5546, %v6002
  %v6443 = vadd.f32 %v5547, %v6003
  %v6444 = vadd.f32 %v5548, %v6004
  %v6445 = vadd.f32 %v5549, %v6005
  %v6446 = vadd.f32 %v5550, %v6006
  %v6447 = vadd.f32 %v5551, %v6007
  %v6448 = vadd.f32 %v5552, %v6008
  %v6449 = vadd.f32 %v5553, %v6009
  %v6450 = vadd.f32 %v5554, %v6010
  %v6451 = vadd.f32 %v5555, %v6011
  %v6452 = vadd.f32 %v5556, %v6012
  %v6453 = vadd.f32 %v5557, %v6013
  %v6454 = vadd.f32 %v5558, %v6014
  %v6455 = vadd.f32 %v5559, %v6015
  %v6456 = vadd.f32 %v5560, %v6016
  %v6457 = vadd.f32 %v5561, %v6017
  %v6458 = vadd.f32 %v5562, %v6018
  %v6459 = vadd.f32 %v5563, %v6019
  %v6460 = vadd.f32 %v5564, %v6020
  %v6461 = vadd.f32 %v5565, %v6021
  %v6462 = vadd.f32 %v5566, %v6022
  %v6463 = vadd.f32 %v5567, %v6023
  %v6464 = vadd.f32 %v5568, %v6024
  %v6465 = vadd.f32 %v5569, %v6025
  %v6466 = vadd.f32 %v5570, %v6026
  %v6467 = vadd.f32 %v5571, %v6027
  %v6468 = vadd.f32 %v5572, %v6028
  %v6469 = vadd.f32 %v5573, %v6029
  %v6470 = vadd.f32 %v5574, %v6030
  %v6471 = vadd.f32 %v5575, %v6031
  %v6472 = vadd.f32 %v5576, %v6032
  %v6473 = vadd.f32 %v5577, %v6033
  %v6474 = vadd.f32 %v5578, %v6034
  %v6475 = vadd.f32 %v5579, %v6035
  %v6476 = vadd.f32 %v5580, %v6036
  %v6477 = vadd.f32 %v5581, %v6037
  %v6478 = vadd.f32 %v5582, %v6038
  %v6479 = vadd.f32 %v5583, %v6039
  %v6480 = vadd.f32 %v5584, %v6040
  %v6481 = vadd.f32 %v5585, %v6041
  %v6482 = vadd.f32 %v5586, %v6042
  %v6483 = vadd.f32 %v5587, %v6043
  %v6484 = vadd.f32 %v5588, %v6044
  %v6485 = vadd.f32 %v5589, %v6045
  %v6486 = vadd.f32 %v5590, %v6046
  %v6487 = vadd.f32 %v5591, %v6047
  %v6488 = vadd.f32 %v5592, %v6048
  %v6489 = vadd.f32 %v5593, %v6049
  %v6490 = vadd.f32 %v5594, %v6050
  %v6491 = vadd.f32 %v5595, %v6051
  %v6492 = vadd.f32 %v5596, %v6052
  %v6493 = vadd.f32 %v5597, %v6053
  %v6494 = vadd.f32 %v5598, %v6054
  %v6495 = vadd.f32 %v5599, %v6055
  %v6496 = vadd.f32 %v5600, %v6056
  %v6497 = vadd.f32 %v5601, %v6057
  %v6498 = vadd.f32 %v5602, %v6058
  %v6499 = vadd.f32 %v5603, %v6059
  %v6500 = vadd.f32 %v5604, %v6060
  %v6501 = vadd.f32 %v5605, %v6061
  %v6502 = vadd.f32 %v5606, %v6062
  %v6503 = vadd.f32 %v5607, %v6063
  %v6504 = vadd.f32 %v5608, %v6064
  %v6505 = vadd.f32 %v5609, %v6065
  %v6506 = vadd.f32 %v5610, %v6066
  %v6507 = vadd.f32 %v5611, %v6067
  %v6508 = vadd.f32 %v5612, %v6068
  %v6509 = vadd.f32 %v5613, %v6069
  %v6510 = vadd.f32 %v5614, %v6070
  %v6511 = vadd.f32 %v5615, %v6071
  %v6512 = vadd.f32 %v5616, %v6072
  %v6513 = vadd.f32 %v5617, %v6073
  %v6514 = vadd.f32 %v5618, %v6074
  %v6515 = vadd.f32 %v5619, %v6075
  %v6516 = vadd.f32 %v5620, %v6076
  %v6517 = vadd.f32 %v5621, %v6077
  %v6518 = vadd.f32 %v5622, %v6078
  %v6519 = vadd.f32 %v5623, %v6079
  %v6520 = vadd.f32 %v5624, %v6080
  %v6521 = vadd.f32 %v5625, %v6081
  %v6522 = vadd.f32 %v5626, %v6082
  %v6523 = vadd.f32 %v5627, %v6083
  %v6524 = vadd.f32 %v5628, %v6084
  %v6525 = vadd.f32 %v5629, %v6085
  %v6526 = vadd.f32 %v5630, %v6086
  %v6527 = vadd.f32 %v5631, %v6087
  %v6528 = vadd.f32 %v5632, %v6088
  %v6529 = vadd.f32 %v5633, %v6089
  %v6530 = vadd.f32 %v5634, %v6090
  %v6531 = vadd.f32 %v5635, %v6091
  %v6532 = vadd.f32 %v5636, %v6092
  %v6533 = vadd.f32 %v5637, %v6093
  %v6534 = vadd.f32 %v5638, %v6094
  %v6535 = vadd.f32 %v5639, %v6095
  %v6536 = vadd.f32 %v5640, %v6096
  %v6537 = vadd.f32 %v5641, %v6097
  %v6538 = vadd.f32 %v5642, %v6098
  %v6539 = vadd.f32 %v5643, %v6099
  %v6540 = vadd.f32 %v5644, %v6100
  %v6541 = vadd.f32 %v5645, %v6101
  %v6542 = vadd.f32 %v5646, %v6102
  %v6543 = vadd.f32 %v5647, %v6103
  %v6544 = vadd.f32 %v5648, %v6104
  %v6545 = vadd.f32 %v5649, %v6105
  %v6546 = vadd.f32 %v5650, %v6106
  %v6547 = vadd.f32 %v5651, %v6107
  %v6548 = vadd.f32 %v5652, %v6108
  %v6549 = vadd.f32 %v5653, %v6109
  %v6550 = vadd.f32 %v5654, %v6110
  %v6551 = vadd.f32 %v5655, %v6111
  %v6552 = vadd.f32 %v5656, %v6112
  %v6553 = vadd.f32 %v5657, %v6113
  %v6554 = vadd.f32 %v5658, %v6114
  %v6555 = vadd.f32 %v5659, %v6115
  %v6556 = vadd.f32 %v5660, %v6116
  %v6557 = vadd.f32 %v5661, %v6117
  %v6558 = vadd.f32 %v5662, %v6118
  %v6559 = vadd.f32 %v5663, %v6119
  %v6560 = vadd.f32 %v5664, %v6120
  %v6561 = vadd.f32 %v5665, %v6121
  %v6562 = vadd.f32 %v5666, %v6122
  %v6563 = vadd.f32 %v5667, %v6123
  %v6564 = vadd.f32 %v5668, %v6124
  %v6565 = vadd.f32 %v5669, %v6125
  %v6566 = vadd.f32 %v5670, %v6126
  %v6567 = vadd.f32 %v5671, %v6127
  %v6568 = vadd.f32 %v5672, %v6128
  %v6569 = vadd.f32 %v5673, %v6129
  %v6570 = vadd.f32 %v5674, %v6130
  %v6571 = vadd.f32 %v5675, %v6131
  %v6572 = vadd.f32 %v5676, %v6132
  %v6573 = vadd.f32 %v5677, %v6133
  %v6574 = vadd.f32 %v5678, %v6134
  %v6575 = vadd.f32 %v5679, %v6135
  %v6576 = vadd.f32 %v5680, %v6136
  %v6577 = vadd.f32 %v5681, %v6137
  %v6578 = vadd.f32 %v5682, %v6138
  %v6579 = vadd.f32 %v5683, %v6139
  %v6580 = vadd.f32 %v5684, %v6140
  %v6581 = vadd.f32 %v5685, %v6141
  %v6582 = vadd.f32 %v5686, %v6142
  %v6583 = vadd.f32 %v5687, %v6143
  %v6584 = vadd.f32 %v5688, %v6144
  %v6585 = vadd.f32 %v5689, %v6145
  %v6586 = vadd.f32 %v5690, %v6146
  %v6587 = vadd.f32 %v5691, %v6147
  %v6588 = vadd.f32 %v5692, %v6148
  %v6589 = vadd.f32 %v5693, %v6149
  %v6590 = vadd.f32 %v5694, %v6150
  %v6591 = vadd.f32 %v5695, %v6151
  %v6592 = vadd.f32 %v5696, %v6152
  %v6593 = vadd.f32 %v5697, %v6153
  %v6594 = vadd.f32 %v5698, %v6154
  %v6595 = vadd.f32 %v5699, %v6155
  %v6596 = vadd.f32 %v5700, %v6156
  %v6597 = vadd.f32 %v5701, %v6157
  %v6598 = vadd.f32 %v5702, %v6158
  %v6599 = vadd.f32 %v5703, %v6159
  %v6600 = vadd.f32 %v5704, %v6160
  %v6601 = vadd.f32 %v5705, %v6161
  %v6602 = vadd.f32 %v5706, %v6162
  %v6603 = vadd.f32 %v5707, %v6163
  %v6604 = vadd.f32 %v5708, %v6164
  %v6605 = vadd.f32 %v5709, %v6165
  %v6606 = vadd.f32 %v5710, %v6166
  %v6607 = vadd.f32 %v5711, %v6167
  %v6608 = vadd.f32 %v5712, %v6168
  %v6609 = vadd.f32 %v5713, %v6169
  %v6610 = vadd.f32 %v5714, %v6170
  %v6611 = vadd.f32 %v5715, %v6171
  %v6612 = vadd.f32 %v5716, %v6172
  %v6613 = vadd.f32 %v5717, %v6173
  %v6614 = vadd.f32 %v5718, %v6174
  %v6615 = vadd.f32 %v5719, %v6175
  %v6616 = vadd.f32 %v5720, %v6176
  %v6617 = vadd.f32 %v5721, %v6177
  %v6618 = vadd.f32 %v5722, %v6178
  %v6619 = vadd.f32 %v5723, %v6179
  %v6620 = vadd.f32 %v5724, %v6180
  %v6621 = vadd.f32 %v5725, %v6181
  %v6622 = vadd.f32 %v5726, %v6182
  %v6623 = vadd.f32 %v5727, %v6183
  %v6624 = vadd.f32 %v5728, %v6184
  %v6625 = vadd.f32 %v5729, %v6185
  %v6626 = vadd.f32 %v5730, %v6186
  %v6627 = vadd.f32 %v5731, %v6187
  %v6628 = vadd.f32 %v5732, %v6188
  %v6629 = vadd.f32 %v5733, %v6189
  %v6630 = vadd.f32 %v5734, %v6190
  %v6631 = vadd.f32 %v5735, %v6191
  %v6632 = vadd.f32 %v5736, %v6192
  %v6633 = vadd.f32 %v5737, %v6193
  %v6634 = vadd.f32 %v5738, %v6194
  %v6635 = vadd.f32 %v5739, %v6195
  %v6636 = vadd.f32 %v5740, %v6196
  %v6637 = vadd.f32 %v5741, %v6197
  %v6638 = vadd.f32 %v5742, %v6198
  %v6639 = vadd.f32 %v5743, %v6199
  %v6640 = vadd.f32 %v5744, %v6200
  %v6641 = vadd.f32 %v5745, %v6201
  %v6642 = vadd.f32 %v5746, %v6202
  %v6643 = vadd.f32 %v5747, %v6203
  %v6644 = vadd.f32 %v5748, %v6204
  %v6645 = vadd.f32 %v5749, %v6205
  %v6646 = vadd.f32 %v5750, %v6206
  %v6647 = vadd.f32 %v5751, %v6207
  %v6648 = vadd.f32 %v5752, %v6208
  %v6649 = vadd.f32 %v5753, %v6209
  %v6650 = vadd.f32 %v5754, %v6210
  %v6651 = vadd.f32 %v5755, %v6211
  %v6652 = vadd.f32 %v5756, %v6212
  %v6653 = vadd.f32 %v5757, %v6213
  %v6654 = vadd.f32 %v5758, %v6214
  %v6655 = vadd.f32 %v5759, %v6215
  %v6656 = vadd.f32 %v5760, %v6216
  %v6657 = vadd.f32 %v5761, %v6217
  %v6658 = vadd.f32 %v5762, %v6218
  %v6659 = vadd.f32 %v5763, %v6219
  %v6660 = vadd.f32 %v5764, %v6220
  %v6661 = vadd.f32 %v5765, %v6221
  %v6662 = vadd.f32 %v5766, %v6222
  %v6663 = vadd.f32 %v5767, %v6223
  %v6664 = vadd.f32 %v5768, %v6224
  %v6665 = vadd.f32 %v5769, %v6225
  %v6666 = vadd.f32 %v5770, %v6226
  %v6667 = vadd.f32 %v5771, %v6227
  %v6668 = vadd.f32 %v5772, %v6228
  %v6669 = vadd.f32 %v5773, %v6229
  %v6670 = vadd.f32 %v5774, %v6230
  %v6671 = vadd.f32 %v5775, %v6231
  %v6672 = vadd.f32 %v5776, %v6232
  %v6673 = vadd.f32 %v5777, %v6233
  %v6674 = vadd.f32 %v5778, %v6234
  %v6675 = vadd.f32 %v5779, %v6235
  %v6676 = vadd.f32 %v5780, %v6236
  %v6677 = vadd.f32 %v5781, %v6237
  %v6678 = vadd.f32 %v5782, %v6238
  %v6679 = vadd.f32 %v5783, %v6239
  %v6680 = vadd.f32 %v5784, %v6240
  %v6681 = vadd.f32 %v5785, %v6241
  %v6682 = vadd.f32 %v5786, %v6242
  %v6683 = vadd.f32 %v5787, %v6243
  %v6684 = vadd.f32 %v5788, %v6244
  %v6685 = vadd.f32 %v5789, %v6245
  %v6686 = vadd.f32 %v5790, %v6246
  %v6687 = vadd.f32 %v5791, %v6247
  %v6688 = vadd.f32 %v5792, %v6248
  %v6689 = vadd.f32 %v5793, %v6249
  %v6690 = vadd.f32 %v5794, %v6250
  %v6691 = vadd.f32 %v5795, %v6251
  %v6692 = vadd.f32 %v5796, %v6252
  %v6693 = vadd.f32 %v5797, %v6253
  %v6694 = vadd.f32 %v5798, %v6254
  %v6695 = vadd.f32 %v5799, %v6255
  %v6696 = vadd.f32 %v5800, %v6256
  %v6697 = vadd.f32 %v5801, %v6257
  %v6698 = vadd.f32 %v5802, %v6258
  %v6699 = vadd.f32 %v5803, %v6259
  %v6700 = vadd.f32 %v5804, %v6260
  %v6701 = vadd.f32 %v5805, %v6261
  %v6702 = vadd.f32 %v5806, %v6262
  %v6703 = vadd.f32 %v5807, %v6263
  %v6704 = vadd.f32 %v5808, %v6264
  %v6705 = vadd.f32 %v5809, %v6265
  %v6706 = vadd.f32 %v5810, %v6266
  %v6707 = vadd.f32 %v5811, %v6267
  %v6708 = vadd.f32 %v5812, %v6268
  %v6709 = vadd.f32 %v5813, %v6269
  %v6710 = vadd.f32 %v5814, %v6270
  %v6711 = vadd.f32 %v5815, %v6271
  %v6712 = vadd.f32 %v5816, %v6272
  %v6713 = vadd.f32 %v5817, %v6273
  %v6714 = vadd.f32 %v5818, %v6274
  %v6715 = vadd.f32 %v5819, %v6275
  %v6716 = vadd.f32 %v5820, %v6276
  %v6717 = vadd.f32 %v5821, %v6277
  %v6718 = vadd.f32 %v5822, %v6278
  %v6719 = vadd.f32 %v5823, %v6279
  %v6720 = vadd.f32 %v5824, %v6280
  %v6721 = vadd.f32 %v5825, %v6281
  %v6722 = vadd.f32 %v5826, %v6282
  %v6723 = vadd.f32 %v5827, %v6283
  %v6724 = vadd.f32 %v5828, %v6284
  %v6725 = vadd.f32 %v5829, %v6285
  %v6726 = vadd.f32 %v5830, %v6286
  %v6727 = vadd.f32 %v5831, %v6287
  %v6728 = vadd.f32 %v5832, %v6288
  %v6729 = vadd.f32 %v5833, %v6289
  %v6730 = vadd.f32 %v5834, %v6290
  %v6731 = vadd.f32 %v5835, %v6291
  %v6732 = vadd.f32 %v5836, %v6292
  %v6733 = vadd.f32 %v5837, %v6293
  %v6734 = vadd.f32 %v5838, %v6294
  %v6735 = vadd.f32 %v5839, %v6295
  %v6736 = vadd.f32 %v5840, %v6296
  %v6737 = vadd.f32 %v5841, %v6297
  %v6738 = vadd.f32 %v5842, %v6298
  %v6739 = vadd.f32 %v5843, %v6299
  %v6740 = vadd.f32 %v5844, %v6300
  %v6741 = vadd.f32 %v5845, %v6301
  %v6742 = vadd.f32 %v5846, %v6302
  %v6743 = vadd.f32 %v5847, %v6303
  %v6744 = vadd.f32 %v5848, %v6304
  %v6745 = vadd.f32 %v5849, %v6305
  %v6746 = vadd.f32 %v5850, %v6306
  %v6747 = vadd.f32 %v5851, %v6307
  %v6748 = vadd.f32 %v5852, %v6308
  %v6749 = vadd.f32 %v5853, %v6309
  %v6750 = vadd.f32 %v5854, %v6310
  %v6751 = vadd.f32 %v5855, %v6311
  %v6752 = vadd.f32 %v5856, %v6312
  %v6753 = vadd.f32 %v5857, %v6313
  %v6754 = vadd.f32 %v5858, %v6314
  %v6755 = vadd.f32 %v5859, %v6315
  %v6756 = vadd.f32 %v5860, %v6316
  %v6757 = vadd.f32 %v5861, %v6317
  %v6758 = vadd.f32 %v5862, %v6318
  %v6759 = vadd.f32 %v5863, %v6319
  %v6760 = vadd.f32 %v5864, %v6320
  %v6761 = vadd.f32 %v5865, %v6321
  %v6762 = vadd.f32 %v5866, %v6322
  %v6763 = vadd.f32 %v5867, %v6323
  %v6764 = vadd.f32 %v5868, %v6324
  %v6765 = vadd.f32 %v5869, %v6325
  %v6766 = vadd.f32 %v5870, %v6326
  %v6767 = vadd.f32 %v5871, %v6327
  %v6768 = vadd.f32 %v5872, %v6328
  %v6769 = vadd.f32 %v5873, %v6329
  %v6770 = vadd.f32 %v5874, %v6330
  %v6771 = vadd.f32 %v5875, %v6331
  %v6772 = vadd.f32 %v5876, %v6332
  %v6773 = vadd.f32 %v5877, %v6333
  %v6774 = vadd.f32 %v5878, %v6334
  %v6775 = vadd.f32 %v5879, %v6335
  %v6776 = vadd.f32 %v5880, %v6336
  %v6777 = vadd.f32 %v5881, %v6337
  %v6778 = vadd.f32 %v5882, %v6338
  %v6779 = vadd.f32 %v5883, %v6339
  %v6780 = vadd.f32 %v5884, %v6340
  %v6781 = vadd.f32 %v5885, %v6341
  %v6782 = vadd.f32 %v5886, %v6342
  %v6783 = vadd.f32 %v5887, %v6343
  %v6784 = vadd.f32 %v5888, %v6344
  %v6785 = vadd.f32 %v5889, %v6345
  %v6786 = vadd.f32 %v5890, %v6346
  %v6787 = vadd.f32 %v5891, %v6347
  %v6788 = vadd.f32 %v5892, %v6348
  %v6789 = vadd.f32 %v5893, %v6349
  %v6790 = vadd.f32 %v5894, %v6350
  %v6791 = vadd.f32 %v5895, %v6351
  %v6792 = vadd.f32 %v5896, %v6352
  %v6793 = vadd.f32 %v5897, %v6353
  %v6794 = vadd.f32 %v5898, %v6354
  %v6795 = vadd.f32 %v5899, %v6355
  %v6796 = vadd.f32 %v5900, %v6356
  %v6797 = vadd.f32 %v5901, %v6357
  %v6798 = vadd.f32 %v5902, %v6358
  %v6799 = vadd.f32 %v5903, %v6359
  %v6800 = vadd.f32 %v5904, %v6360
  %v6801 = vadd.f32 %v5905, %v6361
  %v6802 = vadd.f32 %v5906, %v6362
  %v6803 = vadd.f32 %v5907, %v6363
  %v6804 = vadd.f32 %v5908, %v6364
  %v6805 = vadd.f32 %v5909, %v6365
  %v6806 = vadd.f32 %v5910, %v6366
  %v6807 = vadd.f32 %v5911, %v6367
  %v6808 = vadd.f32 %v5912, %v6368
  %v6809 = vadd.f32 %v5913, %v6369
  %v6810 = vadd.f32 %v5914, %v6370
  %v6811 = vadd.f32 %v5915, %v6371
  %v6812 = vadd.f32 %v5916, %v6372
  %v6813 = vadd.f32 %v5917, %v6373
  %v6814 = vadd.f32 %v5918, %v6374
  %v6835 = vlaneseq
  %v6836 = vshrl.u32 %v6835, 7
  %v6837 = vsub.s32 0, %v6836
  %v6838 = vrot.slane %v291, %v6837
  %v6839 = vlaneseq
  %v6840 = vshrl.u32 %v6839, 7
  %v6841 = vsub.s32 0, %v6840
  %v6842 = vrot.slane %v292, %v6841
  %v6843 = vlaneseq
  %v6844 = vshrl.u32 %v6843, 7
  %v6845 = vsub.s32 0, %v6844
  %v6846 = vrot.slane %v293, %v6845
  %v6847 = vlaneseq
  %v6848 = vshrl.u32 %v6847, 7
  %v6849 = vsub.s32 0, %v6848
  %v6850 = vrot.slane %v294, %v6849
  %v6851 = vlaneseq
  %v6852 = vshrl.u32 %v6851, 7
  %v6853 = vsub.s32 0, %v6852
  %v6854 = vrot.slane %v295, %v6853
  %v6855 = vlaneseq
  %v6856 = vshrl.u32 %v6855, 7
  %v6857 = vsub.s32 0, %v6856
  %v6858 = vrot.slane %v296, %v6857
  %v6859 = vlaneseq
  %v6860 = vshrl.u32 %v6859, 7
  %v6861 = vsub.s32 0, %v6860
  %v6862 = vrot.slane %v297, %v6861
  %v6863 = vlaneseq
  %v6864 = vshrl.u32 %v6863, 7
  %v6865 = vsub.s32 0, %v6864
  %v6866 = vrot.slane %v298, %v6865
  %v6867 = vlaneseq
  %v6868 = vshrl.u32 %v6867, 7
  %v6869 = vsub.s32 0, %v6868
  %v6870 = vrot.slane %v299, %v6869
  %v6871 = vlaneseq
  %v6872 = vshrl.u32 %v6871, 7
  %v6873 = vsub.s32 0, %v6872
  %v6874 = vrot.slane %v300, %v6873
  %v6875 = vlaneseq
  %v6876 = vshrl.u32 %v6875, 7
  %v6877 = vsub.s32 0, %v6876
  %v6878 = vrot.slane %v301, %v6877
  %v6879 = vlaneseq
  %v6880 = vshrl.u32 %v6879, 7
  %v6881 = vsub.s32 0, %v6880
  %v6882 = vrot.slane %v302, %v6881
  %v6883 = vlaneseq
  %v6884 = vshrl.u32 %v6883, 7
  %v6885 = vsub.s32 0, %v6884
  %v6886 = vrot.slane %v303, %v6885
  %v6887 = vlaneseq
  %v6888 = vshrl.u32 %v6887, 7
  %v6889 = vsub.s32 0, %v6888
  %v6890 = vrot.slane %v304, %v6889
  %v6891 = vlaneseq
  %v6892 = vshrl.u32 %v6891, 7
  %v6893 = vsub.s32 0, %v6892
  %v6894 = vrot.slane %v305, %v6893
  %v6895 = vlaneseq
  %v6896 = vshrl.u32 %v6895, 7
  %v6897 = vsub.s32 0, %v6896
  %v6898 = vrot.slane %v306, %v6897
  %v6899 = vlaneseq
  %v6900 = vshrl.u32 %v6899, 7
  %v6901 = vsub.s32 0, %v6900
  %v6902 = vrot.slane %v307, %v6901
  %v6903 = vlaneseq
  %v6904 = vshrl.u32 %v6903, 7
  %v6905 = vsub.s32 0, %v6904
  %v6906 = vrot.slane %v308, %v6905
  %v6907 = vlaneseq
  %v6908 = vshrl.u32 %v6907, 7
  %v6909 = vsub.s32 0, %v6908
  %v6910 = vrot.slane %v309, %v6909
  %v6911 = vlaneseq
  %v6912 = vshrl.u32 %v6911, 7
  %v6913 = vsub.s32 0, %v6912
  %v6914 = vrot.slane %v310, %v6913
  %6936 = vset.pattern.permute.xlu0 0
  %6937 = vperm.xlu0 %6936, %v325
  %v6938 = vpop.permute.xlu0 %6937
  %6941 = vset.pattern.permute.xlu0 0
  %6942 = vperm.xlu0 %6941, %v326
  %v6943 = vpop.permute.xlu0 %6942
  %v6945 = vmul.f32 %v714, %v6938
  %v6946 = vmul.f32 %v714, %v6943
  %v6947 = vmul.f32 %v718, %v6938
  %v6948 = vmul.f32 %v718, %v6943
  %v6949 = vmul.f32 %v722, %v6938
  %v6950 = vmul.f32 %v722, %v6943
  %v6951 = vmul.f32 %v726, %v6938
  %v6952 = vmul.f32 %v726, %v6943
  %v6953 = vmul.f32 %v730, %v6938
  %v6954 = vmul.f32 %v730, %v6943
  %v6955 = vmul.f32 %v734, %v6938
  %v6956 = vmul.f32 %v734, %v6943
  %v6957 = vmul.f32 %v738, %v6938
  %v6958 = vmul.f32 %v738, %v6943
  %v6959 = vmul.f32 %v742, %v6938
  %v6960 = vmul.f32 %v742, %v6943
  %v6961 = vmul.f32 %v746, %v6938
  %v6962 = vmul.f32 %v746, %v6943
  %v6963 = vmul.f32 %v750, %v6938
  %v6964 = vmul.f32 %v750, %v6943
  %v6965 = vmul.f32 %v754, %v6938
  %v6966 = vmul.f32 %v754, %v6943
  %v6967 = vmul.f32 %v758, %v6938
  %v6968 = vmul.f32 %v758, %v6943
  %v6969 = vmul.f32 %v762, %v6938
  %v6970 = vmul.f32 %v762, %v6943
  %v6971 = vmul.f32 %v766, %v6938
  %v6972 = vmul.f32 %v766, %v6943
  %v6973 = vmul.f32 %v770, %v6938
  %v6974 = vmul.f32 %v770, %v6943
  %v6975 = vmul.f32 %v774, %v6938
  %v6976 = vmul.f32 %v774, %v6943
  %v6977 = vmul.f32 %v778, %v6938
  %v6978 = vmul.f32 %v778, %v6943
  %v6979 = vmul.f32 %v782, %v6938
  %v6980 = vmul.f32 %v782, %v6943
  %v6981 = vmul.f32 %v786, %v6938
  %v6982 = vmul.f32 %v786, %v6943
  %v6983 = vmul.f32 %v790, %v6938
  %v6984 = vmul.f32 %v790, %v6943
  %v6985 = vmul.f32 %v794, %v6938
  %v6986 = vmul.f32 %v794, %v6943
  %v6987 = vmul.f32 %v798, %v6938
  %v6988 = vmul.f32 %v798, %v6943
  %v6989 = vmul.f32 %v802, %v6938
  %v6990 = vmul.f32 %v802, %v6943
  %v6991 = vmul.f32 %v806, %v6938
  %v6992 = vmul.f32 %v806, %v6943
  %v6993 = vmul.f32 %v810, %v6938
  %v6994 = vmul.f32 %v810, %v6943
  %v6995 = vmul.f32 %v814, %v6938
  %v6996 = vmul.f32 %v814, %v6943
  %v6997 = vmul.f32 %v818, %v6938
  %v6998 = vmul.f32 %v818, %v6943
  %v6999 = vmul.f32 %v822, %v6938
  %v7000 = vmul.f32 %v822, %v6943
  %v7001 = vmul.f32 %v826, %v6938
  %v7002 = vmul.f32 %v826, %v6943
  %v7003 = vmul.f32 %v830, %v6938
  %v7004 = vmul.f32 %v830, %v6943
  %v7005 = vmul.f32 %v834, %v6938
  %v7006 = vmul.f32 %v834, %v6943
  %v7007 = vmul.f32 %v838, %v6938
  %v7008 = vmul.f32 %v838, %v6943
  %v7009 = vmul.f32 %v842, %v6938
  %v7010 = vmul.f32 %v842, %v6943
  %v7011 = vmul.f32 %v846, %v6938
  %v7012 = vmul.f32 %v846, %v6943
  %v7013 = vmul.f32 %v850, %v6938
  %v7014 = vmul.f32 %v850, %v6943
  %v7015 = vmul.f32 %v854, %v6938
  %v7016 = vmul.f32 %v854, %v6943
  %v7017 = vmul.f32 %v858, %v6938
  %v7018 = vmul.f32 %v858, %v6943
  %v7019 = vmul.f32 %v862, %v6938
  %v7020 = vmul.f32 %v862, %v6943
  %v7021 = vmul.f32 %v866, %v6938
  %v7022 = vmul.f32 %v866, %v6943
  %v7023 = vmul.f32 %v870, %v6938
  %v7024 = vmul.f32 %v870, %v6943
  %v7025 = vmul.f32 %v874, %v6938
  %v7026 = vmul.f32 %v874, %v6943
  %v7027 = vmul.f32 %v878, %v6938
  %v7028 = vmul.f32 %v878, %v6943
  %v7029 = vmul.f32 %v882, %v6938
  %v7030 = vmul.f32 %v882, %v6943
  %v7031 = vmul.f32 %v886, %v6938
  %v7032 = vmul.f32 %v886, %v6943
  %v7033 = vmul.f32 %v890, %v6938
  %v7034 = vmul.f32 %v890, %v6943
  %v7035 = vmul.f32 %v894, %v6938
  %v7036 = vmul.f32 %v894, %v6943
  %v7037 = vmul.f32 %v898, %v6938
  %v7038 = vmul.f32 %v898, %v6943
  %v7039 = vmul.f32 %v902, %v6938
  %v7040 = vmul.f32 %v902, %v6943
  %v7041 = vmul.f32 %v906, %v6938
  %v7042 = vmul.f32 %v906, %v6943
  %v7043 = vmul.f32 %v910, %v6938
  %v7044 = vmul.f32 %v910, %v6943
  %v7045 = vmul.f32 %v914, %v6938
  %v7046 = vmul.f32 %v914, %v6943
  %v7047 = vmul.f32 %v918, %v6938
  %v7048 = vmul.f32 %v918, %v6943
  %v7049 = vmul.f32 %v922, %v6938
  %v7050 = vmul.f32 %v922, %v6943
  %v7051 = vmul.f32 %v926, %v6938
  %v7052 = vmul.f32 %v926, %v6943
  %v7053 = vmul.f32 %v930, %v6938
  %v7054 = vmul.f32 %v930, %v6943
  %v7055 = vmul.f32 %v934, %v6938
  %v7056 = vmul.f32 %v934, %v6943
  %v7057 = vmul.f32 %v938, %v6938
  %v7058 = vmul.f32 %v938, %v6943
  %v7059 = vmul.f32 %v942, %v6938
  %v7060 = vmul.f32 %v942, %v6943
  %v7061 = vmul.f32 %v946, %v6938
  %v7062 = vmul.f32 %v946, %v6943
  %v7063 = vmul.f32 %v950, %v6938
  %v7064 = vmul.f32 %v950, %v6943
  %v7065 = vmul.f32 %v954, %v6938
  %v7066 = vmul.f32 %v954, %v6943
  %v7067 = vmul.f32 %v958, %v6938
  %v7068 = vmul.f32 %v958, %v6943
  %v7069 = vmul.f32 %v962, %v6938
  %v7070 = vmul.f32 %v962, %v6943
  %v7071 = vmul.f32 %v966, %v6938
  %v7072 = vmul.f32 %v966, %v6943
  %v7073 = vmul.f32 %v970, %v6938
  %v7074 = vmul.f32 %v970, %v6943
  %v7075 = vmul.f32 %v974, %v6938
  %v7076 = vmul.f32 %v974, %v6943
  %v7077 = vmul.f32 %v978, %v6938
  %v7078 = vmul.f32 %v978, %v6943
  %v7079 = vmul.f32 %v982, %v6938
  %v7080 = vmul.f32 %v982, %v6943
  %v7081 = vmul.f32 %v986, %v6938
  %v7082 = vmul.f32 %v986, %v6943
  %v7083 = vmul.f32 %v990, %v6938
  %v7084 = vmul.f32 %v990, %v6943
  %v7085 = vmul.f32 %v994, %v6938
  %v7086 = vmul.f32 %v994, %v6943
  %v7087 = vmul.f32 %v998, %v6938
  %v7088 = vmul.f32 %v998, %v6943
  %v7089 = vmul.f32 %v1002, %v6938
  %v7090 = vmul.f32 %v1002, %v6943
  %v7091 = vmul.f32 %v1006, %v6938
  %v7092 = vmul.f32 %v1006, %v6943
  %v7093 = vmul.f32 %v1010, %v6938
  %v7094 = vmul.f32 %v1010, %v6943
  %v7095 = vmul.f32 %v1014, %v6938
  %v7096 = vmul.f32 %v1014, %v6943
  %v7097 = vmul.f32 %v1018, %v6938
  %v7098 = vmul.f32 %v1018, %v6943
  %v7099 = vmul.f32 %v1022, %v6938
  %v7100 = vmul.f32 %v1022, %v6943
  %v7101 = vmul.f32 %v1026, %v6938
  %v7102 = vmul.f32 %v1026, %v6943
  %v7103 = vmul.f32 %v1030, %v6938
  %v7104 = vmul.f32 %v1030, %v6943
  %v7105 = vmul.f32 %v1034, %v6938
  %v7106 = vmul.f32 %v1034, %v6943
  %v7107 = vmul.f32 %v1038, %v6938
  %v7108 = vmul.f32 %v1038, %v6943
  %v7109 = vmul.f32 %v1042, %v6938
  %v7110 = vmul.f32 %v1042, %v6943
  %v7111 = vmul.f32 %v1046, %v6938
  %v7112 = vmul.f32 %v1046, %v6943
  %v7113 = vmul.f32 %v1050, %v6938
  %v7114 = vmul.f32 %v1050, %v6943
  %v7115 = vmul.f32 %v1054, %v6938
  %v7116 = vmul.f32 %v1054, %v6943
  %v7117 = vmul.f32 %v1058, %v6938
  %v7118 = vmul.f32 %v1058, %v6943
  %v7119 = vmul.f32 %v1062, %v6938
  %v7120 = vmul.f32 %v1062, %v6943
  %v7121 = vmul.f32 %v1066, %v6938
  %v7122 = vmul.f32 %v1066, %v6943
  %v7123 = vmul.f32 %v1070, %v6938
  %v7124 = vmul.f32 %v1070, %v6943
  %v7125 = vmul.f32 %v1074, %v6938
  %v7126 = vmul.f32 %v1074, %v6943
  %v7127 = vmul.f32 %v1078, %v6938
  %v7128 = vmul.f32 %v1078, %v6943
  %v7129 = vmul.f32 %v1082, %v6938
  %v7130 = vmul.f32 %v1082, %v6943
  %v7131 = vmul.f32 %v1086, %v6938
  %v7132 = vmul.f32 %v1086, %v6943
  %v7133 = vmul.f32 %v1090, %v6938
  %v7134 = vmul.f32 %v1090, %v6943
  %v7135 = vmul.f32 %v1094, %v6938
  %v7136 = vmul.f32 %v1094, %v6943
  %v7137 = vmul.f32 %v1098, %v6938
  %v7138 = vmul.f32 %v1098, %v6943
  %v7139 = vmul.f32 %v1102, %v6938
  %v7140 = vmul.f32 %v1102, %v6943
  %v7141 = vmul.f32 %v1106, %v6938
  %v7142 = vmul.f32 %v1106, %v6943
  %v7143 = vmul.f32 %v1110, %v6938
  %v7144 = vmul.f32 %v1110, %v6943
  %v7145 = vmul.f32 %v1114, %v6938
  %v7146 = vmul.f32 %v1114, %v6943
  %v7147 = vmul.f32 %v1118, %v6938
  %v7148 = vmul.f32 %v1118, %v6943
  %v7149 = vmul.f32 %v1122, %v6938
  %v7150 = vmul.f32 %v1122, %v6943
  %v7151 = vmul.f32 %v1126, %v6938
  %v7152 = vmul.f32 %v1126, %v6943
  %v7153 = vmul.f32 %v1130, %v6938
  %v7154 = vmul.f32 %v1130, %v6943
  %v7155 = vmul.f32 %v1134, %v6938
  %v7156 = vmul.f32 %v1134, %v6943
  %v7157 = vmul.f32 %v1138, %v6938
  %v7158 = vmul.f32 %v1138, %v6943
  %v7159 = vmul.f32 %v1142, %v6938
  %v7160 = vmul.f32 %v1142, %v6943
  %v7161 = vmul.f32 %v1146, %v6938
  %v7162 = vmul.f32 %v1146, %v6943
  %v7163 = vmul.f32 %v1150, %v6938
  %v7164 = vmul.f32 %v1150, %v6943
  %v7165 = vmul.f32 %v1154, %v6938
  %v7166 = vmul.f32 %v1154, %v6943
  %v7167 = vmul.f32 %v1158, %v6938
  %v7168 = vmul.f32 %v1158, %v6943
  %v7169 = vmul.f32 %v1162, %v6938
  %v7170 = vmul.f32 %v1162, %v6943
  %v7171 = vmul.f32 %v1166, %v6938
  %v7172 = vmul.f32 %v1166, %v6943
  %v7173 = vmul.f32 %v1170, %v6938
  %v7174 = vmul.f32 %v1170, %v6943
  %v7175 = vmul.f32 %v1174, %v6938
  %v7176 = vmul.f32 %v1174, %v6943
  %v7177 = vmul.f32 %v1178, %v6938
  %v7178 = vmul.f32 %v1178, %v6943
  %v7179 = vmul.f32 %v1182, %v6938
  %v7180 = vmul.f32 %v1182, %v6943
  %v7181 = vmul.f32 %v1186, %v6938
  %v7182 = vmul.f32 %v1186, %v6943
  %v7183 = vmul.f32 %v1190, %v6938
  %v7184 = vmul.f32 %v1190, %v6943
  %v7185 = vmul.f32 %v1194, %v6938
  %v7186 = vmul.f32 %v1194, %v6943
  %v7187 = vmul.f32 %v1198, %v6938
  %v7188 = vmul.f32 %v1198, %v6943
  %v7189 = vmul.f32 %v1202, %v6938
  %v7190 = vmul.f32 %v1202, %v6943
  %v7191 = vmul.f32 %v1206, %v6938
  %v7192 = vmul.f32 %v1206, %v6943
  %v7193 = vmul.f32 %v1210, %v6938
  %v7194 = vmul.f32 %v1210, %v6943
  %v7195 = vmul.f32 %v1214, %v6938
  %v7196 = vmul.f32 %v1214, %v6943
  %v7197 = vmul.f32 %v1218, %v6938
  %v7198 = vmul.f32 %v1218, %v6943
  %v7199 = vmul.f32 %v1222, %v6938
  %v7200 = vmul.f32 %v1222, %v6943
  %v7201 = vmul.f32 %v1226, %v6938
  %v7202 = vmul.f32 %v1226, %v6943
  %v7203 = vmul.f32 %v1230, %v6938
  %v7204 = vmul.f32 %v1230, %v6943
  %v7205 = vmul.f32 %v1234, %v6938
  %v7206 = vmul.f32 %v1234, %v6943
  %v7207 = vmul.f32 %v1238, %v6938
  %v7208 = vmul.f32 %v1238, %v6943
  %v7209 = vmul.f32 %v1242, %v6938
  %v7210 = vmul.f32 %v1242, %v6943
  %v7211 = vmul.f32 %v1246, %v6938
  %v7212 = vmul.f32 %v1246, %v6943
  %v7213 = vmul.f32 %v1250, %v6938
  %v7214 = vmul.f32 %v1250, %v6943
  %v7215 = vmul.f32 %v1254, %v6938
  %v7216 = vmul.f32 %v1254, %v6943
  %v7217 = vmul.f32 %v1258, %v6938
  %v7218 = vmul.f32 %v1258, %v6943
  %v7219 = vmul.f32 %v1262, %v6938
  %v7220 = vmul.f32 %v1262, %v6943
  %v7221 = vmul.f32 %v1266, %v6938
  %v7222 = vmul.f32 %v1266, %v6943
  %v7223 = vmul.f32 %v1270, %v6938
  %v7224 = vmul.f32 %v1270, %v6943
  %v7225 = vmul.f32 %v1274, %v6938
  %v7226 = vmul.f32 %v1274, %v6943
  %v7227 = vmul.f32 %v1278, %v6938
  %v7228 = vmul.f32 %v1278, %v6943
  %v7229 = vmul.f32 %v1282, %v6938
  %v7230 = vmul.f32 %v1282, %v6943
  %v7231 = vmul.f32 %v1286, %v6938
  %v7232 = vmul.f32 %v1286, %v6943
  %v7233 = vmul.f32 %v1290, %v6938
  %v7234 = vmul.f32 %v1290, %v6943
  %v7235 = vmul.f32 %v1294, %v6938
  %v7236 = vmul.f32 %v1294, %v6943
  %v7237 = vmul.f32 %v1298, %v6938
  %v7238 = vmul.f32 %v1298, %v6943
  %v7239 = vmul.f32 %v1302, %v6938
  %v7240 = vmul.f32 %v1302, %v6943
  %v7241 = vmul.f32 %v1306, %v6938
  %v7242 = vmul.f32 %v1306, %v6943
  %v7243 = vmul.f32 %v1310, %v6938
  %v7244 = vmul.f32 %v1310, %v6943
  %v7245 = vmul.f32 %v1314, %v6938
  %v7246 = vmul.f32 %v1314, %v6943
  %v7247 = vmul.f32 %v1318, %v6938
  %v7248 = vmul.f32 %v1318, %v6943
  %v7249 = vmul.f32 %v1322, %v6938
  %v7250 = vmul.f32 %v1322, %v6943
  %v7251 = vmul.f32 %v1326, %v6938
  %v7252 = vmul.f32 %v1326, %v6943
  %v7253 = vmul.f32 %v1330, %v6938
  %v7254 = vmul.f32 %v1330, %v6943
  %v7255 = vmul.f32 %v1334, %v6938
  %v7256 = vmul.f32 %v1334, %v6943
  %v7257 = vmul.f32 %v1338, %v6938
  %v7258 = vmul.f32 %v1338, %v6943
  %v7259 = vmul.f32 %v1342, %v6938
  %v7260 = vmul.f32 %v1342, %v6943
  %v7261 = vmul.f32 %v1346, %v6938
  %v7262 = vmul.f32 %v1346, %v6943
  %v7263 = vmul.f32 %v1350, %v6938
  %v7264 = vmul.f32 %v1350, %v6943
  %v7265 = vmul.f32 %v1354, %v6938
  %v7266 = vmul.f32 %v1354, %v6943
  %v7267 = vmul.f32 %v1358, %v6938
  %v7268 = vmul.f32 %v1358, %v6943
  %v7269 = vmul.f32 %v1362, %v6938
  %v7270 = vmul.f32 %v1362, %v6943
  %v7271 = vmul.f32 %v1366, %v6938
  %v7272 = vmul.f32 %v1366, %v6943
  %v7273 = vmul.f32 %v1370, %v6938
  %v7274 = vmul.f32 %v1370, %v6943
  %v7275 = vmul.f32 %v1374, %v6938
  %v7276 = vmul.f32 %v1374, %v6943
  %v7277 = vmul.f32 %v1378, %v6938
  %v7278 = vmul.f32 %v1378, %v6943
  %v7279 = vmul.f32 %v1382, %v6938
  %v7280 = vmul.f32 %v1382, %v6943
  %v7281 = vmul.f32 %v1386, %v6938
  %v7282 = vmul.f32 %v1386, %v6943
  %v7283 = vmul.f32 %v1390, %v6938
  %v7284 = vmul.f32 %v1390, %v6943
  %v7285 = vmul.f32 %v1394, %v6938
  %v7286 = vmul.f32 %v1394, %v6943
  %v7287 = vmul.f32 %v1398, %v6938
  %v7288 = vmul.f32 %v1398, %v6943
  %v7289 = vmul.f32 %v1402, %v6938
  %v7290 = vmul.f32 %v1402, %v6943
  %v7291 = vmul.f32 %v1406, %v6938
  %v7292 = vmul.f32 %v1406, %v6943
  %v7293 = vmul.f32 %v1410, %v6938
  %v7294 = vmul.f32 %v1410, %v6943
  %v7295 = vmul.f32 %v1414, %v6938
  %v7296 = vmul.f32 %v1414, %v6943
  %v7297 = vmul.f32 %v1418, %v6938
  %v7298 = vmul.f32 %v1418, %v6943
  %v7299 = vmul.f32 %v1422, %v6938
  %v7300 = vmul.f32 %v1422, %v6943
  %v7301 = vmul.f32 %v1426, %v6938
  %v7302 = vmul.f32 %v1426, %v6943
  %v7303 = vmul.f32 %v1430, %v6938
  %v7304 = vmul.f32 %v1430, %v6943
  %v7305 = vmul.f32 %v4036, %v6938
  %v7306 = vmul.f32 %v4036, %v6943
  %v7307 = vmul.f32 %v4040, %v6938
  %v7308 = vmul.f32 %v4040, %v6943
  %v7309 = vmul.f32 %v4044, %v6938
  %v7310 = vmul.f32 %v4044, %v6943
  %v7311 = vmul.f32 %v4048, %v6938
  %v7312 = vmul.f32 %v4048, %v6943
  %v7313 = vmul.f32 %v4052, %v6938
  %v7314 = vmul.f32 %v4052, %v6943
  %v7315 = vmul.f32 %v4056, %v6938
  %v7316 = vmul.f32 %v4056, %v6943
  %v7317 = vmul.f32 %v4060, %v6938
  %v7318 = vmul.f32 %v4060, %v6943
  %v7319 = vmul.f32 %v4064, %v6938
  %v7320 = vmul.f32 %v4064, %v6943
  %v7321 = vmul.f32 %v4068, %v6938
  %v7322 = vmul.f32 %v4068, %v6943
  %v7323 = vmul.f32 %v4072, %v6938
  %v7324 = vmul.f32 %v4072, %v6943
  %v7325 = vmul.f32 %v4076, %v6938
  %v7326 = vmul.f32 %v4076, %v6943
  %v7327 = vmul.f32 %v4080, %v6938
  %v7328 = vmul.f32 %v4080, %v6943
  %v7329 = vmul.f32 %v4084, %v6938
  %v7330 = vmul.f32 %v4084, %v6943
  %v7331 = vmul.f32 %v4088, %v6938
  %v7332 = vmul.f32 %v4088, %v6943
  %v7333 = vmul.f32 %v4092, %v6938
  %v7334 = vmul.f32 %v4092, %v6943
  %v7335 = vmul.f32 %v4096, %v6938
  %v7336 = vmul.f32 %v4096, %v6943
  %v7337 = vmul.f32 %v4100, %v6938
  %v7338 = vmul.f32 %v4100, %v6943
  %v7339 = vmul.f32 %v4104, %v6938
  %v7340 = vmul.f32 %v4104, %v6943
  %v7341 = vmul.f32 %v4108, %v6938
  %v7342 = vmul.f32 %v4108, %v6943
  %v7343 = vmul.f32 %v4112, %v6938
  %v7344 = vmul.f32 %v4112, %v6943
  %v7345 = vmul.f32 %v6838, %v6938
  %v7346 = vmul.f32 %v6838, %v6943
  %v7347 = vmul.f32 %v6842, %v6938
  %v7348 = vmul.f32 %v6842, %v6943
  %v7349 = vmul.f32 %v6846, %v6938
  %v7350 = vmul.f32 %v6846, %v6943
  %v7351 = vmul.f32 %v6850, %v6938
  %v7352 = vmul.f32 %v6850, %v6943
  %v7353 = vmul.f32 %v6854, %v6938
  %v7354 = vmul.f32 %v6854, %v6943
  %v7355 = vmul.f32 %v6858, %v6938
  %v7356 = vmul.f32 %v6858, %v6943
  %v7357 = vmul.f32 %v6862, %v6938
  %v7358 = vmul.f32 %v6862, %v6943
  %v7359 = vmul.f32 %v6866, %v6938
  %v7360 = vmul.f32 %v6866, %v6943
  %v7361 = vmul.f32 %v6870, %v6938
  %v7362 = vmul.f32 %v6870, %v6943
  %v7363 = vmul.f32 %v6874, %v6938
  %v7364 = vmul.f32 %v6874, %v6943
  %v7365 = vmul.f32 %v6878, %v6938
  %v7366 = vmul.f32 %v6878, %v6943
  %v7367 = vmul.f32 %v6882, %v6938
  %v7368 = vmul.f32 %v6882, %v6943
  %v7369 = vmul.f32 %v6886, %v6938
  %v7370 = vmul.f32 %v6886, %v6943
  %v7371 = vmul.f32 %v6890, %v6938
  %v7372 = vmul.f32 %v6890, %v6943
  %v7373 = vmul.f32 %v6894, %v6938
  %v7374 = vmul.f32 %v6894, %v6943
  %v7375 = vmul.f32 %v6898, %v6938
  %v7376 = vmul.f32 %v6898, %v6943
  %v7377 = vmul.f32 %v6902, %v6938
  %v7378 = vmul.f32 %v6902, %v6943
  %v7379 = vmul.f32 %v6906, %v6938
  %v7380 = vmul.f32 %v6906, %v6943
  %v7381 = vmul.f32 %v6910, %v6938
  %v7382 = vmul.f32 %v6910, %v6943
  %v7383 = vmul.f32 %v6914, %v6938
  %v7384 = vmul.f32 %v6914, %v6943
  %v7385 = vadd.f32 %v6375, %v6945
  %v7386 = vadd.f32 %v6376, %v6946
  %v7387 = vadd.f32 %v6377, %v6947
  %v7388 = vadd.f32 %v6378, %v6948
  %v7389 = vadd.f32 %v6379, %v6949
  %v7390 = vadd.f32 %v6380, %v6950
  %v7391 = vadd.f32 %v6381, %v6951
  %v7392 = vadd.f32 %v6382, %v6952
  %v7393 = vadd.f32 %v6383, %v6953
  %v7394 = vadd.f32 %v6384, %v6954
  %v7395 = vadd.f32 %v6385, %v6955
  %v7396 = vadd.f32 %v6386, %v6956
  %v7397 = vadd.f32 %v6387, %v6957
  %v7398 = vadd.f32 %v6388, %v6958
  %v7399 = vadd.f32 %v6389, %v6959
  %v7400 = vadd.f32 %v6390, %v6960
  %v7401 = vadd.f32 %v6391, %v6961
  %v7402 = vadd.f32 %v6392, %v6962
  %v7403 = vadd.f32 %v6393, %v6963
  %v7404 = vadd.f32 %v6394, %v6964
  %v7405 = vadd.f32 %v6395, %v6965
  %v7406 = vadd.f32 %v6396, %v6966
  %v7407 = vadd.f32 %v6397, %v6967
  %v7408 = vadd.f32 %v6398, %v6968
  %v7409 = vadd.f32 %v6399, %v6969
  %v7410 = vadd.f32 %v6400, %v6970
  %v7411 = vadd.f32 %v6401, %v6971
  %v7412 = vadd.f32 %v6402, %v6972
  %v7413 = vadd.f32 %v6403, %v6973
  %v7414 = vadd.f32 %v6404, %v6974
  %v7415 = vadd.f32 %v6405, %v6975
  %v7416 = vadd.f32 %v6406, %v6976
  %v7417 = vadd.f32 %v6407, %v6977
  %v7418 = vadd.f32 %v6408, %v6978
  %v7419 = vadd.f32 %v6409, %v6979
  %v7420 = vadd.f32 %v6410, %v6980
  %v7421 = vadd.f32 %v6411, %v6981
  %v7422 = vadd.f32 %v6412, %v6982
  %v7423 = vadd.f32 %v6413, %v6983
  %v7424 = vadd.f32 %v6414, %v6984
  %v7425 = vadd.f32 %v6415, %v6985
  %v7426 = vadd.f32 %v6416, %v6986
  %v7427 = vadd.f32 %v6417, %v6987
  %v7428 = vadd.f32 %v6418, %v6988
  %v7429 = vadd.f32 %v6419, %v6989
  %v7430 = vadd.f32 %v6420, %v6990
  %v7431 = vadd.f32 %v6421, %v6991
  %v7432 = vadd.f32 %v6422, %v6992
  %v7433 = vadd.f32 %v6423, %v6993
  %v7434 = vadd.f32 %v6424, %v6994
  %v7435 = vadd.f32 %v6425, %v6995
  %v7436 = vadd.f32 %v6426, %v6996
  %v7437 = vadd.f32 %v6427, %v6997
  %v7438 = vadd.f32 %v6428, %v6998
  %v7439 = vadd.f32 %v6429, %v6999
  %v7440 = vadd.f32 %v6430, %v7000
  %v7441 = vadd.f32 %v6431, %v7001
  %v7442 = vadd.f32 %v6432, %v7002
  %v7443 = vadd.f32 %v6433, %v7003
  %v7444 = vadd.f32 %v6434, %v7004
  %v7445 = vadd.f32 %v6435, %v7005
  %v7446 = vadd.f32 %v6436, %v7006
  %v7447 = vadd.f32 %v6437, %v7007
  %v7448 = vadd.f32 %v6438, %v7008
  %v7449 = vadd.f32 %v6439, %v7009
  %v7450 = vadd.f32 %v6440, %v7010
  %v7451 = vadd.f32 %v6441, %v7011
  %v7452 = vadd.f32 %v6442, %v7012
  %v7453 = vadd.f32 %v6443, %v7013
  %v7454 = vadd.f32 %v6444, %v7014
  %v7455 = vadd.f32 %v6445, %v7015
  %v7456 = vadd.f32 %v6446, %v7016
  %v7457 = vadd.f32 %v6447, %v7017
  %v7458 = vadd.f32 %v6448, %v7018
  %v7459 = vadd.f32 %v6449, %v7019
  %v7460 = vadd.f32 %v6450, %v7020
  %v7461 = vadd.f32 %v6451, %v7021
  %v7462 = vadd.f32 %v6452, %v7022
  %v7463 = vadd.f32 %v6453, %v7023
  %v7464 = vadd.f32 %v6454, %v7024
  %v7465 = vadd.f32 %v6455, %v7025
  %v7466 = vadd.f32 %v6456, %v7026
  %v7467 = vadd.f32 %v6457, %v7027
  %v7468 = vadd.f32 %v6458, %v7028
  %v7469 = vadd.f32 %v6459, %v7029
  %v7470 = vadd.f32 %v6460, %v7030
  %v7471 = vadd.f32 %v6461, %v7031
  %v7472 = vadd.f32 %v6462, %v7032
  %v7473 = vadd.f32 %v6463, %v7033
  %v7474 = vadd.f32 %v6464, %v7034
  %v7475 = vadd.f32 %v6465, %v7035
  %v7476 = vadd.f32 %v6466, %v7036
  %v7477 = vadd.f32 %v6467, %v7037
  %v7478 = vadd.f32 %v6468, %v7038
  %v7479 = vadd.f32 %v6469, %v7039
  %v7480 = vadd.f32 %v6470, %v7040
  %v7481 = vadd.f32 %v6471, %v7041
  %v7482 = vadd.f32 %v6472, %v7042
  %v7483 = vadd.f32 %v6473, %v7043
  %v7484 = vadd.f32 %v6474, %v7044
  %v7485 = vadd.f32 %v6475, %v7045
  %v7486 = vadd.f32 %v6476, %v7046
  %v7487 = vadd.f32 %v6477, %v7047
  %v7488 = vadd.f32 %v6478, %v7048
  %v7489 = vadd.f32 %v6479, %v7049
  %v7490 = vadd.f32 %v6480, %v7050
  %v7491 = vadd.f32 %v6481, %v7051
  %v7492 = vadd.f32 %v6482, %v7052
  %v7493 = vadd.f32 %v6483, %v7053
  %v7494 = vadd.f32 %v6484, %v7054
  %v7495 = vadd.f32 %v6485, %v7055
  %v7496 = vadd.f32 %v6486, %v7056
  %v7497 = vadd.f32 %v6487, %v7057
  %v7498 = vadd.f32 %v6488, %v7058
  %v7499 = vadd.f32 %v6489, %v7059
  %v7500 = vadd.f32 %v6490, %v7060
  %v7501 = vadd.f32 %v6491, %v7061
  %v7502 = vadd.f32 %v6492, %v7062
  %v7503 = vadd.f32 %v6493, %v7063
  %v7504 = vadd.f32 %v6494, %v7064
  %v7505 = vadd.f32 %v6495, %v7065
  %v7506 = vadd.f32 %v6496, %v7066
  %v7507 = vadd.f32 %v6497, %v7067
  %v7508 = vadd.f32 %v6498, %v7068
  %v7509 = vadd.f32 %v6499, %v7069
  %v7510 = vadd.f32 %v6500, %v7070
  %v7511 = vadd.f32 %v6501, %v7071
  %v7512 = vadd.f32 %v6502, %v7072
  %v7513 = vadd.f32 %v6503, %v7073
  %v7514 = vadd.f32 %v6504, %v7074
  %v7515 = vadd.f32 %v6505, %v7075
  %v7516 = vadd.f32 %v6506, %v7076
  %v7517 = vadd.f32 %v6507, %v7077
  %v7518 = vadd.f32 %v6508, %v7078
  %v7519 = vadd.f32 %v6509, %v7079
  %v7520 = vadd.f32 %v6510, %v7080
  %v7521 = vadd.f32 %v6511, %v7081
  %v7522 = vadd.f32 %v6512, %v7082
  %v7523 = vadd.f32 %v6513, %v7083
  %v7524 = vadd.f32 %v6514, %v7084
  %v7525 = vadd.f32 %v6515, %v7085
  %v7526 = vadd.f32 %v6516, %v7086
  %v7527 = vadd.f32 %v6517, %v7087
  %v7528 = vadd.f32 %v6518, %v7088
  %v7529 = vadd.f32 %v6519, %v7089
  %v7530 = vadd.f32 %v6520, %v7090
  %v7531 = vadd.f32 %v6521, %v7091
  %v7532 = vadd.f32 %v6522, %v7092
  %v7533 = vadd.f32 %v6523, %v7093
  %v7534 = vadd.f32 %v6524, %v7094
  %v7535 = vadd.f32 %v6525, %v7095
  %v7536 = vadd.f32 %v6526, %v7096
  %v7537 = vadd.f32 %v6527, %v7097
  %v7538 = vadd.f32 %v6528, %v7098
  %v7539 = vadd.f32 %v6529, %v7099
  %v7540 = vadd.f32 %v6530, %v7100
  %v7541 = vadd.f32 %v6531, %v7101
  %v7542 = vadd.f32 %v6532, %v7102
  %v7543 = vadd.f32 %v6533, %v7103
  %v7544 = vadd.f32 %v6534, %v7104
  %v7545 = vadd.f32 %v6535, %v7105
  %v7546 = vadd.f32 %v6536, %v7106
  %v7547 = vadd.f32 %v6537, %v7107
  %v7548 = vadd.f32 %v6538, %v7108
  %v7549 = vadd.f32 %v6539, %v7109
  %v7550 = vadd.f32 %v6540, %v7110
  %v7551 = vadd.f32 %v6541, %v7111
  %v7552 = vadd.f32 %v6542, %v7112
  %v7553 = vadd.f32 %v6543, %v7113
  %v7554 = vadd.f32 %v6544, %v7114
  %v7555 = vadd.f32 %v6545, %v7115
  %v7556 = vadd.f32 %v6546, %v7116
  %v7557 = vadd.f32 %v6547, %v7117
  %v7558 = vadd.f32 %v6548, %v7118
  %v7559 = vadd.f32 %v6549, %v7119
  %v7560 = vadd.f32 %v6550, %v7120
  %v7561 = vadd.f32 %v6551, %v7121
  %v7562 = vadd.f32 %v6552, %v7122
  %v7563 = vadd.f32 %v6553, %v7123
  %v7564 = vadd.f32 %v6554, %v7124
  %v7565 = vadd.f32 %v6555, %v7125
  %v7566 = vadd.f32 %v6556, %v7126
  %v7567 = vadd.f32 %v6557, %v7127
  %v7568 = vadd.f32 %v6558, %v7128
  %v7569 = vadd.f32 %v6559, %v7129
  %v7570 = vadd.f32 %v6560, %v7130
  %v7571 = vadd.f32 %v6561, %v7131
  %v7572 = vadd.f32 %v6562, %v7132
  %v7573 = vadd.f32 %v6563, %v7133
  %v7574 = vadd.f32 %v6564, %v7134
  %v7575 = vadd.f32 %v6565, %v7135
  %v7576 = vadd.f32 %v6566, %v7136
  %v7577 = vadd.f32 %v6567, %v7137
  %v7578 = vadd.f32 %v6568, %v7138
  %v7579 = vadd.f32 %v6569, %v7139
  %v7580 = vadd.f32 %v6570, %v7140
  %v7581 = vadd.f32 %v6571, %v7141
  %v7582 = vadd.f32 %v6572, %v7142
  %v7583 = vadd.f32 %v6573, %v7143
  %v7584 = vadd.f32 %v6574, %v7144
  %v7585 = vadd.f32 %v6575, %v7145
  %v7586 = vadd.f32 %v6576, %v7146
  %v7587 = vadd.f32 %v6577, %v7147
  %v7588 = vadd.f32 %v6578, %v7148
  %v7589 = vadd.f32 %v6579, %v7149
  %v7590 = vadd.f32 %v6580, %v7150
  %v7591 = vadd.f32 %v6581, %v7151
  %v7592 = vadd.f32 %v6582, %v7152
  %v7593 = vadd.f32 %v6583, %v7153
  %v7594 = vadd.f32 %v6584, %v7154
  %v7595 = vadd.f32 %v6585, %v7155
  %v7596 = vadd.f32 %v6586, %v7156
  %v7597 = vadd.f32 %v6587, %v7157
  %v7598 = vadd.f32 %v6588, %v7158
  %v7599 = vadd.f32 %v6589, %v7159
  %v7600 = vadd.f32 %v6590, %v7160
  %v7601 = vadd.f32 %v6591, %v7161
  %v7602 = vadd.f32 %v6592, %v7162
  %v7603 = vadd.f32 %v6593, %v7163
  %v7604 = vadd.f32 %v6594, %v7164
  %v7605 = vadd.f32 %v6595, %v7165
  %v7606 = vadd.f32 %v6596, %v7166
  %v7607 = vadd.f32 %v6597, %v7167
  %v7608 = vadd.f32 %v6598, %v7168
  %v7609 = vadd.f32 %v6599, %v7169
  %v7610 = vadd.f32 %v6600, %v7170
  %v7611 = vadd.f32 %v6601, %v7171
  %v7612 = vadd.f32 %v6602, %v7172
  %v7613 = vadd.f32 %v6603, %v7173
  %v7614 = vadd.f32 %v6604, %v7174
  %v7615 = vadd.f32 %v6605, %v7175
  %v7616 = vadd.f32 %v6606, %v7176
  %v7617 = vadd.f32 %v6607, %v7177
  %v7618 = vadd.f32 %v6608, %v7178
  %v7619 = vadd.f32 %v6609, %v7179
  %v7620 = vadd.f32 %v6610, %v7180
  %v7621 = vadd.f32 %v6611, %v7181
  %v7622 = vadd.f32 %v6612, %v7182
  %v7623 = vadd.f32 %v6613, %v7183
  %v7624 = vadd.f32 %v6614, %v7184
  %v7625 = vadd.f32 %v6615, %v7185
  %v7626 = vadd.f32 %v6616, %v7186
  %v7627 = vadd.f32 %v6617, %v7187
  %v7628 = vadd.f32 %v6618, %v7188
  %v7629 = vadd.f32 %v6619, %v7189
  %v7630 = vadd.f32 %v6620, %v7190
  %v7631 = vadd.f32 %v6621, %v7191
  %v7632 = vadd.f32 %v6622, %v7192
  %v7633 = vadd.f32 %v6623, %v7193
  %v7634 = vadd.f32 %v6624, %v7194
  %v7635 = vadd.f32 %v6625, %v7195
  %v7636 = vadd.f32 %v6626, %v7196
  %v7637 = vadd.f32 %v6627, %v7197
  %v7638 = vadd.f32 %v6628, %v7198
  %v7639 = vadd.f32 %v6629, %v7199
  %v7640 = vadd.f32 %v6630, %v7200
  %v7641 = vadd.f32 %v6631, %v7201
  %v7642 = vadd.f32 %v6632, %v7202
  %v7643 = vadd.f32 %v6633, %v7203
  %v7644 = vadd.f32 %v6634, %v7204
  %v7645 = vadd.f32 %v6635, %v7205
  %v7646 = vadd.f32 %v6636, %v7206
  %v7647 = vadd.f32 %v6637, %v7207
  %v7648 = vadd.f32 %v6638, %v7208
  %v7649 = vadd.f32 %v6639, %v7209
  %v7650 = vadd.f32 %v6640, %v7210
  %v7651 = vadd.f32 %v6641, %v7211
  %v7652 = vadd.f32 %v6642, %v7212
  %v7653 = vadd.f32 %v6643, %v7213
  %v7654 = vadd.f32 %v6644, %v7214
  %v7655 = vadd.f32 %v6645, %v7215
  %v7656 = vadd.f32 %v6646, %v7216
  %v7657 = vadd.f32 %v6647, %v7217
  %v7658 = vadd.f32 %v6648, %v7218
  %v7659 = vadd.f32 %v6649, %v7219
  %v7660 = vadd.f32 %v6650, %v7220
  %v7661 = vadd.f32 %v6651, %v7221
  %v7662 = vadd.f32 %v6652, %v7222
  %v7663 = vadd.f32 %v6653, %v7223
  %v7664 = vadd.f32 %v6654, %v7224
  %v7665 = vadd.f32 %v6655, %v7225
  %v7666 = vadd.f32 %v6656, %v7226
  %v7667 = vadd.f32 %v6657, %v7227
  %v7668 = vadd.f32 %v6658, %v7228
  %v7669 = vadd.f32 %v6659, %v7229
  %v7670 = vadd.f32 %v6660, %v7230
  %v7671 = vadd.f32 %v6661, %v7231
  %v7672 = vadd.f32 %v6662, %v7232
  %v7673 = vadd.f32 %v6663, %v7233
  %v7674 = vadd.f32 %v6664, %v7234
  %v7675 = vadd.f32 %v6665, %v7235
  %v7676 = vadd.f32 %v6666, %v7236
  %v7677 = vadd.f32 %v6667, %v7237
  %v7678 = vadd.f32 %v6668, %v7238
  %v7679 = vadd.f32 %v6669, %v7239
  %v7680 = vadd.f32 %v6670, %v7240
  %v7681 = vadd.f32 %v6671, %v7241
  %v7682 = vadd.f32 %v6672, %v7242
  %v7683 = vadd.f32 %v6673, %v7243
  %v7684 = vadd.f32 %v6674, %v7244
  %v7685 = vadd.f32 %v6675, %v7245
  %v7686 = vadd.f32 %v6676, %v7246
  %v7687 = vadd.f32 %v6677, %v7247
  %v7688 = vadd.f32 %v6678, %v7248
  %v7689 = vadd.f32 %v6679, %v7249
  %v7690 = vadd.f32 %v6680, %v7250
  %v7691 = vadd.f32 %v6681, %v7251
  %v7692 = vadd.f32 %v6682, %v7252
  %v7693 = vadd.f32 %v6683, %v7253
  %v7694 = vadd.f32 %v6684, %v7254
  %v7695 = vadd.f32 %v6685, %v7255
  %v7696 = vadd.f32 %v6686, %v7256
  %v7697 = vadd.f32 %v6687, %v7257
  %v7698 = vadd.f32 %v6688, %v7258
  %v7699 = vadd.f32 %v6689, %v7259
  %v7700 = vadd.f32 %v6690, %v7260
  %v7701 = vadd.f32 %v6691, %v7261
  %v7702 = vadd.f32 %v6692, %v7262
  %v7703 = vadd.f32 %v6693, %v7263
  %v7704 = vadd.f32 %v6694, %v7264
  %v7705 = vadd.f32 %v6695, %v7265
  %v7706 = vadd.f32 %v6696, %v7266
  %v7707 = vadd.f32 %v6697, %v7267
  %v7708 = vadd.f32 %v6698, %v7268
  %v7709 = vadd.f32 %v6699, %v7269
  %v7710 = vadd.f32 %v6700, %v7270
  %v7711 = vadd.f32 %v6701, %v7271
  %v7712 = vadd.f32 %v6702, %v7272
  %v7713 = vadd.f32 %v6703, %v7273
  %v7714 = vadd.f32 %v6704, %v7274
  %v7715 = vadd.f32 %v6705, %v7275
  %v7716 = vadd.f32 %v6706, %v7276
  %v7717 = vadd.f32 %v6707, %v7277
  %v7718 = vadd.f32 %v6708, %v7278
  %v7719 = vadd.f32 %v6709, %v7279
  %v7720 = vadd.f32 %v6710, %v7280
  %v7721 = vadd.f32 %v6711, %v7281
  %v7722 = vadd.f32 %v6712, %v7282
  %v7723 = vadd.f32 %v6713, %v7283
  %v7724 = vadd.f32 %v6714, %v7284
  %v7725 = vadd.f32 %v6715, %v7285
  %v7726 = vadd.f32 %v6716, %v7286
  %v7727 = vadd.f32 %v6717, %v7287
  %v7728 = vadd.f32 %v6718, %v7288
  %v7729 = vadd.f32 %v6719, %v7289
  %v7730 = vadd.f32 %v6720, %v7290
  %v7731 = vadd.f32 %v6721, %v7291
  %v7732 = vadd.f32 %v6722, %v7292
  %v7733 = vadd.f32 %v6723, %v7293
  %v7734 = vadd.f32 %v6724, %v7294
  %v7735 = vadd.f32 %v6725, %v7295
  %v7736 = vadd.f32 %v6726, %v7296
  %v7737 = vadd.f32 %v6727, %v7297
  %v7738 = vadd.f32 %v6728, %v7298
  %v7739 = vadd.f32 %v6729, %v7299
  %v7740 = vadd.f32 %v6730, %v7300
  %v7741 = vadd.f32 %v6731, %v7301
  %v7742 = vadd.f32 %v6732, %v7302
  %v7743 = vadd.f32 %v6733, %v7303
  %v7744 = vadd.f32 %v6734, %v7304
  %v7745 = vadd.f32 %v6735, %v7305
  %v7746 = vadd.f32 %v6736, %v7306
  %v7747 = vadd.f32 %v6737, %v7307
  %v7748 = vadd.f32 %v6738, %v7308
  %v7749 = vadd.f32 %v6739, %v7309
  %v7750 = vadd.f32 %v6740, %v7310
  %v7751 = vadd.f32 %v6741, %v7311
  %v7752 = vadd.f32 %v6742, %v7312
  %v7753 = vadd.f32 %v6743, %v7313
  %v7754 = vadd.f32 %v6744, %v7314
  %v7755 = vadd.f32 %v6745, %v7315
  %v7756 = vadd.f32 %v6746, %v7316
  %v7757 = vadd.f32 %v6747, %v7317
  %v7758 = vadd.f32 %v6748, %v7318
  %v7759 = vadd.f32 %v6749, %v7319
  %v7760 = vadd.f32 %v6750, %v7320
  %v7761 = vadd.f32 %v6751, %v7321
  %v7762 = vadd.f32 %v6752, %v7322
  %v7763 = vadd.f32 %v6753, %v7323
  %v7764 = vadd.f32 %v6754, %v7324
  %v7765 = vadd.f32 %v6755, %v7325
  %v7766 = vadd.f32 %v6756, %v7326
  %v7767 = vadd.f32 %v6757, %v7327
  %v7768 = vadd.f32 %v6758, %v7328
  %v7769 = vadd.f32 %v6759, %v7329
  %v7770 = vadd.f32 %v6760, %v7330
  %v7771 = vadd.f32 %v6761, %v7331
  %v7772 = vadd.f32 %v6762, %v7332
  %v7773 = vadd.f32 %v6763, %v7333
  %v7774 = vadd.f32 %v6764, %v7334
  %v7775 = vadd.f32 %v6765, %v7335
  %v7776 = vadd.f32 %v6766, %v7336
  %v7777 = vadd.f32 %v6767, %v7337
  %v7778 = vadd.f32 %v6768, %v7338
  %v7779 = vadd.f32 %v6769, %v7339
  %v7780 = vadd.f32 %v6770, %v7340
  %v7781 = vadd.f32 %v6771, %v7341
  %v7782 = vadd.f32 %v6772, %v7342
  %v7783 = vadd.f32 %v6773, %v7343
  %v7784 = vadd.f32 %v6774, %v7344
  %v7785 = vadd.f32 %v6775, %v7345
  %v7786 = vadd.f32 %v6776, %v7346
  %v7787 = vadd.f32 %v6777, %v7347
  %v7788 = vadd.f32 %v6778, %v7348
  %v7789 = vadd.f32 %v6779, %v7349
  %v7790 = vadd.f32 %v6780, %v7350
  %v7791 = vadd.f32 %v6781, %v7351
  %v7792 = vadd.f32 %v6782, %v7352
  %v7793 = vadd.f32 %v6783, %v7353
  %v7794 = vadd.f32 %v6784, %v7354
  %v7795 = vadd.f32 %v6785, %v7355
  %v7796 = vadd.f32 %v6786, %v7356
  %v7797 = vadd.f32 %v6787, %v7357
  %v7798 = vadd.f32 %v6788, %v7358
  %v7799 = vadd.f32 %v6789, %v7359
  %v7800 = vadd.f32 %v6790, %v7360
  %v7801 = vadd.f32 %v6791, %v7361
  %v7802 = vadd.f32 %v6792, %v7362
  %v7803 = vadd.f32 %v6793, %v7363
  %v7804 = vadd.f32 %v6794, %v7364
  %v7805 = vadd.f32 %v6795, %v7365
  %v7806 = vadd.f32 %v6796, %v7366
  %v7807 = vadd.f32 %v6797, %v7367
  %v7808 = vadd.f32 %v6798, %v7368
  %v7809 = vadd.f32 %v6799, %v7369
  %v7810 = vadd.f32 %v6800, %v7370
  %v7811 = vadd.f32 %v6801, %v7371
  %v7812 = vadd.f32 %v6802, %v7372
  %v7813 = vadd.f32 %v6803, %v7373
  %v7814 = vadd.f32 %v6804, %v7374
  %v7815 = vadd.f32 %v6805, %v7375
  %v7816 = vadd.f32 %v6806, %v7376
  %v7817 = vadd.f32 %v6807, %v7377
  %v7818 = vadd.f32 %v6808, %v7378
  %v7819 = vadd.f32 %v6809, %v7379
  %v7820 = vadd.f32 %v6810, %v7380
  %v7821 = vadd.f32 %v6811, %v7381
  %v7822 = vadd.f32 %v6812, %v7382
  %v7823 = vadd.f32 %v6813, %v7383
  %v7824 = vadd.f32 %v6814, %v7384
  %v7826 = vlaneseq
  %v7827 = vshrl.u32 %v7826, 7
  %v7828 = vsub.s32 0, %v7827
  %v7829 = vrot.slane %v311, %v7828
  %7832 = vset.pattern.permute.xlu0 0
  %7833 = vperm.xlu0 %7832, %v327
  %v7834 = vpop.permute.xlu0 %7833
  %7837 = vset.pattern.permute.xlu0 0
  %7838 = vperm.xlu0 %7837, %v328
  %v7839 = vpop.permute.xlu0 %7838
  %v7841 = vmul.f32 %v718, %v7834
  %v7842 = vmul.f32 %v718, %v7839
  %v7843 = vmul.f32 %v722, %v7834
  %v7844 = vmul.f32 %v722, %v7839
  %v7845 = vmul.f32 %v726, %v7834
  %v7846 = vmul.f32 %v726, %v7839
  %v7847 = vmul.f32 %v730, %v7834
  %v7848 = vmul.f32 %v730, %v7839
  %v7849 = vmul.f32 %v734, %v7834
  %v7850 = vmul.f32 %v734, %v7839
  %v7851 = vmul.f32 %v738, %v7834
  %v7852 = vmul.f32 %v738, %v7839
  %v7853 = vmul.f32 %v742, %v7834
  %v7854 = vmul.f32 %v742, %v7839
  %v7855 = vmul.f32 %v746, %v7834
  %v7856 = vmul.f32 %v746, %v7839
  %v7857 = vmul.f32 %v750, %v7834
  %v7858 = vmul.f32 %v750, %v7839
  %v7859 = vmul.f32 %v754, %v7834
  %v7860 = vmul.f32 %v754, %v7839
  %v7861 = vmul.f32 %v758, %v7834
  %v7862 = vmul.f32 %v758, %v7839
  %v7863 = vmul.f32 %v762, %v7834
  %v7864 = vmul.f32 %v762, %v7839
  %v7865 = vmul.f32 %v766, %v7834
  %v7866 = vmul.f32 %v766, %v7839
  %v7867 = vmul.f32 %v770, %v7834
  %v7868 = vmul.f32 %v770, %v7839
  %v7869 = vmul.f32 %v774, %v7834
  %v7870 = vmul.f32 %v774, %v7839
  %v7871 = vmul.f32 %v778, %v7834
  %v7872 = vmul.f32 %v778, %v7839
  %v7873 = vmul.f32 %v782, %v7834
  %v7874 = vmul.f32 %v782, %v7839
  %v7875 = vmul.f32 %v786, %v7834
  %v7876 = vmul.f32 %v786, %v7839
  %v7877 = vmul.f32 %v790, %v7834
  %v7878 = vmul.f32 %v790, %v7839
  %v7879 = vmul.f32 %v2123, %v7834
  %v7880 = vmul.f32 %v2123, %v7839
  %v7881 = vmul.f32 %v798, %v7834
  %v7882 = vmul.f32 %v798, %v7839
  %v7883 = vmul.f32 %v802, %v7834
  %v7884 = vmul.f32 %v802, %v7839
  %v7885 = vmul.f32 %v806, %v7834
  %v7886 = vmul.f32 %v806, %v7839
  %v7887 = vmul.f32 %v810, %v7834
  %v7888 = vmul.f32 %v810, %v7839
  %v7889 = vmul.f32 %v814, %v7834
  %v7890 = vmul.f32 %v814, %v7839
  %v7891 = vmul.f32 %v818, %v7834
  %v7892 = vmul.f32 %v818, %v7839
  %v7893 = vmul.f32 %v822, %v7834
  %v7894 = vmul.f32 %v822, %v7839
  %v7895 = vmul.f32 %v826, %v7834
  %v7896 = vmul.f32 %v826, %v7839
  %v7897 = vmul.f32 %v830, %v7834
  %v7898 = vmul.f32 %v830, %v7839
  %v7899 = vmul.f32 %v834, %v7834
  %v7900 = vmul.f32 %v834, %v7839
  %v7901 = vmul.f32 %v838, %v7834
  %v7902 = vmul.f32 %v838, %v7839
  %v7903 = vmul.f32 %v842, %v7834
  %v7904 = vmul.f32 %v842, %v7839
  %v7905 = vmul.f32 %v846, %v7834
  %v7906 = vmul.f32 %v846, %v7839
  %v7907 = vmul.f32 %v850, %v7834
  %v7908 = vmul.f32 %v850, %v7839
  %v7909 = vmul.f32 %v854, %v7834
  %v7910 = vmul.f32 %v854, %v7839
  %v7911 = vmul.f32 %v858, %v7834
  %v7912 = vmul.f32 %v858, %v7839
  %v7913 = vmul.f32 %v862, %v7834
  %v7914 = vmul.f32 %v862, %v7839
  %v7915 = vmul.f32 %v866, %v7834
  %v7916 = vmul.f32 %v866, %v7839
  %v7917 = vmul.f32 %v870, %v7834
  %v7918 = vmul.f32 %v870, %v7839
  %v7919 = vmul.f32 %v2127, %v7834
  %v7920 = vmul.f32 %v2127, %v7839
  %v7921 = vmul.f32 %v878, %v7834
  %v7922 = vmul.f32 %v878, %v7839
  %v7923 = vmul.f32 %v882, %v7834
  %v7924 = vmul.f32 %v882, %v7839
  %v7925 = vmul.f32 %v886, %v7834
  %v7926 = vmul.f32 %v886, %v7839
  %v7927 = vmul.f32 %v890, %v7834
  %v7928 = vmul.f32 %v890, %v7839
  %v7929 = vmul.f32 %v894, %v7834
  %v7930 = vmul.f32 %v894, %v7839
  %v7931 = vmul.f32 %v898, %v7834
  %v7932 = vmul.f32 %v898, %v7839
  %v7933 = vmul.f32 %v902, %v7834
  %v7934 = vmul.f32 %v902, %v7839
  %v7935 = vmul.f32 %v906, %v7834
  %v7936 = vmul.f32 %v906, %v7839
  %v7937 = vmul.f32 %v910, %v7834
  %v7938 = vmul.f32 %v910, %v7839
  %v7939 = vmul.f32 %v914, %v7834
  %v7940 = vmul.f32 %v914, %v7839
  %v7941 = vmul.f32 %v918, %v7834
  %v7942 = vmul.f32 %v918, %v7839
  %v7943 = vmul.f32 %v922, %v7834
  %v7944 = vmul.f32 %v922, %v7839
  %v7945 = vmul.f32 %v926, %v7834
  %v7946 = vmul.f32 %v926, %v7839
  %v7947 = vmul.f32 %v930, %v7834
  %v7948 = vmul.f32 %v930, %v7839
  %v7949 = vmul.f32 %v934, %v7834
  %v7950 = vmul.f32 %v934, %v7839
  %v7951 = vmul.f32 %v938, %v7834
  %v7952 = vmul.f32 %v938, %v7839
  %v7953 = vmul.f32 %v942, %v7834
  %v7954 = vmul.f32 %v942, %v7839
  %v7955 = vmul.f32 %v946, %v7834
  %v7956 = vmul.f32 %v946, %v7839
  %v7957 = vmul.f32 %v950, %v7834
  %v7958 = vmul.f32 %v950, %v7839
  %v7959 = vmul.f32 %v2131, %v7834
  %v7960 = vmul.f32 %v2131, %v7839
  %v7961 = vmul.f32 %v958, %v7834
  %v7962 = vmul.f32 %v958, %v7839
  %v7963 = vmul.f32 %v962, %v7834
  %v7964 = vmul.f32 %v962, %v7839
  %v7965 = vmul.f32 %v966, %v7834
  %v7966 = vmul.f32 %v966, %v7839
  %v7967 = vmul.f32 %v970, %v7834
  %v7968 = vmul.f32 %v970, %v7839
  %v7969 = vmul.f32 %v974, %v7834
  %v7970 = vmul.f32 %v974, %v7839
  %v7971 = vmul.f32 %v978, %v7834
  %v7972 = vmul.f32 %v978, %v7839
  %v7973 = vmul.f32 %v982, %v7834
  %v7974 = vmul.f32 %v982, %v7839
  %v7975 = vmul.f32 %v986, %v7834
  %v7976 = vmul.f32 %v986, %v7839
  %v7977 = vmul.f32 %v990, %v7834
  %v7978 = vmul.f32 %v990, %v7839
  %v7979 = vmul.f32 %v994, %v7834
  %v7980 = vmul.f32 %v994, %v7839
  %v7981 = vmul.f32 %v998, %v7834
  %v7982 = vmul.f32 %v998, %v7839
  %v7983 = vmul.f32 %v1002, %v7834
  %v7984 = vmul.f32 %v1002, %v7839
  %v7985 = vmul.f32 %v1006, %v7834
  %v7986 = vmul.f32 %v1006, %v7839
  %v7987 = vmul.f32 %v1010, %v7834
  %v7988 = vmul.f32 %v1010, %v7839
  %v7989 = vmul.f32 %v1014, %v7834
  %v7990 = vmul.f32 %v1014, %v7839
  %v7991 = vmul.f32 %v1018, %v7834
  %v7992 = vmul.f32 %v1018, %v7839
  %v7993 = vmul.f32 %v1022, %v7834
  %v7994 = vmul.f32 %v1022, %v7839
  %v7995 = vmul.f32 %v1026, %v7834
  %v7996 = vmul.f32 %v1026, %v7839
  %v7997 = vmul.f32 %v1030, %v7834
  %v7998 = vmul.f32 %v1030, %v7839
  %v7999 = vmul.f32 %v2135, %v7834
  %v8000 = vmul.f32 %v2135, %v7839
  %v8001 = vmul.f32 %v1038, %v7834
  %v8002 = vmul.f32 %v1038, %v7839
  %v8003 = vmul.f32 %v1042, %v7834
  %v8004 = vmul.f32 %v1042, %v7839
  %v8005 = vmul.f32 %v1046, %v7834
  %v8006 = vmul.f32 %v1046, %v7839
  %v8007 = vmul.f32 %v1050, %v7834
  %v8008 = vmul.f32 %v1050, %v7839
  %v8009 = vmul.f32 %v1054, %v7834
  %v8010 = vmul.f32 %v1054, %v7839
  %v8011 = vmul.f32 %v1058, %v7834
  %v8012 = vmul.f32 %v1058, %v7839
  %v8013 = vmul.f32 %v1062, %v7834
  %v8014 = vmul.f32 %v1062, %v7839
  %v8015 = vmul.f32 %v1066, %v7834
  %v8016 = vmul.f32 %v1066, %v7839
  %v8017 = vmul.f32 %v1070, %v7834
  %v8018 = vmul.f32 %v1070, %v7839
  %v8019 = vmul.f32 %v1074, %v7834
  %v8020 = vmul.f32 %v1074, %v7839
  %v8021 = vmul.f32 %v1078, %v7834
  %v8022 = vmul.f32 %v1078, %v7839
  %v8023 = vmul.f32 %v1082, %v7834
  %v8024 = vmul.f32 %v1082, %v7839
  %v8025 = vmul.f32 %v1086, %v7834
  %v8026 = vmul.f32 %v1086, %v7839
  %v8027 = vmul.f32 %v1090, %v7834
  %v8028 = vmul.f32 %v1090, %v7839
  %v8029 = vmul.f32 %v1094, %v7834
  %v8030 = vmul.f32 %v1094, %v7839
  %v8031 = vmul.f32 %v1098, %v7834
  %v8032 = vmul.f32 %v1098, %v7839
  %v8033 = vmul.f32 %v1102, %v7834
  %v8034 = vmul.f32 %v1102, %v7839
  %v8035 = vmul.f32 %v1106, %v7834
  %v8036 = vmul.f32 %v1106, %v7839
  %v8037 = vmul.f32 %v1110, %v7834
  %v8038 = vmul.f32 %v1110, %v7839
  %v8039 = vmul.f32 %v2139, %v7834
  %v8040 = vmul.f32 %v2139, %v7839
  %v8041 = vmul.f32 %v1118, %v7834
  %v8042 = vmul.f32 %v1118, %v7839
  %v8043 = vmul.f32 %v1122, %v7834
  %v8044 = vmul.f32 %v1122, %v7839
  %v8045 = vmul.f32 %v1126, %v7834
  %v8046 = vmul.f32 %v1126, %v7839
  %v8047 = vmul.f32 %v1130, %v7834
  %v8048 = vmul.f32 %v1130, %v7839
  %v8049 = vmul.f32 %v1134, %v7834
  %v8050 = vmul.f32 %v1134, %v7839
  %v8051 = vmul.f32 %v1138, %v7834
  %v8052 = vmul.f32 %v1138, %v7839
  %v8053 = vmul.f32 %v1142, %v7834
  %v8054 = vmul.f32 %v1142, %v7839
  %v8055 = vmul.f32 %v1146, %v7834
  %v8056 = vmul.f32 %v1146, %v7839
  %v8057 = vmul.f32 %v1150, %v7834
  %v8058 = vmul.f32 %v1150, %v7839
  %v8059 = vmul.f32 %v1154, %v7834
  %v8060 = vmul.f32 %v1154, %v7839
  %v8061 = vmul.f32 %v1158, %v7834
  %v8062 = vmul.f32 %v1158, %v7839
  %v8063 = vmul.f32 %v1162, %v7834
  %v8064 = vmul.f32 %v1162, %v7839
  %v8065 = vmul.f32 %v1166, %v7834
  %v8066 = vmul.f32 %v1166, %v7839
  %v8067 = vmul.f32 %v1170, %v7834
  %v8068 = vmul.f32 %v1170, %v7839
  %v8069 = vmul.f32 %v1174, %v7834
  %v8070 = vmul.f32 %v1174, %v7839
  %v8071 = vmul.f32 %v1178, %v7834
  %v8072 = vmul.f32 %v1178, %v7839
  %v8073 = vmul.f32 %v1182, %v7834
  %v8074 = vmul.f32 %v1182, %v7839
  %v8075 = vmul.f32 %v1186, %v7834
  %v8076 = vmul.f32 %v1186, %v7839
  %v8077 = vmul.f32 %v1190, %v7834
  %v8078 = vmul.f32 %v1190, %v7839
  %v8079 = vmul.f32 %v2143, %v7834
  %v8080 = vmul.f32 %v2143, %v7839
  %v8081 = vmul.f32 %v1198, %v7834
  %v8082 = vmul.f32 %v1198, %v7839
  %v8083 = vmul.f32 %v1202, %v7834
  %v8084 = vmul.f32 %v1202, %v7839
  %v8085 = vmul.f32 %v1206, %v7834
  %v8086 = vmul.f32 %v1206, %v7839
  %v8087 = vmul.f32 %v1210, %v7834
  %v8088 = vmul.f32 %v1210, %v7839
  %v8089 = vmul.f32 %v1214, %v7834
  %v8090 = vmul.f32 %v1214, %v7839
  %v8091 = vmul.f32 %v1218, %v7834
  %v8092 = vmul.f32 %v1218, %v7839
  %v8093 = vmul.f32 %v1222, %v7834
  %v8094 = vmul.f32 %v1222, %v7839
  %v8095 = vmul.f32 %v1226, %v7834
  %v8096 = vmul.f32 %v1226, %v7839
  %v8097 = vmul.f32 %v1230, %v7834
  %v8098 = vmul.f32 %v1230, %v7839
  %v8099 = vmul.f32 %v1234, %v7834
  %v8100 = vmul.f32 %v1234, %v7839
  %v8101 = vmul.f32 %v1238, %v7834
  %v8102 = vmul.f32 %v1238, %v7839
  %v8103 = vmul.f32 %v1242, %v7834
  %v8104 = vmul.f32 %v1242, %v7839
  %v8105 = vmul.f32 %v1246, %v7834
  %v8106 = vmul.f32 %v1246, %v7839
  %v8107 = vmul.f32 %v1250, %v7834
  %v8108 = vmul.f32 %v1250, %v7839
  %v8109 = vmul.f32 %v1254, %v7834
  %v8110 = vmul.f32 %v1254, %v7839
  %v8111 = vmul.f32 %v1258, %v7834
  %v8112 = vmul.f32 %v1258, %v7839
  %v8113 = vmul.f32 %v1262, %v7834
  %v8114 = vmul.f32 %v1262, %v7839
  %v8115 = vmul.f32 %v1266, %v7834
  %v8116 = vmul.f32 %v1266, %v7839
  %v8117 = vmul.f32 %v1270, %v7834
  %v8118 = vmul.f32 %v1270, %v7839
  %v8119 = vmul.f32 %v2147, %v7834
  %v8120 = vmul.f32 %v2147, %v7839
  %v8121 = vmul.f32 %v1278, %v7834
  %v8122 = vmul.f32 %v1278, %v7839
  %v8123 = vmul.f32 %v1282, %v7834
  %v8124 = vmul.f32 %v1282, %v7839
  %v8125 = vmul.f32 %v1286, %v7834
  %v8126 = vmul.f32 %v1286, %v7839
  %v8127 = vmul.f32 %v1290, %v7834
  %v8128 = vmul.f32 %v1290, %v7839
  %v8129 = vmul.f32 %v1294, %v7834
  %v8130 = vmul.f32 %v1294, %v7839
  %v8131 = vmul.f32 %v1298, %v7834
  %v8132 = vmul.f32 %v1298, %v7839
  %v8133 = vmul.f32 %v1302, %v7834
  %v8134 = vmul.f32 %v1302, %v7839
  %v8135 = vmul.f32 %v1306, %v7834
  %v8136 = vmul.f32 %v1306, %v7839
  %v8137 = vmul.f32 %v1310, %v7834
  %v8138 = vmul.f32 %v1310, %v7839
  %v8139 = vmul.f32 %v1314, %v7834
  %v8140 = vmul.f32 %v1314, %v7839
  %v8141 = vmul.f32 %v1318, %v7834
  %v8142 = vmul.f32 %v1318, %v7839
  %v8143 = vmul.f32 %v1322, %v7834
  %v8144 = vmul.f32 %v1322, %v7839
  %v8145 = vmul.f32 %v1326, %v7834
  %v8146 = vmul.f32 %v1326, %v7839
  %v8147 = vmul.f32 %v1330, %v7834
  %v8148 = vmul.f32 %v1330, %v7839
  %v8149 = vmul.f32 %v1334, %v7834
  %v8150 = vmul.f32 %v1334, %v7839
  %v8151 = vmul.f32 %v1338, %v7834
  %v8152 = vmul.f32 %v1338, %v7839
  %v8153 = vmul.f32 %v1342, %v7834
  %v8154 = vmul.f32 %v1342, %v7839
  %v8155 = vmul.f32 %v1346, %v7834
  %v8156 = vmul.f32 %v1346, %v7839
  %v8157 = vmul.f32 %v1350, %v7834
  %v8158 = vmul.f32 %v1350, %v7839
  %v8159 = vmul.f32 %v2151, %v7834
  %v8160 = vmul.f32 %v2151, %v7839
  %v8161 = vmul.f32 %v1358, %v7834
  %v8162 = vmul.f32 %v1358, %v7839
  %v8163 = vmul.f32 %v1362, %v7834
  %v8164 = vmul.f32 %v1362, %v7839
  %v8165 = vmul.f32 %v1366, %v7834
  %v8166 = vmul.f32 %v1366, %v7839
  %v8167 = vmul.f32 %v1370, %v7834
  %v8168 = vmul.f32 %v1370, %v7839
  %v8169 = vmul.f32 %v1374, %v7834
  %v8170 = vmul.f32 %v1374, %v7839
  %v8171 = vmul.f32 %v1378, %v7834
  %v8172 = vmul.f32 %v1378, %v7839
  %v8173 = vmul.f32 %v1382, %v7834
  %v8174 = vmul.f32 %v1382, %v7839
  %v8175 = vmul.f32 %v1386, %v7834
  %v8176 = vmul.f32 %v1386, %v7839
  %v8177 = vmul.f32 %v1390, %v7834
  %v8178 = vmul.f32 %v1390, %v7839
  %v8179 = vmul.f32 %v1394, %v7834
  %v8180 = vmul.f32 %v1394, %v7839
  %v8181 = vmul.f32 %v1398, %v7834
  %v8182 = vmul.f32 %v1398, %v7839
  %v8183 = vmul.f32 %v1402, %v7834
  %v8184 = vmul.f32 %v1402, %v7839
  %v8185 = vmul.f32 %v1406, %v7834
  %v8186 = vmul.f32 %v1406, %v7839
  %v8187 = vmul.f32 %v1410, %v7834
  %v8188 = vmul.f32 %v1410, %v7839
  %v8189 = vmul.f32 %v1414, %v7834
  %v8190 = vmul.f32 %v1414, %v7839
  %v8191 = vmul.f32 %v1418, %v7834
  %v8192 = vmul.f32 %v1418, %v7839
  %v8193 = vmul.f32 %v1422, %v7834
  %v8194 = vmul.f32 %v1422, %v7839
  %v8195 = vmul.f32 %v1426, %v7834
  %v8196 = vmul.f32 %v1426, %v7839
  %v8197 = vmul.f32 %v1430, %v7834
  %v8198 = vmul.f32 %v1430, %v7839
  %v8199 = vmul.f32 %v2155, %v7834
  %v8200 = vmul.f32 %v2155, %v7839
  %v8201 = vmul.f32 %v4040, %v7834
  %v8202 = vmul.f32 %v4040, %v7839
  %v8203 = vmul.f32 %v4044, %v7834
  %v8204 = vmul.f32 %v4044, %v7839
  %v8205 = vmul.f32 %v4048, %v7834
  %v8206 = vmul.f32 %v4048, %v7839
  %v8207 = vmul.f32 %v4052, %v7834
  %v8208 = vmul.f32 %v4052, %v7839
  %v8209 = vmul.f32 %v4056, %v7834
  %v8210 = vmul.f32 %v4056, %v7839
  %v8211 = vmul.f32 %v4060, %v7834
  %v8212 = vmul.f32 %v4060, %v7839
  %v8213 = vmul.f32 %v4064, %v7834
  %v8214 = vmul.f32 %v4064, %v7839
  %v8215 = vmul.f32 %v4068, %v7834
  %v8216 = vmul.f32 %v4068, %v7839
  %v8217 = vmul.f32 %v4072, %v7834
  %v8218 = vmul.f32 %v4072, %v7839
  %v8219 = vmul.f32 %v4076, %v7834
  %v8220 = vmul.f32 %v4076, %v7839
  %v8221 = vmul.f32 %v4080, %v7834
  %v8222 = vmul.f32 %v4080, %v7839
  %v8223 = vmul.f32 %v4084, %v7834
  %v8224 = vmul.f32 %v4084, %v7839
  %v8225 = vmul.f32 %v4088, %v7834
  %v8226 = vmul.f32 %v4088, %v7839
  %v8227 = vmul.f32 %v4092, %v7834
  %v8228 = vmul.f32 %v4092, %v7839
  %v8229 = vmul.f32 %v4096, %v7834
  %v8230 = vmul.f32 %v4096, %v7839
  %v8231 = vmul.f32 %v4100, %v7834
  %v8232 = vmul.f32 %v4100, %v7839
  %v8233 = vmul.f32 %v4104, %v7834
  %v8234 = vmul.f32 %v4104, %v7839
  %v8235 = vmul.f32 %v4108, %v7834
  %v8236 = vmul.f32 %v4108, %v7839
  %v8237 = vmul.f32 %v4112, %v7834
  %v8238 = vmul.f32 %v4112, %v7839
  %v8239 = vmul.f32 %v5027, %v7834
  %v8240 = vmul.f32 %v5027, %v7839
  %v8241 = vmul.f32 %v6842, %v7834
  %v8242 = vmul.f32 %v6842, %v7839
  %v8243 = vmul.f32 %v6846, %v7834
  %v8244 = vmul.f32 %v6846, %v7839
  %v8245 = vmul.f32 %v6850, %v7834
  %v8246 = vmul.f32 %v6850, %v7839
  %v8247 = vmul.f32 %v6854, %v7834
  %v8248 = vmul.f32 %v6854, %v7839
  %v8249 = vmul.f32 %v6858, %v7834
  %v8250 = vmul.f32 %v6858, %v7839
  %v8251 = vmul.f32 %v6862, %v7834
  %v8252 = vmul.f32 %v6862, %v7839
  %v8253 = vmul.f32 %v6866, %v7834
  %v8254 = vmul.f32 %v6866, %v7839
  %v8255 = vmul.f32 %v6870, %v7834
  %v8256 = vmul.f32 %v6870, %v7839
  %v8257 = vmul.f32 %v6874, %v7834
  %v8258 = vmul.f32 %v6874, %v7839
  %v8259 = vmul.f32 %v6878, %v7834
  %v8260 = vmul.f32 %v6878, %v7839
  %v8261 = vmul.f32 %v6882, %v7834
  %v8262 = vmul.f32 %v6882, %v7839
  %v8263 = vmul.f32 %v6886, %v7834
  %v8264 = vmul.f32 %v6886, %v7839
  %v8265 = vmul.f32 %v6890, %v7834
  %v8266 = vmul.f32 %v6890, %v7839
  %v8267 = vmul.f32 %v6894, %v7834
  %v8268 = vmul.f32 %v6894, %v7839
  %v8269 = vmul.f32 %v6898, %v7834
  %v8270 = vmul.f32 %v6898, %v7839
  %v8271 = vmul.f32 %v6902, %v7834
  %v8272 = vmul.f32 %v6902, %v7839
  %v8273 = vmul.f32 %v6906, %v7834
  %v8274 = vmul.f32 %v6906, %v7839
  %v8275 = vmul.f32 %v6910, %v7834
  %v8276 = vmul.f32 %v6910, %v7839
  %v8277 = vmul.f32 %v6914, %v7834
  %v8278 = vmul.f32 %v6914, %v7839
  %v8279 = vmul.f32 %v7829, %v7834
  %v8280 = vmul.f32 %v7829, %v7839
  %v8281 = vadd.f32 %v7385, %v7841
  %v8282 = vadd.f32 %v7386, %v7842
  %v8283 = vadd.f32 %v7387, %v7843
  %v8284 = vadd.f32 %v7388, %v7844
  %v8285 = vadd.f32 %v7389, %v7845
  %v8286 = vadd.f32 %v7390, %v7846
  %v8287 = vadd.f32 %v7391, %v7847
  %v8288 = vadd.f32 %v7392, %v7848
  %v8289 = vadd.f32 %v7393, %v7849
  %v8290 = vadd.f32 %v7394, %v7850
  %v8291 = vadd.f32 %v7395, %v7851
  %v8292 = vadd.f32 %v7396, %v7852
  %v8293 = vadd.f32 %v7397, %v7853
  %v8294 = vadd.f32 %v7398, %v7854
  %v8295 = vadd.f32 %v7399, %v7855
  %v8296 = vadd.f32 %v7400, %v7856
  %v8297 = vadd.f32 %v7401, %v7857
  %v8298 = vadd.f32 %v7402, %v7858
  %v8299 = vadd.f32 %v7403, %v7859
  %v8300 = vadd.f32 %v7404, %v7860
  %v8301 = vadd.f32 %v7405, %v7861
  %v8302 = vadd.f32 %v7406, %v7862
  %v8303 = vadd.f32 %v7407, %v7863
  %v8304 = vadd.f32 %v7408, %v7864
  %v8305 = vadd.f32 %v7409, %v7865
  %v8306 = vadd.f32 %v7410, %v7866
  %v8307 = vadd.f32 %v7411, %v7867
  %v8308 = vadd.f32 %v7412, %v7868
  %v8309 = vadd.f32 %v7413, %v7869
  %v8310 = vadd.f32 %v7414, %v7870
  %v8311 = vadd.f32 %v7415, %v7871
  %v8312 = vadd.f32 %v7416, %v7872
  %v8313 = vadd.f32 %v7417, %v7873
  %v8314 = vadd.f32 %v7418, %v7874
  %v8315 = vadd.f32 %v7419, %v7875
  %v8316 = vadd.f32 %v7420, %v7876
  %v8317 = vadd.f32 %v7421, %v7877
  %v8318 = vadd.f32 %v7422, %v7878
  %v8319 = vadd.f32 %v7423, %v7879
  %v8320 = vadd.f32 %v7424, %v7880
  %v8321 = vadd.f32 %v7425, %v7881
  %v8322 = vadd.f32 %v7426, %v7882
  %v8323 = vadd.f32 %v7427, %v7883
  %v8324 = vadd.f32 %v7428, %v7884
  %v8325 = vadd.f32 %v7429, %v7885
  %v8326 = vadd.f32 %v7430, %v7886
  %v8327 = vadd.f32 %v7431, %v7887
  %v8328 = vadd.f32 %v7432, %v7888
  %v8329 = vadd.f32 %v7433, %v7889
  %v8330 = vadd.f32 %v7434, %v7890
  %v8331 = vadd.f32 %v7435, %v7891
  %v8332 = vadd.f32 %v7436, %v7892
  %v8333 = vadd.f32 %v7437, %v7893
  %v8334 = vadd.f32 %v7438, %v7894
  %v8335 = vadd.f32 %v7439, %v7895
  %v8336 = vadd.f32 %v7440, %v7896
  %v8337 = vadd.f32 %v7441, %v7897
  %v8338 = vadd.f32 %v7442, %v7898
  %v8339 = vadd.f32 %v7443, %v7899
  %v8340 = vadd.f32 %v7444, %v7900
  %v8341 = vadd.f32 %v7445, %v7901
  %v8342 = vadd.f32 %v7446, %v7902
  %v8343 = vadd.f32 %v7447, %v7903
  %v8344 = vadd.f32 %v7448, %v7904
  %v8345 = vadd.f32 %v7449, %v7905
  %v8346 = vadd.f32 %v7450, %v7906
  %v8347 = vadd.f32 %v7451, %v7907
  %v8348 = vadd.f32 %v7452, %v7908
  %v8349 = vadd.f32 %v7453, %v7909
  %v8350 = vadd.f32 %v7454, %v7910
  %v8351 = vadd.f32 %v7455, %v7911
  %v8352 = vadd.f32 %v7456, %v7912
  %v8353 = vadd.f32 %v7457, %v7913
  %v8354 = vadd.f32 %v7458, %v7914
  %v8355 = vadd.f32 %v7459, %v7915
  %v8356 = vadd.f32 %v7460, %v7916
  %v8357 = vadd.f32 %v7461, %v7917
  %v8358 = vadd.f32 %v7462, %v7918
  %v8359 = vadd.f32 %v7463, %v7919
  %v8360 = vadd.f32 %v7464, %v7920
  %v8361 = vadd.f32 %v7465, %v7921
  %v8362 = vadd.f32 %v7466, %v7922
  %v8363 = vadd.f32 %v7467, %v7923
  %v8364 = vadd.f32 %v7468, %v7924
  %v8365 = vadd.f32 %v7469, %v7925
  %v8366 = vadd.f32 %v7470, %v7926
  %v8367 = vadd.f32 %v7471, %v7927
  %v8368 = vadd.f32 %v7472, %v7928
  %v8369 = vadd.f32 %v7473, %v7929
  %v8370 = vadd.f32 %v7474, %v7930
  %v8371 = vadd.f32 %v7475, %v7931
  %v8372 = vadd.f32 %v7476, %v7932
  %v8373 = vadd.f32 %v7477, %v7933
  %v8374 = vadd.f32 %v7478, %v7934
  %v8375 = vadd.f32 %v7479, %v7935
  %v8376 = vadd.f32 %v7480, %v7936
  %v8377 = vadd.f32 %v7481, %v7937
  %v8378 = vadd.f32 %v7482, %v7938
  %v8379 = vadd.f32 %v7483, %v7939
  %v8380 = vadd.f32 %v7484, %v7940
  %v8381 = vadd.f32 %v7485, %v7941
  %v8382 = vadd.f32 %v7486, %v7942
  %v8383 = vadd.f32 %v7487, %v7943
  %v8384 = vadd.f32 %v7488, %v7944
  %v8385 = vadd.f32 %v7489, %v7945
  %v8386 = vadd.f32 %v7490, %v7946
  %v8387 = vadd.f32 %v7491, %v7947
  %v8388 = vadd.f32 %v7492, %v7948
  %v8389 = vadd.f32 %v7493, %v7949
  %v8390 = vadd.f32 %v7494, %v7950
  %v8391 = vadd.f32 %v7495, %v7951
  %v8392 = vadd.f32 %v7496, %v7952
  %v8393 = vadd.f32 %v7497, %v7953
  %v8394 = vadd.f32 %v7498, %v7954
  %v8395 = vadd.f32 %v7499, %v7955
  %v8396 = vadd.f32 %v7500, %v7956
  %v8397 = vadd.f32 %v7501, %v7957
  %v8398 = vadd.f32 %v7502, %v7958
  %v8399 = vadd.f32 %v7503, %v7959
  %v8400 = vadd.f32 %v7504, %v7960
  %v8401 = vadd.f32 %v7505, %v7961
  %v8402 = vadd.f32 %v7506, %v7962
  %v8403 = vadd.f32 %v7507, %v7963
  %v8404 = vadd.f32 %v7508, %v7964
  %v8405 = vadd.f32 %v7509, %v7965
  %v8406 = vadd.f32 %v7510, %v7966
  %v8407 = vadd.f32 %v7511, %v7967
  %v8408 = vadd.f32 %v7512, %v7968
  %v8409 = vadd.f32 %v7513, %v7969
  %v8410 = vadd.f32 %v7514, %v7970
  %v8411 = vadd.f32 %v7515, %v7971
  %v8412 = vadd.f32 %v7516, %v7972
  %v8413 = vadd.f32 %v7517, %v7973
  %v8414 = vadd.f32 %v7518, %v7974
  %v8415 = vadd.f32 %v7519, %v7975
  %v8416 = vadd.f32 %v7520, %v7976
  %v8417 = vadd.f32 %v7521, %v7977
  %v8418 = vadd.f32 %v7522, %v7978
  %v8419 = vadd.f32 %v7523, %v7979
  %v8420 = vadd.f32 %v7524, %v7980
  %v8421 = vadd.f32 %v7525, %v7981
  %v8422 = vadd.f32 %v7526, %v7982
  %v8423 = vadd.f32 %v7527, %v7983
  %v8424 = vadd.f32 %v7528, %v7984
  %v8425 = vadd.f32 %v7529, %v7985
  %v8426 = vadd.f32 %v7530, %v7986
  %v8427 = vadd.f32 %v7531, %v7987
  %v8428 = vadd.f32 %v7532, %v7988
  %v8429 = vadd.f32 %v7533, %v7989
  %v8430 = vadd.f32 %v7534, %v7990
  %v8431 = vadd.f32 %v7535, %v7991
  %v8432 = vadd.f32 %v7536, %v7992
  %v8433 = vadd.f32 %v7537, %v7993
  %v8434 = vadd.f32 %v7538, %v7994
  %v8435 = vadd.f32 %v7539, %v7995
  %v8436 = vadd.f32 %v7540, %v7996
  %v8437 = vadd.f32 %v7541, %v7997
  %v8438 = vadd.f32 %v7542, %v7998
  %v8439 = vadd.f32 %v7543, %v7999
  %v8440 = vadd.f32 %v7544, %v8000
  %v8441 = vadd.f32 %v7545, %v8001
  %v8442 = vadd.f32 %v7546, %v8002
  %v8443 = vadd.f32 %v7547, %v8003
  %v8444 = vadd.f32 %v7548, %v8004
  %v8445 = vadd.f32 %v7549, %v8005
  %v8446 = vadd.f32 %v7550, %v8006
  %v8447 = vadd.f32 %v7551, %v8007
  %v8448 = vadd.f32 %v7552, %v8008
  %v8449 = vadd.f32 %v7553, %v8009
  %v8450 = vadd.f32 %v7554, %v8010
  %v8451 = vadd.f32 %v7555, %v8011
  %v8452 = vadd.f32 %v7556, %v8012
  %v8453 = vadd.f32 %v7557, %v8013
  %v8454 = vadd.f32 %v7558, %v8014
  %v8455 = vadd.f32 %v7559, %v8015
  %v8456 = vadd.f32 %v7560, %v8016
  %v8457 = vadd.f32 %v7561, %v8017
  %v8458 = vadd.f32 %v7562, %v8018
  %v8459 = vadd.f32 %v7563, %v8019
  %v8460 = vadd.f32 %v7564, %v8020
  %v8461 = vadd.f32 %v7565, %v8021
  %v8462 = vadd.f32 %v7566, %v8022
  %v8463 = vadd.f32 %v7567, %v8023
  %v8464 = vadd.f32 %v7568, %v8024
  %v8465 = vadd.f32 %v7569, %v8025
  %v8466 = vadd.f32 %v7570, %v8026
  %v8467 = vadd.f32 %v7571, %v8027
  %v8468 = vadd.f32 %v7572, %v8028
  %v8469 = vadd.f32 %v7573, %v8029
  %v8470 = vadd.f32 %v7574, %v8030
  %v8471 = vadd.f32 %v7575, %v8031
  %v8472 = vadd.f32 %v7576, %v8032
  %v8473 = vadd.f32 %v7577, %v8033
  %v8474 = vadd.f32 %v7578, %v8034
  %v8475 = vadd.f32 %v7579, %v8035
  %v8476 = vadd.f32 %v7580, %v8036
  %v8477 = vadd.f32 %v7581, %v8037
  %v8478 = vadd.f32 %v7582, %v8038
  %v8479 = vadd.f32 %v7583, %v8039
  %v8480 = vadd.f32 %v7584, %v8040
  %v8481 = vadd.f32 %v7585, %v8041
  %v8482 = vadd.f32 %v7586, %v8042
  %v8483 = vadd.f32 %v7587, %v8043
  %v8484 = vadd.f32 %v7588, %v8044
  %v8485 = vadd.f32 %v7589, %v8045
  %v8486 = vadd.f32 %v7590, %v8046
  %v8487 = vadd.f32 %v7591, %v8047
  %v8488 = vadd.f32 %v7592, %v8048
  %v8489 = vadd.f32 %v7593, %v8049
  %v8490 = vadd.f32 %v7594, %v8050
  %v8491 = vadd.f32 %v7595, %v8051
  %v8492 = vadd.f32 %v7596, %v8052
  %v8493 = vadd.f32 %v7597, %v8053
  %v8494 = vadd.f32 %v7598, %v8054
  %v8495 = vadd.f32 %v7599, %v8055
  %v8496 = vadd.f32 %v7600, %v8056
  %v8497 = vadd.f32 %v7601, %v8057
  %v8498 = vadd.f32 %v7602, %v8058
  %v8499 = vadd.f32 %v7603, %v8059
  %v8500 = vadd.f32 %v7604, %v8060
  %v8501 = vadd.f32 %v7605, %v8061
  %v8502 = vadd.f32 %v7606, %v8062
  %v8503 = vadd.f32 %v7607, %v8063
  %v8504 = vadd.f32 %v7608, %v8064
  %v8505 = vadd.f32 %v7609, %v8065
  %v8506 = vadd.f32 %v7610, %v8066
  %v8507 = vadd.f32 %v7611, %v8067
  %v8508 = vadd.f32 %v7612, %v8068
  %v8509 = vadd.f32 %v7613, %v8069
  %v8510 = vadd.f32 %v7614, %v8070
  %v8511 = vadd.f32 %v7615, %v8071
  %v8512 = vadd.f32 %v7616, %v8072
  %v8513 = vadd.f32 %v7617, %v8073
  %v8514 = vadd.f32 %v7618, %v8074
  %v8515 = vadd.f32 %v7619, %v8075
  %v8516 = vadd.f32 %v7620, %v8076
  %v8517 = vadd.f32 %v7621, %v8077
  %v8518 = vadd.f32 %v7622, %v8078
  %v8519 = vadd.f32 %v7623, %v8079
  %v8520 = vadd.f32 %v7624, %v8080
  %v8521 = vadd.f32 %v7625, %v8081
  %v8522 = vadd.f32 %v7626, %v8082
  %v8523 = vadd.f32 %v7627, %v8083
  %v8524 = vadd.f32 %v7628, %v8084
  %v8525 = vadd.f32 %v7629, %v8085
  %v8526 = vadd.f32 %v7630, %v8086
  %v8527 = vadd.f32 %v7631, %v8087
  %v8528 = vadd.f32 %v7632, %v8088
  %v8529 = vadd.f32 %v7633, %v8089
  %v8530 = vadd.f32 %v7634, %v8090
  %v8531 = vadd.f32 %v7635, %v8091
  %v8532 = vadd.f32 %v7636, %v8092
  %v8533 = vadd.f32 %v7637, %v8093
  %v8534 = vadd.f32 %v7638, %v8094
  %v8535 = vadd.f32 %v7639, %v8095
  %v8536 = vadd.f32 %v7640, %v8096
  %v8537 = vadd.f32 %v7641, %v8097
  %v8538 = vadd.f32 %v7642, %v8098
  %v8539 = vadd.f32 %v7643, %v8099
  %v8540 = vadd.f32 %v7644, %v8100
  %v8541 = vadd.f32 %v7645, %v8101
  %v8542 = vadd.f32 %v7646, %v8102
  %v8543 = vadd.f32 %v7647, %v8103
  %v8544 = vadd.f32 %v7648, %v8104
  %v8545 = vadd.f32 %v7649, %v8105
  %v8546 = vadd.f32 %v7650, %v8106
  %v8547 = vadd.f32 %v7651, %v8107
  %v8548 = vadd.f32 %v7652, %v8108
  %v8549 = vadd.f32 %v7653, %v8109
  %v8550 = vadd.f32 %v7654, %v8110
  %v8551 = vadd.f32 %v7655, %v8111
  %v8552 = vadd.f32 %v7656, %v8112
  %v8553 = vadd.f32 %v7657, %v8113
  %v8554 = vadd.f32 %v7658, %v8114
  %v8555 = vadd.f32 %v7659, %v8115
  %v8556 = vadd.f32 %v7660, %v8116
  %v8557 = vadd.f32 %v7661, %v8117
  %v8558 = vadd.f32 %v7662, %v8118
  %v8559 = vadd.f32 %v7663, %v8119
  %v8560 = vadd.f32 %v7664, %v8120
  %v8561 = vadd.f32 %v7665, %v8121
  %v8562 = vadd.f32 %v7666, %v8122
  %v8563 = vadd.f32 %v7667, %v8123
  %v8564 = vadd.f32 %v7668, %v8124
  %v8565 = vadd.f32 %v7669, %v8125
  %v8566 = vadd.f32 %v7670, %v8126
  %v8567 = vadd.f32 %v7671, %v8127
  %v8568 = vadd.f32 %v7672, %v8128
  %v8569 = vadd.f32 %v7673, %v8129
  %v8570 = vadd.f32 %v7674, %v8130
  %v8571 = vadd.f32 %v7675, %v8131
  %v8572 = vadd.f32 %v7676, %v8132
  %v8573 = vadd.f32 %v7677, %v8133
  %v8574 = vadd.f32 %v7678, %v8134
  %v8575 = vadd.f32 %v7679, %v8135
  %v8576 = vadd.f32 %v7680, %v8136
  %v8577 = vadd.f32 %v7681, %v8137
  %v8578 = vadd.f32 %v7682, %v8138
  %v8579 = vadd.f32 %v7683, %v8139
  %v8580 = vadd.f32 %v7684, %v8140
  %v8581 = vadd.f32 %v7685, %v8141
  %v8582 = vadd.f32 %v7686, %v8142
  %v8583 = vadd.f32 %v7687, %v8143
  %v8584 = vadd.f32 %v7688, %v8144
  %v8585 = vadd.f32 %v7689, %v8145
  %v8586 = vadd.f32 %v7690, %v8146
  %v8587 = vadd.f32 %v7691, %v8147
  %v8588 = vadd.f32 %v7692, %v8148
  %v8589 = vadd.f32 %v7693, %v8149
  %v8590 = vadd.f32 %v7694, %v8150
  %v8591 = vadd.f32 %v7695, %v8151
  %v8592 = vadd.f32 %v7696, %v8152
  %v8593 = vadd.f32 %v7697, %v8153
  %v8594 = vadd.f32 %v7698, %v8154
  %v8595 = vadd.f32 %v7699, %v8155
  %v8596 = vadd.f32 %v7700, %v8156
  %v8597 = vadd.f32 %v7701, %v8157
  %v8598 = vadd.f32 %v7702, %v8158
  %v8599 = vadd.f32 %v7703, %v8159
  %v8600 = vadd.f32 %v7704, %v8160
  %v8601 = vadd.f32 %v7705, %v8161
  %v8602 = vadd.f32 %v7706, %v8162
  %v8603 = vadd.f32 %v7707, %v8163
  %v8604 = vadd.f32 %v7708, %v8164
  %v8605 = vadd.f32 %v7709, %v8165
  %v8606 = vadd.f32 %v7710, %v8166
  %v8607 = vadd.f32 %v7711, %v8167
  %v8608 = vadd.f32 %v7712, %v8168
  %v8609 = vadd.f32 %v7713, %v8169
  %v8610 = vadd.f32 %v7714, %v8170
  %v8611 = vadd.f32 %v7715, %v8171
  %v8612 = vadd.f32 %v7716, %v8172
  %v8613 = vadd.f32 %v7717, %v8173
  %v8614 = vadd.f32 %v7718, %v8174
  %v8615 = vadd.f32 %v7719, %v8175
  %v8616 = vadd.f32 %v7720, %v8176
  %v8617 = vadd.f32 %v7721, %v8177
  %v8618 = vadd.f32 %v7722, %v8178
  %v8619 = vadd.f32 %v7723, %v8179
  %v8620 = vadd.f32 %v7724, %v8180
  %v8621 = vadd.f32 %v7725, %v8181
  %v8622 = vadd.f32 %v7726, %v8182
  %v8623 = vadd.f32 %v7727, %v8183
  %v8624 = vadd.f32 %v7728, %v8184
  %v8625 = vadd.f32 %v7729, %v8185
  %v8626 = vadd.f32 %v7730, %v8186
  %v8627 = vadd.f32 %v7731, %v8187
  %v8628 = vadd.f32 %v7732, %v8188
  %v8629 = vadd.f32 %v7733, %v8189
  %v8630 = vadd.f32 %v7734, %v8190
  %v8631 = vadd.f32 %v7735, %v8191
  %v8632 = vadd.f32 %v7736, %v8192
  %v8633 = vadd.f32 %v7737, %v8193
  %v8634 = vadd.f32 %v7738, %v8194
  %v8635 = vadd.f32 %v7739, %v8195
  %v8636 = vadd.f32 %v7740, %v8196
  %v8637 = vadd.f32 %v7741, %v8197
  %v8638 = vadd.f32 %v7742, %v8198
  %v8639 = vadd.f32 %v7743, %v8199
  %v8640 = vadd.f32 %v7744, %v8200
  %v8641 = vadd.f32 %v7745, %v8201
  %v8642 = vadd.f32 %v7746, %v8202
  %v8643 = vadd.f32 %v7747, %v8203
  %v8644 = vadd.f32 %v7748, %v8204
  %v8645 = vadd.f32 %v7749, %v8205
  %v8646 = vadd.f32 %v7750, %v8206
  %v8647 = vadd.f32 %v7751, %v8207
  %v8648 = vadd.f32 %v7752, %v8208
  %v8649 = vadd.f32 %v7753, %v8209
  %v8650 = vadd.f32 %v7754, %v8210
  %v8651 = vadd.f32 %v7755, %v8211
  %v8652 = vadd.f32 %v7756, %v8212
  %v8653 = vadd.f32 %v7757, %v8213
  %v8654 = vadd.f32 %v7758, %v8214
  %v8655 = vadd.f32 %v7759, %v8215
  %v8656 = vadd.f32 %v7760, %v8216
  %v8657 = vadd.f32 %v7761, %v8217
  %v8658 = vadd.f32 %v7762, %v8218
  %v8659 = vadd.f32 %v7763, %v8219
  %v8660 = vadd.f32 %v7764, %v8220
  %v8661 = vadd.f32 %v7765, %v8221
  %v8662 = vadd.f32 %v7766, %v8222
  %v8663 = vadd.f32 %v7767, %v8223
  %v8664 = vadd.f32 %v7768, %v8224
  %v8665 = vadd.f32 %v7769, %v8225
  %v8666 = vadd.f32 %v7770, %v8226
  %v8667 = vadd.f32 %v7771, %v8227
  %v8668 = vadd.f32 %v7772, %v8228
  %v8669 = vadd.f32 %v7773, %v8229
  %v8670 = vadd.f32 %v7774, %v8230
  %v8671 = vadd.f32 %v7775, %v8231
  %v8672 = vadd.f32 %v7776, %v8232
  %v8673 = vadd.f32 %v7777, %v8233
  %v8674 = vadd.f32 %v7778, %v8234
  %v8675 = vadd.f32 %v7779, %v8235
  %v8676 = vadd.f32 %v7780, %v8236
  %v8677 = vadd.f32 %v7781, %v8237
  %v8678 = vadd.f32 %v7782, %v8238
  %v8679 = vadd.f32 %v7783, %v8239
  %v8680 = vadd.f32 %v7784, %v8240
  %v8681 = vadd.f32 %v7785, %v8241
  %v8682 = vadd.f32 %v7786, %v8242
  %v8683 = vadd.f32 %v7787, %v8243
  %v8684 = vadd.f32 %v7788, %v8244
  %v8685 = vadd.f32 %v7789, %v8245
  %v8686 = vadd.f32 %v7790, %v8246
  %v8687 = vadd.f32 %v7791, %v8247
  %v8688 = vadd.f32 %v7792, %v8248
  %v8689 = vadd.f32 %v7793, %v8249
  %v8690 = vadd.f32 %v7794, %v8250
  %v8691 = vadd.f32 %v7795, %v8251
  %v8692 = vadd.f32 %v7796, %v8252
  %v8693 = vadd.f32 %v7797, %v8253
  %v8694 = vadd.f32 %v7798, %v8254
  %v8695 = vadd.f32 %v7799, %v8255
  %v8696 = vadd.f32 %v7800, %v8256
  %v8697 = vadd.f32 %v7801, %v8257
  %v8698 = vadd.f32 %v7802, %v8258
  %v8699 = vadd.f32 %v7803, %v8259
  %v8700 = vadd.f32 %v7804, %v8260
  %v8701 = vadd.f32 %v7805, %v8261
  %v8702 = vadd.f32 %v7806, %v8262
  %v8703 = vadd.f32 %v7807, %v8263
  %v8704 = vadd.f32 %v7808, %v8264
  %v8705 = vadd.f32 %v7809, %v8265
  %v8706 = vadd.f32 %v7810, %v8266
  %v8707 = vadd.f32 %v7811, %v8267
  %v8708 = vadd.f32 %v7812, %v8268
  %v8709 = vadd.f32 %v7813, %v8269
  %v8710 = vadd.f32 %v7814, %v8270
  %v8711 = vadd.f32 %v7815, %v8271
  %v8712 = vadd.f32 %v7816, %v8272
  %v8713 = vadd.f32 %v7817, %v8273
  %v8714 = vadd.f32 %v7818, %v8274
  %v8715 = vadd.f32 %v7819, %v8275
  %v8716 = vadd.f32 %v7820, %v8276
  %v8717 = vadd.f32 %v7821, %v8277
  %v8718 = vadd.f32 %v7822, %v8278
  %v8719 = vadd.f32 %v7823, %v8279
  %v8720 = vadd.f32 %v7824, %v8280
  %v8722 = vlaneseq
  %v8723 = vshrl.u32 %v8722, 7
  %v8724 = vsub.s32 0, %v8723
  %v8725 = vrot.slane %v312, %v8724
  %8728 = vset.pattern.permute.xlu0 0
  %8729 = vperm.xlu0 %8728, %v329
  %v8730 = vpop.permute.xlu0 %8729
  %8733 = vset.pattern.permute.xlu0 0
  %8734 = vperm.xlu0 %8733, %v330
  %v8735 = vpop.permute.xlu0 %8734
  %v8737 = vmul.f32 %v722, %v8730
  %v8738 = vmul.f32 %v722, %v8735
  %v8739 = vmul.f32 %v726, %v8730
  %v8740 = vmul.f32 %v726, %v8735
  %v8741 = vmul.f32 %v730, %v8730
  %v8742 = vmul.f32 %v730, %v8735
  %v8743 = vmul.f32 %v734, %v8730
  %v8744 = vmul.f32 %v734, %v8735
  %v8745 = vmul.f32 %v738, %v8730
  %v8746 = vmul.f32 %v738, %v8735
  %v8747 = vmul.f32 %v742, %v8730
  %v8748 = vmul.f32 %v742, %v8735
  %v8749 = vmul.f32 %v746, %v8730
  %v8750 = vmul.f32 %v746, %v8735
  %v8751 = vmul.f32 %v750, %v8730
  %v8752 = vmul.f32 %v750, %v8735
  %v8753 = vmul.f32 %v754, %v8730
  %v8754 = vmul.f32 %v754, %v8735
  %v8755 = vmul.f32 %v758, %v8730
  %v8756 = vmul.f32 %v758, %v8735
  %v8757 = vmul.f32 %v762, %v8730
  %v8758 = vmul.f32 %v762, %v8735
  %v8759 = vmul.f32 %v766, %v8730
  %v8760 = vmul.f32 %v766, %v8735
  %v8761 = vmul.f32 %v770, %v8730
  %v8762 = vmul.f32 %v770, %v8735
  %v8763 = vmul.f32 %v774, %v8730
  %v8764 = vmul.f32 %v774, %v8735
  %v8765 = vmul.f32 %v778, %v8730
  %v8766 = vmul.f32 %v778, %v8735
  %v8767 = vmul.f32 %v782, %v8730
  %v8768 = vmul.f32 %v782, %v8735
  %v8769 = vmul.f32 %v786, %v8730
  %v8770 = vmul.f32 %v786, %v8735
  %v8771 = vmul.f32 %v790, %v8730
  %v8772 = vmul.f32 %v790, %v8735
  %v8773 = vmul.f32 %v2123, %v8730
  %v8774 = vmul.f32 %v2123, %v8735
  %v8775 = vmul.f32 %v3079, %v8730
  %v8776 = vmul.f32 %v3079, %v8735
  %v8777 = vmul.f32 %v802, %v8730
  %v8778 = vmul.f32 %v802, %v8735
  %v8779 = vmul.f32 %v806, %v8730
  %v8780 = vmul.f32 %v806, %v8735
  %v8781 = vmul.f32 %v810, %v8730
  %v8782 = vmul.f32 %v810, %v8735
  %v8783 = vmul.f32 %v814, %v8730
  %v8784 = vmul.f32 %v814, %v8735
  %v8785 = vmul.f32 %v818, %v8730
  %v8786 = vmul.f32 %v818, %v8735
  %v8787 = vmul.f32 %v822, %v8730
  %v8788 = vmul.f32 %v822, %v8735
  %v8789 = vmul.f32 %v826, %v8730
  %v8790 = vmul.f32 %v826, %v8735
  %v8791 = vmul.f32 %v830, %v8730
  %v8792 = vmul.f32 %v830, %v8735
  %v8793 = vmul.f32 %v834, %v8730
  %v8794 = vmul.f32 %v834, %v8735
  %v8795 = vmul.f32 %v838, %v8730
  %v8796 = vmul.f32 %v838, %v8735
  %v8797 = vmul.f32 %v842, %v8730
  %v8798 = vmul.f32 %v842, %v8735
  %v8799 = vmul.f32 %v846, %v8730
  %v8800 = vmul.f32 %v846, %v8735
  %v8801 = vmul.f32 %v850, %v8730
  %v8802 = vmul.f32 %v850, %v8735
  %v8803 = vmul.f32 %v854, %v8730
  %v8804 = vmul.f32 %v854, %v8735
  %v8805 = vmul.f32 %v858, %v8730
  %v8806 = vmul.f32 %v858, %v8735
  %v8807 = vmul.f32 %v862, %v8730
  %v8808 = vmul.f32 %v862, %v8735
  %v8809 = vmul.f32 %v866, %v8730
  %v8810 = vmul.f32 %v866, %v8735
  %v8811 = vmul.f32 %v870, %v8730
  %v8812 = vmul.f32 %v870, %v8735
  %v8813 = vmul.f32 %v2127, %v8730
  %v8814 = vmul.f32 %v2127, %v8735
  %v8815 = vmul.f32 %v3083, %v8730
  %v8816 = vmul.f32 %v3083, %v8735
  %v8817 = vmul.f32 %v882, %v8730
  %v8818 = vmul.f32 %v882, %v8735
  %v8819 = vmul.f32 %v886, %v8730
  %v8820 = vmul.f32 %v886, %v8735
  %v8821 = vmul.f32 %v890, %v8730
  %v8822 = vmul.f32 %v890, %v8735
  %v8823 = vmul.f32 %v894, %v8730
  %v8824 = vmul.f32 %v894, %v8735
  %v8825 = vmul.f32 %v898, %v8730
  %v8826 = vmul.f32 %v898, %v8735
  %v8827 = vmul.f32 %v902, %v8730
  %v8828 = vmul.f32 %v902, %v8735
  %v8829 = vmul.f32 %v906, %v8730
  %v8830 = vmul.f32 %v906, %v8735
  %v8831 = vmul.f32 %v910, %v8730
  %v8832 = vmul.f32 %v910, %v8735
  %v8833 = vmul.f32 %v914, %v8730
  %v8834 = vmul.f32 %v914, %v8735
  %v8835 = vmul.f32 %v918, %v8730
  %v8836 = vmul.f32 %v918, %v8735
  %v8837 = vmul.f32 %v922, %v8730
  %v8838 = vmul.f32 %v922, %v8735
  %v8839 = vmul.f32 %v926, %v8730
  %v8840 = vmul.f32 %v926, %v8735
  %v8841 = vmul.f32 %v930, %v8730
  %v8842 = vmul.f32 %v930, %v8735
  %v8843 = vmul.f32 %v934, %v8730
  %v8844 = vmul.f32 %v934, %v8735
  %v8845 = vmul.f32 %v938, %v8730
  %v8846 = vmul.f32 %v938, %v8735
  %v8847 = vmul.f32 %v942, %v8730
  %v8848 = vmul.f32 %v942, %v8735
  %v8849 = vmul.f32 %v946, %v8730
  %v8850 = vmul.f32 %v946, %v8735
  %v8851 = vmul.f32 %v950, %v8730
  %v8852 = vmul.f32 %v950, %v8735
  %v8853 = vmul.f32 %v2131, %v8730
  %v8854 = vmul.f32 %v2131, %v8735
  %v8855 = vmul.f32 %v3087, %v8730
  %v8856 = vmul.f32 %v3087, %v8735
  %v8857 = vmul.f32 %v962, %v8730
  %v8858 = vmul.f32 %v962, %v8735
  %v8859 = vmul.f32 %v966, %v8730
  %v8860 = vmul.f32 %v966, %v8735
  %v8861 = vmul.f32 %v970, %v8730
  %v8862 = vmul.f32 %v970, %v8735
  %v8863 = vmul.f32 %v974, %v8730
  %v8864 = vmul.f32 %v974, %v8735
  %v8865 = vmul.f32 %v978, %v8730
  %v8866 = vmul.f32 %v978, %v8735
  %v8867 = vmul.f32 %v982, %v8730
  %v8868 = vmul.f32 %v982, %v8735
  %v8869 = vmul.f32 %v986, %v8730
  %v8870 = vmul.f32 %v986, %v8735
  %v8871 = vmul.f32 %v990, %v8730
  %v8872 = vmul.f32 %v990, %v8735
  %v8873 = vmul.f32 %v994, %v8730
  %v8874 = vmul.f32 %v994, %v8735
  %v8875 = vmul.f32 %v998, %v8730
  %v8876 = vmul.f32 %v998, %v8735
  %v8877 = vmul.f32 %v1002, %v8730
  %v8878 = vmul.f32 %v1002, %v8735
  %v8879 = vmul.f32 %v1006, %v8730
  %v8880 = vmul.f32 %v1006, %v8735
  %v8881 = vmul.f32 %v1010, %v8730
  %v8882 = vmul.f32 %v1010, %v8735
  %v8883 = vmul.f32 %v1014, %v8730
  %v8884 = vmul.f32 %v1014, %v8735
  %v8885 = vmul.f32 %v1018, %v8730
  %v8886 = vmul.f32 %v1018, %v8735
  %v8887 = vmul.f32 %v1022, %v8730
  %v8888 = vmul.f32 %v1022, %v8735
  %v8889 = vmul.f32 %v1026, %v8730
  %v8890 = vmul.f32 %v1026, %v8735
  %v8891 = vmul.f32 %v1030, %v8730
  %v8892 = vmul.f32 %v1030, %v8735
  %v8893 = vmul.f32 %v2135, %v8730
  %v8894 = vmul.f32 %v2135, %v8735
  %v8895 = vmul.f32 %v3091, %v8730
  %v8896 = vmul.f32 %v3091, %v8735
  %v8897 = vmul.f32 %v1042, %v8730
  %v8898 = vmul.f32 %v1042, %v8735
  %v8899 = vmul.f32 %v1046, %v8730
  %v8900 = vmul.f32 %v1046, %v8735
  %v8901 = vmul.f32 %v1050, %v8730
  %v8902 = vmul.f32 %v1050, %v8735
  %v8903 = vmul.f32 %v1054, %v8730
  %v8904 = vmul.f32 %v1054, %v8735
  %v8905 = vmul.f32 %v1058, %v8730
  %v8906 = vmul.f32 %v1058, %v8735
  %v8907 = vmul.f32 %v1062, %v8730
  %v8908 = vmul.f32 %v1062, %v8735
  %v8909 = vmul.f32 %v1066, %v8730
  %v8910 = vmul.f32 %v1066, %v8735
  %v8911 = vmul.f32 %v1070, %v8730
  %v8912 = vmul.f32 %v1070, %v8735
  %v8913 = vmul.f32 %v1074, %v8730
  %v8914 = vmul.f32 %v1074, %v8735
  %v8915 = vmul.f32 %v1078, %v8730
  %v8916 = vmul.f32 %v1078, %v8735
  %v8917 = vmul.f32 %v1082, %v8730
  %v8918 = vmul.f32 %v1082, %v8735
  %v8919 = vmul.f32 %v1086, %v8730
  %v8920 = vmul.f32 %v1086, %v8735
  %v8921 = vmul.f32 %v1090, %v8730
  %v8922 = vmul.f32 %v1090, %v8735
  %v8923 = vmul.f32 %v1094, %v8730
  %v8924 = vmul.f32 %v1094, %v8735
  %v8925 = vmul.f32 %v1098, %v8730
  %v8926 = vmul.f32 %v1098, %v8735
  %v8927 = vmul.f32 %v1102, %v8730
  %v8928 = vmul.f32 %v1102, %v8735
  %v8929 = vmul.f32 %v1106, %v8730
  %v8930 = vmul.f32 %v1106, %v8735
  %v8931 = vmul.f32 %v1110, %v8730
  %v8932 = vmul.f32 %v1110, %v8735
  %v8933 = vmul.f32 %v2139, %v8730
  %v8934 = vmul.f32 %v2139, %v8735
  %v8935 = vmul.f32 %v3095, %v8730
  %v8936 = vmul.f32 %v3095, %v8735
  %v8937 = vmul.f32 %v1122, %v8730
  %v8938 = vmul.f32 %v1122, %v8735
  %v8939 = vmul.f32 %v1126, %v8730
  %v8940 = vmul.f32 %v1126, %v8735
  %v8941 = vmul.f32 %v1130, %v8730
  %v8942 = vmul.f32 %v1130, %v8735
  %v8943 = vmul.f32 %v1134, %v8730
  %v8944 = vmul.f32 %v1134, %v8735
  %v8945 = vmul.f32 %v1138, %v8730
  %v8946 = vmul.f32 %v1138, %v8735
  %v8947 = vmul.f32 %v1142, %v8730
  %v8948 = vmul.f32 %v1142, %v8735
  %v8949 = vmul.f32 %v1146, %v8730
  %v8950 = vmul.f32 %v1146, %v8735
  %v8951 = vmul.f32 %v1150, %v8730
  %v8952 = vmul.f32 %v1150, %v8735
  %v8953 = vmul.f32 %v1154, %v8730
  %v8954 = vmul.f32 %v1154, %v8735
  %v8955 = vmul.f32 %v1158, %v8730
  %v8956 = vmul.f32 %v1158, %v8735
  %v8957 = vmul.f32 %v1162, %v8730
  %v8958 = vmul.f32 %v1162, %v8735
  %v8959 = vmul.f32 %v1166, %v8730
  %v8960 = vmul.f32 %v1166, %v8735
  %v8961 = vmul.f32 %v1170, %v8730
  %v8962 = vmul.f32 %v1170, %v8735
  %v8963 = vmul.f32 %v1174, %v8730
  %v8964 = vmul.f32 %v1174, %v8735
  %v8965 = vmul.f32 %v1178, %v8730
  %v8966 = vmul.f32 %v1178, %v8735
  %v8967 = vmul.f32 %v1182, %v8730
  %v8968 = vmul.f32 %v1182, %v8735
  %v8969 = vmul.f32 %v1186, %v8730
  %v8970 = vmul.f32 %v1186, %v8735
  %v8971 = vmul.f32 %v1190, %v8730
  %v8972 = vmul.f32 %v1190, %v8735
  %v8973 = vmul.f32 %v2143, %v8730
  %v8974 = vmul.f32 %v2143, %v8735
  %v8975 = vmul.f32 %v3099, %v8730
  %v8976 = vmul.f32 %v3099, %v8735
  %v8977 = vmul.f32 %v1202, %v8730
  %v8978 = vmul.f32 %v1202, %v8735
  %v8979 = vmul.f32 %v1206, %v8730
  %v8980 = vmul.f32 %v1206, %v8735
  %v8981 = vmul.f32 %v1210, %v8730
  %v8982 = vmul.f32 %v1210, %v8735
  %v8983 = vmul.f32 %v1214, %v8730
  %v8984 = vmul.f32 %v1214, %v8735
  %v8985 = vmul.f32 %v1218, %v8730
  %v8986 = vmul.f32 %v1218, %v8735
  %v8987 = vmul.f32 %v1222, %v8730
  %v8988 = vmul.f32 %v1222, %v8735
  %v8989 = vmul.f32 %v1226, %v8730
  %v8990 = vmul.f32 %v1226, %v8735
  %v8991 = vmul.f32 %v1230, %v8730
  %v8992 = vmul.f32 %v1230, %v8735
  %v8993 = vmul.f32 %v1234, %v8730
  %v8994 = vmul.f32 %v1234, %v8735
  %v8995 = vmul.f32 %v1238, %v8730
  %v8996 = vmul.f32 %v1238, %v8735
  %v8997 = vmul.f32 %v1242, %v8730
  %v8998 = vmul.f32 %v1242, %v8735
  %v8999 = vmul.f32 %v1246, %v8730
  %v9000 = vmul.f32 %v1246, %v8735
  %v9001 = vmul.f32 %v1250, %v8730
  %v9002 = vmul.f32 %v1250, %v8735
  %v9003 = vmul.f32 %v1254, %v8730
  %v9004 = vmul.f32 %v1254, %v8735
  %v9005 = vmul.f32 %v1258, %v8730
  %v9006 = vmul.f32 %v1258, %v8735
  %v9007 = vmul.f32 %v1262, %v8730
  %v9008 = vmul.f32 %v1262, %v8735
  %v9009 = vmul.f32 %v1266, %v8730
  %v9010 = vmul.f32 %v1266, %v8735
  %v9011 = vmul.f32 %v1270, %v8730
  %v9012 = vmul.f32 %v1270, %v8735
  %v9013 = vmul.f32 %v2147, %v8730
  %v9014 = vmul.f32 %v2147, %v8735
  %v9015 = vmul.f32 %v3103, %v8730
  %v9016 = vmul.f32 %v3103, %v8735
  %v9017 = vmul.f32 %v1282, %v8730
  %v9018 = vmul.f32 %v1282, %v8735
  %v9019 = vmul.f32 %v1286, %v8730
  %v9020 = vmul.f32 %v1286, %v8735
  %v9021 = vmul.f32 %v1290, %v8730
  %v9022 = vmul.f32 %v1290, %v8735
  %v9023 = vmul.f32 %v1294, %v8730
  %v9024 = vmul.f32 %v1294, %v8735
  %v9025 = vmul.f32 %v1298, %v8730
  %v9026 = vmul.f32 %v1298, %v8735
  %v9027 = vmul.f32 %v1302, %v8730
  %v9028 = vmul.f32 %v1302, %v8735
  %v9029 = vmul.f32 %v1306, %v8730
  %v9030 = vmul.f32 %v1306, %v8735
  %v9031 = vmul.f32 %v1310, %v8730
  %v9032 = vmul.f32 %v1310, %v8735
  %v9033 = vmul.f32 %v1314, %v8730
  %v9034 = vmul.f32 %v1314, %v8735
  %v9035 = vmul.f32 %v1318, %v8730
  %v9036 = vmul.f32 %v1318, %v8735
  %v9037 = vmul.f32 %v1322, %v8730
  %v9038 = vmul.f32 %v1322, %v8735
  %v9039 = vmul.f32 %v1326, %v8730
  %v9040 = vmul.f32 %v1326, %v8735
  %v9041 = vmul.f32 %v1330, %v8730
  %v9042 = vmul.f32 %v1330, %v8735
  %v9043 = vmul.f32 %v1334, %v8730
  %v9044 = vmul.f32 %v1334, %v8735
  %v9045 = vmul.f32 %v1338, %v8730
  %v9046 = vmul.f32 %v1338, %v8735
  %v9047 = vmul.f32 %v1342, %v8730
  %v9048 = vmul.f32 %v1342, %v8735
  %v9049 = vmul.f32 %v1346, %v8730
  %v9050 = vmul.f32 %v1346, %v8735
  %v9051 = vmul.f32 %v1350, %v8730
  %v9052 = vmul.f32 %v1350, %v8735
  %v9053 = vmul.f32 %v2151, %v8730
  %v9054 = vmul.f32 %v2151, %v8735
  %v9055 = vmul.f32 %v3107, %v8730
  %v9056 = vmul.f32 %v3107, %v8735
  %v9057 = vmul.f32 %v1362, %v8730
  %v9058 = vmul.f32 %v1362, %v8735
  %v9059 = vmul.f32 %v1366, %v8730
  %v9060 = vmul.f32 %v1366, %v8735
  %v9061 = vmul.f32 %v1370, %v8730
  %v9062 = vmul.f32 %v1370, %v8735
  %v9063 = vmul.f32 %v1374, %v8730
  %v9064 = vmul.f32 %v1374, %v8735
  %v9065 = vmul.f32 %v1378, %v8730
  %v9066 = vmul.f32 %v1378, %v8735
  %v9067 = vmul.f32 %v1382, %v8730
  %v9068 = vmul.f32 %v1382, %v8735
  %v9069 = vmul.f32 %v1386, %v8730
  %v9070 = vmul.f32 %v1386, %v8735
  %v9071 = vmul.f32 %v1390, %v8730
  %v9072 = vmul.f32 %v1390, %v8735
  %v9073 = vmul.f32 %v1394, %v8730
  %v9074 = vmul.f32 %v1394, %v8735
  %v9075 = vmul.f32 %v1398, %v8730
  %v9076 = vmul.f32 %v1398, %v8735
  %v9077 = vmul.f32 %v1402, %v8730
  %v9078 = vmul.f32 %v1402, %v8735
  %v9079 = vmul.f32 %v1406, %v8730
  %v9080 = vmul.f32 %v1406, %v8735
  %v9081 = vmul.f32 %v1410, %v8730
  %v9082 = vmul.f32 %v1410, %v8735
  %v9083 = vmul.f32 %v1414, %v8730
  %v9084 = vmul.f32 %v1414, %v8735
  %v9085 = vmul.f32 %v1418, %v8730
  %v9086 = vmul.f32 %v1418, %v8735
  %v9087 = vmul.f32 %v1422, %v8730
  %v9088 = vmul.f32 %v1422, %v8735
  %v9089 = vmul.f32 %v1426, %v8730
  %v9090 = vmul.f32 %v1426, %v8735
  %v9091 = vmul.f32 %v1430, %v8730
  %v9092 = vmul.f32 %v1430, %v8735
  %v9093 = vmul.f32 %v2155, %v8730
  %v9094 = vmul.f32 %v2155, %v8735
  %v9095 = vmul.f32 %v3111, %v8730
  %v9096 = vmul.f32 %v3111, %v8735
  %v9097 = vmul.f32 %v4044, %v8730
  %v9098 = vmul.f32 %v4044, %v8735
  %v9099 = vmul.f32 %v4048, %v8730
  %v9100 = vmul.f32 %v4048, %v8735
  %v9101 = vmul.f32 %v4052, %v8730
  %v9102 = vmul.f32 %v4052, %v8735
  %v9103 = vmul.f32 %v4056, %v8730
  %v9104 = vmul.f32 %v4056, %v8735
  %v9105 = vmul.f32 %v4060, %v8730
  %v9106 = vmul.f32 %v4060, %v8735
  %v9107 = vmul.f32 %v4064, %v8730
  %v9108 = vmul.f32 %v4064, %v8735
  %v9109 = vmul.f32 %v4068, %v8730
  %v9110 = vmul.f32 %v4068, %v8735
  %v9111 = vmul.f32 %v4072, %v8730
  %v9112 = vmul.f32 %v4072, %v8735
  %v9113 = vmul.f32 %v4076, %v8730
  %v9114 = vmul.f32 %v4076, %v8735
  %v9115 = vmul.f32 %v4080, %v8730
  %v9116 = vmul.f32 %v4080, %v8735
  %v9117 = vmul.f32 %v4084, %v8730
  %v9118 = vmul.f32 %v4084, %v8735
  %v9119 = vmul.f32 %v4088, %v8730
  %v9120 = vmul.f32 %v4088, %v8735
  %v9121 = vmul.f32 %v4092, %v8730
  %v9122 = vmul.f32 %v4092, %v8735
  %v9123 = vmul.f32 %v4096, %v8730
  %v9124 = vmul.f32 %v4096, %v8735
  %v9125 = vmul.f32 %v4100, %v8730
  %v9126 = vmul.f32 %v4100, %v8735
  %v9127 = vmul.f32 %v4104, %v8730
  %v9128 = vmul.f32 %v4104, %v8735
  %v9129 = vmul.f32 %v4108, %v8730
  %v9130 = vmul.f32 %v4108, %v8735
  %v9131 = vmul.f32 %v4112, %v8730
  %v9132 = vmul.f32 %v4112, %v8735
  %v9133 = vmul.f32 %v5027, %v8730
  %v9134 = vmul.f32 %v5027, %v8735
  %v9135 = vmul.f32 %v5923, %v8730
  %v9136 = vmul.f32 %v5923, %v8735
  %v9137 = vmul.f32 %v6846, %v8730
  %v9138 = vmul.f32 %v6846, %v8735
  %v9139 = vmul.f32 %v6850, %v8730
  %v9140 = vmul.f32 %v6850, %v8735
  %v9141 = vmul.f32 %v6854, %v8730
  %v9142 = vmul.f32 %v6854, %v8735
  %v9143 = vmul.f32 %v6858, %v8730
  %v9144 = vmul.f32 %v6858, %v8735
  %v9145 = vmul.f32 %v6862, %v8730
  %v9146 = vmul.f32 %v6862, %v8735
  %v9147 = vmul.f32 %v6866, %v8730
  %v9148 = vmul.f32 %v6866, %v8735
  %v9149 = vmul.f32 %v6870, %v8730
  %v9150 = vmul.f32 %v6870, %v8735
  %v9151 = vmul.f32 %v6874, %v8730
  %v9152 = vmul.f32 %v6874, %v8735
  %v9153 = vmul.f32 %v6878, %v8730
  %v9154 = vmul.f32 %v6878, %v8735
  %v9155 = vmul.f32 %v6882, %v8730
  %v9156 = vmul.f32 %v6882, %v8735
  %v9157 = vmul.f32 %v6886, %v8730
  %v9158 = vmul.f32 %v6886, %v8735
  %v9159 = vmul.f32 %v6890, %v8730
  %v9160 = vmul.f32 %v6890, %v8735
  %v9161 = vmul.f32 %v6894, %v8730
  %v9162 = vmul.f32 %v6894, %v8735
  %v9163 = vmul.f32 %v6898, %v8730
  %v9164 = vmul.f32 %v6898, %v8735
  %v9165 = vmul.f32 %v6902, %v8730
  %v9166 = vmul.f32 %v6902, %v8735
  %v9167 = vmul.f32 %v6906, %v8730
  %v9168 = vmul.f32 %v6906, %v8735
  %v9169 = vmul.f32 %v6910, %v8730
  %v9170 = vmul.f32 %v6910, %v8735
  %v9171 = vmul.f32 %v6914, %v8730
  %v9172 = vmul.f32 %v6914, %v8735
  %v9173 = vmul.f32 %v7829, %v8730
  %v9174 = vmul.f32 %v7829, %v8735
  %v9175 = vmul.f32 %v8725, %v8730
  %v9176 = vmul.f32 %v8725, %v8735
  %v9177 = vadd.f32 %v8281, %v8737
  %v9178 = vadd.f32 %v8282, %v8738
  %v9179 = vadd.f32 %v8283, %v8739
  %v9180 = vadd.f32 %v8284, %v8740
  %v9181 = vadd.f32 %v8285, %v8741
  %v9182 = vadd.f32 %v8286, %v8742
  %v9183 = vadd.f32 %v8287, %v8743
  %v9184 = vadd.f32 %v8288, %v8744
  %v9185 = vadd.f32 %v8289, %v8745
  %v9186 = vadd.f32 %v8290, %v8746
  %v9187 = vadd.f32 %v8291, %v8747
  %v9188 = vadd.f32 %v8292, %v8748
  %v9189 = vadd.f32 %v8293, %v8749
  %v9190 = vadd.f32 %v8294, %v8750
  %v9191 = vadd.f32 %v8295, %v8751
  %v9192 = vadd.f32 %v8296, %v8752
  %v9193 = vadd.f32 %v8297, %v8753
  %v9194 = vadd.f32 %v8298, %v8754
  %v9195 = vadd.f32 %v8299, %v8755
  %v9196 = vadd.f32 %v8300, %v8756
  %v9197 = vadd.f32 %v8301, %v8757
  %v9198 = vadd.f32 %v8302, %v8758
  %v9199 = vadd.f32 %v8303, %v8759
  %v9200 = vadd.f32 %v8304, %v8760
  %v9201 = vadd.f32 %v8305, %v8761
  %v9202 = vadd.f32 %v8306, %v8762
  %v9203 = vadd.f32 %v8307, %v8763
  %v9204 = vadd.f32 %v8308, %v8764
  %v9205 = vadd.f32 %v8309, %v8765
  %v9206 = vadd.f32 %v8310, %v8766
  %v9207 = vadd.f32 %v8311, %v8767
  %v9208 = vadd.f32 %v8312, %v8768
  %v9209 = vadd.f32 %v8313, %v8769
  %v9210 = vadd.f32 %v8314, %v8770
  %v9211 = vadd.f32 %v8315, %v8771
  %v9212 = vadd.f32 %v8316, %v8772
  %v9213 = vadd.f32 %v8317, %v8773
  %v9214 = vadd.f32 %v8318, %v8774
  %v9215 = vadd.f32 %v8319, %v8775
  %v9216 = vadd.f32 %v8320, %v8776
  %v9217 = vadd.f32 %v8321, %v8777
  %v9218 = vadd.f32 %v8322, %v8778
  %v9219 = vadd.f32 %v8323, %v8779
  %v9220 = vadd.f32 %v8324, %v8780
  %v9221 = vadd.f32 %v8325, %v8781
  %v9222 = vadd.f32 %v8326, %v8782
  %v9223 = vadd.f32 %v8327, %v8783
  %v9224 = vadd.f32 %v8328, %v8784
  %v9225 = vadd.f32 %v8329, %v8785
  %v9226 = vadd.f32 %v8330, %v8786
  %v9227 = vadd.f32 %v8331, %v8787
  %v9228 = vadd.f32 %v8332, %v8788
  %v9229 = vadd.f32 %v8333, %v8789
  %v9230 = vadd.f32 %v8334, %v8790
  %v9231 = vadd.f32 %v8335, %v8791
  %v9232 = vadd.f32 %v8336, %v8792
  %v9233 = vadd.f32 %v8337, %v8793
  %v9234 = vadd.f32 %v8338, %v8794
  %v9235 = vadd.f32 %v8339, %v8795
  %v9236 = vadd.f32 %v8340, %v8796
  %v9237 = vadd.f32 %v8341, %v8797
  %v9238 = vadd.f32 %v8342, %v8798
  %v9239 = vadd.f32 %v8343, %v8799
  %v9240 = vadd.f32 %v8344, %v8800
  %v9241 = vadd.f32 %v8345, %v8801
  %v9242 = vadd.f32 %v8346, %v8802
  %v9243 = vadd.f32 %v8347, %v8803
  %v9244 = vadd.f32 %v8348, %v8804
  %v9245 = vadd.f32 %v8349, %v8805
  %v9246 = vadd.f32 %v8350, %v8806
  %v9247 = vadd.f32 %v8351, %v8807
  %v9248 = vadd.f32 %v8352, %v8808
  %v9249 = vadd.f32 %v8353, %v8809
  %v9250 = vadd.f32 %v8354, %v8810
  %v9251 = vadd.f32 %v8355, %v8811
  %v9252 = vadd.f32 %v8356, %v8812
  %v9253 = vadd.f32 %v8357, %v8813
  %v9254 = vadd.f32 %v8358, %v8814
  %v9255 = vadd.f32 %v8359, %v8815
  %v9256 = vadd.f32 %v8360, %v8816
  %v9257 = vadd.f32 %v8361, %v8817
  %v9258 = vadd.f32 %v8362, %v8818
  %v9259 = vadd.f32 %v8363, %v8819
  %v9260 = vadd.f32 %v8364, %v8820
  %v9261 = vadd.f32 %v8365, %v8821
  %v9262 = vadd.f32 %v8366, %v8822
  %v9263 = vadd.f32 %v8367, %v8823
  %v9264 = vadd.f32 %v8368, %v8824
  %v9265 = vadd.f32 %v8369, %v8825
  %v9266 = vadd.f32 %v8370, %v8826
  %v9267 = vadd.f32 %v8371, %v8827
  %v9268 = vadd.f32 %v8372, %v8828
  %v9269 = vadd.f32 %v8373, %v8829
  %v9270 = vadd.f32 %v8374, %v8830
  %v9271 = vadd.f32 %v8375, %v8831
  %v9272 = vadd.f32 %v8376, %v8832
  %v9273 = vadd.f32 %v8377, %v8833
  %v9274 = vadd.f32 %v8378, %v8834
  %v9275 = vadd.f32 %v8379, %v8835
  %v9276 = vadd.f32 %v8380, %v8836
  %v9277 = vadd.f32 %v8381, %v8837
  %v9278 = vadd.f32 %v8382, %v8838
  %v9279 = vadd.f32 %v8383, %v8839
  %v9280 = vadd.f32 %v8384, %v8840
  %v9281 = vadd.f32 %v8385, %v8841
  %v9282 = vadd.f32 %v8386, %v8842
  %v9283 = vadd.f32 %v8387, %v8843
  %v9284 = vadd.f32 %v8388, %v8844
  %v9285 = vadd.f32 %v8389, %v8845
  %v9286 = vadd.f32 %v8390, %v8846
  %v9287 = vadd.f32 %v8391, %v8847
  %v9288 = vadd.f32 %v8392, %v8848
  %v9289 = vadd.f32 %v8393, %v8849
  %v9290 = vadd.f32 %v8394, %v8850
  %v9291 = vadd.f32 %v8395, %v8851
  %v9292 = vadd.f32 %v8396, %v8852
  %v9293 = vadd.f32 %v8397, %v8853
  %v9294 = vadd.f32 %v8398, %v8854
  %v9295 = vadd.f32 %v8399, %v8855
  %v9296 = vadd.f32 %v8400, %v8856
  %v9297 = vadd.f32 %v8401, %v8857
  %v9298 = vadd.f32 %v8402, %v8858
  %v9299 = vadd.f32 %v8403, %v8859
  %v9300 = vadd.f32 %v8404, %v8860
  %v9301 = vadd.f32 %v8405, %v8861
  %v9302 = vadd.f32 %v8406, %v8862
  %v9303 = vadd.f32 %v8407, %v8863
  %v9304 = vadd.f32 %v8408, %v8864
  %v9305 = vadd.f32 %v8409, %v8865
  %v9306 = vadd.f32 %v8410, %v8866
  %v9307 = vadd.f32 %v8411, %v8867
  %v9308 = vadd.f32 %v8412, %v8868
  %v9309 = vadd.f32 %v8413, %v8869
  %v9310 = vadd.f32 %v8414, %v8870
  %v9311 = vadd.f32 %v8415, %v8871
  %v9312 = vadd.f32 %v8416, %v8872
  %v9313 = vadd.f32 %v8417, %v8873
  %v9314 = vadd.f32 %v8418, %v8874
  %v9315 = vadd.f32 %v8419, %v8875
  %v9316 = vadd.f32 %v8420, %v8876
  %v9317 = vadd.f32 %v8421, %v8877
  %v9318 = vadd.f32 %v8422, %v8878
  %v9319 = vadd.f32 %v8423, %v8879
  %v9320 = vadd.f32 %v8424, %v8880
  %v9321 = vadd.f32 %v8425, %v8881
  %v9322 = vadd.f32 %v8426, %v8882
  %v9323 = vadd.f32 %v8427, %v8883
  %v9324 = vadd.f32 %v8428, %v8884
  %v9325 = vadd.f32 %v8429, %v8885
  %v9326 = vadd.f32 %v8430, %v8886
  %v9327 = vadd.f32 %v8431, %v8887
  %v9328 = vadd.f32 %v8432, %v8888
  %v9329 = vadd.f32 %v8433, %v8889
  %v9330 = vadd.f32 %v8434, %v8890
  %v9331 = vadd.f32 %v8435, %v8891
  %v9332 = vadd.f32 %v8436, %v8892
  %v9333 = vadd.f32 %v8437, %v8893
  %v9334 = vadd.f32 %v8438, %v8894
  %v9335 = vadd.f32 %v8439, %v8895
  %v9336 = vadd.f32 %v8440, %v8896
  %v9337 = vadd.f32 %v8441, %v8897
  %v9338 = vadd.f32 %v8442, %v8898
  %v9339 = vadd.f32 %v8443, %v8899
  %v9340 = vadd.f32 %v8444, %v8900
  %v9341 = vadd.f32 %v8445, %v8901
  %v9342 = vadd.f32 %v8446, %v8902
  %v9343 = vadd.f32 %v8447, %v8903
  %v9344 = vadd.f32 %v8448, %v8904
  %v9345 = vadd.f32 %v8449, %v8905
  %v9346 = vadd.f32 %v8450, %v8906
  %v9347 = vadd.f32 %v8451, %v8907
  %v9348 = vadd.f32 %v8452, %v8908
  %v9349 = vadd.f32 %v8453, %v8909
  %v9350 = vadd.f32 %v8454, %v8910
  %v9351 = vadd.f32 %v8455, %v8911
  %v9352 = vadd.f32 %v8456, %v8912
  %v9353 = vadd.f32 %v8457, %v8913
  %v9354 = vadd.f32 %v8458, %v8914
  %v9355 = vadd.f32 %v8459, %v8915
  %v9356 = vadd.f32 %v8460, %v8916
  %v9357 = vadd.f32 %v8461, %v8917
  %v9358 = vadd.f32 %v8462, %v8918
  %v9359 = vadd.f32 %v8463, %v8919
  %v9360 = vadd.f32 %v8464, %v8920
  %v9361 = vadd.f32 %v8465, %v8921
  %v9362 = vadd.f32 %v8466, %v8922
  %v9363 = vadd.f32 %v8467, %v8923
  %v9364 = vadd.f32 %v8468, %v8924
  %v9365 = vadd.f32 %v8469, %v8925
  %v9366 = vadd.f32 %v8470, %v8926
  %v9367 = vadd.f32 %v8471, %v8927
  %v9368 = vadd.f32 %v8472, %v8928
  %v9369 = vadd.f32 %v8473, %v8929
  %v9370 = vadd.f32 %v8474, %v8930
  %v9371 = vadd.f32 %v8475, %v8931
  %v9372 = vadd.f32 %v8476, %v8932
  %v9373 = vadd.f32 %v8477, %v8933
  %v9374 = vadd.f32 %v8478, %v8934
  %v9375 = vadd.f32 %v8479, %v8935
  %v9376 = vadd.f32 %v8480, %v8936
  %v9377 = vadd.f32 %v8481, %v8937
  %v9378 = vadd.f32 %v8482, %v8938
  %v9379 = vadd.f32 %v8483, %v8939
  %v9380 = vadd.f32 %v8484, %v8940
  %v9381 = vadd.f32 %v8485, %v8941
  %v9382 = vadd.f32 %v8486, %v8942
  %v9383 = vadd.f32 %v8487, %v8943
  %v9384 = vadd.f32 %v8488, %v8944
  %v9385 = vadd.f32 %v8489, %v8945
  %v9386 = vadd.f32 %v8490, %v8946
  %v9387 = vadd.f32 %v8491, %v8947
  %v9388 = vadd.f32 %v8492, %v8948
  %v9389 = vadd.f32 %v8493, %v8949
  %v9390 = vadd.f32 %v8494, %v8950
  %v9391 = vadd.f32 %v8495, %v8951
  %v9392 = vadd.f32 %v8496, %v8952
  %v9393 = vadd.f32 %v8497, %v8953
  %v9394 = vadd.f32 %v8498, %v8954
  %v9395 = vadd.f32 %v8499, %v8955
  %v9396 = vadd.f32 %v8500, %v8956
  %v9397 = vadd.f32 %v8501, %v8957
  %v9398 = vadd.f32 %v8502, %v8958
  %v9399 = vadd.f32 %v8503, %v8959
  %v9400 = vadd.f32 %v8504, %v8960
  %v9401 = vadd.f32 %v8505, %v8961
  %v9402 = vadd.f32 %v8506, %v8962
  %v9403 = vadd.f32 %v8507, %v8963
  %v9404 = vadd.f32 %v8508, %v8964
  %v9405 = vadd.f32 %v8509, %v8965
  %v9406 = vadd.f32 %v8510, %v8966
  %v9407 = vadd.f32 %v8511, %v8967
  %v9408 = vadd.f32 %v8512, %v8968
  %v9409 = vadd.f32 %v8513, %v8969
  %v9410 = vadd.f32 %v8514, %v8970
  %v9411 = vadd.f32 %v8515, %v8971
  %v9412 = vadd.f32 %v8516, %v8972
  %v9413 = vadd.f32 %v8517, %v8973
  %v9414 = vadd.f32 %v8518, %v8974
  %v9415 = vadd.f32 %v8519, %v8975
  %v9416 = vadd.f32 %v8520, %v8976
  %v9417 = vadd.f32 %v8521, %v8977
  %v9418 = vadd.f32 %v8522, %v8978
  %v9419 = vadd.f32 %v8523, %v8979
  %v9420 = vadd.f32 %v8524, %v8980
  %v9421 = vadd.f32 %v8525, %v8981
  %v9422 = vadd.f32 %v8526, %v8982
  %v9423 = vadd.f32 %v8527, %v8983
  %v9424 = vadd.f32 %v8528, %v8984
  %v9425 = vadd.f32 %v8529, %v8985
  %v9426 = vadd.f32 %v8530, %v8986
  %v9427 = vadd.f32 %v8531, %v8987
  %v9428 = vadd.f32 %v8532, %v8988
  %v9429 = vadd.f32 %v8533, %v8989
  %v9430 = vadd.f32 %v8534, %v8990
  %v9431 = vadd.f32 %v8535, %v8991
  %v9432 = vadd.f32 %v8536, %v8992
  %v9433 = vadd.f32 %v8537, %v8993
  %v9434 = vadd.f32 %v8538, %v8994
  %v9435 = vadd.f32 %v8539, %v8995
  %v9436 = vadd.f32 %v8540, %v8996
  %v9437 = vadd.f32 %v8541, %v8997
  %v9438 = vadd.f32 %v8542, %v8998
  %v9439 = vadd.f32 %v8543, %v8999
  %v9440 = vadd.f32 %v8544, %v9000
  %v9441 = vadd.f32 %v8545, %v9001
  %v9442 = vadd.f32 %v8546, %v9002
  %v9443 = vadd.f32 %v8547, %v9003
  %v9444 = vadd.f32 %v8548, %v9004
  %v9445 = vadd.f32 %v8549, %v9005
  %v9446 = vadd.f32 %v8550, %v9006
  %v9447 = vadd.f32 %v8551, %v9007
  %v9448 = vadd.f32 %v8552, %v9008
  %v9449 = vadd.f32 %v8553, %v9009
  %v9450 = vadd.f32 %v8554, %v9010
  %v9451 = vadd.f32 %v8555, %v9011
  %v9452 = vadd.f32 %v8556, %v9012
  %v9453 = vadd.f32 %v8557, %v9013
  %v9454 = vadd.f32 %v8558, %v9014
  %v9455 = vadd.f32 %v8559, %v9015
  %v9456 = vadd.f32 %v8560, %v9016
  %v9457 = vadd.f32 %v8561, %v9017
  %v9458 = vadd.f32 %v8562, %v9018
  %v9459 = vadd.f32 %v8563, %v9019
  %v9460 = vadd.f32 %v8564, %v9020
  %v9461 = vadd.f32 %v8565, %v9021
  %v9462 = vadd.f32 %v8566, %v9022
  %v9463 = vadd.f32 %v8567, %v9023
  %v9464 = vadd.f32 %v8568, %v9024
  %v9465 = vadd.f32 %v8569, %v9025
  %v9466 = vadd.f32 %v8570, %v9026
  %v9467 = vadd.f32 %v8571, %v9027
  %v9468 = vadd.f32 %v8572, %v9028
  %v9469 = vadd.f32 %v8573, %v9029
  %v9470 = vadd.f32 %v8574, %v9030
  %v9471 = vadd.f32 %v8575, %v9031
  %v9472 = vadd.f32 %v8576, %v9032
  %v9473 = vadd.f32 %v8577, %v9033
  %v9474 = vadd.f32 %v8578, %v9034
  %v9475 = vadd.f32 %v8579, %v9035
  %v9476 = vadd.f32 %v8580, %v9036
  %v9477 = vadd.f32 %v8581, %v9037
  %v9478 = vadd.f32 %v8582, %v9038
  %v9479 = vadd.f32 %v8583, %v9039
  %v9480 = vadd.f32 %v8584, %v9040
  %v9481 = vadd.f32 %v8585, %v9041
  %v9482 = vadd.f32 %v8586, %v9042
  %v9483 = vadd.f32 %v8587, %v9043
  %v9484 = vadd.f32 %v8588, %v9044
  %v9485 = vadd.f32 %v8589, %v9045
  %v9486 = vadd.f32 %v8590, %v9046
  %v9487 = vadd.f32 %v8591, %v9047
  %v9488 = vadd.f32 %v8592, %v9048
  %v9489 = vadd.f32 %v8593, %v9049
  %v9490 = vadd.f32 %v8594, %v9050
  %v9491 = vadd.f32 %v8595, %v9051
  %v9492 = vadd.f32 %v8596, %v9052
  %v9493 = vadd.f32 %v8597, %v9053
  %v9494 = vadd.f32 %v8598, %v9054
  %v9495 = vadd.f32 %v8599, %v9055
  %v9496 = vadd.f32 %v8600, %v9056
  %v9497 = vadd.f32 %v8601, %v9057
  %v9498 = vadd.f32 %v8602, %v9058
  %v9499 = vadd.f32 %v8603, %v9059
  %v9500 = vadd.f32 %v8604, %v9060
  %v9501 = vadd.f32 %v8605, %v9061
  %v9502 = vadd.f32 %v8606, %v9062
  %v9503 = vadd.f32 %v8607, %v9063
  %v9504 = vadd.f32 %v8608, %v9064
  %v9505 = vadd.f32 %v8609, %v9065
  %v9506 = vadd.f32 %v8610, %v9066
  %v9507 = vadd.f32 %v8611, %v9067
  %v9508 = vadd.f32 %v8612, %v9068
  %v9509 = vadd.f32 %v8613, %v9069
  %v9510 = vadd.f32 %v8614, %v9070
  %v9511 = vadd.f32 %v8615, %v9071
  %v9512 = vadd.f32 %v8616, %v9072
  %v9513 = vadd.f32 %v8617, %v9073
  %v9514 = vadd.f32 %v8618, %v9074
  %v9515 = vadd.f32 %v8619, %v9075
  %v9516 = vadd.f32 %v8620, %v9076
  %v9517 = vadd.f32 %v8621, %v9077
  %v9518 = vadd.f32 %v8622, %v9078
  %v9519 = vadd.f32 %v8623, %v9079
  %v9520 = vadd.f32 %v8624, %v9080
  %v9521 = vadd.f32 %v8625, %v9081
  %v9522 = vadd.f32 %v8626, %v9082
  %v9523 = vadd.f32 %v8627, %v9083
  %v9524 = vadd.f32 %v8628, %v9084
  %v9525 = vadd.f32 %v8629, %v9085
  %v9526 = vadd.f32 %v8630, %v9086
  %v9527 = vadd.f32 %v8631, %v9087
  %v9528 = vadd.f32 %v8632, %v9088
  %v9529 = vadd.f32 %v8633, %v9089
  %v9530 = vadd.f32 %v8634, %v9090
  %v9531 = vadd.f32 %v8635, %v9091
  %v9532 = vadd.f32 %v8636, %v9092
  %v9533 = vadd.f32 %v8637, %v9093
  %v9534 = vadd.f32 %v8638, %v9094
  %v9535 = vadd.f32 %v8639, %v9095
  %v9536 = vadd.f32 %v8640, %v9096
  %v9537 = vadd.f32 %v8641, %v9097
  %v9538 = vadd.f32 %v8642, %v9098
  %v9539 = vadd.f32 %v8643, %v9099
  %v9540 = vadd.f32 %v8644, %v9100
  %v9541 = vadd.f32 %v8645, %v9101
  %v9542 = vadd.f32 %v8646, %v9102
  %v9543 = vadd.f32 %v8647, %v9103
  %v9544 = vadd.f32 %v8648, %v9104
  %v9545 = vadd.f32 %v8649, %v9105
  %v9546 = vadd.f32 %v8650, %v9106
  %v9547 = vadd.f32 %v8651, %v9107
  %v9548 = vadd.f32 %v8652, %v9108
  %v9549 = vadd.f32 %v8653, %v9109
  %v9550 = vadd.f32 %v8654, %v9110
  %v9551 = vadd.f32 %v8655, %v9111
  %v9552 = vadd.f32 %v8656, %v9112
  %v9553 = vadd.f32 %v8657, %v9113
  %v9554 = vadd.f32 %v8658, %v9114
  %v9555 = vadd.f32 %v8659, %v9115
  %v9556 = vadd.f32 %v8660, %v9116
  %v9557 = vadd.f32 %v8661, %v9117
  %v9558 = vadd.f32 %v8662, %v9118
  %v9559 = vadd.f32 %v8663, %v9119
  %v9560 = vadd.f32 %v8664, %v9120
  %v9561 = vadd.f32 %v8665, %v9121
  %v9562 = vadd.f32 %v8666, %v9122
  %v9563 = vadd.f32 %v8667, %v9123
  %v9564 = vadd.f32 %v8668, %v9124
  %v9565 = vadd.f32 %v8669, %v9125
  %v9566 = vadd.f32 %v8670, %v9126
  %v9567 = vadd.f32 %v8671, %v9127
  %v9568 = vadd.f32 %v8672, %v9128
  %v9569 = vadd.f32 %v8673, %v9129
  %v9570 = vadd.f32 %v8674, %v9130
  %v9571 = vadd.f32 %v8675, %v9131
  %v9572 = vadd.f32 %v8676, %v9132
  %v9573 = vadd.f32 %v8677, %v9133
  %v9574 = vadd.f32 %v8678, %v9134
  %v9575 = vadd.f32 %v8679, %v9135
  %v9576 = vadd.f32 %v8680, %v9136
  %v9577 = vadd.f32 %v8681, %v9137
  %v9578 = vadd.f32 %v8682, %v9138
  %v9579 = vadd.f32 %v8683, %v9139
  %v9580 = vadd.f32 %v8684, %v9140
  %v9581 = vadd.f32 %v8685, %v9141
  %v9582 = vadd.f32 %v8686, %v9142
  %v9583 = vadd.f32 %v8687, %v9143
  %v9584 = vadd.f32 %v8688, %v9144
  %v9585 = vadd.f32 %v8689, %v9145
  %v9586 = vadd.f32 %v8690, %v9146
  %v9587 = vadd.f32 %v8691, %v9147
  %v9588 = vadd.f32 %v8692, %v9148
  %v9589 = vadd.f32 %v8693, %v9149
  %v9590 = vadd.f32 %v8694, %v9150
  %v9591 = vadd.f32 %v8695, %v9151
  %v9592 = vadd.f32 %v8696, %v9152
  %v9593 = vadd.f32 %v8697, %v9153
  %v9594 = vadd.f32 %v8698, %v9154
  %v9595 = vadd.f32 %v8699, %v9155
  %v9596 = vadd.f32 %v8700, %v9156
  %v9597 = vadd.f32 %v8701, %v9157
  %v9598 = vadd.f32 %v8702, %v9158
  %v9599 = vadd.f32 %v8703, %v9159
  %v9600 = vadd.f32 %v8704, %v9160
  %v9601 = vadd.f32 %v8705, %v9161
  %v9602 = vadd.f32 %v8706, %v9162
  %v9603 = vadd.f32 %v8707, %v9163
  %v9604 = vadd.f32 %v8708, %v9164
  %v9605 = vadd.f32 %v8709, %v9165
  %v9606 = vadd.f32 %v8710, %v9166
  %v9607 = vadd.f32 %v8711, %v9167
  %v9608 = vadd.f32 %v8712, %v9168
  %v9609 = vadd.f32 %v8713, %v9169
  %v9610 = vadd.f32 %v8714, %v9170
  %v9611 = vadd.f32 %v8715, %v9171
  %v9612 = vadd.f32 %v8716, %v9172
  %v9613 = vadd.f32 %v8717, %v9173
  %v9614 = vadd.f32 %v8718, %v9174
  %v9615 = vadd.f32 %v8719, %v9175
  %v9616 = vadd.f32 %v8720, %v9176
  %v9617 = vld [vmem:[%s2] sm:$0xff]
  %v9618 = vld [vmem:[%s2 + $0x8] sm:$0xff]
  %9620 = vset.pattern.permute.xlu0 0
  %9621 = vperm.xlu0 %9620, %v9617
  %v9622 = vpop.permute.xlu0 %9621
  %9625 = vset.pattern.permute.xlu0 0
  %9626 = vperm.xlu0 %9625, %v9618
  %v9627 = vpop.permute.xlu0 %9626
  %v9629 = vadd.f32 %v9177, %v9622
  %v9630 = vadd.f32 %v9178, %v9627
  %v9631 = vadd.f32 %v9179, %v9622
  %v9632 = vadd.f32 %v9180, %v9627
  %v9633 = vadd.f32 %v9181, %v9622
  %v9634 = vadd.f32 %v9182, %v9627
  %v9635 = vadd.f32 %v9183, %v9622
  %v9636 = vadd.f32 %v9184, %v9627
  %v9637 = vadd.f32 %v9185, %v9622
  %v9638 = vadd.f32 %v9186, %v9627
  %v9639 = vadd.f32 %v9187, %v9622
  %v9640 = vadd.f32 %v9188, %v9627
  %v9641 = vadd.f32 %v9189, %v9622
  %v9642 = vadd.f32 %v9190, %v9627
  %v9643 = vadd.f32 %v9191, %v9622
  %v9644 = vadd.f32 %v9192, %v9627
  %v9645 = vadd.f32 %v9193, %v9622
  %v9646 = vadd.f32 %v9194, %v9627
  %v9647 = vadd.f32 %v9195, %v9622
  %v9648 = vadd.f32 %v9196, %v9627
  %v9649 = vadd.f32 %v9197, %v9622
  %v9650 = vadd.f32 %v9198, %v9627
  %v9651 = vadd.f32 %v9199, %v9622
  %v9652 = vadd.f32 %v9200, %v9627
  %v9653 = vadd.f32 %v9201, %v9622
  %v9654 = vadd.f32 %v9202, %v9627
  %v9655 = vadd.f32 %v9203, %v9622
  %v9656 = vadd.f32 %v9204, %v9627
  %v9657 = vadd.f32 %v9205, %v9622
  %v9658 = vadd.f32 %v9206, %v9627
  %v9659 = vadd.f32 %v9207, %v9622
  %v9660 = vadd.f32 %v9208, %v9627
  %v9661 = vadd.f32 %v9209, %v9622
  %v9662 = vadd.f32 %v9210, %v9627
  %v9663 = vadd.f32 %v9211, %v9622
  %v9664 = vadd.f32 %v9212, %v9627
  %v9665 = vadd.f32 %v9213, %v9622
  %v9666 = vadd.f32 %v9214, %v9627
  %v9667 = vadd.f32 %v9215, %v9622
  %v9668 = vadd.f32 %v9216, %v9627
  %v9669 = vadd.f32 %v9217, %v9622
  %v9670 = vadd.f32 %v9218, %v9627
  %v9671 = vadd.f32 %v9219, %v9622
  %v9672 = vadd.f32 %v9220, %v9627
  %v9673 = vadd.f32 %v9221, %v9622
  %v9674 = vadd.f32 %v9222, %v9627
  %v9675 = vadd.f32 %v9223, %v9622
  %v9676 = vadd.f32 %v9224, %v9627
  %v9677 = vadd.f32 %v9225, %v9622
  %v9678 = vadd.f32 %v9226, %v9627
  %v9679 = vadd.f32 %v9227, %v9622
  %v9680 = vadd.f32 %v9228, %v9627
  %v9681 = vadd.f32 %v9229, %v9622
  %v9682 = vadd.f32 %v9230, %v9627
  %v9683 = vadd.f32 %v9231, %v9622
  %v9684 = vadd.f32 %v9232, %v9627
  %v9685 = vadd.f32 %v9233, %v9622
  %v9686 = vadd.f32 %v9234, %v9627
  %v9687 = vadd.f32 %v9235, %v9622
  %v9688 = vadd.f32 %v9236, %v9627
  %v9689 = vadd.f32 %v9237, %v9622
  %v9690 = vadd.f32 %v9238, %v9627
  %v9691 = vadd.f32 %v9239, %v9622
  %v9692 = vadd.f32 %v9240, %v9627
  %v9693 = vadd.f32 %v9241, %v9622
  %v9694 = vadd.f32 %v9242, %v9627
  %v9695 = vadd.f32 %v9243, %v9622
  %v9696 = vadd.f32 %v9244, %v9627
  %v9697 = vadd.f32 %v9245, %v9622
  %v9698 = vadd.f32 %v9246, %v9627
  %v9699 = vadd.f32 %v9247, %v9622
  %v9700 = vadd.f32 %v9248, %v9627
  %v9701 = vadd.f32 %v9249, %v9622
  %v9702 = vadd.f32 %v9250, %v9627
  %v9703 = vadd.f32 %v9251, %v9622
  %v9704 = vadd.f32 %v9252, %v9627
  %v9705 = vadd.f32 %v9253, %v9622
  %v9706 = vadd.f32 %v9254, %v9627
  %v9707 = vadd.f32 %v9255, %v9622
  %v9708 = vadd.f32 %v9256, %v9627
  %v9709 = vadd.f32 %v9257, %v9622
  %v9710 = vadd.f32 %v9258, %v9627
  %v9711 = vadd.f32 %v9259, %v9622
  %v9712 = vadd.f32 %v9260, %v9627
  %v9713 = vadd.f32 %v9261, %v9622
  %v9714 = vadd.f32 %v9262, %v9627
  %v9715 = vadd.f32 %v9263, %v9622
  %v9716 = vadd.f32 %v9264, %v9627
  %v9717 = vadd.f32 %v9265, %v9622
  %v9718 = vadd.f32 %v9266, %v9627
  %v9719 = vadd.f32 %v9267, %v9622
  %v9720 = vadd.f32 %v9268, %v9627
  %v9721 = vadd.f32 %v9269, %v9622
  %v9722 = vadd.f32 %v9270, %v9627
  %v9723 = vadd.f32 %v9271, %v9622
  %v9724 = vadd.f32 %v9272, %v9627
  %v9725 = vadd.f32 %v9273, %v9622
  %v9726 = vadd.f32 %v9274, %v9627
  %v9727 = vadd.f32 %v9275, %v9622
  %v9728 = vadd.f32 %v9276, %v9627
  %v9729 = vadd.f32 %v9277, %v9622
  %v9730 = vadd.f32 %v9278, %v9627
  %v9731 = vadd.f32 %v9279, %v9622
  %v9732 = vadd.f32 %v9280, %v9627
  %v9733 = vadd.f32 %v9281, %v9622
  %v9734 = vadd.f32 %v9282, %v9627
  %v9735 = vadd.f32 %v9283, %v9622
  %v9736 = vadd.f32 %v9284, %v9627
  %v9737 = vadd.f32 %v9285, %v9622
  %v9738 = vadd.f32 %v9286, %v9627
  %v9739 = vadd.f32 %v9287, %v9622
  %v9740 = vadd.f32 %v9288, %v9627
  %v9741 = vadd.f32 %v9289, %v9622
  %v9742 = vadd.f32 %v9290, %v9627
  %v9743 = vadd.f32 %v9291, %v9622
  %v9744 = vadd.f32 %v9292, %v9627
  %v9745 = vadd.f32 %v9293, %v9622
  %v9746 = vadd.f32 %v9294, %v9627
  %v9747 = vadd.f32 %v9295, %v9622
  %v9748 = vadd.f32 %v9296, %v9627
  %v9749 = vadd.f32 %v9297, %v9622
  %v9750 = vadd.f32 %v9298, %v9627
  %v9751 = vadd.f32 %v9299, %v9622
  %v9752 = vadd.f32 %v9300, %v9627
  %v9753 = vadd.f32 %v9301, %v9622
  %v9754 = vadd.f32 %v9302, %v9627
  %v9755 = vadd.f32 %v9303, %v9622
  %v9756 = vadd.f32 %v9304, %v9627
  %v9757 = vadd.f32 %v9305, %v9622
  %v9758 = vadd.f32 %v9306, %v9627
  %v9759 = vadd.f32 %v9307, %v9622
  %v9760 = vadd.f32 %v9308, %v9627
  %v9761 = vadd.f32 %v9309, %v9622
  %v9762 = vadd.f32 %v9310, %v9627
  %v9763 = vadd.f32 %v9311, %v9622
  %v9764 = vadd.f32 %v9312, %v9627
  %v9765 = vadd.f32 %v9313, %v9622
  %v9766 = vadd.f32 %v9314, %v9627
  %v9767 = vadd.f32 %v9315, %v9622
  %v9768 = vadd.f32 %v9316, %v9627
  %v9769 = vadd.f32 %v9317, %v9622
  %v9770 = vadd.f32 %v9318, %v9627
  %v9771 = vadd.f32 %v9319, %v9622
  %v9772 = vadd.f32 %v9320, %v9627
  %v9773 = vadd.f32 %v9321, %v9622
  %v9774 = vadd.f32 %v9322, %v9627
  %v9775 = vadd.f32 %v9323, %v9622
  %v9776 = vadd.f32 %v9324, %v9627
  %v9777 = vadd.f32 %v9325, %v9622
  %v9778 = vadd.f32 %v9326, %v9627
  %v9779 = vadd.f32 %v9327, %v9622
  %v9780 = vadd.f32 %v9328, %v9627
  %v9781 = vadd.f32 %v9329, %v9622
  %v9782 = vadd.f32 %v9330, %v9627
  %v9783 = vadd.f32 %v9331, %v9622
  %v9784 = vadd.f32 %v9332, %v9627
  %v9785 = vadd.f32 %v9333, %v9622
  %v9786 = vadd.f32 %v9334, %v9627
  %v9787 = vadd.f32 %v9335, %v9622
  %v9788 = vadd.f32 %v9336, %v9627
  %v9789 = vadd.f32 %v9337, %v9622
  %v9790 = vadd.f32 %v9338, %v9627
  %v9791 = vadd.f32 %v9339, %v9622
  %v9792 = vadd.f32 %v9340, %v9627
  %v9793 = vadd.f32 %v9341, %v9622
  %v9794 = vadd.f32 %v9342, %v9627
  %v9795 = vadd.f32 %v9343, %v9622
  %v9796 = vadd.f32 %v9344, %v9627
  %v9797 = vadd.f32 %v9345, %v9622
  %v9798 = vadd.f32 %v9346, %v9627
  %v9799 = vadd.f32 %v9347, %v9622
  %v9800 = vadd.f32 %v9348, %v9627
  %v9801 = vadd.f32 %v9349, %v9622
  %v9802 = vadd.f32 %v9350, %v9627
  %v9803 = vadd.f32 %v9351, %v9622
  %v9804 = vadd.f32 %v9352, %v9627
  %v9805 = vadd.f32 %v9353, %v9622
  %v9806 = vadd.f32 %v9354, %v9627
  %v9807 = vadd.f32 %v9355, %v9622
  %v9808 = vadd.f32 %v9356, %v9627
  %v9809 = vadd.f32 %v9357, %v9622
  %v9810 = vadd.f32 %v9358, %v9627
  %v9811 = vadd.f32 %v9359, %v9622
  %v9812 = vadd.f32 %v9360, %v9627
  %v9813 = vadd.f32 %v9361, %v9622
  %v9814 = vadd.f32 %v9362, %v9627
  %v9815 = vadd.f32 %v9363, %v9622
  %v9816 = vadd.f32 %v9364, %v9627
  %v9817 = vadd.f32 %v9365, %v9622
  %v9818 = vadd.f32 %v9366, %v9627
  %v9819 = vadd.f32 %v9367, %v9622
  %v9820 = vadd.f32 %v9368, %v9627
  %v9821 = vadd.f32 %v9369, %v9622
  %v9822 = vadd.f32 %v9370, %v9627
  %v9823 = vadd.f32 %v9371, %v9622
  %v9824 = vadd.f32 %v9372, %v9627
  %v9825 = vadd.f32 %v9373, %v9622
  %v9826 = vadd.f32 %v9374, %v9627
  %v9827 = vadd.f32 %v9375, %v9622
  %v9828 = vadd.f32 %v9376, %v9627
  %v9829 = vadd.f32 %v9377, %v9622
  %v9830 = vadd.f32 %v9378, %v9627
  %v9831 = vadd.f32 %v9379, %v9622
  %v9832 = vadd.f32 %v9380, %v9627
  %v9833 = vadd.f32 %v9381, %v9622
  %v9834 = vadd.f32 %v9382, %v9627
  %v9835 = vadd.f32 %v9383, %v9622
  %v9836 = vadd.f32 %v9384, %v9627
  %v9837 = vadd.f32 %v9385, %v9622
  %v9838 = vadd.f32 %v9386, %v9627
  %v9839 = vadd.f32 %v9387, %v9622
  %v9840 = vadd.f32 %v9388, %v9627
  %v9841 = vadd.f32 %v9389, %v9622
  %v9842 = vadd.f32 %v9390, %v9627
  %v9843 = vadd.f32 %v9391, %v9622
  %v9844 = vadd.f32 %v9392, %v9627
  %v9845 = vadd.f32 %v9393, %v9622
  %v9846 = vadd.f32 %v9394, %v9627
  %v9847 = vadd.f32 %v9395, %v9622
  %v9848 = vadd.f32 %v9396, %v9627
  %v9849 = vadd.f32 %v9397, %v9622
  %v9850 = vadd.f32 %v9398, %v9627
  %v9851 = vadd.f32 %v9399, %v9622
  %v9852 = vadd.f32 %v9400, %v9627
  %v9853 = vadd.f32 %v9401, %v9622
  %v9854 = vadd.f32 %v9402, %v9627
  %v9855 = vadd.f32 %v9403, %v9622
  %v9856 = vadd.f32 %v9404, %v9627
  %v9857 = vadd.f32 %v9405, %v9622
  %v9858 = vadd.f32 %v9406, %v9627
  %v9859 = vadd.f32 %v9407, %v9622
  %v9860 = vadd.f32 %v9408, %v9627
  %v9861 = vadd.f32 %v9409, %v9622
  %v9862 = vadd.f32 %v9410, %v9627
  %v9863 = vadd.f32 %v9411, %v9622
  %v9864 = vadd.f32 %v9412, %v9627
  %v9865 = vadd.f32 %v9413, %v9622
  %v9866 = vadd.f32 %v9414, %v9627
  %v9867 = vadd.f32 %v9415, %v9622
  %v9868 = vadd.f32 %v9416, %v9627
  %v9869 = vadd.f32 %v9417, %v9622
  %v9870 = vadd.f32 %v9418, %v9627
  %v9871 = vadd.f32 %v9419, %v9622
  %v9872 = vadd.f32 %v9420, %v9627
  %v9873 = vadd.f32 %v9421, %v9622
  %v9874 = vadd.f32 %v9422, %v9627
  %v9875 = vadd.f32 %v9423, %v9622
  %v9876 = vadd.f32 %v9424, %v9627
  %v9877 = vadd.f32 %v9425, %v9622
  %v9878 = vadd.f32 %v9426, %v9627
  %v9879 = vadd.f32 %v9427, %v9622
  %v9880 = vadd.f32 %v9428, %v9627
  %v9881 = vadd.f32 %v9429, %v9622
  %v9882 = vadd.f32 %v9430, %v9627
  %v9883 = vadd.f32 %v9431, %v9622
  %v9884 = vadd.f32 %v9432, %v9627
  %v9885 = vadd.f32 %v9433, %v9622
  %v9886 = vadd.f32 %v9434, %v9627
  %v9887 = vadd.f32 %v9435, %v9622
  %v9888 = vadd.f32 %v9436, %v9627
  %v9889 = vadd.f32 %v9437, %v9622
  %v9890 = vadd.f32 %v9438, %v9627
  %v9891 = vadd.f32 %v9439, %v9622
  %v9892 = vadd.f32 %v9440, %v9627
  %v9893 = vadd.f32 %v9441, %v9622
  %v9894 = vadd.f32 %v9442, %v9627
  %v9895 = vadd.f32 %v9443, %v9622
  %v9896 = vadd.f32 %v9444, %v9627
  %v9897 = vadd.f32 %v9445, %v9622
  %v9898 = vadd.f32 %v9446, %v9627
  %v9899 = vadd.f32 %v9447, %v9622
  %v9900 = vadd.f32 %v9448, %v9627
  %v9901 = vadd.f32 %v9449, %v9622
  %v9902 = vadd.f32 %v9450, %v9627
  %v9903 = vadd.f32 %v9451, %v9622
  %v9904 = vadd.f32 %v9452, %v9627
  %v9905 = vadd.f32 %v9453, %v9622
  %v9906 = vadd.f32 %v9454, %v9627
  %v9907 = vadd.f32 %v9455, %v9622
  %v9908 = vadd.f32 %v9456, %v9627
  %v9909 = vadd.f32 %v9457, %v9622
  %v9910 = vadd.f32 %v9458, %v9627
  %v9911 = vadd.f32 %v9459, %v9622
  %v9912 = vadd.f32 %v9460, %v9627
  %v9913 = vadd.f32 %v9461, %v9622
  %v9914 = vadd.f32 %v9462, %v9627
  %v9915 = vadd.f32 %v9463, %v9622
  %v9916 = vadd.f32 %v9464, %v9627
  %v9917 = vadd.f32 %v9465, %v9622
  %v9918 = vadd.f32 %v9466, %v9627
  %v9919 = vadd.f32 %v9467, %v9622
  %v9920 = vadd.f32 %v9468, %v9627
  %v9921 = vadd.f32 %v9469, %v9622
  %v9922 = vadd.f32 %v9470, %v9627
  %v9923 = vadd.f32 %v9471, %v9622
  %v9924 = vadd.f32 %v9472, %v9627
  %v9925 = vadd.f32 %v9473, %v9622
  %v9926 = vadd.f32 %v9474, %v9627
  %v9927 = vadd.f32 %v9475, %v9622
  %v9928 = vadd.f32 %v9476, %v9627
  %v9929 = vadd.f32 %v9477, %v9622
  %v9930 = vadd.f32 %v9478, %v9627
  %v9931 = vadd.f32 %v9479, %v9622
  %v9932 = vadd.f32 %v9480, %v9627
  %v9933 = vadd.f32 %v9481, %v9622
  %v9934 = vadd.f32 %v9482, %v9627
  %v9935 = vadd.f32 %v9483, %v9622
  %v9936 = vadd.f32 %v9484, %v9627
  %v9937 = vadd.f32 %v9485, %v9622
  %v9938 = vadd.f32 %v9486, %v9627
  %v9939 = vadd.f32 %v9487, %v9622
  %v9940 = vadd.f32 %v9488, %v9627
  %v9941 = vadd.f32 %v9489, %v9622
  %v9942 = vadd.f32 %v9490, %v9627
  %v9943 = vadd.f32 %v9491, %v9622
  %v9944 = vadd.f32 %v9492, %v9627
  %v9945 = vadd.f32 %v9493, %v9622
  %v9946 = vadd.f32 %v9494, %v9627
  %v9947 = vadd.f32 %v9495, %v9622
  %v9948 = vadd.f32 %v9496, %v9627
  %v9949 = vadd.f32 %v9497, %v9622
  %v9950 = vadd.f32 %v9498, %v9627
  %v9951 = vadd.f32 %v9499, %v9622
  %v9952 = vadd.f32 %v9500, %v9627
  %v9953 = vadd.f32 %v9501, %v9622
  %v9954 = vadd.f32 %v9502, %v9627
  %v9955 = vadd.f32 %v9503, %v9622
  %v9956 = vadd.f32 %v9504, %v9627
  %v9957 = vadd.f32 %v9505, %v9622
  %v9958 = vadd.f32 %v9506, %v9627
  %v9959 = vadd.f32 %v9507, %v9622
  %v9960 = vadd.f32 %v9508, %v9627
  %v9961 = vadd.f32 %v9509, %v9622
  %v9962 = vadd.f32 %v9510, %v9627
  %v9963 = vadd.f32 %v9511, %v9622
  %v9964 = vadd.f32 %v9512, %v9627
  %v9965 = vadd.f32 %v9513, %v9622
  %v9966 = vadd.f32 %v9514, %v9627
  %v9967 = vadd.f32 %v9515, %v9622
  %v9968 = vadd.f32 %v9516, %v9627
  %v9969 = vadd.f32 %v9517, %v9622
  %v9970 = vadd.f32 %v9518, %v9627
  %v9971 = vadd.f32 %v9519, %v9622
  %v9972 = vadd.f32 %v9520, %v9627
  %v9973 = vadd.f32 %v9521, %v9622
  %v9974 = vadd.f32 %v9522, %v9627
  %v9975 = vadd.f32 %v9523, %v9622
  %v9976 = vadd.f32 %v9524, %v9627
  %v9977 = vadd.f32 %v9525, %v9622
  %v9978 = vadd.f32 %v9526, %v9627
  %v9979 = vadd.f32 %v9527, %v9622
  %v9980 = vadd.f32 %v9528, %v9627
  %v9981 = vadd.f32 %v9529, %v9622
  %v9982 = vadd.f32 %v9530, %v9627
  %v9983 = vadd.f32 %v9531, %v9622
  %v9984 = vadd.f32 %v9532, %v9627
  %v9985 = vadd.f32 %v9533, %v9622
  %v9986 = vadd.f32 %v9534, %v9627
  %v9987 = vadd.f32 %v9535, %v9622
  %v9988 = vadd.f32 %v9536, %v9627
  %v9989 = vadd.f32 %v9537, %v9622
  %v9990 = vadd.f32 %v9538, %v9627
  %v9991 = vadd.f32 %v9539, %v9622
  %v9992 = vadd.f32 %v9540, %v9627
  %v9993 = vadd.f32 %v9541, %v9622
  %v9994 = vadd.f32 %v9542, %v9627
  %v9995 = vadd.f32 %v9543, %v9622
  %v9996 = vadd.f32 %v9544, %v9627
  %v9997 = vadd.f32 %v9545, %v9622
  %v9998 = vadd.f32 %v9546, %v9627
  %v9999 = vadd.f32 %v9547, %v9622
  %v10000 = vadd.f32 %v9548, %v9627
  %v10001 = vadd.f32 %v9549, %v9622
  %v10002 = vadd.f32 %v9550, %v9627
  %v10003 = vadd.f32 %v9551, %v9622
  %v10004 = vadd.f32 %v9552, %v9627
  %v10005 = vadd.f32 %v9553, %v9622
  %v10006 = vadd.f32 %v9554, %v9627
  %v10007 = vadd.f32 %v9555, %v9622
  %v10008 = vadd.f32 %v9556, %v9627
  %v10009 = vadd.f32 %v9557, %v9622
  %v10010 = vadd.f32 %v9558, %v9627
  %v10011 = vadd.f32 %v9559, %v9622
  %v10012 = vadd.f32 %v9560, %v9627
  %v10013 = vadd.f32 %v9561, %v9622
  %v10014 = vadd.f32 %v9562, %v9627
  %v10015 = vadd.f32 %v9563, %v9622
  %v10016 = vadd.f32 %v9564, %v9627
  %v10017 = vadd.f32 %v9565, %v9622
  %v10018 = vadd.f32 %v9566, %v9627
  %v10019 = vadd.f32 %v9567, %v9622
  %v10020 = vadd.f32 %v9568, %v9627
  %v10021 = vadd.f32 %v9569, %v9622
  %v10022 = vadd.f32 %v9570, %v9627
  %v10023 = vadd.f32 %v9571, %v9622
  %v10024 = vadd.f32 %v9572, %v9627
  %v10025 = vadd.f32 %v9573, %v9622
  %v10026 = vadd.f32 %v9574, %v9627
  %v10027 = vadd.f32 %v9575, %v9622
  %v10028 = vadd.f32 %v9576, %v9627
  %v10029 = vadd.f32 %v9577, %v9622
  %v10030 = vadd.f32 %v9578, %v9627
  %v10031 = vadd.f32 %v9579, %v9622
  %v10032 = vadd.f32 %v9580, %v9627
  %v10033 = vadd.f32 %v9581, %v9622
  %v10034 = vadd.f32 %v9582, %v9627
  %v10035 = vadd.f32 %v9583, %v9622
  %v10036 = vadd.f32 %v9584, %v9627
  %v10037 = vadd.f32 %v9585, %v9622
  %v10038 = vadd.f32 %v9586, %v9627
  %v10039 = vadd.f32 %v9587, %v9622
  %v10040 = vadd.f32 %v9588, %v9627
  %v10041 = vadd.f32 %v9589, %v9622
  %v10042 = vadd.f32 %v9590, %v9627
  %v10043 = vadd.f32 %v9591, %v9622
  %v10044 = vadd.f32 %v9592, %v9627
  %v10045 = vadd.f32 %v9593, %v9622
  %v10046 = vadd.f32 %v9594, %v9627
  %v10047 = vadd.f32 %v9595, %v9622
  %v10048 = vadd.f32 %v9596, %v9627
  %v10049 = vadd.f32 %v9597, %v9622
  %v10050 = vadd.f32 %v9598, %v9627
  %v10051 = vadd.f32 %v9599, %v9622
  %v10052 = vadd.f32 %v9600, %v9627
  %v10053 = vadd.f32 %v9601, %v9622
  %v10054 = vadd.f32 %v9602, %v9627
  %v10055 = vadd.f32 %v9603, %v9622
  %v10056 = vadd.f32 %v9604, %v9627
  %v10057 = vadd.f32 %v9605, %v9622
  %v10058 = vadd.f32 %v9606, %v9627
  %v10059 = vadd.f32 %v9607, %v9622
  %v10060 = vadd.f32 %v9608, %v9627
  %v10061 = vadd.f32 %v9609, %v9622
  %v10062 = vadd.f32 %v9610, %v9627
  %v10063 = vadd.f32 %v9611, %v9622
  %v10064 = vadd.f32 %v9612, %v9627
  %v10065 = vadd.f32 %v9613, %v9622
  %v10066 = vadd.f32 %v9614, %v9627
  %v10067 = vadd.f32 %v9615, %v9622
  %v10068 = vadd.f32 %v9616, %v9627
  %v10069 = vmax.f32 %v9629, 0.0
  %v10070 = vmax.f32 %v9630, 0.0
  %v10071 = vmax.f32 %v9631, 0.0
  %v10072 = vmax.f32 %v9632, 0.0
  %v10073 = vmax.f32 %v9633, 0.0
  %v10074 = vmax.f32 %v9634, 0.0
  %v10075 = vmax.f32 %v9635, 0.0
  %v10076 = vmax.f32 %v9636, 0.0
  %v10077 = vmax.f32 %v9637, 0.0
  %v10078 = vmax.f32 %v9638, 0.0
  %v10079 = vmax.f32 %v9639, 0.0
  %v10080 = vmax.f32 %v9640, 0.0
  %v10081 = vmax.f32 %v9641, 0.0
  %v10082 = vmax.f32 %v9642, 0.0
  %v10083 = vmax.f32 %v9643, 0.0
  %v10084 = vmax.f32 %v9644, 0.0
  %v10085 = vmax.f32 %v9645, 0.0
  %v10086 = vmax.f32 %v9646, 0.0
  %v10087 = vmax.f32 %v9647, 0.0
  %v10088 = vmax.f32 %v9648, 0.0
  %v10089 = vmax.f32 %v9649, 0.0
  %v10090 = vmax.f32 %v9650, 0.0
  %v10091 = vmax.f32 %v9651, 0.0
  %v10092 = vmax.f32 %v9652, 0.0
  %v10093 = vmax.f32 %v9653, 0.0
  %v10094 = vmax.f32 %v9654, 0.0
  %v10095 = vmax.f32 %v9655, 0.0
  %v10096 = vmax.f32 %v9656, 0.0
  %v10097 = vmax.f32 %v9657, 0.0
  %v10098 = vmax.f32 %v9658, 0.0
  %v10099 = vmax.f32 %v9659, 0.0
  %v10100 = vmax.f32 %v9660, 0.0
  %v10101 = vmax.f32 %v9661, 0.0
  %v10102 = vmax.f32 %v9662, 0.0
  %v10103 = vmax.f32 %v9663, 0.0
  %v10104 = vmax.f32 %v9664, 0.0
  %v10105 = vmax.f32 %v9665, 0.0
  %v10106 = vmax.f32 %v9666, 0.0
  %v10107 = vmax.f32 %v9667, 0.0
  %v10108 = vmax.f32 %v9668, 0.0
  %v10109 = vmax.f32 %v9669, 0.0
  %v10110 = vmax.f32 %v9670, 0.0
  %v10111 = vmax.f32 %v9671, 0.0
  %v10112 = vmax.f32 %v9672, 0.0
  %v10113 = vmax.f32 %v9673, 0.0
  %v10114 = vmax.f32 %v9674, 0.0
  %v10115 = vmax.f32 %v9675, 0.0
  %v10116 = vmax.f32 %v9676, 0.0
  %v10117 = vmax.f32 %v9677, 0.0
  %v10118 = vmax.f32 %v9678, 0.0
  %v10119 = vmax.f32 %v9679, 0.0
  %v10120 = vmax.f32 %v9680, 0.0
  %v10121 = vmax.f32 %v9681, 0.0
  %v10122 = vmax.f32 %v9682, 0.0
  %v10123 = vmax.f32 %v9683, 0.0
  %v10124 = vmax.f32 %v9684, 0.0
  %v10125 = vmax.f32 %v9685, 0.0
  %v10126 = vmax.f32 %v9686, 0.0
  %v10127 = vmax.f32 %v9687, 0.0
  %v10128 = vmax.f32 %v9688, 0.0
  %v10129 = vmax.f32 %v9689, 0.0
  %v10130 = vmax.f32 %v9690, 0.0
  %v10131 = vmax.f32 %v9691, 0.0
  %v10132 = vmax.f32 %v9692, 0.0
  %v10133 = vmax.f32 %v9693, 0.0
  %v10134 = vmax.f32 %v9694, 0.0
  %v10135 = vmax.f32 %v9695, 0.0
  %v10136 = vmax.f32 %v9696, 0.0
  %v10137 = vmax.f32 %v9697, 0.0
  %v10138 = vmax.f32 %v9698, 0.0
  %v10139 = vmax.f32 %v9699, 0.0
  %v10140 = vmax.f32 %v9700, 0.0
  %v10141 = vmax.f32 %v9701, 0.0
  %v10142 = vmax.f32 %v9702, 0.0
  %v10143 = vmax.f32 %v9703, 0.0
  %v10144 = vmax.f32 %v9704, 0.0
  %v10145 = vmax.f32 %v9705, 0.0
  %v10146 = vmax.f32 %v9706, 0.0
  %v10147 = vmax.f32 %v9707, 0.0
  %v10148 = vmax.f32 %v9708, 0.0
  %v10149 = vmax.f32 %v9709, 0.0
  %v10150 = vmax.f32 %v9710, 0.0
  %v10151 = vmax.f32 %v9711, 0.0
  %v10152 = vmax.f32 %v9712, 0.0
  %v10153 = vmax.f32 %v9713, 0.0
  %v10154 = vmax.f32 %v9714, 0.0
  %v10155 = vmax.f32 %v9715, 0.0
  %v10156 = vmax.f32 %v9716, 0.0
  %v10157 = vmax.f32 %v9717, 0.0
  %v10158 = vmax.f32 %v9718, 0.0
  %v10159 = vmax.f32 %v9719, 0.0
  %v10160 = vmax.f32 %v9720, 0.0
  %v10161 = vmax.f32 %v9721, 0.0
  %v10162 = vmax.f32 %v9722, 0.0
  %v10163 = vmax.f32 %v9723, 0.0
  %v10164 = vmax.f32 %v9724, 0.0
  %v10165 = vmax.f32 %v9725, 0.0
  %v10166 = vmax.f32 %v9726, 0.0
  %v10167 = vmax.f32 %v9727, 0.0
  %v10168 = vmax.f32 %v9728, 0.0
  %v10169 = vmax.f32 %v9729, 0.0
  %v10170 = vmax.f32 %v9730, 0.0
  %v10171 = vmax.f32 %v9731, 0.0
  %v10172 = vmax.f32 %v9732, 0.0
  %v10173 = vmax.f32 %v9733, 0.0
  %v10174 = vmax.f32 %v9734, 0.0
  %v10175 = vmax.f32 %v9735, 0.0
  %v10176 = vmax.f32 %v9736, 0.0
  %v10177 = vmax.f32 %v9737, 0.0
  %v10178 = vmax.f32 %v9738, 0.0
  %v10179 = vmax.f32 %v9739, 0.0
  %v10180 = vmax.f32 %v9740, 0.0
  %v10181 = vmax.f32 %v9741, 0.0
  %v10182 = vmax.f32 %v9742, 0.0
  %v10183 = vmax.f32 %v9743, 0.0
  %v10184 = vmax.f32 %v9744, 0.0
  %v10185 = vmax.f32 %v9745, 0.0
  %v10186 = vmax.f32 %v9746, 0.0
  %v10187 = vmax.f32 %v9747, 0.0
  %v10188 = vmax.f32 %v9748, 0.0
  %v10189 = vmax.f32 %v9749, 0.0
  %v10190 = vmax.f32 %v9750, 0.0
  %v10191 = vmax.f32 %v9751, 0.0
  %v10192 = vmax.f32 %v9752, 0.0
  %v10193 = vmax.f32 %v9753, 0.0
  %v10194 = vmax.f32 %v9754, 0.0
  %v10195 = vmax.f32 %v9755, 0.0
  %v10196 = vmax.f32 %v9756, 0.0
  %v10197 = vmax.f32 %v9757, 0.0
  %v10198 = vmax.f32 %v9758, 0.0
  %v10199 = vmax.f32 %v9759, 0.0
  %v10200 = vmax.f32 %v9760, 0.0
  %v10201 = vmax.f32 %v9761, 0.0
  %v10202 = vmax.f32 %v9762, 0.0
  %v10203 = vmax.f32 %v9763, 0.0
  %v10204 = vmax.f32 %v9764, 0.0
  %v10205 = vmax.f32 %v9765, 0.0
  %v10206 = vmax.f32 %v9766, 0.0
  %v10207 = vmax.f32 %v9767, 0.0
  %v10208 = vmax.f32 %v9768, 0.0
  %v10209 = vmax.f32 %v9769, 0.0
  %v10210 = vmax.f32 %v9770, 0.0
  %v10211 = vmax.f32 %v9771, 0.0
  %v10212 = vmax.f32 %v9772, 0.0
  %v10213 = vmax.f32 %v9773, 0.0
  %v10214 = vmax.f32 %v9774, 0.0
  %v10215 = vmax.f32 %v9775, 0.0
  %v10216 = vmax.f32 %v9776, 0.0
  %v10217 = vmax.f32 %v9777, 0.0
  %v10218 = vmax.f32 %v9778, 0.0
  %v10219 = vmax.f32 %v9779, 0.0
  %v10220 = vmax.f32 %v9780, 0.0
  %v10221 = vmax.f32 %v9781, 0.0
  %v10222 = vmax.f32 %v9782, 0.0
  %v10223 = vmax.f32 %v9783, 0.0
  %v10224 = vmax.f32 %v9784, 0.0
  %v10225 = vmax.f32 %v9785, 0.0
  %v10226 = vmax.f32 %v9786, 0.0
  %v10227 = vmax.f32 %v9787, 0.0
  %v10228 = vmax.f32 %v9788, 0.0
  %v10229 = vmax.f32 %v9789, 0.0
  %v10230 = vmax.f32 %v9790, 0.0
  %v10231 = vmax.f32 %v9791, 0.0
  %v10232 = vmax.f32 %v9792, 0.0
  %v10233 = vmax.f32 %v9793, 0.0
  %v10234 = vmax.f32 %v9794, 0.0
  %v10235 = vmax.f32 %v9795, 0.0
  %v10236 = vmax.f32 %v9796, 0.0
  %v10237 = vmax.f32 %v9797, 0.0
  %v10238 = vmax.f32 %v9798, 0.0
  %v10239 = vmax.f32 %v9799, 0.0
  %v10240 = vmax.f32 %v9800, 0.0
  %v10241 = vmax.f32 %v9801, 0.0
  %v10242 = vmax.f32 %v9802, 0.0
  %v10243 = vmax.f32 %v9803, 0.0
  %v10244 = vmax.f32 %v9804, 0.0
  %v10245 = vmax.f32 %v9805, 0.0
  %v10246 = vmax.f32 %v9806, 0.0
  %v10247 = vmax.f32 %v9807, 0.0
  %v10248 = vmax.f32 %v9808, 0.0
  %v10249 = vmax.f32 %v9809, 0.0
  %v10250 = vmax.f32 %v9810, 0.0
  %v10251 = vmax.f32 %v9811, 0.0
  %v10252 = vmax.f32 %v9812, 0.0
  %v10253 = vmax.f32 %v9813, 0.0
  %v10254 = vmax.f32 %v9814, 0.0
  %v10255 = vmax.f32 %v9815, 0.0
  %v10256 = vmax.f32 %v9816, 0.0
  %v10257 = vmax.f32 %v9817, 0.0
  %v10258 = vmax.f32 %v9818, 0.0
  %v10259 = vmax.f32 %v9819, 0.0
  %v10260 = vmax.f32 %v9820, 0.0
  %v10261 = vmax.f32 %v9821, 0.0
  %v10262 = vmax.f32 %v9822, 0.0
  %v10263 = vmax.f32 %v9823, 0.0
  %v10264 = vmax.f32 %v9824, 0.0
  %v10265 = vmax.f32 %v9825, 0.0
  %v10266 = vmax.f32 %v9826, 0.0
  %v10267 = vmax.f32 %v9827, 0.0
  %v10268 = vmax.f32 %v9828, 0.0
  %v10269 = vmax.f32 %v9829, 0.0
  %v10270 = vmax.f32 %v9830, 0.0
  %v10271 = vmax.f32 %v9831, 0.0
  %v10272 = vmax.f32 %v9832, 0.0
  %v10273 = vmax.f32 %v9833, 0.0
  %v10274 = vmax.f32 %v9834, 0.0
  %v10275 = vmax.f32 %v9835, 0.0
  %v10276 = vmax.f32 %v9836, 0.0
  %v10277 = vmax.f32 %v9837, 0.0
  %v10278 = vmax.f32 %v9838, 0.0
  %v10279 = vmax.f32 %v9839, 0.0
  %v10280 = vmax.f32 %v9840, 0.0
  %v10281 = vmax.f32 %v9841, 0.0
  %v10282 = vmax.f32 %v9842, 0.0
  %v10283 = vmax.f32 %v9843, 0.0
  %v10284 = vmax.f32 %v9844, 0.0
  %v10285 = vmax.f32 %v9845, 0.0
  %v10286 = vmax.f32 %v9846, 0.0
  %v10287 = vmax.f32 %v9847, 0.0
  %v10288 = vmax.f32 %v9848, 0.0
  %v10289 = vmax.f32 %v9849, 0.0
  %v10290 = vmax.f32 %v9850, 0.0
  %v10291 = vmax.f32 %v9851, 0.0
  %v10292 = vmax.f32 %v9852, 0.0
  %v10293 = vmax.f32 %v9853, 0.0
  %v10294 = vmax.f32 %v9854, 0.0
  %v10295 = vmax.f32 %v9855, 0.0
  %v10296 = vmax.f32 %v9856, 0.0
  %v10297 = vmax.f32 %v9857, 0.0
  %v10298 = vmax.f32 %v9858, 0.0
  %v10299 = vmax.f32 %v9859, 0.0
  %v10300 = vmax.f32 %v9860, 0.0
  %v10301 = vmax.f32 %v9861, 0.0
  %v10302 = vmax.f32 %v9862, 0.0
  %v10303 = vmax.f32 %v9863, 0.0
  %v10304 = vmax.f32 %v9864, 0.0
  %v10305 = vmax.f32 %v9865, 0.0
  %v10306 = vmax.f32 %v9866, 0.0
  %v10307 = vmax.f32 %v9867, 0.0
  %v10308 = vmax.f32 %v9868, 0.0
  %v10309 = vmax.f32 %v9869, 0.0
  %v10310 = vmax.f32 %v9870, 0.0
  %v10311 = vmax.f32 %v9871, 0.0
  %v10312 = vmax.f32 %v9872, 0.0
  %v10313 = vmax.f32 %v9873, 0.0
  %v10314 = vmax.f32 %v9874, 0.0
  %v10315 = vmax.f32 %v9875, 0.0
  %v10316 = vmax.f32 %v9876, 0.0
  %v10317 = vmax.f32 %v9877, 0.0
  %v10318 = vmax.f32 %v9878, 0.0
  %v10319 = vmax.f32 %v9879, 0.0
  %v10320 = vmax.f32 %v9880, 0.0
  %v10321 = vmax.f32 %v9881, 0.0
  %v10322 = vmax.f32 %v9882, 0.0
  %v10323 = vmax.f32 %v9883, 0.0
  %v10324 = vmax.f32 %v9884, 0.0
  %v10325 = vmax.f32 %v9885, 0.0
  %v10326 = vmax.f32 %v9886, 0.0
  %v10327 = vmax.f32 %v9887, 0.0
  %v10328 = vmax.f32 %v9888, 0.0
  %v10329 = vmax.f32 %v9889, 0.0
  %v10330 = vmax.f32 %v9890, 0.0
  %v10331 = vmax.f32 %v9891, 0.0
  %v10332 = vmax.f32 %v9892, 0.0
  %v10333 = vmax.f32 %v9893, 0.0
  %v10334 = vmax.f32 %v9894, 0.0
  %v10335 = vmax.f32 %v9895, 0.0
  %v10336 = vmax.f32 %v9896, 0.0
  %v10337 = vmax.f32 %v9897, 0.0
  %v10338 = vmax.f32 %v9898, 0.0
  %v10339 = vmax.f32 %v9899, 0.0
  %v10340 = vmax.f32 %v9900, 0.0
  %v10341 = vmax.f32 %v9901, 0.0
  %v10342 = vmax.f32 %v9902, 0.0
  %v10343 = vmax.f32 %v9903, 0.0
  %v10344 = vmax.f32 %v9904, 0.0
  %v10345 = vmax.f32 %v9905, 0.0
  %v10346 = vmax.f32 %v9906, 0.0
  %v10347 = vmax.f32 %v9907, 0.0
  %v10348 = vmax.f32 %v9908, 0.0
  %v10349 = vmax.f32 %v9909, 0.0
  %v10350 = vmax.f32 %v9910, 0.0
  %v10351 = vmax.f32 %v9911, 0.0
  %v10352 = vmax.f32 %v9912, 0.0
  %v10353 = vmax.f32 %v9913, 0.0
  %v10354 = vmax.f32 %v9914, 0.0
  %v10355 = vmax.f32 %v9915, 0.0
  %v10356 = vmax.f32 %v9916, 0.0
  %v10357 = vmax.f32 %v9917, 0.0
  %v10358 = vmax.f32 %v9918, 0.0
  %v10359 = vmax.f32 %v9919, 0.0
  %v10360 = vmax.f32 %v9920, 0.0
  %v10361 = vmax.f32 %v9921, 0.0
  %v10362 = vmax.f32 %v9922, 0.0
  %v10363 = vmax.f32 %v9923, 0.0
  %v10364 = vmax.f32 %v9924, 0.0
  %v10365 = vmax.f32 %v9925, 0.0
  %v10366 = vmax.f32 %v9926, 0.0
  %v10367 = vmax.f32 %v9927, 0.0
  %v10368 = vmax.f32 %v9928, 0.0
  %v10369 = vmax.f32 %v9929, 0.0
  %v10370 = vmax.f32 %v9930, 0.0
  %v10371 = vmax.f32 %v9931, 0.0
  %v10372 = vmax.f32 %v9932, 0.0
  %v10373 = vmax.f32 %v9933, 0.0
  %v10374 = vmax.f32 %v9934, 0.0
  %v10375 = vmax.f32 %v9935, 0.0
  %v10376 = vmax.f32 %v9936, 0.0
  %v10377 = vmax.f32 %v9937, 0.0
  %v10378 = vmax.f32 %v9938, 0.0
  %v10379 = vmax.f32 %v9939, 0.0
  %v10380 = vmax.f32 %v9940, 0.0
  %v10381 = vmax.f32 %v9941, 0.0
  %v10382 = vmax.f32 %v9942, 0.0
  %v10383 = vmax.f32 %v9943, 0.0
  %v10384 = vmax.f32 %v9944, 0.0
  %v10385 = vmax.f32 %v9945, 0.0
  %v10386 = vmax.f32 %v9946, 0.0
  %v10387 = vmax.f32 %v9947, 0.0
  %v10388 = vmax.f32 %v9948, 0.0
  %v10389 = vmax.f32 %v9949, 0.0
  %v10390 = vmax.f32 %v9950, 0.0
  %v10391 = vmax.f32 %v9951, 0.0
  %v10392 = vmax.f32 %v9952, 0.0
  %v10393 = vmax.f32 %v9953, 0.0
  %v10394 = vmax.f32 %v9954, 0.0
  %v10395 = vmax.f32 %v9955, 0.0
  %v10396 = vmax.f32 %v9956, 0.0
  %v10397 = vmax.f32 %v9957, 0.0
  %v10398 = vmax.f32 %v9958, 0.0
  %v10399 = vmax.f32 %v9959, 0.0
  %v10400 = vmax.f32 %v9960, 0.0
  %v10401 = vmax.f32 %v9961, 0.0
  %v10402 = vmax.f32 %v9962, 0.0
  %v10403 = vmax.f32 %v9963, 0.0
  %v10404 = vmax.f32 %v9964, 0.0
  %v10405 = vmax.f32 %v9965, 0.0
  %v10406 = vmax.f32 %v9966, 0.0
  %v10407 = vmax.f32 %v9967, 0.0
  %v10408 = vmax.f32 %v9968, 0.0
  %v10409 = vmax.f32 %v9969, 0.0
  %v10410 = vmax.f32 %v9970, 0.0
  %v10411 = vmax.f32 %v9971, 0.0
  %v10412 = vmax.f32 %v9972, 0.0
  %v10413 = vmax.f32 %v9973, 0.0
  %v10414 = vmax.f32 %v9974, 0.0
  %v10415 = vmax.f32 %v9975, 0.0
  %v10416 = vmax.f32 %v9976, 0.0
  %v10417 = vmax.f32 %v9977, 0.0
  %v10418 = vmax.f32 %v9978, 0.0
  %v10419 = vmax.f32 %v9979, 0.0
  %v10420 = vmax.f32 %v9980, 0.0
  %v10421 = vmax.f32 %v9981, 0.0
  %v10422 = vmax.f32 %v9982, 0.0
  %v10423 = vmax.f32 %v9983, 0.0
  %v10424 = vmax.f32 %v9984, 0.0
  %v10425 = vmax.f32 %v9985, 0.0
  %v10426 = vmax.f32 %v9986, 0.0
  %v10427 = vmax.f32 %v9987, 0.0
  %v10428 = vmax.f32 %v9988, 0.0
  %v10429 = vmax.f32 %v9989, 0.0
  %v10430 = vmax.f32 %v9990, 0.0
  %v10431 = vmax.f32 %v9991, 0.0
  %v10432 = vmax.f32 %v9992, 0.0
  %v10433 = vmax.f32 %v9993, 0.0
  %v10434 = vmax.f32 %v9994, 0.0
  %v10435 = vmax.f32 %v9995, 0.0
  %v10436 = vmax.f32 %v9996, 0.0
  %v10437 = vmax.f32 %v9997, 0.0
  %v10438 = vmax.f32 %v9998, 0.0
  %v10439 = vmax.f32 %v9999, 0.0
  %v10440 = vmax.f32 %v10000, 0.0
  %v10441 = vmax.f32 %v10001, 0.0
  %v10442 = vmax.f32 %v10002, 0.0
  %v10443 = vmax.f32 %v10003, 0.0
  %v10444 = vmax.f32 %v10004, 0.0
  %v10445 = vmax.f32 %v10005, 0.0
  %v10446 = vmax.f32 %v10006, 0.0
  %v10447 = vmax.f32 %v10007, 0.0
  %v10448 = vmax.f32 %v10008, 0.0
  %v10449 = vmax.f32 %v10009, 0.0
  %v10450 = vmax.f32 %v10010, 0.0
  %v10451 = vmax.f32 %v10011, 0.0
  %v10452 = vmax.f32 %v10012, 0.0
  %v10453 = vmax.f32 %v10013, 0.0
  %v10454 = vmax.f32 %v10014, 0.0
  %v10455 = vmax.f32 %v10015, 0.0
  %v10456 = vmax.f32 %v10016, 0.0
  %v10457 = vmax.f32 %v10017, 0.0
  %v10458 = vmax.f32 %v10018, 0.0
  %v10459 = vmax.f32 %v10019, 0.0
  %v10460 = vmax.f32 %v10020, 0.0
  %v10461 = vmax.f32 %v10021, 0.0
  %v10462 = vmax.f32 %v10022, 0.0
  %v10463 = vmax.f32 %v10023, 0.0
  %v10464 = vmax.f32 %v10024, 0.0
  %v10465 = vmax.f32 %v10025, 0.0
  %v10466 = vmax.f32 %v10026, 0.0
  %v10467 = vmax.f32 %v10027, 0.0
  %v10468 = vmax.f32 %v10028, 0.0
  %v10469 = vmax.f32 %v10029, 0.0
  %v10470 = vmax.f32 %v10030, 0.0
  %v10471 = vmax.f32 %v10031, 0.0
  %v10472 = vmax.f32 %v10032, 0.0
  %v10473 = vmax.f32 %v10033, 0.0
  %v10474 = vmax.f32 %v10034, 0.0
  %v10475 = vmax.f32 %v10035, 0.0
  %v10476 = vmax.f32 %v10036, 0.0
  %v10477 = vmax.f32 %v10037, 0.0
  %v10478 = vmax.f32 %v10038, 0.0
  %v10479 = vmax.f32 %v10039, 0.0
  %v10480 = vmax.f32 %v10040, 0.0
  %v10481 = vmax.f32 %v10041, 0.0
  %v10482 = vmax.f32 %v10042, 0.0
  %v10483 = vmax.f32 %v10043, 0.0
  %v10484 = vmax.f32 %v10044, 0.0
  %v10485 = vmax.f32 %v10045, 0.0
  %v10486 = vmax.f32 %v10046, 0.0
  %v10487 = vmax.f32 %v10047, 0.0
  %v10488 = vmax.f32 %v10048, 0.0
  %v10489 = vmax.f32 %v10049, 0.0
  %v10490 = vmax.f32 %v10050, 0.0
  %v10491 = vmax.f32 %v10051, 0.0
  %v10492 = vmax.f32 %v10052, 0.0
  %v10493 = vmax.f32 %v10053, 0.0
  %v10494 = vmax.f32 %v10054, 0.0
  %v10495 = vmax.f32 %v10055, 0.0
  %v10496 = vmax.f32 %v10056, 0.0
  %v10497 = vmax.f32 %v10057, 0.0
  %v10498 = vmax.f32 %v10058, 0.0
  %v10499 = vmax.f32 %v10059, 0.0
  %v10500 = vmax.f32 %v10060, 0.0
  %v10501 = vmax.f32 %v10061, 0.0
  %v10502 = vmax.f32 %v10062, 0.0
  %v10503 = vmax.f32 %v10063, 0.0
  %v10504 = vmax.f32 %v10064, 0.0
  %v10505 = vmax.f32 %v10065, 0.0
  %v10506 = vmax.f32 %v10066, 0.0
  %v10507 = vmax.f32 %v10067, 0.0
  %v10508 = vmax.f32 %v10068, 0.0
  %v10509 = vmax.f32 %v10069, %v10109
  %v10510 = vmax.f32 %v10070, %v10110
  %v10511 = vmax.f32 %v10071, %v10111
  %v10512 = vmax.f32 %v10072, %v10112
  %v10513 = vmax.f32 %v10073, %v10113
  %v10514 = vmax.f32 %v10074, %v10114
  %v10515 = vmax.f32 %v10075, %v10115
  %v10516 = vmax.f32 %v10076, %v10116
  %v10517 = vmax.f32 %v10077, %v10117
  %v10518 = vmax.f32 %v10078, %v10118
  %v10519 = vmax.f32 %v10079, %v10119
  %v10520 = vmax.f32 %v10080, %v10120
  %v10521 = vmax.f32 %v10081, %v10121
  %v10522 = vmax.f32 %v10082, %v10122
  %v10523 = vmax.f32 %v10083, %v10123
  %v10524 = vmax.f32 %v10084, %v10124
  %v10525 = vmax.f32 %v10085, %v10125
  %v10526 = vmax.f32 %v10086, %v10126
  %v10527 = vmax.f32 %v10087, %v10127
  %v10528 = vmax.f32 %v10088, %v10128
  %v10529 = vmax.f32 %v10089, %v10129
  %v10530 = vmax.f32 %v10090, %v10130
  %v10531 = vmax.f32 %v10091, %v10131
  %v10532 = vmax.f32 %v10092, %v10132
  %v10533 = vmax.f32 %v10093, %v10133
  %v10534 = vmax.f32 %v10094, %v10134
  %v10535 = vmax.f32 %v10095, %v10135
  %v10536 = vmax.f32 %v10096, %v10136
  %v10537 = vmax.f32 %v10097, %v10137
  %v10538 = vmax.f32 %v10098, %v10138
  %v10539 = vmax.f32 %v10099, %v10139
  %v10540 = vmax.f32 %v10100, %v10140
  %v10541 = vmax.f32 %v10101, %v10141
  %v10542 = vmax.f32 %v10102, %v10142
  %v10543 = vmax.f32 %v10103, %v10143
  %v10544 = vmax.f32 %v10104, %v10144
  %v10545 = vmax.f32 %v10105, %v10145
  %v10546 = vmax.f32 %v10106, %v10146
  %v10547 = vmax.f32 %v10107, %v10147
  %v10548 = vmax.f32 %v10108, %v10148
  %v10549 = vmax.f32 %v10149, %v10189
  %v10550 = vmax.f32 %v10150, %v10190
  %v10551 = vmax.f32 %v10151, %v10191
  %v10552 = vmax.f32 %v10152, %v10192
  %v10553 = vmax.f32 %v10153, %v10193
  %v10554 = vmax.f32 %v10154, %v10194
  %v10555 = vmax.f32 %v10155, %v10195
  %v10556 = vmax.f32 %v10156, %v10196
  %v10557 = vmax.f32 %v10157, %v10197
  %v10558 = vmax.f32 %v10158, %v10198
  %v10559 = vmax.f32 %v10159, %v10199
  %v10560 = vmax.f32 %v10160, %v10200
  %v10561 = vmax.f32 %v10161, %v10201
  %v10562 = vmax.f32 %v10162, %v10202
  %v10563 = vmax.f32 %v10163, %v10203
  %v10564 = vmax.f32 %v10164, %v10204
  %v10565 = vmax.f32 %v10165, %v10205
  %v10566 = vmax.f32 %v10166, %v10206
  %v10567 = vmax.f32 %v10167, %v10207
  %v10568 = vmax.f32 %v10168, %v10208
  %v10569 = vmax.f32 %v10169, %v10209
  %v10570 = vmax.f32 %v10170, %v10210
  %v10571 = vmax.f32 %v10171, %v10211
  %v10572 = vmax.f32 %v10172, %v10212
  %v10573 = vmax.f32 %v10173, %v10213
  %v10574 = vmax.f32 %v10174, %v10214
  %v10575 = vmax.f32 %v10175, %v10215
  %v10576 = vmax.f32 %v10176, %v10216
  %v10577 = vmax.f32 %v10177, %v10217
  %v10578 = vmax.f32 %v10178, %v10218
  %v10579 = vmax.f32 %v10179, %v10219
  %v10580 = vmax.f32 %v10180, %v10220
  %v10581 = vmax.f32 %v10181, %v10221
  %v10582 = vmax.f32 %v10182, %v10222
  %v10583 = vmax.f32 %v10183, %v10223
  %v10584 = vmax.f32 %v10184, %v10224
  %v10585 = vmax.f32 %v10185, %v10225
  %v10586 = vmax.f32 %v10186, %v10226
  %v10587 = vmax.f32 %v10187, %v10227
  %v10588 = vmax.f32 %v10188, %v10228
  %v10589 = vmax.f32 %v10549, %v10229
  %v10590 = vmax.f32 %v10550, %v10230
  %v10591 = vmax.f32 %v10551, %v10231
  %v10592 = vmax.f32 %v10552, %v10232
  %v10593 = vmax.f32 %v10553, %v10233
  %v10594 = vmax.f32 %v10554, %v10234
  %v10595 = vmax.f32 %v10555, %v10235
  %v10596 = vmax.f32 %v10556, %v10236
  %v10597 = vmax.f32 %v10557, %v10237
  %v10598 = vmax.f32 %v10558, %v10238
  %v10599 = vmax.f32 %v10559, %v10239
  %v10600 = vmax.f32 %v10560, %v10240
  %v10601 = vmax.f32 %v10561, %v10241
  %v10602 = vmax.f32 %v10562, %v10242
  %v10603 = vmax.f32 %v10563, %v10243
  %v10604 = vmax.f32 %v10564, %v10244
  %v10605 = vmax.f32 %v10565, %v10245
  %v10606 = vmax.f32 %v10566, %v10246
  %v10607 = vmax.f32 %v10567, %v10247
  %v10608 = vmax.f32 %v10568, %v10248
  %v10609 = vmax.f32 %v10569, %v10249
  %v10610 = vmax.f32 %v10570, %v10250
  %v10611 = vmax.f32 %v10571, %v10251
  %v10612 = vmax.f32 %v10572, %v10252
  %v10613 = vmax.f32 %v10573, %v10253
  %v10614 = vmax.f32 %v10574, %v10254
  %v10615 = vmax.f32 %v10575, %v10255
  %v10616 = vmax.f32 %v10576, %v10256
  %v10617 = vmax.f32 %v10577, %v10257
  %v10618 = vmax.f32 %v10578, %v10258
  %v10619 = vmax.f32 %v10579, %v10259
  %v10620 = vmax.f32 %v10580, %v10260
  %v10621 = vmax.f32 %v10581, %v10261
  %v10622 = vmax.f32 %v10582, %v10262
  %v10623 = vmax.f32 %v10583, %v10263
  %v10624 = vmax.f32 %v10584, %v10264
  %v10625 = vmax.f32 %v10585, %v10265
  %v10626 = vmax.f32 %v10586, %v10266
  %v10627 = vmax.f32 %v10587, %v10267
  %v10628 = vmax.f32 %v10588, %v10268
  %v10629 = vmax.f32 %v10269, %v10309
  %v10630 = vmax.f32 %v10270, %v10310
  %v10631 = vmax.f32 %v10271, %v10311
  %v10632 = vmax.f32 %v10272, %v10312
  %v10633 = vmax.f32 %v10273, %v10313
  %v10634 = vmax.f32 %v10274, %v10314
  %v10635 = vmax.f32 %v10275, %v10315
  %v10636 = vmax.f32 %v10276, %v10316
  %v10637 = vmax.f32 %v10277, %v10317
  %v10638 = vmax.f32 %v10278, %v10318
  %v10639 = vmax.f32 %v10279, %v10319
  %v10640 = vmax.f32 %v10280, %v10320
  %v10641 = vmax.f32 %v10281, %v10321
  %v10642 = vmax.f32 %v10282, %v10322
  %v10643 = vmax.f32 %v10283, %v10323
  %v10644 = vmax.f32 %v10284, %v10324
  %v10645 = vmax.f32 %v10285, %v10325
  %v10646 = vmax.f32 %v10286, %v10326
  %v10647 = vmax.f32 %v10287, %v10327
  %v10648 = vmax.f32 %v10288, %v10328
  %v10649 = vmax.f32 %v10289, %v10329
  %v10650 = vmax.f32 %v10290, %v10330
  %v10651 = vmax.f32 %v10291, %v10331
  %v10652 = vmax.f32 %v10292, %v10332
  %v10653 = vmax.f32 %v10293, %v10333
  %v10654 = vmax.f32 %v10294, %v10334
  %v10655 = vmax.f32 %v10295, %v10335
  %v10656 = vmax.f32 %v10296, %v10336
  %v10657 = vmax.f32 %v10297, %v10337
  %v10658 = vmax.f32 %v10298, %v10338
  %v10659 = vmax.f32 %v10299, %v10339
  %v10660 = vmax.f32 %v10300, %v10340
  %v10661 = vmax.f32 %v10301, %v10341
  %v10662 = vmax.f32 %v10302, %v10342
  %v10663 = vmax.f32 %v10303, %v10343
  %v10664 = vmax.f32 %v10304, %v10344
  %v10665 = vmax.f32 %v10305, %v10345
  %v10666 = vmax.f32 %v10306, %v10346
  %v10667 = vmax.f32 %v10307, %v10347
  %v10668 = vmax.f32 %v10308, %v10348
  %v10669 = vmax.f32 %v10629, %v10349
  %v10670 = vmax.f32 %v10630, %v10350
  %v10671 = vmax.f32 %v10631, %v10351
  %v10672 = vmax.f32 %v10632, %v10352
  %v10673 = vmax.f32 %v10633, %v10353
  %v10674 = vmax.f32 %v10634, %v10354
  %v10675 = vmax.f32 %v10635, %v10355
  %v10676 = vmax.f32 %v10636, %v10356
  %v10677 = vmax.f32 %v10637, %v10357
  %v10678 = vmax.f32 %v10638, %v10358
  %v10679 = vmax.f32 %v10639, %v10359
  %v10680 = vmax.f32 %v10640, %v10360
  %v10681 = vmax.f32 %v10641, %v10361
  %v10682 = vmax.f32 %v10642, %v10362
  %v10683 = vmax.f32 %v10643, %v10363
  %v10684 = vmax.f32 %v10644, %v10364
  %v10685 = vmax.f32 %v10645, %v10365
  %v10686 = vmax.f32 %v10646, %v10366
  %v10687 = vmax.f32 %v10647, %v10367
  %v10688 = vmax.f32 %v10648, %v10368
  %v10689 = vmax.f32 %v10649, %v10369
  %v10690 = vmax.f32 %v10650, %v10370
  %v10691 = vmax.f32 %v10651, %v10371
  %v10692 = vmax.f32 %v10652, %v10372
  %v10693 = vmax.f32 %v10653, %v10373
  %v10694 = vmax.f32 %v10654, %v10374
  %v10695 = vmax.f32 %v10655, %v10375
  %v10696 = vmax.f32 %v10656, %v10376
  %v10697 = vmax.f32 %v10657, %v10377
  %v10698 = vmax.f32 %v10658, %v10378
  %v10699 = vmax.f32 %v10659, %v10379
  %v10700 = vmax.f32 %v10660, %v10380
  %v10701 = vmax.f32 %v10661, %v10381
  %v10702 = vmax.f32 %v10662, %v10382
  %v10703 = vmax.f32 %v10663, %v10383
  %v10704 = vmax.f32 %v10664, %v10384
  %v10705 = vmax.f32 %v10665, %v10385
  %v10706 = vmax.f32 %v10666, %v10386
  %v10707 = vmax.f32 %v10667, %v10387
  %v10708 = vmax.f32 %v10668, %v10388
  %v10709 = vmax.f32 %v10389, %v10429
  %v10710 = vmax.f32 %v10390, %v10430
  %v10711 = vmax.f32 %v10391, %v10431
  %v10712 = vmax.f32 %v10392, %v10432
  %v10713 = vmax.f32 %v10393, %v10433
  %v10714 = vmax.f32 %v10394, %v10434
  %v10715 = vmax.f32 %v10395, %v10435
  %v10716 = vmax.f32 %v10396, %v10436
  %v10717 = vmax.f32 %v10397, %v10437
  %v10718 = vmax.f32 %v10398, %v10438
  %v10719 = vmax.f32 %v10399, %v10439
  %v10720 = vmax.f32 %v10400, %v10440
  %v10721 = vmax.f32 %v10401, %v10441
  %v10722 = vmax.f32 %v10402, %v10442
  %v10723 = vmax.f32 %v10403, %v10443
  %v10724 = vmax.f32 %v10404, %v10444
  %v10725 = vmax.f32 %v10405, %v10445
  %v10726 = vmax.f32 %v10406, %v10446
  %v10727 = vmax.f32 %v10407, %v10447
  %v10728 = vmax.f32 %v10408, %v10448
  %v10729 = vmax.f32 %v10409, %v10449
  %v10730 = vmax.f32 %v10410, %v10450
  %v10731 = vmax.f32 %v10411, %v10451
  %v10732 = vmax.f32 %v10412, %v10452
  %v10733 = vmax.f32 %v10413, %v10453
  %v10734 = vmax.f32 %v10414, %v10454
  %v10735 = vmax.f32 %v10415, %v10455
  %v10736 = vmax.f32 %v10416, %v10456
  %v10737 = vmax.f32 %v10417, %v10457
  %v10738 = vmax.f32 %v10418, %v10458
  %v10739 = vmax.f32 %v10419, %v10459
  %v10740 = vmax.f32 %v10420, %v10460
  %v10741 = vmax.f32 %v10421, %v10461
  %v10742 = vmax.f32 %v10422, %v10462
  %v10743 = vmax.f32 %v10423, %v10463
  %v10744 = vmax.f32 %v10424, %v10464
  %v10745 = vmax.f32 %v10425, %v10465
  %v10746 = vmax.f32 %v10426, %v10466
  %v10747 = vmax.f32 %v10427, %v10467
  %v10748 = vmax.f32 %v10428, %v10468
  %v10749 = vmax.f32 %v10709, %v10469
  %v10750 = vmax.f32 %v10710, %v10470
  %v10751 = vmax.f32 %v10711, %v10471
  %v10752 = vmax.f32 %v10712, %v10472
  %v10753 = vmax.f32 %v10713, %v10473
  %v10754 = vmax.f32 %v10714, %v10474
  %v10755 = vmax.f32 %v10715, %v10475
  %v10756 = vmax.f32 %v10716, %v10476
  %v10757 = vmax.f32 %v10717, %v10477
  %v10758 = vmax.f32 %v10718, %v10478
  %v10759 = vmax.f32 %v10719, %v10479
  %v10760 = vmax.f32 %v10720, %v10480
  %v10761 = vmax.f32 %v10721, %v10481
  %v10762 = vmax.f32 %v10722, %v10482
  %v10763 = vmax.f32 %v10723, %v10483
  %v10764 = vmax.f32 %v10724, %v10484
  %v10765 = vmax.f32 %v10725, %v10485
  %v10766 = vmax.f32 %v10726, %v10486
  %v10767 = vmax.f32 %v10727, %v10487
  %v10768 = vmax.f32 %v10728, %v10488
  %v10769 = vmax.f32 %v10729, %v10489
  %v10770 = vmax.f32 %v10730, %v10490
  %v10771 = vmax.f32 %v10731, %v10491
  %v10772 = vmax.f32 %v10732, %v10492
  %v10773 = vmax.f32 %v10733, %v10493
  %v10774 = vmax.f32 %v10734, %v10494
  %v10775 = vmax.f32 %v10735, %v10495
  %v10776 = vmax.f32 %v10736, %v10496
  %v10777 = vmax.f32 %v10737, %v10497
  %v10778 = vmax.f32 %v10738, %v10498
  %v10779 = vmax.f32 %v10739, %v10499
  %v10780 = vmax.f32 %v10740, %v10500
  %v10781 = vmax.f32 %v10741, %v10501
  %v10782 = vmax.f32 %v10742, %v10502
  %v10783 = vmax.f32 %v10743, %v10503
  %v10784 = vmax.f32 %v10744, %v10504
  %v10785 = vmax.f32 %v10745, %v10505
  %v10786 = vmax.f32 %v10746, %v10506
  %v10787 = vmax.f32 %v10747, %v10507
  %v10788 = vmax.f32 %v10748, %v10508
  %v10789 = vmax.f32 %v10509, %v10511
  %v10790 = vmax.f32 %v10510, %v10512
  %v10791 = vpack.c.bf16 %v10790, %v10789
  %v10792 = vmax.f32 %v10513, %v10515
  %v10793 = vmax.f32 %v10514, %v10516
  %v10794 = vmax.f32 %v10792, %v10517
  %v10795 = vmax.f32 %v10793, %v10518
  %v10796 = vpack.c.bf16 %v10795, %v10794
  %v10797 = vmax.f32 %v10519, %v10521
  %v10798 = vmax.f32 %v10520, %v10522
  %v10799 = vmax.f32 %v10797, %v10523
  %v10800 = vmax.f32 %v10798, %v10524
  %v10801 = vpack.c.bf16 %v10800, %v10799
  %v10802 = vmax.f32 %v10525, %v10527
  %v10803 = vmax.f32 %v10526, %v10528
  %v10804 = vmax.f32 %v10802, %v10529
  %v10805 = vmax.f32 %v10803, %v10530
  %v10806 = vpack.c.bf16 %v10805, %v10804
  %v10807 = vmax.f32 %v10531, %v10533
  %v10808 = vmax.f32 %v10532, %v10534
  %v10809 = vmax.f32 %v10807, %v10535
  %v10810 = vmax.f32 %v10808, %v10536
  %v10811 = vpack.c.bf16 %v10810, %v10809
  %v10812 = vmax.f32 %v10537, %v10539
  %v10813 = vmax.f32 %v10538, %v10540
  %v10814 = vmax.f32 %v10812, %v10541
  %v10815 = vmax.f32 %v10813, %v10542
  %v10816 = vpack.c.bf16 %v10815, %v10814
  %v10817 = vmax.f32 %v10543, %v10545
  %v10818 = vmax.f32 %v10544, %v10546
  %v10819 = vmax.f32 %v10817, %v10547
  %v10820 = vmax.f32 %v10818, %v10548
  %v10821 = vpack.c.bf16 %v10820, %v10819
  %v10822 = vmax.f32 %v10589, %v10591
  %v10823 = vmax.f32 %v10590, %v10592
  %v10824 = vpack.c.bf16 %v10823, %v10822
  %v10825 = vmax.f32 %v10593, %v10595
  %v10826 = vmax.f32 %v10594, %v10596
  %v10827 = vmax.f32 %v10825, %v10597
  %v10828 = vmax.f32 %v10826, %v10598
  %v10829 = vpack.c.bf16 %v10828, %v10827
  %v10830 = vmax.f32 %v10599, %v10601
  %v10831 = vmax.f32 %v10600, %v10602
  %v10832 = vmax.f32 %v10830, %v10603
  %v10833 = vmax.f32 %v10831, %v10604
  %v10834 = vpack.c.bf16 %v10833, %v10832
  %v10835 = vmax.f32 %v10605, %v10607
  %v10836 = vmax.f32 %v10606, %v10608
  %v10837 = vmax.f32 %v10835, %v10609
  %v10838 = vmax.f32 %v10836, %v10610
  %v10839 = vpack.c.bf16 %v10838, %v10837
  %v10840 = vmax.f32 %v10611, %v10613
  %v10841 = vmax.f32 %v10612, %v10614
  %v10842 = vmax.f32 %v10840, %v10615
  %v10843 = vmax.f32 %v10841, %v10616
  %v10844 = vpack.c.bf16 %v10843, %v10842
  %v10845 = vmax.f32 %v10617, %v10619
  %v10846 = vmax.f32 %v10618, %v10620
  %v10847 = vmax.f32 %v10845, %v10621
  %v10848 = vmax.f32 %v10846, %v10622
  %v10849 = vpack.c.bf16 %v10848, %v10847
  %v10850 = vmax.f32 %v10623, %v10625
  %v10851 = vmax.f32 %v10624, %v10626
  %v10852 = vmax.f32 %v10850, %v10627
  %v10853 = vmax.f32 %v10851, %v10628
  %v10854 = vpack.c.bf16 %v10853, %v10852
  %v10855 = vmax.f32 %v10669, %v10671
  %v10856 = vmax.f32 %v10670, %v10672
  %v10857 = vpack.c.bf16 %v10856, %v10855
  %v10858 = vmax.f32 %v10673, %v10675
  %v10859 = vmax.f32 %v10674, %v10676
  %v10860 = vmax.f32 %v10858, %v10677
  %v10861 = vmax.f32 %v10859, %v10678
  %v10862 = vpack.c.bf16 %v10861, %v10860
  %v10863 = vmax.f32 %v10679, %v10681
  %v10864 = vmax.f32 %v10680, %v10682
  %v10865 = vmax.f32 %v10863, %v10683
  %v10866 = vmax.f32 %v10864, %v10684
  %v10867 = vpack.c.bf16 %v10866, %v10865
  %v10868 = vmax.f32 %v10685, %v10687
  %v10869 = vmax.f32 %v10686, %v10688
  %v10870 = vmax.f32 %v10868, %v10689
  %v10871 = vmax.f32 %v10869, %v10690
  %v10872 = vpack.c.bf16 %v10871, %v10870
  %v10873 = vmax.f32 %v10691, %v10693
  %v10874 = vmax.f32 %v10692, %v10694
  %v10875 = vmax.f32 %v10873, %v10695
  %v10876 = vmax.f32 %v10874, %v10696
  %v10877 = vpack.c.bf16 %v10876, %v10875
  %v10878 = vmax.f32 %v10697, %v10699
  %v10879 = vmax.f32 %v10698, %v10700
  %v10880 = vmax.f32 %v10878, %v10701
  %v10881 = vmax.f32 %v10879, %v10702
  %v10882 = vpack.c.bf16 %v10881, %v10880
  %v10883 = vmax.f32 %v10703, %v10705
  %v10884 = vmax.f32 %v10704, %v10706
  %v10885 = vmax.f32 %v10883, %v10707
  %v10886 = vmax.f32 %v10884, %v10708
  %v10887 = vpack.c.bf16 %v10886, %v10885
  %v10888 = vmax.f32 %v10749, %v10751
  %v10889 = vmax.f32 %v10750, %v10752
  %v10890 = vpack.c.bf16 %v10889, %v10888
  %v10891 = vmax.f32 %v10753, %v10755
  %v10892 = vmax.f32 %v10754, %v10756
  %v10893 = vmax.f32 %v10891, %v10757
  %v10894 = vmax.f32 %v10892, %v10758
  %v10895 = vpack.c.bf16 %v10894, %v10893
  %v10896 = vmax.f32 %v10759, %v10761
  %v10897 = vmax.f32 %v10760, %v10762
  %v10898 = vmax.f32 %v10896, %v10763
  %v10899 = vmax.f32 %v10897, %v10764
  %v10900 = vpack.c.bf16 %v10899, %v10898
  %v10901 = vmax.f32 %v10765, %v10767
  %v10902 = vmax.f32 %v10766, %v10768
  %v10903 = vmax.f32 %v10901, %v10769
  %v10904 = vmax.f32 %v10902, %v10770
  %v10905 = vpack.c.bf16 %v10904, %v10903
  %v10906 = vmax.f32 %v10771, %v10773
  %v10907 = vmax.f32 %v10772, %v10774
  %v10908 = vmax.f32 %v10906, %v10775
  %v10909 = vmax.f32 %v10907, %v10776
  %v10910 = vpack.c.bf16 %v10909, %v10908
  %v10911 = vmax.f32 %v10777, %v10779
  %v10912 = vmax.f32 %v10778, %v10780
  %v10913 = vmax.f32 %v10911, %v10781
  %v10914 = vmax.f32 %v10912, %v10782
  %v10915 = vpack.c.bf16 %v10914, %v10913
  %v10916 = vmax.f32 %v10783, %v10785
  %v10917 = vmax.f32 %v10784, %v10786
  %v10918 = vmax.f32 %v10916, %v10787
  %v10919 = vmax.f32 %v10917, %v10788
  %v10920 = vpack.c.bf16 %v10919, %v10918
  %v10921 = vld [vmem:[%s3] sm:$0xff]
  %v10922 = vld [vmem:[%s3 + $0x8] sm:$0xff]
  %v10923 = vld [vmem:[%s4] sm:$0xff]
  %v10924 = vld [vmem:[%s4 + $0x8] sm:$0xff]
  %10926 = vset.pattern.permute.xlu0 0
  %10927 = vperm.xlu0 %10926, %v10923
  %v10928 = vpop.permute.xlu0 %10927
  %10931 = vset.pattern.permute.xlu0 0
  %10932 = vperm.xlu0 %10931, %v10924
  %v10933 = vpop.permute.xlu0 %10932
  %v10937 = vunpack.c.l.b16 %v10921
  %v10938 = vunpack.c.h.b16 %v10921
  %v10939 = vunpack.c.l.b16 %v10922
  %v10940 = vunpack.c.h.b16 %v10922
  %v10941 = vpack.c.b16 %v10939, %v10937
  %v10942 = vpack.c.b16 %v10940, %v10938
  %vm10944 = vcmask 130048
  %v10946 = vsel %vm10944, %v10942, 0
  %10948 = vmatprep.subr.bf16.mxu0 0
  %10949 = vmatpush1.bf16.msra.mxu0 0
  %10950 = vmatprep.subr.bf16.mxu0 0
  %10951 = vmatpush1.bf16.msra.mxu0 0
  %10952 = vmatprep.subr.bf16.mxu0 0
  %10953 = vmatpush1.bf16.msra.mxu0 0
  %10954 = vmatprep.subr.bf16.mxu0 0
  %10955 = vmatpush1.bf16.msra.mxu0 0
  %10956 = vmatprep.subr.bf16.mxu0 0
  %10957 = vmatpush1.bf16.msra.mxu0 %v10791
  %10958 = vmatprep.subr.bf16.mxu0 0
  %10959 = vmatpush1.bf16.msra.mxu0 %v10796
  %10960 = vmatprep.subr.bf16.mxu0 0
  %10961 = vmatpush1.bf16.msra.mxu0 0
  %10962 = vmatprep.subr.bf16.mxu0 0
  %10963 = vmatpush1.bf16.msra.mxu0 %v10824
  %10964 = vmatprep.subr.bf16.mxu0 0
  %10965 = vmatpush1.bf16.msra.mxu0 %v10829
  %10966 = vmatprep.subr.bf16.mxu0 0
  %10967 = vmatpush1.bf16.msra.mxu0 0
  %10968 = vmatprep.subr.bf16.mxu0 0
  %10969 = vmatpush1.bf16.msra.mxu0 0
  %10970 = vmatprep.subr.bf16.mxu0 0
  %10971 = vmatpush1.bf16.msra.mxu0 0
  %10972 = vmatprep.subr.bf16.mxu0 0
  %10973 = vmatpush1.bf16.msra.mxu0 0
  %10974 = vmatprep.subr.bf16.mxu0 0
  %10975 = vmatpush1.bf16.msra.mxu0 0
  %10976 = vmatprep.subr.bf16.mxu0 0
  %10977 = vmatpush1.bf16.msra.mxu0 0
  %10978 = vmatprep.subr.bf16.mxu0 0
  %10979 = vmatpush1.bf16.msra.mxu0 0
  %10980 = vmatprep.mubr.bf16.mxu0 %v10946
  %10981 = vmatmul.mubr.bf16.gmra.mrb[0].mxu0 %v10941
  %v10982 = vpop.f32.mrb[0].mxu0
  %v10983 = vadd.f32 %v10928, %v10982
  %v10984 = vpop.f32.mrb[0].mxu0
  %v10985 = vpop.f32.mrb[0].mxu0
  %v10986 = vadd.f32 %v10933, %v10985
  %v10987 = vpop.f32.mrb[0].mxu0
  %10988 = vdwg.mxu0
  %v10989 = vmax.f32 %v10983, 0.0
  %v10990 = vmax.f32 %v10986, 0.0
  %10991 = vmatprep.subr.bf16.mxu0 0
  %10992 = vmatpush1.bf16.msra.mxu0 0
  %10993 = vmatprep.subr.bf16.mxu0 0
  %10994 = vmatpush1.bf16.msra.mxu0 0
  %10995 = vmatprep.subr.bf16.mxu0 0
  %10996 = vmatpush1.bf16.msra.mxu0 0
  %10997 = vmatprep.subr.bf16.mxu0 0
  %10998 = vmatpush1.bf16.msra.mxu0 %v10791
  %10999 = vmatprep.subr.bf16.mxu0 0
  %11000 = vmatpush1.bf16.msra.mxu0 %v10796
  %11001 = vmatprep.subr.bf16.mxu0 0
  %11002 = vmatpush1.bf16.msra.mxu0 %v10801
  %11003 = vmatprep.subr.bf16.mxu0 0
  %11004 = vmatpush1.bf16.msra.mxu0 %v10824
  %11005 = vmatprep.subr.bf16.mxu0 0
  %11006 = vmatpush1.bf16.msra.mxu0 %v10829
  %11007 = vmatprep.subr.bf16.mxu0 0
  %11008 = vmatpush1.bf16.msra.mxu0 %v10834
  %11009 = vmatprep.subr.bf16.mxu0 0
  %11010 = vmatpush1.bf16.msra.mxu0 0
  %11011 = vmatprep.subr.bf16.mxu0 0
  %11012 = vmatpush1.bf16.msra.mxu0 0
  %11013 = vmatprep.subr.bf16.mxu0 0
  %11014 = vmatpush1.bf16.msra.mxu0 0
  %11015 = vmatprep.subr.bf16.mxu0 0
  %11016 = vmatpush1.bf16.msra.mxu0 0
  %11017 = vmatprep.subr.bf16.mxu0 0
  %11018 = vmatpush1.bf16.msra.mxu0 0
  %11019 = vmatprep.subr.bf16.mxu0 0
  %11020 = vmatpush1.bf16.msra.mxu0 0
  %11021 = vmatprep.subr.bf16.mxu0 0
  %11022 = vmatpush1.bf16.msra.mxu0 0
  %11023 = vmatprep.mubr.bf16.mxu0 %v10946
  %11024 = vmatmul.mubr.bf16.gmra.mrb[0].mxu0 %v10941
  %v11025 = vpop.f32.mrb[0].mxu0
  %v11026 = vadd.f32 %v10928, %v11025
  %v11027 = vpop.f32.mrb[0].mxu0
  %v11028 = vpop.f32.mrb[0].mxu0
  %v11029 = vadd.f32 %v10933, %v11028
  %v11030 = vpop.f32.mrb[0].mxu0
  %11031 = vdwg.mxu0
  %v11032 = vmax.f32 %v11026, 0.0
  %v11033 = vmax.f32 %v11029, 0.0
  %11034 = vmatprep.subr.bf16.mxu0 0
  %11035 = vmatpush1.bf16.msra.mxu0 0
  %11036 = vmatprep.subr.bf16.mxu0 0
  %11037 = vmatpush1.bf16.msra.mxu0 0
  %11038 = vmatprep.subr.bf16.mxu0 0
  %11039 = vmatpush1.bf16.msra.mxu0 0
  %11040 = vmatprep.subr.bf16.mxu0 0
  %11041 = vmatpush1.bf16.msra.mxu0 %v10796
  %11042 = vmatprep.subr.bf16.mxu0 0
  %11043 = vmatpush1.bf16.msra.mxu0 %v10801
  %11044 = vmatprep.subr.bf16.mxu0 0
  %11045 = vmatpush1.bf16.msra.mxu0 %v10806
  %11046 = vmatprep.subr.bf16.mxu0 0
  %11047 = vmatpush1.bf16.msra.mxu0 %v10829
  %11048 = vmatprep.subr.bf16.mxu0 0
  %11049 = vmatpush1.bf16.msra.mxu0 %v10834
  %11050 = vmatprep.subr.bf16.mxu0 0
  %11051 = vmatpush1.bf16.msra.mxu0 %v10839
  %11052 = vmatprep.subr.bf16.mxu0 0
  %11053 = vmatpush1.bf16.msra.mxu0 0
  %11054 = vmatprep.subr.bf16.mxu0 0
  %11055 = vmatpush1.bf16.msra.mxu0 0
  %11056 = vmatprep.subr.bf16.mxu0 0
  %11057 = vmatpush1.bf16.msra.mxu0 0
  %11058 = vmatprep.subr.bf16.mxu0 0
  %11059 = vmatpush1.bf16.msra.mxu0 0
  %11060 = vmatprep.subr.bf16.mxu0 0
  %11061 = vmatpush1.bf16.msra.mxu0 0
  %11062 = vmatprep.subr.bf16.mxu0 0
  %11063 = vmatpush1.bf16.msra.mxu0 0
  %11064 = vmatprep.subr.bf16.mxu0 0
  %11065 = vmatpush1.bf16.msra.mxu0 0
  %11066 = vmatprep.mubr.bf16.mxu0 %v10946
  %11067 = vmatmul.mubr.bf16.gmra.mrb[0].mxu0 %v10941
  %v11068 = vpop.f32.mrb[0].mxu0
  %v11069 = vadd.f32 %v10928, %v11068
  %v11070 = vpop.f32.mrb[0].mxu0
  %v11071 = vpop.f32.mrb[0].mxu0
  %v11072 = vadd.f32 %v10933, %v11071
  %v11073 = vpop.f32.mrb[0].mxu0
  %11074 = vdwg.mxu0
  %v11075 = vmax.f32 %v11069, 0.0
  %v11076 = vmax.f32 %v11072, 0.0
  %11077 = vmatprep.subr.bf16.mxu0 0
  %11078 = vmatpush1.bf16.msra.mxu0 0
  %11079 = vmatprep.subr.bf16.mxu0 0
  %11080 = vmatpush1.bf16.msra.mxu0 0
  %11081 = vmatprep.subr.bf16.mxu0 0
  %11082 = vmatpush1.bf16.msra.mxu0 0
  %11083 = vmatprep.subr.bf16.mxu0 0
  %11084 = vmatpush1.bf16.msra.mxu0 %v10801
  %11085 = vmatprep.subr.bf16.mxu0 0
  %11086 = vmatpush1.bf16.msra.mxu0 %v10806
  %11087 = vmatprep.subr.bf16.mxu0 0
  %11088 = vmatpush1.bf16.msra.mxu0 %v10811
  %11089 = vmatprep.subr.bf16.mxu0 0
  %11090 = vmatpush1.bf16.msra.mxu0 %v10834
  %11091 = vmatprep.subr.bf16.mxu0 0
  %11092 = vmatpush1.bf16.msra.mxu0 %v10839
  %11093 = vmatprep.subr.bf16.mxu0 0
  %11094 = vmatpush1.bf16.msra.mxu0 %v10844
  %11095 = vmatprep.subr.bf16.mxu0 0
  %11096 = vmatpush1.bf16.msra.mxu0 0
  %11097 = vmatprep.subr.bf16.mxu0 0
  %11098 = vmatpush1.bf16.msra.mxu0 0
  %11099 = vmatprep.subr.bf16.mxu0 0
  %11100 = vmatpush1.bf16.msra.mxu0 0
  %11101 = vmatprep.subr.bf16.mxu0 0
  %11102 = vmatpush1.bf16.msra.mxu0 0
  %11103 = vmatprep.subr.bf16.mxu0 0
  %11104 = vmatpush1.bf16.msra.mxu0 0
  %11105 = vmatprep.subr.bf16.mxu0 0
  %11106 = vmatpush1.bf16.msra.mxu0 0
  %11107 = vmatprep.subr.bf16.mxu0 0
  %11108 = vmatpush1.bf16.msra.mxu0 0
  %11109 = vmatprep.mubr.bf16.mxu0 %v10946
  %11110 = vmatmul.mubr.bf16.gmra.mrb[0].mxu0 %v10941
  %v11111 = vpop.f32.mrb[0].mxu0
  %v11112 = vadd.f32 %v10928, %v11111
  %v11113 = vpop.f32.mrb[0].mxu0
  %v11114 = vpop.f32.mrb[0].mxu0
  %v11115 = vadd.f32 %v10933, %v11114
  %v11116 = vpop.f32.mrb[0].mxu0
  %11117 = vdwg.mxu0
  %v11118 = vmax.f32 %v11112, 0.0
  %v11119 = vmax.f32 %v11115, 0.0
  %11120 = vmatprep.subr.bf16.mxu0 0
  %11121 = vmatpush1.bf16.msra.mxu0 0
  %11122 = vmatprep.subr.bf16.mxu0 0
  %11123 = vmatpush1.bf16.msra.mxu0 0
  %11124 = vmatprep.subr.bf16.mxu0 0
  %11125 = vmatpush1.bf16.msra.mxu0 0
  %11126 = vmatprep.subr.bf16.mxu0 0
  %11127 = vmatpush1.bf16.msra.mxu0 %v10806
  %11128 = vmatprep.subr.bf16.mxu0 0
  %11129 = vmatpush1.bf16.msra.mxu0 %v10811
  %11130 = vmatprep.subr.bf16.mxu0 0
  %11131 = vmatpush1.bf16.msra.mxu0 %v10816
  %11132 = vmatprep.subr.bf16.mxu0 0
  %11133 = vmatpush1.bf16.msra.mxu0 %v10839
  %11134 = vmatprep.subr.bf16.mxu0 0
  %11135 = vmatpush1.bf16.msra.mxu0 %v10844
  %11136 = vmatprep.subr.bf16.mxu0 0
  %11137 = vmatpush1.bf16.msra.mxu0 %v10849
  %11138 = vmatprep.subr.bf16.mxu0 0
  %11139 = vmatpush1.bf16.msra.mxu0 0
  %11140 = vmatprep.subr.bf16.mxu0 0
  %11141 = vmatpush1.bf16.msra.mxu0 0
  %11142 = vmatprep.subr.bf16.mxu0 0
  %11143 = vmatpush1.bf16.msra.mxu0 0
  %11144 = vmatprep.subr.bf16.mxu0 0
  %11145 = vmatpush1.bf16.msra.mxu0 0
  %11146 = vmatprep.subr.bf16.mxu0 0
  %11147 = vmatpush1.bf16.msra.mxu0 0
  %11148 = vmatprep.subr.bf16.mxu0 0
  %11149 = vmatpush1.bf16.msra.mxu0 0
  %11150 = vmatprep.subr.bf16.mxu0 0
  %11151 = vmatpush1.bf16.msra.mxu0 0
  %11152 = vmatprep.mubr.bf16.mxu0 %v10946
  %11153 = vmatmul.mubr.bf16.gmra.mrb[0].mxu0 %v10941
  %v11154 = vpop.f32.mrb[0].mxu0
  %v11155 = vadd.f32 %v10928, %v11154
  %v11156 = vpop.f32.mrb[0].mxu0
  %v11157 = vpop.f32.mrb[0].mxu0
  %v11158 = vadd.f32 %v10933, %v11157
  %v11159 = vpop.f32.mrb[0].mxu0
  %11160 = vdwg.mxu0
  %v11161 = vmax.f32 %v11155, 0.0
  %v11162 = vmax.f32 %v11158, 0.0
  %11163 = vmatprep.subr.bf16.mxu0 0
  %11164 = vmatpush1.bf16.msra.mxu0 0
  %11165 = vmatprep.subr.bf16.mxu0 0
  %11166 = vmatpush1.bf16.msra.mxu0 0
  %11167 = vmatprep.subr.bf16.mxu0 0
  %11168 = vmatpush1.bf16.msra.mxu0 0
  %11169 = vmatprep.subr.bf16.mxu0 0
  %11170 = vmatpush1.bf16.msra.mxu0 %v10811
  %11171 = vmatprep.subr.bf16.mxu0 0
  %11172 = vmatpush1.bf16.msra.mxu0 %v10816
  %11173 = vmatprep.subr.bf16.mxu0 0
  %11174 = vmatpush1.bf16.msra.mxu0 %v10821
  %11175 = vmatprep.subr.bf16.mxu0 0
  %11176 = vmatpush1.bf16.msra.mxu0 %v10844
  %11177 = vmatprep.subr.bf16.mxu0 0
  %11178 = vmatpush1.bf16.msra.mxu0 %v10849
  %11179 = vmatprep.subr.bf16.mxu0 0
  %11180 = vmatpush1.bf16.msra.mxu0 %v10854
  %11181 = vmatprep.subr.bf16.mxu0 0
  %11182 = vmatpush1.bf16.msra.mxu0 0
  %11183 = vmatprep.subr.bf16.mxu0 0
  %11184 = vmatpush1.bf16.msra.mxu0 0
  %11185 = vmatprep.subr.bf16.mxu0 0
  %11186 = vmatpush1.bf16.msra.mxu0 0
  %11187 = vmatprep.subr.bf16.mxu0 0
  %11188 = vmatpush1.bf16.msra.mxu0 0
  %11189 = vmatprep.subr.bf16.mxu0 0
  %11190 = vmatpush1.bf16.msra.mxu0 0
  %11191 = vmatprep.subr.bf16.mxu0 0
  %11192 = vmatpush1.bf16.msra.mxu0 0
  %11193 = vmatprep.subr.bf16.mxu0 0
  %11194 = vmatpush1.bf16.msra.mxu0 0
  %11195 = vmatprep.mubr.bf16.mxu0 %v10946
  %11196 = vmatmul.mubr.bf16.gmra.mrb[0].mxu0 %v10941
  %v11197 = vpop.f32.mrb[0].mxu0
  %v11198 = vadd.f32 %v10928, %v11197
  %v11199 = vpop.f32.mrb[0].mxu0
  %v11200 = vpop.f32.mrb[0].mxu0
  %v11201 = vadd.f32 %v10933, %v11200
  %v11202 = vpop.f32.mrb[0].mxu0
  %11203 = vdwg.mxu0
  %v11204 = vmax.f32 %v11198, 0.0
  %v11205 = vmax.f32 %v11201, 0.0
  %11206 = vmatprep.subr.bf16.mxu0 0
  %11207 = vmatpush1.bf16.msra.mxu0 0
  %11208 = vmatprep.subr.bf16.mxu0 0
  %11209 = vmatpush1.bf16.msra.mxu0 0
  %11210 = vmatprep.subr.bf16.mxu0 0
  %11211 = vmatpush1.bf16.msra.mxu0 0
  %11212 = vmatprep.subr.bf16.mxu0 0
  %11213 = vmatpush1.bf16.msra.mxu0 %v10816
  %11214 = vmatprep.subr.bf16.mxu0 0
  %11215 = vmatpush1.bf16.msra.mxu0 %v10821
  %11216 = vmatprep.subr.bf16.mxu0 0
  %11217 = vmatpush1.bf16.msra.mxu0 0
  %11218 = vmatprep.subr.bf16.mxu0 0
  %11219 = vmatpush1.bf16.msra.mxu0 %v10849
  %11220 = vmatprep.subr.bf16.mxu0 0
  %11221 = vmatpush1.bf16.msra.mxu0 %v10854
  %11222 = vmatprep.subr.bf16.mxu0 0
  %11223 = vmatpush1.bf16.msra.mxu0 0
  %11224 = vmatprep.subr.bf16.mxu0 0
  %11225 = vmatpush1.bf16.msra.mxu0 0
  %11226 = vmatprep.subr.bf16.mxu0 0
  %11227 = vmatpush1.bf16.msra.mxu0 0
  %11228 = vmatprep.subr.bf16.mxu0 0
  %11229 = vmatpush1.bf16.msra.mxu0 0
  %11230 = vmatprep.subr.bf16.mxu0 0
  %11231 = vmatpush1.bf16.msra.mxu0 0
  %11232 = vmatprep.subr.bf16.mxu0 0
  %11233 = vmatpush1.bf16.msra.mxu0 0
  %11234 = vmatprep.subr.bf16.mxu0 0
  %11235 = vmatpush1.bf16.msra.mxu0 0
  %11236 = vmatprep.subr.bf16.mxu0 0
  %11237 = vmatpush1.bf16.msra.mxu0 0
  %11238 = vmatprep.mubr.bf16.mxu0 %v10946
  %11239 = vmatmul.mubr.bf16.gmra.mrb[0].mxu0 %v10941
  %v11240 = vpop.f32.mrb[0].mxu0
  %v11241 = vadd.f32 %v10928, %v11240
  %v11242 = vpop.f32.mrb[0].mxu0
  %v11243 = vpop.f32.mrb[0].mxu0
  %v11244 = vadd.f32 %v10933, %v11243
  %v11245 = vpop.f32.mrb[0].mxu0
  %11246 = vdwg.mxu0
  %v11247 = vmax.f32 %v11241, 0.0
  %v11248 = vmax.f32 %v11244, 0.0
  %11249 = vmatprep.subr.bf16.mxu0 0
  %11250 = vmatpush1.bf16.msra.mxu0 0
  %11251 = vmatprep.subr.bf16.mxu0 0
  %11252 = vmatpush1.bf16.msra.mxu0 %v10791
  %11253 = vmatprep.subr.bf16.mxu0 0
  %11254 = vmatpush1.bf16.msra.mxu0 %v10796
  %11255 = vmatprep.subr.bf16.mxu0 0
  %11256 = vmatpush1.bf16.msra.mxu0 0
  %11257 = vmatprep.subr.bf16.mxu0 0
  %11258 = vmatpush1.bf16.msra.mxu0 %v10824
  %11259 = vmatprep.subr.bf16.mxu0 0
  %11260 = vmatpush1.bf16.msra.mxu0 %v10829
  %11261 = vmatprep.subr.bf16.mxu0 0
  %11262 = vmatpush1.bf16.msra.mxu0 0
  %11263 = vmatprep.subr.bf16.mxu0 0
  %11264 = vmatpush1.bf16.msra.mxu0 %v10857
  %11265 = vmatprep.subr.bf16.mxu0 0
  %11266 = vmatpush1.bf16.msra.mxu0 %v10862
  %11267 = vmatprep.subr.bf16.mxu0 0
  %11268 = vmatpush1.bf16.msra.mxu0 0
  %11269 = vmatprep.subr.bf16.mxu0 0
  %11270 = vmatpush1.bf16.msra.mxu0 0
  %11271 = vmatprep.subr.bf16.mxu0 0
  %11272 = vmatpush1.bf16.msra.mxu0 0
  %11273 = vmatprep.subr.bf16.mxu0 0
  %11274 = vmatpush1.bf16.msra.mxu0 0
  %11275 = vmatprep.subr.bf16.mxu0 0
  %11276 = vmatpush1.bf16.msra.mxu0 0
  %11277 = vmatprep.subr.bf16.mxu0 0
  %11278 = vmatpush1.bf16.msra.mxu0 0
  %11279 = vmatprep.subr.bf16.mxu0 0
  %11280 = vmatpush1.bf16.msra.mxu0 0
  %11281 = vmatprep.mubr.bf16.mxu0 %v10946
  %11282 = vmatmul.mubr.bf16.gmra.mrb[0].mxu0 %v10941
  %v11283 = vpop.f32.mrb[0].mxu0
  %v11284 = vadd.f32 %v10928, %v11283
  %v11285 = vpop.f32.mrb[0].mxu0
  %v11286 = vpop.f32.mrb[0].mxu0
  %v11287 = vadd.f32 %v10933, %v11286
  %v11288 = vpop.f32.mrb[0].mxu0
  %11289 = vdwg.mxu0
  %v11290 = vmax.f32 %v11284, 0.0
  %v11291 = vmax.f32 %v11287, 0.0
  %11292 = vmatprep.subr.bf16.mxu0 0
  %11293 = vmatpush1.bf16.msra.mxu0 %v10791
  %11294 = vmatprep.subr.bf16.mxu0 0
  %11295 = vmatpush1.bf16.msra.mxu0 %v10796
  %11296 = vmatprep.subr.bf16.mxu0 0
  %11297 = vmatpush1.bf16.msra.mxu0 %v10801
  %11298 = vmatprep.subr.bf16.mxu0 0
  %11299 = vmatpush1.bf16.msra.mxu0 %v10824
  %11300 = vmatprep.subr.bf16.mxu0 0
  %11301 = vmatpush1.bf16.msra.mxu0 %v10829
  %11302 = vmatprep.subr.bf16.mxu0 0
  %11303 = vmatpush1.bf16.msra.mxu0 %v10834
  %11304 = vmatprep.subr.bf16.mxu0 0
  %11305 = vmatpush1.bf16.msra.mxu0 %v10857
  %11306 = vmatprep.subr.bf16.mxu0 0
  %11307 = vmatpush1.bf16.msra.mxu0 %v10862
  %11308 = vmatprep.subr.bf16.mxu0 0
  %11309 = vmatpush1.bf16.msra.mxu0 %v10867
  %11310 = vmatprep.subr.bf16.mxu0 0
  %11311 = vmatpush1.bf16.msra.mxu0 0
  %11312 = vmatprep.subr.bf16.mxu0 0
  %11313 = vmatpush1.bf16.msra.mxu0 0
  %11314 = vmatprep.subr.bf16.mxu0 0
  %11315 = vmatpush1.bf16.msra.mxu0 0
  %11316 = vmatprep.subr.bf16.mxu0 0
  %11317 = vmatpush1.bf16.msra.mxu0 0
  %11318 = vmatprep.subr.bf16.mxu0 0
  %11319 = vmatpush1.bf16.msra.mxu0 0
  %11320 = vmatprep.subr.bf16.mxu0 0
  %11321 = vmatpush1.bf16.msra.mxu0 0
  %11322 = vmatprep.subr.bf16.mxu0 0
  %11323 = vmatpush1.bf16.msra.mxu0 0
  %11324 = vmatprep.mubr.bf16.mxu0 %v10946
  %11325 = vmatmul.mubr.bf16.gmra.mrb[0].mxu0 %v10941
  %v11326 = vpop.f32.mrb[0].mxu0
  %v11327 = vadd.f32 %v10928, %v11326
  %v11328 = vpop.f32.mrb[0].mxu0
  %v11329 = vpop.f32.mrb[0].mxu0
  %v11330 = vadd.f32 %v10933, %v11329
  %v11331 = vpop.f32.mrb[0].mxu0
  %11332 = vdwg.mxu0
  %v11333 = vmax.f32 %v11327, 0.0
  %v11334 = vmax.f32 %v11330, 0.0
  %11335 = vmatprep.subr.bf16.mxu0 0
  %11336 = vmatpush1.bf16.msra.mxu0 %v10796
  %11337 = vmatprep.subr.bf16.mxu0 0
  %11338 = vmatpush1.bf16.msra.mxu0 %v10801
  %11339 = vmatprep.subr.bf16.mxu0 0
  %11340 = vmatpush1.bf16.msra.mxu0 %v10806
  %11341 = vmatprep.subr.bf16.mxu0 0
  %11342 = vmatpush1.bf16.msra.mxu0 %v10829
  %11343 = vmatprep.subr.bf16.mxu0 0
  %11344 = vmatpush1.bf16.msra.mxu0 %v10834
  %11345 = vmatprep.subr.bf16.mxu0 0
  %11346 = vmatpush1.bf16.msra.mxu0 %v10839
  %11347 = vmatprep.subr.bf16.mxu0 0
  %11348 = vmatpush1.bf16.msra.mxu0 %v10862
  %11349 = vmatprep.subr.bf16.mxu0 0
  %11350 = vmatpush1.bf16.msra.mxu0 %v10867
  %11351 = vmatprep.subr.bf16.mxu0 0
  %11352 = vmatpush1.bf16.msra.mxu0 %v10872
  %11353 = vmatprep.subr.bf16.mxu0 0
  %11354 = vmatpush1.bf16.msra.mxu0 0
  %11355 = vmatprep.subr.bf16.mxu0 0
  %11356 = vmatpush1.bf16.msra.mxu0 0
  %11357 = vmatprep.subr.bf16.mxu0 0
  %11358 = vmatpush1.bf16.msra.mxu0 0
  %11359 = vmatprep.subr.bf16.mxu0 0
  %11360 = vmatpush1.bf16.msra.mxu0 0
  %11361 = vmatprep.subr.bf16.mxu0 0
  %11362 = vmatpush1.bf16.msra.mxu0 0
  %11363 = vmatprep.subr.bf16.mxu0 0
  %11364 = vmatpush1.bf16.msra.mxu0 0
  %11365 = vmatprep.subr.bf16.mxu0 0
  %11366 = vmatpush1.bf16.msra.mxu0 0
  %11367 = vmatprep.mubr.bf16.mxu0 %v10946
  %11368 = vmatmul.mubr.bf16.gmra.mrb[0].mxu0 %v10941
  %v11369 = vpop.f32.mrb[0].mxu0
  %v11370 = vadd.f32 %v10928, %v11369
  %v11371 = vpop.f32.mrb[0].mxu0
  %v11372 = vpop.f32.mrb[0].mxu0
  %v11373 = vadd.f32 %v10933, %v11372
  %v11374 = vpop.f32.mrb[0].mxu0
  %11375 = vdwg.mxu0
  %v11376 = vmax.f32 %v11370, 0.0
  %v11377 = vmax.f32 %v11373, 0.0
  %11378 = vmatprep.subr.bf16.mxu0 0
  %11379 = vmatpush1.bf16.msra.mxu0 %v10801
  %11380 = vmatprep.subr.bf16.mxu0 0
  %11381 = vmatpush1.bf16.msra.mxu0 %v10806
  %11382 = vmatprep.subr.bf16.mxu0 0
  %11383 = vmatpush1.bf16.msra.mxu0 %v10811
  %11384 = vmatprep.subr.bf16.mxu0 0
  %11385 = vmatpush1.bf16.msra.mxu0 %v10834
  %11386 = vmatprep.subr.bf16.mxu0 0
  %11387 = vmatpush1.bf16.msra.mxu0 %v10839
  %11388 = vmatprep.subr.bf16.mxu0 0
  %11389 = vmatpush1.bf16.msra.mxu0 %v10844
  %11390 = vmatprep.subr.bf16.mxu0 0
  %11391 = vmatpush1.bf16.msra.mxu0 %v10867
  %11392 = vmatprep.subr.bf16.mxu0 0
  %11393 = vmatpush1.bf16.msra.mxu0 %v10872
  %11394 = vmatprep.subr.bf16.mxu0 0
  %11395 = vmatpush1.bf16.msra.mxu0 %v10877
  %11396 = vmatprep.subr.bf16.mxu0 0
  %11397 = vmatpush1.bf16.msra.mxu0 0
  %11398 = vmatprep.subr.bf16.mxu0 0
  %11399 = vmatpush1.bf16.msra.mxu0 0
  %11400 = vmatprep.subr.bf16.mxu0 0
  %11401 = vmatpush1.bf16.msra.mxu0 0
  %11402 = vmatprep.subr.bf16.mxu0 0
  %11403 = vmatpush1.bf16.msra.mxu0 0
  %11404 = vmatprep.subr.bf16.mxu0 0
  %11405 = vmatpush1.bf16.msra.mxu0 0
  %11406 = vmatprep.subr.bf16.mxu0 0
  %11407 = vmatpush1.bf16.msra.mxu0 0
  %11408 = vmatprep.subr.bf16.mxu0 0
  %11409 = vmatpush1.bf16.msra.mxu0 0
  %11410 = vmatprep.mubr.bf16.mxu0 %v10946
  %11411 = vmatmul.mubr.bf16.gmra.mrb[0].mxu0 %v10941
  %v11412 = vpop.f32.mrb[0].mxu0
  %v11413 = vadd.f32 %v10928, %v11412
  %v11414 = vpop.f32.mrb[0].mxu0
  %v11415 = vpop.f32.mrb[0].mxu0
  %v11416 = vadd.f32 %v10933, %v11415
  %v11417 = vpop.f32.mrb[0].mxu0
  %11418 = vdwg.mxu0
  %v11419 = vmax.f32 %v11413, 0.0
  %v11420 = vmax.f32 %v11416, 0.0
  %11421 = vmatprep.subr.bf16.mxu0 0
  %11422 = vmatpush1.bf16.msra.mxu0 %v10806
  %11423 = vmatprep.subr.bf16.mxu0 0
  %11424 = vmatpush1.bf16.msra.mxu0 %v10811
  %11425 = vmatprep.subr.bf16.mxu0 0
  %11426 = vmatpush1.bf16.msra.mxu0 %v10816
  %11427 = vmatprep.subr.bf16.mxu0 0
  %11428 = vmatpush1.bf16.msra.mxu0 %v10839
  %11429 = vmatprep.subr.bf16.mxu0 0
  %11430 = vmatpush1.bf16.msra.mxu0 %v10844
  %11431 = vmatprep.subr.bf16.mxu0 0
  %11432 = vmatpush1.bf16.msra.mxu0 %v10849
  %11433 = vmatprep.subr.bf16.mxu0 0
  %11434 = vmatpush1.bf16.msra.mxu0 %v10872
  %11435 = vmatprep.subr.bf16.mxu0 0
  %11436 = vmatpush1.bf16.msra.mxu0 %v10877
  %11437 = vmatprep.subr.bf16.mxu0 0
  %11438 = vmatpush1.bf16.msra.mxu0 %v10882
  %11439 = vmatprep.subr.bf16.mxu0 0
  %11440 = vmatpush1.bf16.msra.mxu0 0
  %11441 = vmatprep.subr.bf16.mxu0 0
  %11442 = vmatpush1.bf16.msra.mxu0 0
  %11443 = vmatprep.subr.bf16.mxu0 0
  %11444 = vmatpush1.bf16.msra.mxu0 0
  %11445 = vmatprep.subr.bf16.mxu0 0
  %11446 = vmatpush1.bf16.msra.mxu0 0
  %11447 = vmatprep.subr.bf16.mxu0 0
  %11448 = vmatpush1.bf16.msra.mxu0 0
  %11449 = vmatprep.subr.bf16.mxu0 0
  %11450 = vmatpush1.bf16.msra.mxu0 0
  %11451 = vmatprep.subr.bf16.mxu0 0
  %11452 = vmatpush1.bf16.msra.mxu0 0
  %11453 = vmatprep.mubr.bf16.mxu0 %v10946
  %11454 = vmatmul.mubr.bf16.gmra.mrb[0].mxu0 %v10941
  %v11455 = vpop.f32.mrb[0].mxu0
  %v11456 = vadd.f32 %v10928, %v11455
  %v11457 = vpop.f32.mrb[0].mxu0
  %v11458 = vpop.f32.mrb[0].mxu0
  %v11459 = vadd.f32 %v10933, %v11458
  %v11460 = vpop.f32.mrb[0].mxu0
  %11461 = vdwg.mxu0
  %v11462 = vmax.f32 %v11456, 0.0
  %v11463 = vmax.f32 %v11459, 0.0
  %11464 = vmatprep.subr.bf16.mxu0 0
  %11465 = vmatpush1.bf16.msra.mxu0 %v10811
  %11466 = vmatprep.subr.bf16.mxu0 0
  %11467 = vmatpush1.bf16.msra.mxu0 %v10816
  %11468 = vmatprep.subr.bf16.mxu0 0
  %11469 = vmatpush1.bf16.msra.mxu0 %v10821
  %11470 = vmatprep.subr.bf16.mxu0 0
  %11471 = vmatpush1.bf16.msra.mxu0 %v10844
  %11472 = vmatprep.subr.bf16.mxu0 0
  %11473 = vmatpush1.bf16.msra.mxu0 %v10849
  %11474 = vmatprep.subr.bf16.mxu0 0
  %11475 = vmatpush1.bf16.msra.mxu0 %v10854
  %11476 = vmatprep.subr.bf16.mxu0 0
  %11477 = vmatpush1.bf16.msra.mxu0 %v10877
  %11478 = vmatprep.subr.bf16.mxu0 0
  %11479 = vmatpush1.bf16.msra.mxu0 %v10882
  %11480 = vmatprep.subr.bf16.mxu0 0
  %11481 = vmatpush1.bf16.msra.mxu0 %v10887
  %11482 = vmatprep.subr.bf16.mxu0 0
  %11483 = vmatpush1.bf16.msra.mxu0 0
  %11484 = vmatprep.subr.bf16.mxu0 0
  %11485 = vmatpush1.bf16.msra.mxu0 0
  %11486 = vmatprep.subr.bf16.mxu0 0
  %11487 = vmatpush1.bf16.msra.mxu0 0
  %11488 = vmatprep.subr.bf16.mxu0 0
  %11489 = vmatpush1.bf16.msra.mxu0 0
  %11490 = vmatprep.subr.bf16.mxu0 0
  %11491 = vmatpush1.bf16.msra.mxu0 0
  %11492 = vmatprep.subr.bf16.mxu0 0
  %11493 = vmatpush1.bf16.msra.mxu0 0
  %11494 = vmatprep.subr.bf16.mxu0 0
  %11495 = vmatpush1.bf16.msra.mxu0 0
  %11496 = vmatprep.mubr.bf16.mxu0 %v10946
  %11497 = vmatmul.mubr.bf16.gmra.mrb[0].mxu0 %v10941
  %v11498 = vpop.f32.mrb[0].mxu0
  %v11499 = vadd.f32 %v10928, %v11498
  %v11500 = vpop.f32.mrb[0].mxu0
  %v11501 = vpop.f32.mrb[0].mxu0
  %v11502 = vadd.f32 %v10933, %v11501
  %v11503 = vpop.f32.mrb[0].mxu0
  %11504 = vdwg.mxu0
  %v11505 = vmax.f32 %v11499, 0.0
  %v11506 = vmax.f32 %v11502, 0.0
  %11507 = vmatprep.subr.bf16.mxu0 0
  %11508 = vmatpush1.bf16.msra.mxu0 %v10816
  %11509 = vmatprep.subr.bf16.mxu0 0
  %11510 = vmatpush1.bf16.msra.mxu0 %v10821
  %11511 = vmatprep.subr.bf16.mxu0 0
  %11512 = vmatpush1.bf16.msra.mxu0 0
  %11513 = vmatprep.subr.bf16.mxu0 0
  %11514 = vmatpush1.bf16.msra.mxu0 %v10849
  %11515 = vmatprep.subr.bf16.mxu0 0
  %11516 = vmatpush1.bf16.msra.mxu0 %v10854
  %11517 = vmatprep.subr.bf16.mxu0 0
  %11518 = vmatpush1.bf16.msra.mxu0 0
  %11519 = vmatprep.subr.bf16.mxu0 0
  %11520 = vmatpush1.bf16.msra.mxu0 %v10882
  %11521 = vmatprep.subr.bf16.mxu0 0
  %11522 = vmatpush1.bf16.msra.mxu0 %v10887
  %11523 = vmatprep.subr.bf16.mxu0 0
  %11524 = vmatpush1.bf16.msra.mxu0 0
  %11525 = vmatprep.subr.bf16.mxu0 0
  %11526 = vmatpush1.bf16.msra.mxu0 0
  %11527 = vmatprep.subr.bf16.mxu0 0
  %11528 = vmatpush1.bf16.msra.mxu0 0
  %11529 = vmatprep.subr.bf16.mxu0 0
  %11530 = vmatpush1.bf16.msra.mxu0 0
  %11531 = vmatprep.subr.bf16.mxu0 0
  %11532 = vmatpush1.bf16.msra.mxu0 0
  %11533 = vmatprep.subr.bf16.mxu0 0
  %11534 = vmatpush1.bf16.msra.mxu0 0
  %11535 = vmatprep.subr.bf16.mxu0 0
  %11536 = vmatpush1.bf16.msra.mxu0 0
  %11537 = vmatprep.subr.bf16.mxu0 0
  %11538 = vmatpush1.bf16.msra.mxu0 0
  %11539 = vmatprep.mubr.bf16.mxu0 %v10946
  %11540 = vmatmul.mubr.bf16.gmra.mrb[0].mxu0 %v10941
  %v11541 = vpop.f32.mrb[0].mxu0
  %v11542 = vadd.f32 %v10928, %v11541
  %v11543 = vpop.f32.mrb[0].mxu0
  %v11544 = vpop.f32.mrb[0].mxu0
  %v11545 = vadd.f32 %v10933, %v11544
  %v11546 = vpop.f32.mrb[0].mxu0
  %11547 = vdwg.mxu0
  %v11548 = vmax.f32 %v11542, 0.0
  %v11549 = vmax.f32 %v11545, 0.0
  %11550 = vmatprep.subr.bf16.mxu0 0
  %11551 = vmatpush1.bf16.msra.mxu0 0
  %11552 = vmatprep.subr.bf16.mxu0 0
  %11553 = vmatpush1.bf16.msra.mxu0 %v10824
  %11554 = vmatprep.subr.bf16.mxu0 0
  %11555 = vmatpush1.bf16.msra.mxu0 %v10829
  %11556 = vmatprep.subr.bf16.mxu0 0
  %11557 = vmatpush1.bf16.msra.mxu0 0
  %11558 = vmatprep.subr.bf16.mxu0 0
  %11559 = vmatpush1.bf16.msra.mxu0 %v10857
  %11560 = vmatprep.subr.bf16.mxu0 0
  %11561 = vmatpush1.bf16.msra.mxu0 %v10862
  %11562 = vmatprep.subr.bf16.mxu0 0
  %11563 = vmatpush1.bf16.msra.mxu0 0
  %11564 = vmatprep.subr.bf16.mxu0 0
  %11565 = vmatpush1.bf16.msra.mxu0 %v10890
  %11566 = vmatprep.subr.bf16.mxu0 0
  %11567 = vmatpush1.bf16.msra.mxu0 %v10895
  %11568 = vmatprep.subr.bf16.mxu0 0
  %11569 = vmatpush1.bf16.msra.mxu0 0
  %11570 = vmatprep.subr.bf16.mxu0 0
  %11571 = vmatpush1.bf16.msra.mxu0 0
  %11572 = vmatprep.subr.bf16.mxu0 0
  %11573 = vmatpush1.bf16.msra.mxu0 0
  %11574 = vmatprep.subr.bf16.mxu0 0
  %11575 = vmatpush1.bf16.msra.mxu0 0
  %11576 = vmatprep.subr.bf16.mxu0 0
  %11577 = vmatpush1.bf16.msra.mxu0 0
  %11578 = vmatprep.subr.bf16.mxu0 0
  %11579 = vmatpush1.bf16.msra.mxu0 0
  %11580 = vmatprep.subr.bf16.mxu0 0
  %11581 = vmatpush1.bf16.msra.mxu0 0
  %11582 = vmatprep.mubr.bf16.mxu0 %v10946
  %11583 = vmatmul.mubr.bf16.gmra.mrb[0].mxu0 %v10941
  %v11584 = vpop.f32.mrb[0].mxu0
  %v11585 = vadd.f32 %v10928, %v11584
  %v11586 = vpop.f32.mrb[0].mxu0
  %v11587 = vpop.f32.mrb[0].mxu0
  %v11588 = vadd.f32 %v10933, %v11587
  %v11589 = vpop.f32.mrb[0].mxu0
  %11590 = vdwg.mxu0
  %v11591 = vmax.f32 %v11585, 0.0
  %v11592 = vmax.f32 %v11588, 0.0
  %11593 = vmatprep.subr.bf16.mxu0 0
  %11594 = vmatpush1.bf16.msra.mxu0 %v10824
  %11595 = vmatprep.subr.bf16.mxu0 0
  %11596 = vmatpush1.bf16.msra.mxu0 %v10829
  %11597 = vmatprep.subr.bf16.mxu0 0
  %11598 = vmatpush1.bf16.msra.mxu0 %v10834
  %11599 = vmatprep.subr.bf16.mxu0 0
  %11600 = vmatpush1.bf16.msra.mxu0 %v10857
  %11601 = vmatprep.subr.bf16.mxu0 0
  %11602 = vmatpush1.bf16.msra.mxu0 %v10862
  %11603 = vmatprep.subr.bf16.mxu0 0
  %11604 = vmatpush1.bf16.msra.mxu0 %v10867
  %11605 = vmatprep.subr.bf16.mxu0 0
  %11606 = vmatpush1.bf16.msra.mxu0 %v10890
  %11607 = vmatprep.subr.bf16.mxu0 0
  %11608 = vmatpush1.bf16.msra.mxu0 %v10895
  %11609 = vmatprep.subr.bf16.mxu0 0
  %11610 = vmatpush1.bf16.msra.mxu0 %v10900
  %11611 = vmatprep.subr.bf16.mxu0 0
  %11612 = vmatpush1.bf16.msra.mxu0 0
  %11613 = vmatprep.subr.bf16.mxu0 0
  %11614 = vmatpush1.bf16.msra.mxu0 0
  %11615 = vmatprep.subr.bf16.mxu0 0
  %11616 = vmatpush1.bf16.msra.mxu0 0
  %11617 = vmatprep.subr.bf16.mxu0 0
  %11618 = vmatpush1.bf16.msra.mxu0 0
  %11619 = vmatprep.subr.bf16.mxu0 0
  %11620 = vmatpush1.bf16.msra.mxu0 0
  %11621 = vmatprep.subr.bf16.mxu0 0
  %11622 = vmatpush1.bf16.msra.mxu0 0
  %11623 = vmatprep.subr.bf16.mxu0 0
  %11624 = vmatpush1.bf16.msra.mxu0 0
  %11625 = vmatprep.mubr.bf16.mxu0 %v10946
  %11626 = vmatmul.mubr.bf16.gmra.mrb[0].mxu0 %v10941
  %v11627 = vpop.f32.mrb[0].mxu0
  %v11628 = vadd.f32 %v10928, %v11627
  %v11629 = vpop.f32.mrb[0].mxu0
  %v11630 = vpop.f32.mrb[0].mxu0
  %v11631 = vadd.f32 %v10933, %v11630
  %v11632 = vpop.f32.mrb[0].mxu0
  %11633 = vdwg.mxu0
  %v11634 = vmax.f32 %v11628, 0.0
  %v11635 = vmax.f32 %v11631, 0.0
  %11636 = vmatprep.subr.bf16.mxu0 0
  %11637 = vmatpush1.bf16.msra.mxu0 %v10829
  %11638 = vmatprep.subr.bf16.mxu0 0
  %11639 = vmatpush1.bf16.msra.mxu0 %v10834
  %11640 = vmatprep.subr.bf16.mxu0 0
  %11641 = vmatpush1.bf16.msra.mxu0 %v10839
  %11642 = vmatprep.subr.bf16.mxu0 0
  %11643 = vmatpush1.bf16.msra.mxu0 %v10862
  %11644 = vmatprep.subr.bf16.mxu0 0
  %11645 = vmatpush1.bf16.msra.mxu0 %v10867
  %11646 = vmatprep.subr.bf16.mxu0 0
  %11647 = vmatpush1.bf16.msra.mxu0 %v10872
  %11648 = vmatprep.subr.bf16.mxu0 0
  %11649 = vmatpush1.bf16.msra.mxu0 %v10895
  %11650 = vmatprep.subr.bf16.mxu0 0
  %11651 = vmatpush1.bf16.msra.mxu0 %v10900
  %11652 = vmatprep.subr.bf16.mxu0 0
  %11653 = vmatpush1.bf16.msra.mxu0 %v10905
  %11654 = vmatprep.subr.bf16.mxu0 0
  %11655 = vmatpush1.bf16.msra.mxu0 0
  %11656 = vmatprep.subr.bf16.mxu0 0
  %11657 = vmatpush1.bf16.msra.mxu0 0
  %11658 = vmatprep.subr.bf16.mxu0 0
  %11659 = vmatpush1.bf16.msra.mxu0 0
  %11660 = vmatprep.subr.bf16.mxu0 0
  %11661 = vmatpush1.bf16.msra.mxu0 0
  %11662 = vmatprep.subr.bf16.mxu0 0
  %11663 = vmatpush1.bf16.msra.mxu0 0
  %11664 = vmatprep.subr.bf16.mxu0 0
  %11665 = vmatpush1.bf16.msra.mxu0 0
  %11666 = vmatprep.subr.bf16.mxu0 0
  %11667 = vmatpush1.bf16.msra.mxu0 0
  %11668 = vmatprep.mubr.bf16.mxu0 %v10946
  %11669 = vmatmul.mubr.bf16.gmra.mrb[0].mxu0 %v10941
  %v11670 = vpop.f32.mrb[0].mxu0
  %v11671 = vadd.f32 %v10928, %v11670
  %v11672 = vpop.f32.mrb[0].mxu0
  %v11673 = vpop.f32.mrb[0].mxu0
  %v11674 = vadd.f32 %v10933, %v11673
  %v11675 = vpop.f32.mrb[0].mxu0
  %11676 = vdwg.mxu0
  %v11677 = vmax.f32 %v11671, 0.0
  %v11678 = vmax.f32 %v11674, 0.0
  %11679 = vmatprep.subr.bf16.mxu0 0
  %11680 = vmatpush1.bf16.msra.mxu0 %v10834
  %11681 = vmatprep.subr.bf16.mxu0 0
  %11682 = vmatpush1.bf16.msra.mxu0 %v10839
  %11683 = vmatprep.subr.bf16.mxu0 0
  %11684 = vmatpush1.bf16.msra.mxu0 %v10844
  %11685 = vmatprep.subr.bf16.mxu0 0
  %11686 = vmatpush1.bf16.msra.mxu0 %v10867
  %11687 = vmatprep.subr.bf16.mxu0 0
  %11688 = vmatpush1.bf16.msra.mxu0 %v10872
  %11689 = vmatprep.subr.bf16.mxu0 0
  %11690 = vmatpush1.bf16.msra.mxu0 %v10877
  %11691 = vmatprep.subr.bf16.mxu0 0
  %11692 = vmatpush1.bf16.msra.mxu0 %v10900
  %11693 = vmatprep.subr.bf16.mxu0 0
  %11694 = vmatpush1.bf16.msra.mxu0 %v10905
  %11695 = vmatprep.subr.bf16.mxu0 0
  %11696 = vmatpush1.bf16.msra.mxu0 %v10910
  %11697 = vmatprep.subr.bf16.mxu0 0
  %11698 = vmatpush1.bf16.msra.mxu0 0
  %11699 = vmatprep.subr.bf16.mxu0 0
  %11700 = vmatpush1.bf16.msra.mxu0 0
  %11701 = vmatprep.subr.bf16.mxu0 0
  %11702 = vmatpush1.bf16.msra.mxu0 0
  %11703 = vmatprep.subr.bf16.mxu0 0
  %11704 = vmatpush1.bf16.msra.mxu0 0
  %11705 = vmatprep.subr.bf16.mxu0 0
  %11706 = vmatpush1.bf16.msra.mxu0 0
  %11707 = vmatprep.subr.bf16.mxu0 0
  %11708 = vmatpush1.bf16.msra.mxu0 0
  %11709 = vmatprep.subr.bf16.mxu0 0
  %11710 = vmatpush1.bf16.msra.mxu0 0
  %11711 = vmatprep.mubr.bf16.mxu0 %v10946
  %11712 = vmatmul.mubr.bf16.gmra.mrb[0].mxu0 %v10941
  %v11713 = vpop.f32.mrb[0].mxu0
  %v11714 = vadd.f32 %v10928, %v11713
  %v11715 = vpop.f32.mrb[0].mxu0
  %v11716 = vpop.f32.mrb[0].mxu0
  %v11717 = vadd.f32 %v10933, %v11716
  %v11718 = vpop.f32.mrb[0].mxu0
  %11719 = vdwg.mxu0
  %v11720 = vmax.f32 %v11714, 0.0
  %v11721 = vmax.f32 %v11717, 0.0
  %11722 = vmatprep.subr.bf16.mxu0 0
  %11723 = vmatpush1.bf16.msra.mxu0 %v10839
  %11724 = vmatprep.subr.bf16.mxu0 0
  %11725 = vmatpush1.bf16.msra.mxu0 %v10844
  %11726 = vmatprep.subr.bf16.mxu0 0
  %11727 = vmatpush1.bf16.msra.mxu0 %v10849
  %11728 = vmatprep.subr.bf16.mxu0 0
  %11729 = vmatpush1.bf16.msra.mxu0 %v10872
  %11730 = vmatprep.subr.bf16.mxu0 0
  %11731 = vmatpush1.bf16.msra.mxu0 %v10877
  %11732 = vmatprep.subr.bf16.mxu0 0
  %11733 = vmatpush1.bf16.msra.mxu0 %v10882
  %11734 = vmatprep.subr.bf16.mxu0 0
  %11735 = vmatpush1.bf16.msra.mxu0 %v10905
  %11736 = vmatprep.subr.bf16.mxu0 0
  %11737 = vmatpush1.bf16.msra.mxu0 %v10910
  %11738 = vmatprep.subr.bf16.mxu0 0
  %11739 = vmatpush1.bf16.msra.mxu0 %v10915
  %11740 = vmatprep.subr.bf16.mxu0 0
  %11741 = vmatpush1.bf16.msra.mxu0 0
  %11742 = vmatprep.subr.bf16.mxu0 0
  %11743 = vmatpush1.bf16.msra.mxu0 0
  %11744 = vmatprep.subr.bf16.mxu0 0
  %11745 = vmatpush1.bf16.msra.mxu0 0
  %11746 = vmatprep.subr.bf16.mxu0 0
  %11747 = vmatpush1.bf16.msra.mxu0 0
  %11748 = vmatprep.subr.bf16.mxu0 0
  %11749 = vmatpush1.bf16.msra.mxu0 0
  %11750 = vmatprep.subr.bf16.mxu0 0
  %11751 = vmatpush1.bf16.msra.mxu0 0
  %11752 = vmatprep.subr.bf16.mxu0 0
  %11753 = vmatpush1.bf16.msra.mxu0 0
  %11754 = vmatprep.mubr.bf16.mxu0 %v10946
  %11755 = vmatmul.mubr.bf16.gmra.mrb[0].mxu0 %v10941
  %v11756 = vpop.f32.mrb[0].mxu0
  %v11757 = vadd.f32 %v10928, %v11756
  %v11758 = vpop.f32.mrb[0].mxu0
  %v11759 = vpop.f32.mrb[0].mxu0
  %v11760 = vadd.f32 %v10933, %v11759
  %v11761 = vpop.f32.mrb[0].mxu0
  %11762 = vdwg.mxu0
  %v11763 = vmax.f32 %v11757, 0.0
  %v11764 = vmax.f32 %v11760, 0.0
  %11765 = vmatprep.subr.bf16.mxu0 0
  %11766 = vmatpush1.bf16.msra.mxu0 %v10844
  %11767 = vmatprep.subr.bf16.mxu0 0
  %11768 = vmatpush1.bf16.msra.mxu0 %v10849
  %11769 = vmatprep.subr.bf16.mxu0 0
  %11770 = vmatpush1.bf16.msra.mxu0 %v10854
  %11771 = vmatprep.subr.bf16.mxu0 0
  %11772 = vmatpush1.bf16.msra.mxu0 %v10877
  %11773 = vmatprep.subr.bf16.mxu0 0
  %11774 = vmatpush1.bf16.msra.mxu0 %v10882
  %11775 = vmatprep.subr.bf16.mxu0 0
  %11776 = vmatpush1.bf16.msra.mxu0 %v10887
  %11777 = vmatprep.subr.bf16.mxu0 0
  %11778 = vmatpush1.bf16.msra.mxu0 %v10910
  %11779 = vmatprep.subr.bf16.mxu0 0
  %11780 = vmatpush1.bf16.msra.mxu0 %v10915
  %11781 = vmatprep.subr.bf16.mxu0 0
  %11782 = vmatpush1.bf16.msra.mxu0 %v10920
  %11783 = vmatprep.subr.bf16.mxu0 0
  %11784 = vmatpush1.bf16.msra.mxu0 0
  %11785 = vmatprep.subr.bf16.mxu0 0
  %11786 = vmatpush1.bf16.msra.mxu0 0
  %11787 = vmatprep.subr.bf16.mxu0 0
  %11788 = vmatpush1.bf16.msra.mxu0 0
  %11789 = vmatprep.subr.bf16.mxu0 0
  %11790 = vmatpush1.bf16.msra.mxu0 0
  %11791 = vmatprep.subr.bf16.mxu0 0
  %11792 = vmatpush1.bf16.msra.mxu0 0
  %11793 = vmatprep.subr.bf16.mxu0 0
  %11794 = vmatpush1.bf16.msra.mxu0 0
  %11795 = vmatprep.subr.bf16.mxu0 0
  %11796 = vmatpush1.bf16.msra.mxu0 0
  %11797 = vmatprep.mubr.bf16.mxu0 %v10946
  %11798 = vmatmul.mubr.bf16.gmra.mrb[0].mxu0 %v10941
  %v11799 = vpop.f32.mrb[0].mxu0
  %v11800 = vadd.f32 %v10928, %v11799
  %v11801 = vpop.f32.mrb[0].mxu0
  %v11802 = vpop.f32.mrb[0].mxu0
  %v11803 = vadd.f32 %v10933, %v11802
  %v11804 = vpop.f32.mrb[0].mxu0
  %11805 = vdwg.mxu0
  %v11806 = vmax.f32 %v11800, 0.0
  %v11807 = vmax.f32 %v11803, 0.0
  %11808 = vmatprep.subr.bf16.mxu0 0
  %11809 = vmatpush1.bf16.msra.mxu0 %v10849
  %11810 = vmatprep.subr.bf16.mxu0 0
  %11811 = vmatpush1.bf16.msra.mxu0 %v10854
  %11812 = vmatprep.subr.bf16.mxu0 0
  %11813 = vmatpush1.bf16.msra.mxu0 0
  %11814 = vmatprep.subr.bf16.mxu0 0
  %11815 = vmatpush1.bf16.msra.mxu0 %v10882
  %11816 = vmatprep.subr.bf16.mxu0 0
  %11817 = vmatpush1.bf16.msra.mxu0 %v10887
  %11818 = vmatprep.subr.bf16.mxu0 0
  %11819 = vmatpush1.bf16.msra.mxu0 0
  %11820 = vmatprep.subr.bf16.mxu0 0
  %11821 = vmatpush1.bf16.msra.mxu0 %v10915
  %11822 = vmatprep.subr.bf16.mxu0 0
  %11823 = vmatpush1.bf16.msra.mxu0 %v10920
  %11824 = vmatprep.subr.bf16.mxu0 0
  %11825 = vmatpush1.bf16.msra.mxu0 0
  %11826 = vmatprep.subr.bf16.mxu0 0
  %11827 = vmatpush1.bf16.msra.mxu0 0
  %11828 = vmatprep.subr.bf16.mxu0 0
  %11829 = vmatpush1.bf16.msra.mxu0 0
  %11830 = vmatprep.subr.bf16.mxu0 0
  %11831 = vmatpush1.bf16.msra.mxu0 0
  %11832 = vmatprep.subr.bf16.mxu0 0
  %11833 = vmatpush1.bf16.msra.mxu0 0
  %11834 = vmatprep.subr.bf16.mxu0 0
  %11835 = vmatpush1.bf16.msra.mxu0 0
  %11836 = vmatprep.subr.bf16.mxu0 0
  %11837 = vmatpush1.bf16.msra.mxu0 0
  %11838 = vmatprep.subr.bf16.mxu0 0
  %11839 = vmatpush1.bf16.msra.mxu0 0
  %11840 = vmatprep.mubr.bf16.mxu0 %v10946
  %11841 = vmatmul.mubr.bf16.gmra.mrb[0].mxu0 %v10941
  %v11842 = vpop.f32.mrb[0].mxu0
  %v11843 = vadd.f32 %v10928, %v11842
  %v11844 = vpop.f32.mrb[0].mxu0
  %v11845 = vpop.f32.mrb[0].mxu0
  %v11846 = vadd.f32 %v10933, %v11845
  %v11847 = vpop.f32.mrb[0].mxu0
  %11848 = vdwg.mxu0
  %v11849 = vmax.f32 %v11843, 0.0
  %v11850 = vmax.f32 %v11846, 0.0
  %11851 = vmatprep.subr.bf16.mxu0 0
  %11852 = vmatpush1.bf16.msra.mxu0 0
  %11853 = vmatprep.subr.bf16.mxu0 0
  %11854 = vmatpush1.bf16.msra.mxu0 %v10857
  %11855 = vmatprep.subr.bf16.mxu0 0
  %11856 = vmatpush1.bf16.msra.mxu0 %v10862
  %11857 = vmatprep.subr.bf16.mxu0 0
  %11858 = vmatpush1.bf16.msra.mxu0 0
  %11859 = vmatprep.subr.bf16.mxu0 0
  %11860 = vmatpush1.bf16.msra.mxu0 %v10890
  %11861 = vmatprep.subr.bf16.mxu0 0
  %11862 = vmatpush1.bf16.msra.mxu0 %v10895
  %11863 = vmatprep.subr.bf16.mxu0 0
  %11864 = vmatpush1.bf16.msra.mxu0 0
  %11865 = vmatprep.subr.bf16.mxu0 0
  %11866 = vmatpush1.bf16.msra.mxu0 0
  %11867 = vmatprep.subr.bf16.mxu0 0
  %11868 = vmatpush1.bf16.msra.mxu0 0
  %11869 = vmatprep.subr.bf16.mxu0 0
  %11870 = vmatpush1.bf16.msra.mxu0 0
  %11871 = vmatprep.subr.bf16.mxu0 0
  %11872 = vmatpush1.bf16.msra.mxu0 0
  %11873 = vmatprep.subr.bf16.mxu0 0
  %11874 = vmatpush1.bf16.msra.mxu0 0
  %11875 = vmatprep.subr.bf16.mxu0 0
  %11876 = vmatpush1.bf16.msra.mxu0 0
  %11877 = vmatprep.subr.bf16.mxu0 0
  %11878 = vmatpush1.bf16.msra.mxu0 0
  %11879 = vmatprep.subr.bf16.mxu0 0
  %11880 = vmatpush1.bf16.msra.mxu0 0
  %11881 = vmatprep.subr.bf16.mxu0 0
  %11882 = vmatpush1.bf16.msra.mxu0 0
  %11883 = vmatprep.mubr.bf16.mxu0 %v10946
  %11884 = vmatmul.mubr.bf16.gmra.mrb[0].mxu0 %v10941
  %v11885 = vpop.f32.mrb[0].mxu0
  %v11886 = vadd.f32 %v10928, %v11885
  %v11887 = vpop.f32.mrb[0].mxu0
  %v11888 = vpop.f32.mrb[0].mxu0
  %v11889 = vadd.f32 %v10933, %v11888
  %v11890 = vpop.f32.mrb[0].mxu0
  %11891 = vdwg.mxu0
  %v11892 = vmax.f32 %v11886, 0.0
  %v11893 = vmax.f32 %v11889, 0.0
  %11894 = vmatprep.subr.bf16.mxu0 0
  %11895 = vmatpush1.bf16.msra.mxu0 %v10857
  %11896 = vmatprep.subr.bf16.mxu0 0
  %11897 = vmatpush1.bf16.msra.mxu0 %v10862
  %11898 = vmatprep.subr.bf16.mxu0 0
  %11899 = vmatpush1.bf16.msra.mxu0 %v10867
  %11900 = vmatprep.subr.bf16.mxu0 0
  %11901 = vmatpush1.bf16.msra.mxu0 %v10890
  %11902 = vmatprep.subr.bf16.mxu0 0
  %11903 = vmatpush1.bf16.msra.mxu0 %v10895
  %11904 = vmatprep.subr.bf16.mxu0 0
  %11905 = vmatpush1.bf16.msra.mxu0 %v10900
  %11906 = vmatprep.subr.bf16.mxu0 0
  %11907 = vmatpush1.bf16.msra.mxu0 0
  %11908 = vmatprep.subr.bf16.mxu0 0
  %11909 = vmatpush1.bf16.msra.mxu0 0
  %11910 = vmatprep.subr.bf16.mxu0 0
  %11911 = vmatpush1.bf16.msra.mxu0 0
  %11912 = vmatprep.subr.bf16.mxu0 0
  %11913 = vmatpush1.bf16.msra.mxu0 0
  %11914 = vmatprep.subr.bf16.mxu0 0
  %11915 = vmatpush1.bf16.msra.mxu0 0
  %11916 = vmatprep.subr.bf16.mxu0 0
  %11917 = vmatpush1.bf16.msra.mxu0 0
  %11918 = vmatprep.subr.bf16.mxu0 0
  %11919 = vmatpush1.bf16.msra.mxu0 0
  %11920 = vmatprep.subr.bf16.mxu0 0
  %11921 = vmatpush1.bf16.msra.mxu0 0
  %11922 = vmatprep.subr.bf16.mxu0 0
  %11923 = vmatpush1.bf16.msra.mxu0 0
  %11924 = vmatprep.subr.bf16.mxu0 0
  %11925 = vmatpush1.bf16.msra.mxu0 0
  %11926 = vmatprep.mubr.bf16.mxu0 %v10946
  %11927 = vmatmul.mubr.bf16.gmra.mrb[0].mxu0 %v10941
  %v11928 = vpop.f32.mrb[0].mxu0
  %v11929 = vadd.f32 %v10928, %v11928
  %v11930 = vpop.f32.mrb[0].mxu0
  %v11931 = vpop.f32.mrb[0].mxu0
  %v11932 = vadd.f32 %v10933, %v11931
  %v11933 = vpop.f32.mrb[0].mxu0
  %11934 = vdwg.mxu0
  %v11935 = vmax.f32 %v11929, 0.0
  %v11936 = vmax.f32 %v11932, 0.0
  %11937 = vmatprep.subr.bf16.mxu0 0
  %11938 = vmatpush1.bf16.msra.mxu0 %v10862
  %11939 = vmatprep.subr.bf16.mxu0 0
  %11940 = vmatpush1.bf16.msra.mxu0 %v10867
  %11941 = vmatprep.subr.bf16.mxu0 0
  %11942 = vmatpush1.bf16.msra.mxu0 %v10872
  %11943 = vmatprep.subr.bf16.mxu0 0
  %11944 = vmatpush1.bf16.msra.mxu0 %v10895
  %11945 = vmatprep.subr.bf16.mxu0 0
  %11946 = vmatpush1.bf16.msra.mxu0 %v10900
  %11947 = vmatprep.subr.bf16.mxu0 0
  %11948 = vmatpush1.bf16.msra.mxu0 %v10905
  %11949 = vmatprep.subr.bf16.mxu0 0
  %11950 = vmatpush1.bf16.msra.mxu0 0
  %11951 = vmatprep.subr.bf16.mxu0 0
  %11952 = vmatpush1.bf16.msra.mxu0 0
  %11953 = vmatprep.subr.bf16.mxu0 0
  %11954 = vmatpush1.bf16.msra.mxu0 0
  %11955 = vmatprep.subr.bf16.mxu0 0
  %11956 = vmatpush1.bf16.msra.mxu0 0
  %11957 = vmatprep.subr.bf16.mxu0 0
  %11958 = vmatpush1.bf16.msra.mxu0 0
  %11959 = vmatprep.subr.bf16.mxu0 0
  %11960 = vmatpush1.bf16.msra.mxu0 0
  %11961 = vmatprep.subr.bf16.mxu0 0
  %11962 = vmatpush1.bf16.msra.mxu0 0
  %11963 = vmatprep.subr.bf16.mxu0 0
  %11964 = vmatpush1.bf16.msra.mxu0 0
  %11965 = vmatprep.subr.bf16.mxu0 0
  %11966 = vmatpush1.bf16.msra.mxu0 0
  %11967 = vmatprep.subr.bf16.mxu0 0
  %11968 = vmatpush1.bf16.msra.mxu0 0
  %11969 = vmatprep.mubr.bf16.mxu0 %v10946
  %11970 = vmatmul.mubr.bf16.gmra.mrb[0].mxu0 %v10941
  %v11971 = vpop.f32.mrb[0].mxu0
  %v11972 = vadd.f32 %v10928, %v11971
  %v11973 = vpop.f32.mrb[0].mxu0
  %v11974 = vpop.f32.mrb[0].mxu0
  %v11975 = vadd.f32 %v10933, %v11974
  %v11976 = vpop.f32.mrb[0].mxu0
  %11977 = vdwg.mxu0
  %v11978 = vmax.f32 %v11972, 0.0
  %v11979 = vmax.f32 %v11975, 0.0
  %11980 = vmatprep.subr.bf16.mxu0 0
  %11981 = vmatpush1.bf16.msra.mxu0 %v10867
  %11982 = vmatprep.subr.bf16.mxu0 0
  %11983 = vmatpush1.bf16.msra.mxu0 %v10872
  %11984 = vmatprep.subr.bf16.mxu0 0
  %11985 = vmatpush1.bf16.msra.mxu0 %v10877
  %11986 = vmatprep.subr.bf16.mxu0 0
  %11987 = vmatpush1.bf16.msra.mxu0 %v10900
  %11988 = vmatprep.subr.bf16.mxu0 0
  %11989 = vmatpush1.bf16.msra.mxu0 %v10905
  %11990 = vmatprep.subr.bf16.mxu0 0
  %11991 = vmatpush1.bf16.msra.mxu0 %v10910
  %11992 = vmatprep.subr.bf16.mxu0 0
  %11993 = vmatpush1.bf16.msra.mxu0 0
  %11994 = vmatprep.subr.bf16.mxu0 0
  %11995 = vmatpush1.bf16.msra.mxu0 0
  %11996 = vmatprep.subr.bf16.mxu0 0
  %11997 = vmatpush1.bf16.msra.mxu0 0
  %11998 = vmatprep.subr.bf16.mxu0 0
  %11999 = vmatpush1.bf16.msra.mxu0 0
  %12000 = vmatprep.subr.bf16.mxu0 0
  %12001 = vmatpush1.bf16.msra.mxu0 0
  %12002 = vmatprep.subr.bf16.mxu0 0
  %12003 = vmatpush1.bf16.msra.mxu0 0
  %12004 = vmatprep.subr.bf16.mxu0 0
  %12005 = vmatpush1.bf16.msra.mxu0 0
  %12006 = vmatprep.subr.bf16.mxu0 0
  %12007 = vmatpush1.bf16.msra.mxu0 0
  %12008 = vmatprep.subr.bf16.mxu0 0
  %12009 = vmatpush1.bf16.msra.mxu0 0
  %12010 = vmatprep.subr.bf16.mxu0 0
  %12011 = vmatpush1.bf16.msra.mxu0 0
  %12012 = vmatprep.mubr.bf16.mxu0 %v10946
  %12013 = vmatmul.mubr.bf16.gmra.mrb[0].mxu0 %v10941
  %v12014 = vpop.f32.mrb[0].mxu0
  %v12015 = vadd.f32 %v10928, %v12014
  %v12016 = vpop.f32.mrb[0].mxu0
  %v12017 = vpop.f32.mrb[0].mxu0
  %v12018 = vadd.f32 %v10933, %v12017
  %v12019 = vpop.f32.mrb[0].mxu0
  %12020 = vdwg.mxu0
  %v12021 = vmax.f32 %v12015, 0.0
  %v12022 = vmax.f32 %v12018, 0.0
  %12023 = vmatprep.subr.bf16.mxu0 0
  %12024 = vmatpush1.bf16.msra.mxu0 %v10872
  %12025 = vmatprep.subr.bf16.mxu0 0
  %12026 = vmatpush1.bf16.msra.mxu0 %v10877
  %12027 = vmatprep.subr.bf16.mxu0 0
  %12028 = vmatpush1.bf16.msra.mxu0 %v10882
  %12029 = vmatprep.subr.bf16.mxu0 0
  %12030 = vmatpush1.bf16.msra.mxu0 %v10905
  %12031 = vmatprep.subr.bf16.mxu0 0
  %12032 = vmatpush1.bf16.msra.mxu0 %v10910
  %12033 = vmatprep.subr.bf16.mxu0 0
  %12034 = vmatpush1.bf16.msra.mxu0 %v10915
  %12035 = vmatprep.subr.bf16.mxu0 0
  %12036 = vmatpush1.bf16.msra.mxu0 0
  %12037 = vmatprep.subr.bf16.mxu0 0
  %12038 = vmatpush1.bf16.msra.mxu0 0
  %12039 = vmatprep.subr.bf16.mxu0 0
  %12040 = vmatpush1.bf16.msra.mxu0 0
  %12041 = vmatprep.subr.bf16.mxu0 0
  %12042 = vmatpush1.bf16.msra.mxu0 0
  %12043 = vmatprep.subr.bf16.mxu0 0
  %12044 = vmatpush1.bf16.msra.mxu0 0
  %12045 = vmatprep.subr.bf16.mxu0 0
  %12046 = vmatpush1.bf16.msra.mxu0 0
  %12047 = vmatprep.subr.bf16.mxu0 0
  %12048 = vmatpush1.bf16.msra.mxu0 0
  %12049 = vmatprep.subr.bf16.mxu0 0
  %12050 = vmatpush1.bf16.msra.mxu0 0
  %12051 = vmatprep.subr.bf16.mxu0 0
  %12052 = vmatpush1.bf16.msra.mxu0 0
  %12053 = vmatprep.subr.bf16.mxu0 0
  %12054 = vmatpush1.bf16.msra.mxu0 0
  %12055 = vmatprep.mubr.bf16.mxu0 %v10946
  %12056 = vmatmul.mubr.bf16.gmra.mrb[0].mxu0 %v10941
  %v12057 = vpop.f32.mrb[0].mxu0
  %v12058 = vadd.f32 %v10928, %v12057
  %v12059 = vpop.f32.mrb[0].mxu0
  %v12060 = vpop.f32.mrb[0].mxu0
  %v12061 = vadd.f32 %v10933, %v12060
  %v12062 = vpop.f32.mrb[0].mxu0
  %12063 = vdwg.mxu0
  %v12064 = vmax.f32 %v12058, 0.0
  %v12065 = vmax.f32 %v12061, 0.0
  %12066 = vmatprep.subr.bf16.mxu0 0
  %12067 = vmatpush1.bf16.msra.mxu0 %v10877
  %12068 = vmatprep.subr.bf16.mxu0 0
  %12069 = vmatpush1.bf16.msra.mxu0 %v10882
  %12070 = vmatprep.subr.bf16.mxu0 0
  %12071 = vmatpush1.bf16.msra.mxu0 %v10887
  %12072 = vmatprep.subr.bf16.mxu0 0
  %12073 = vmatpush1.bf16.msra.mxu0 %v10910
  %12074 = vmatprep.subr.bf16.mxu0 0
  %12075 = vmatpush1.bf16.msra.mxu0 %v10915
  %12076 = vmatprep.subr.bf16.mxu0 0
  %12077 = vmatpush1.bf16.msra.mxu0 %v10920
  %12078 = vmatprep.subr.bf16.mxu0 0
  %12079 = vmatpush1.bf16.msra.mxu0 0
  %12080 = vmatprep.subr.bf16.mxu0 0
  %12081 = vmatpush1.bf16.msra.mxu0 0
  %12082 = vmatprep.subr.bf16.mxu0 0
  %12083 = vmatpush1.bf16.msra.mxu0 0
  %12084 = vmatprep.subr.bf16.mxu0 0
  %12085 = vmatpush1.bf16.msra.mxu0 0
  %12086 = vmatprep.subr.bf16.mxu0 0
  %12087 = vmatpush1.bf16.msra.mxu0 0
  %12088 = vmatprep.subr.bf16.mxu0 0
  %12089 = vmatpush1.bf16.msra.mxu0 0
  %12090 = vmatprep.subr.bf16.mxu0 0
  %12091 = vmatpush1.bf16.msra.mxu0 0
  %12092 = vmatprep.subr.bf16.mxu0 0
  %12093 = vmatpush1.bf16.msra.mxu0 0
  %12094 = vmatprep.subr.bf16.mxu0 0
  %12095 = vmatpush1.bf16.msra.mxu0 0
  %12096 = vmatprep.subr.bf16.mxu0 0
  %12097 = vmatpush1.bf16.msra.mxu0 0
  %12098 = vmatprep.mubr.bf16.mxu0 %v10946
  %12099 = vmatmul.mubr.bf16.gmra.mrb[0].mxu0 %v10941
  %v12100 = vpop.f32.mrb[0].mxu0
  %v12101 = vadd.f32 %v10928, %v12100
  %v12102 = vpop.f32.mrb[0].mxu0
  %v12103 = vpop.f32.mrb[0].mxu0
  %v12104 = vadd.f32 %v10933, %v12103
  %v12105 = vpop.f32.mrb[0].mxu0
  %12106 = vdwg.mxu0
  %v12107 = vmax.f32 %v12101, 0.0
  %v12108 = vmax.f32 %v12104, 0.0
  %12109 = vmatprep.subr.bf16.mxu0 0
  %12110 = vmatpush1.bf16.msra.mxu0 %v10882
  %12111 = vmatprep.subr.bf16.mxu0 0
  %12112 = vmatpush1.bf16.msra.mxu0 %v10887
  %12113 = vmatprep.subr.bf16.mxu0 0
  %12114 = vmatpush1.bf16.msra.mxu0 0
  %12115 = vmatprep.subr.bf16.mxu0 0
  %12116 = vmatpush1.bf16.msra.mxu0 %v10915
  %12117 = vmatprep.subr.bf16.mxu0 0
  %12118 = vmatpush1.bf16.msra.mxu0 %v10920
  %12119 = vmatprep.subr.bf16.mxu0 0
  %12120 = vmatpush1.bf16.msra.mxu0 0
  %12121 = vmatprep.subr.bf16.mxu0 0
  %12122 = vmatpush1.bf16.msra.mxu0 0
  %12123 = vmatprep.subr.bf16.mxu0 0
  %12124 = vmatpush1.bf16.msra.mxu0 0
  %12125 = vmatprep.subr.bf16.mxu0 0
  %12126 = vmatpush1.bf16.msra.mxu0 0
  %12127 = vmatprep.subr.bf16.mxu0 0
  %12128 = vmatpush1.bf16.msra.mxu0 0
  %12129 = vmatprep.subr.bf16.mxu0 0
  %12130 = vmatpush1.bf16.msra.mxu0 0
  %12131 = vmatprep.subr.bf16.mxu0 0
  %12132 = vmatpush1.bf16.msra.mxu0 0
  %12133 = vmatprep.subr.bf16.mxu0 0
  %12134 = vmatpush1.bf16.msra.mxu0 0
  %12135 = vmatprep.subr.bf16.mxu0 0
  %12136 = vmatpush1.bf16.msra.mxu0 0
  %12137 = vmatprep.subr.bf16.mxu0 0
  %12138 = vmatpush1.bf16.msra.mxu0 0
  %12139 = vmatprep.subr.bf16.mxu0 0
  %12140 = vmatpush1.bf16.msra.mxu0 0
  %12141 = vmatprep.mubr.bf16.mxu0 %v10946
  %12142 = vmatmul.mubr.bf16.gmra.mrb[0].mxu0 %v10941
  %v12143 = vpop.f32.mrb[0].mxu0
  %v12144 = vadd.f32 %v10928, %v12143
  %v12145 = vpop.f32.mrb[0].mxu0
  %v12146 = vpop.f32.mrb[0].mxu0
  %v12147 = vadd.f32 %v10933, %v12146
  %v12148 = vpop.f32.mrb[0].mxu0
  %12149 = vdwg.mxu0
  %v12150 = vmax.f32 %v12144, 0.0
  %v12151 = vmax.f32 %v12147, 0.0
  %v12152 = vmax.f32 %v10989, %v11032
  %v12153 = vmax.f32 %v10990, %v11033
  %v12154 = vmax.f32 %v12152, %v11290
  %v12155 = vmax.f32 %v12153, %v11291
  %v12156 = vmax.f32 %v12154, %v11333
  %v12157 = vmax.f32 %v12155, %v11334
  %v12158 = vpack.c.bf16 %v12157, %v12156
  %v12159 = vmax.f32 %v11075, %v11118
  %v12160 = vmax.f32 %v11076, %v11119
  %v12161 = vmax.f32 %v12159, %v11161
  %v12162 = vmax.f32 %v12160, %v11162
  %v12163 = vmax.f32 %v12161, %v11376
  %v12164 = vmax.f32 %v12162, %v11377
  %v12165 = vmax.f32 %v12163, %v11419
  %v12166 = vmax.f32 %v12164, %v11420
  %v12167 = vmax.f32 %v12165, %v11462
  %v12168 = vmax.f32 %v12166, %v11463
  %v12169 = vpack.c.bf16 %v12168, %v12167
  %v12170 = vmax.f32 %v11204, %v11247
  %v12171 = vmax.f32 %v11205, %v11248
  %v12172 = vmax.f32 %v12170, %v11505
  %v12173 = vmax.f32 %v12171, %v11506
  %v12174 = vmax.f32 %v12172, %v11548
  %v12175 = vmax.f32 %v12173, %v11549
  %v12176 = vpack.c.bf16 %v12175, %v12174
  %v12177 = vmax.f32 %v11591, %v11634
  %v12178 = vmax.f32 %v11592, %v11635
  %v12179 = vmax.f32 %v12177, %v11892
  %v12180 = vmax.f32 %v12178, %v11893
  %v12181 = vmax.f32 %v12179, %v11935
  %v12182 = vmax.f32 %v12180, %v11936
  %v12183 = vpack.c.bf16 %v12182, %v12181
  %v12184 = vmax.f32 %v11677, %v11720
  %v12185 = vmax.f32 %v11678, %v11721
  %v12186 = vmax.f32 %v12184, %v11763
  %v12187 = vmax.f32 %v12185, %v11764
  %v12188 = vmax.f32 %v12186, %v11978
  %v12189 = vmax.f32 %v12187, %v11979
  %v12190 = vmax.f32 %v12188, %v12021
  %v12191 = vmax.f32 %v12189, %v12022
  %v12192 = vmax.f32 %v12190, %v12064
  %v12193 = vmax.f32 %v12191, %v12065
  %v12194 = vpack.c.bf16 %v12193, %v12192
  %v12195 = vmax.f32 %v11806, %v11849
  %v12196 = vmax.f32 %v11807, %v11850
  %v12197 = vmax.f32 %v12195, %v12107
  %v12198 = vmax.f32 %v12196, %v12108
  %v12199 = vmax.f32 %v12197, %v12150
  %v12200 = vmax.f32 %v12198, %v12151
  %v12201 = vpack.c.bf16 %v12200, %v12199
  %v12202 = vld [vmem:[%s5] sm:$0xf]
  %v12203 = vld [vmem:[%s5 + $0x4] sm:$0xf]
  %v12204 = vld [vmem:[%s5 + $0x8] sm:$0xf]
  %v12205 = vld [vmem:[%s5 + $0xc] sm:$0xf]
  %v12206 = vld [vmem:[%s5 + $0x10] sm:$0xf]
  %v12207 = vld [vmem:[%s5 + $0x14] sm:$0xf]
  %v12208 = vld [vmem:[%s5 + $0x18] sm:$0x1]
  %v12209 = vld [vmem:[%s6] sm:$0xff]
  %v12210 = vld [vmem:[%s6 + $0x8] sm:$0xff]
  %v12211 = vld [vmem:[%s6 + $0x10] sm:$0xff]
  %v12212 = vld [vmem:[%s6 + $0x18] sm:$0xff]
  %v12213 = vld [vmem:[%s6 + $0x20] sm:$0xff]
  %v12214 = vld [vmem:[%s6 + $0x28] sm:$0xff]
  %v12215 = vld [vmem:[%s6 + $0x30] sm:$0x3]
  %12217 = vset.pattern.permute.xlu0 0
  %12218 = vperm.xlu0 %12217, %v12209
  %v12219 = vpop.permute.xlu0 %12218
  %12222 = vset.pattern.permute.xlu0 0
  %12223 = vperm.xlu0 %12222, %v12210
  %v12224 = vpop.permute.xlu0 %12223
  %12227 = vset.pattern.permute.xlu0 0
  %12228 = vperm.xlu0 %12227, %v12211
  %v12229 = vpop.permute.xlu0 %12228
  %12232 = vset.pattern.permute.xlu0 0
  %12233 = vperm.xlu0 %12232, %v12212
  %v12234 = vpop.permute.xlu0 %12233
  %12237 = vset.pattern.permute.xlu0 0
  %12238 = vperm.xlu0 %12237, %v12213
  %v12239 = vpop.permute.xlu0 %12238
  %12242 = vset.pattern.permute.xlu0 0
  %12243 = vperm.xlu0 %12242, %v12214
  %v12244 = vpop.permute.xlu0 %12243
  %12247 = vset.pattern.permute.xlu0 0
  %12248 = vperm.xlu0 %12247, %v12215
  %v12249 = vpop.permute.xlu0 %12248
  %v12258 = vunpack.c.l.b16 %v12202
  %v12259 = vunpack.c.l.b16 %v12203
  %v12260 = vunpack.c.l.b16 %v12204
  %v12261 = vunpack.c.l.b16 %v12205
  %v12262 = vunpack.c.l.b16 %v12206
  %v12263 = vunpack.c.l.b16 %v12207
  %v12264 = vunpack.c.l.b16 %v12208
  %v12265 = vpack.c.b16 %v12259, %v12258
  %v12266 = vpack.c.b16 %v12261, %v12260
  %v12267 = vpack.c.b16 %v12263, %v12262
  %v12268 = vpack.c.b16 %v12264, %v12264
  %vm12269 = vcmask 785408
  %v12271 = vsel %vm12269, %v12265, 0
  %v12274 = vsel %vm12269, %v12266, 0
  %v12277 = vsel %vm12269, %v12267, 0
  %v12280 = vsel %vm12269, %v12268, 0
  %12282 = vmatprep.subr.bf16.mxu0 0
  %12283 = vmatpush1.bf16.msra.mxu0 %v12158
  %12284 = vmatprep.subr.bf16.mxu0 0
  %12285 = vmatpush1.bf16.msra.mxu0 %v12169
  %12286 = vmatprep.subr.bf16.mxu0 0
  %12287 = vmatpush1.bf16.msra.mxu0 %v12176
  %12288 = vmatprep.subr.bf16.mxu0 0
  %12289 = vmatpush1.bf16.msra.mxu0 %v12183
  %12290 = vmatprep.subr.bf16.mxu0 0
  %12291 = vmatpush1.bf16.msra.mxu0 %v12194
  %12292 = vmatprep.subr.bf16.mxu0 0
  %12293 = vmatpush1.bf16.msra.mxu0 %v12201
  %12294 = vmatprep.subr.bf16.mxu0 0
  %12295 = vmatpush1.bf16.msra.mxu0 0
  %12296 = vmatprep.subr.bf16.mxu0 0
  %12297 = vmatpush1.bf16.msra.mxu0 0
  %12298 = vmatprep.subr.bf16.mxu0 0
  %12299 = vmatpush1.bf16.msra.mxu0 0
  %12300 = vmatprep.subr.bf16.mxu0 0
  %12301 = vmatpush1.bf16.msra.mxu0 0
  %12302 = vmatprep.subr.bf16.mxu0 0
  %12303 = vmatpush1.bf16.msra.mxu0 0
  %12304 = vmatprep.subr.bf16.mxu0 0
  %12305 = vmatpush1.bf16.msra.mxu0 0
  %12306 = vmatprep.subr.bf16.mxu0 0
  %12307 = vmatpush1.bf16.msra.mxu0 0
  %12308 = vmatprep.subr.bf16.mxu0 0
  %12309 = vmatpush1.bf16.msra.mxu0 0
  %12310 = vmatprep.subr.bf16.mxu0 0
  %12311 = vmatpush1.bf16.msra.mxu0 0
  %12312 = vmatprep.subr.bf16.mxu0 0
  %12313 = vmatpush1.bf16.msra.mxu0 0
  %12314 = vmatprep.mubr.bf16.mxu0 0
  %12315 = vmatmul.mubr.bf16.gmra.mrb[0].mxu0 %v12271
  %v12316 = vpop.f32.mrb[0].mxu0
  %v12317 = vadd.f32 %v12219, %v12316
  %v12318 = vpop.f32.mrb[0].mxu0
  %v12319 = vpop.f32.mrb[0].mxu0
  %v12320 = vadd.f32 %v12224, %v12319
  %v12321 = vpop.f32.mrb[0].mxu0
  %12322 = vmatprep.mubr.bf16.mxu0 0
  %12323 = vmatmul.mubr.bf16.gmra.mrb[0].mxu0 %v12274
  %v12324 = vpop.f32.mrb[0].mxu0
  %v12325 = vadd.f32 %v12229, %v12324
  %v12326 = vpop.f32.mrb[0].mxu0
  %v12327 = vpop.f32.mrb[0].mxu0
  %v12328 = vadd.f32 %v12234, %v12327
  %v12329 = vpop.f32.mrb[0].mxu0
  %12330 = vmatprep.mubr.bf16.mxu0 0
  %12331 = vmatmul.mubr.bf16.gmra.mrb[0].mxu0 %v12277
  %v12332 = vpop.f32.mrb[0].mxu0
  %v12333 = vadd.f32 %v12239, %v12332
  %v12334 = vpop.f32.mrb[0].mxu0
  %v12335 = vpop.f32.mrb[0].mxu0
  %v12336 = vadd.f32 %v12244, %v12335
  %v12337 = vpop.f32.mrb[0].mxu0
  %12338 = vmatprep.mubr.bf16.mxu0 0
  %12339 = vmatmul.mubr.bf16.gmra.mrb[0].mxu0 %v12280
  %v12340 = vpop.f32.mrb[0].mxu0
  %v12341 = vadd.f32 %v12249, %v12340
  %v12342 = vpop.f32.mrb[0].mxu0
  %v12343 = vpop.f32.mrb[0].mxu0
  %v12344 = vpop.f32.mrb[0].mxu0
  %12345 = vdwg.mxu0
  %12353 = vrot.lane.b32.xlu0 %v12317, 126
  %v12354 = vpop.permute.xlu0 %12353
  %12355 = vrot.lane.b32.xlu0 %v12320, 126
  %v12356 = vpop.permute.xlu0 %12355
  %12357 = vrot.lane.b32.xlu0 %v12325, 126
  %v12358 = vpop.permute.xlu0 %12357
  %12359 = vrot.lane.b32.xlu0 %v12328, 126
  %v12360 = vpop.permute.xlu0 %12359
  %12361 = vrot.lane.b32.xlu0 %v12333, 126
  %v12362 = vpop.permute.xlu0 %12361
  %12363 = vrot.lane.b32.xlu0 %v12336, 126
  %v12364 = vpop.permute.xlu0 %12363
  %12365 = vrot.lane.b32.xlu0 %v12341, 126
  %v12366 = vpop.permute.xlu0 %12365
  %v12374 = vsub.f32 %v12317, %v12354
  %v12375 = vsub.f32 %v12320, %v12356
  %v12376 = vsub.f32 %v12325, %v12358
  %v12377 = vsub.f32 %v12328, %v12360
  %v12378 = vsub.f32 %v12333, %v12362
  %v12379 = vsub.f32 %v12336, %v12364
  %v12380 = vsub.f32 %v12341, %v12366
  %v12381 = vand.u32 2147483647, %v12374
  %v12382 = vand.u32 2147483647, %v12375
  %v12383 = vand.u32 2147483647, %v12376
  %v12384 = vand.u32 2147483647, %v12377
  %v12385 = vand.u32 2147483647, %v12378
  %v12386 = vand.u32 2147483647, %v12379
  %v12387 = vand.u32 2147483647, %v12380
  %vm12388 = vcmask 15360
  %v12389 = vsel %vm12388, %v12381, 0.0
  %v12390 = vsel %vm12388, %v12382, 0.0
  %v12391 = vadd.f32 %v12389, %v12390
  %v12392 = vsel %vm12388, %v12383, 0.0
  %v12393 = vadd.f32 %v12391, %v12392
  %v12394 = vsel %vm12388, %v12384, 0.0
  %v12395 = vadd.f32 %v12393, %v12394
  %v12396 = vsel %vm12388, %v12385, 0.0
  %v12397 = vadd.f32 %v12395, %v12396
  %v12398 = vsel %vm12388, %v12386, 0.0
  %v12399 = vadd.f32 %v12397, %v12398
  %vm12400 = vcmask 9216
  %v12401 = vsel %vm12400, %v12387, 0.0
  %v12402 = vadd.f32 %v12399, %v12401
  %v12403 = vrot.slane %v12402, 4
  %v12404 = vadd.f32 %v12402, %v12403
  %v12405 = vrot.slane %v12404, 2
  %v12406 = vadd.f32 %v12404, %v12405
  %v12407 = vrot.slane %v12406, 1
  %v12408 = vadd.f32 %v12406, %v12407
  %v12409 = vsub.f32 0.0, %v12408
  %v12410 = vmul.f32 %v12409, 1.442695
  %v12411 = vpow.pop %v12410
  %12413 = vrot.lane.b32.xlu0 %v12411, 2
  %v12414 = vpop.permute.xlu0 %12413
  %v12416 = vsel %vm12388, %v12411, %v12414
  %v12418 = vrot.slane %v12416, 6
  %vm12420 = vcmask 1041408
  %v12421 = vsel %vm12420, %v12341, %v12418
  %vm12422 = vcmask 31744
  %12423 = vst.msk [vmem:[%s7] sm:$0xff] %vm12422, %v12317
  %12424 = vst.msk [vmem:[%s7 + $0x8] sm:$0xff] %vm12422, %v12320
  %12425 = vst.msk [vmem:[%s7 + $0x10] sm:$0xff] %vm12422, %v12325
  %12426 = vst.msk [vmem:[%s7 + $0x18] sm:$0xff] %vm12422, %v12328
  %12427 = vst.msk [vmem:[%s7 + $0x20] sm:$0xff] %vm12422, %v12333
  %12428 = vst.msk [vmem:[%s7 + $0x28] sm:$0xff] %vm12422, %v12336
  %vm12429 = vcmask 26624
  %12430 = vst.msk [vmem:[%s7 + $0x30] sm:$0x7] %vm12429, %v12421
  // Predicated region
  $region30: #{tpu_custom_call.1} parent=0 // pred_check
    _
  $region31: #{tpu_custom_call.1} parent=0 // pred_check_branch
    %12432 = sbr.rel (0) target = $region33
  $region32: #{tpu_custom_call.1} parent=0 // pred_region
    _
  $region33: #{tpu_custom_call.1} parent=0 // pred_fallthru
    _
  // Predicated region
  $region34: #{tpu_custom_call.1} parent=0 // pred_check
    _
  $region35: #{tpu_custom_call.1} parent=0 // pred_check_branch
    %12434 = sbr.rel (0) target = $region37
  $region36: #{tpu_custom_call.1} parent=0 // pred_region
    _
  $region37: #{tpu_custom_call.1} parent=0 // pred_fallthru
    _

</llo_original>
